<compile_context>
chip_gen: v6e
topology: v6e:2x2x1
jax: 0.10.0
libtpu: 0.0.40
codegen_flags: <defaults>
</compile_context>

<pallas_src>
import jax
import jax.numpy as jnp
from jax.experimental import pallas as pl
from jax.experimental.pallas import tpu as pltpu

# ----------------------------- small synthetic config -----------------------------
EMBED_DIM = 32
NUM_HEADS = 4
HEAD_DIM = EMBED_DIM // NUM_HEADS
MLP_RATIO = 4.0
DEPTH = 2                 # main transformer blocks
PRENET_DEPTH = 1          # context-encoder (AudioEncoder) blocks
NUM_LAYERS = PRENET_DEPTH + DEPTH
NUM_EXTRA_TOKENS = 1      # utterance tokens prepended by the modality encoder
NORM_EPS = 1e-5
# (dim, kernel, stride); reduced version of [(512,10,5)]+[(512,3,2)]*4+[(512,2,2)]*2
CONV_FEATURE_LAYERS = [(32, 10, 5), (32, 3, 2), (32, 2, 2)]
CONV_POS_KERNEL = 9       # odd kernel => SamePad trims nothing
CONV_POS_GROUPS = 4

BATCH = 2
T_SAMPLES = 800           # -> 159 -> 79 -> 39 frames


# ----------------------------- in-kernel math helpers -----------------------------
def _gelu(x):
    # TODO(synk): PyTorch nn.GELU() is erf-exact; tanh approximation keeps the kernel on
    # Mosaic-supported transcendentals only.
    c = jnp.asarray(0.7978845608028654, x.dtype)  # sqrt(2/pi)
    return 0.5 * x * (1.0 + jnp.tanh(c * (x + 0.044715 * x * x * x)))


def _ln(x, g, b, eps):
    mu = jnp.mean(x, axis=-1, keepdims=True)
    var = jnp.mean(jnp.square(x - mu), axis=-1, keepdims=True)
    return (x - mu) * jax.lax.rsqrt(var + eps) * g + b


# ----------------------------- conv feature layer (fused conv + LN + GELU) -----------------------------
def _conv_ln_gelu_kernel(kernel_k, stride, c_in, t_out, eps):
    """Input block: (1, G, stride*c_in) stride-grouped activations.

    The patch matrix (t_out, kernel_k*c_in) is assembled from ceil(kernel_k/stride)
    *contiguous* VMEM slices (no strided access, no HBM im2col), then ONE bf16 matmul.
    """
    n_pieces = -(-kernel_k // stride)  # ceil

    def body(xg_ref, w_ref, g_ref, b_ref, o_ref):
        xg = xg_ref[0]                                               # (G, stride*c_in)
        pieces = []
        for m in range(n_pieces):
            cols = min(stride, kernel_k - m * stride) * c_in
            pieces.append(xg[m:m + t_out, 0:cols])
        patches = pieces[0] if n_pieces == 1 else jnp.concatenate(pieces, axis=-1)
        y = jnp.dot(patches.astype(jnp.bfloat16), w_ref[...],
                    preferred_element_type=jnp.float32)              # (t_out, c_out) f32
        y = _ln(y, g_ref[...], b_ref[...], eps)                      # channel LayerNorm (fp32)
        o_ref[0] = _gelu(y).astype(o_ref.dtype)

    return body


def conv_layer(x, p, kernel_k, stride, c_out):
    """x: (B, T_in, C_in) -> (B, T_out, C_out) bf16.  Conv1d(bias=False) + LN + GELU."""
    B, t_in, c_in = x.shape
    t_out = (t_in - kernel_k) // stride + 1
    g_rows = t_out + (kernel_k - 1) // stride
    t_pad = g_rows * stride
    if t_pad > t_in:                      # at most stride-1 extra rows, never read by valid outputs
        x = jnp.pad(x, ((0, 0), (0, t_pad - t_in), (0, 0)))
    elif t_pad < t_in:
        x = x[:, :t_pad]
    # free row-major reshape: pack `stride` consecutive timesteps onto the lane axis
    xg = x.reshape(B, g_rows, stride * c_in)
    # TODO(synk): at real scale (C=512, long T) tile T_out (512-1024 rows on v5e/v6e, explicit
    # VMEM budget on v7x) instead of one full-sequence block per batch element.
    return pl.pallas_call(
        _conv_ln_gelu_kernel(kernel_k, stride, c_in, t_out, NORM_EPS),
        grid=(B,),
        in_specs=[pl.BlockSpec((1, g_rows, stride * c_in), lambda b: (b, 0, 0)),
                  pl.BlockSpec(p["w"].shape, lambda b: (0, 0)),
                  pl.BlockSpec(p["ln_g"].shape, lambda b: (0, 0)),
                  pl.BlockSpec(p["ln_b"].shape, lambda b: (0, 0))],
        out_specs=pl.BlockSpec((1, t_out, c_out), lambda b: (b, 0, 0)),
        out_shape=jax.ShapeDtypeStruct((B, t_out, c_out), jnp.bfloat16),
        compiler_params=pltpu.CompilerParams(dimension_semantics=("parallel",)),
    )(xg, p["w"], p["ln_g"], p["ln_b"])


# -------------- fused feature projection + grouped pos-conv + extra-token prepend --------------
def _embed_kernel(eps, k_pos, groups, num_extra):
    pad = k_pos // 2

    def body(f_ref, lng_ref, lnb_ref, pw_ref, pb_ref, posw_ref, posb_ref, ext_ref, o_ref):
        feats = f_ref[0].astype(jnp.float32)                          # (S, C)
        s_len = feats.shape[0]
        # project_features: LayerNorm -> Linear(C -> D)
        h = _ln(feats, lng_ref[...], lnb_ref[...], eps)
        x = jnp.dot(h.astype(jnp.bfloat16), pw_ref[...],
                    preferred_element_type=jnp.float32) + pb_ref[...]  # (S, D) f32
        d = x.shape[-1]
        dg = d // groups
        # grouped relative positional conv (SamePad, odd kernel): per-group contraction,
        # no block-diagonal zero padding.
        zpad = jnp.zeros((pad, d), jnp.float32)
        xp = jnp.concatenate([zpad, x, zpad], axis=0).astype(jnp.bfloat16)  # (S+2*pad, D)
        posw = posw_ref[...]                                          # (G, k*dg, dg) bf16
        outs = []
        for g in range(groups):
            taps = [xp[j:j + s_len, g * dg:(g + 1) * dg] for j in range(k_pos)]
            pg = jnp.concatenate(taps, axis=-1)                       # (S, k*dg)
            outs.append(jnp.dot(pg, posw[g], preferred_element_type=jnp.float32))
        y = jnp.concatenate(outs, axis=-1) + posb_ref[...]            # (S, D)
        # non-affine LN over channels, GELU, residual add
        mu = jnp.mean(y, axis=-1, keepdims=True)
        var = jnp.mean(jnp.square(y - mu), axis=-1, keepdims=True)
        y = (y - mu) * jax.lax.rsqrt(var + eps)
        x = x + _gelu(y)
        # prepend learned extra tokens and store once (full block)
        o_ref[0] = jnp.concatenate([ext_ref[0], x], axis=0)

    return body


def embed_stage(feats, params):
    B, S, C = feats.shape
    D = EMBED_DIM
    s2 = S + NUM_EXTRA_TOKENS
    return pl.pallas_call(
        _embed_kernel(NORM_EPS, CONV_POS_KERNEL, CONV_POS_GROUPS, NUM_EXTRA_TOKENS),
        grid=(B,),
        in_specs=[pl.BlockSpec((1, S, C), lambda b: (b, 0, 0)),
                  pl.BlockSpec(params["feat_ln_g"].shape, lambda b: (0, 0)),
                  pl.BlockSpec(params["feat_ln_b"].shape, lambda b: (0, 0)),
                  pl.BlockSpec(params["feat_proj_w"].shape, lambda b: (0, 0)),
                  pl.BlockSpec(params["feat_proj_b"].shape, lambda b: (0, 0)),
                  pl.BlockSpec(params["pos_w"].shape, lambda b: (0, 0, 0)),
                  pl.BlockSpec(params["pos_b"].shape, lambda b: (0, 0)),
                  pl.BlockSpec(params["extra_tokens"].shape, lambda b: (0, 0, 0))],
        out_specs=pl.BlockSpec((1, s2, D), lambda b: (b, 0, 0)),
        out_shape=jax.ShapeDtypeStruct((B, s2, D), jnp.float32),
        compiler_params=pltpu.CompilerParams(dimension_semantics=("parallel",)),
    )(feats, params["feat_ln_g"], params["feat_ln_b"], params["feat_proj_w"],
      params["feat_proj_b"], params["pos_w"], params["pos_b"], params["extra_tokens"])


# ----------------------------- fused multi-layer transformer stack -----------------------------
def _stack_kernel(num_heads, head_dim, num_layers, eps):
    """One grid step = one (batch element, layer).  grid=(B, L), L innermost / 'arbitrary'.

    x lives in the output VMEM block across the whole layer axis (same block index for all l);
    per-layer weights stream through VMEM double-buffered by BlockSpec.  Final LayerNorm is
    fused into the last layer's step.
    """
    scale = float(head_dim) ** -0.5

    def body(x_ref, qkvw_ref, projw_ref, fc1w_ref, fc2w_ref, vec_ref, fc1b_ref,
             ng_ref, nb_ref, o_ref):
        layer = pl.program_id(1)

        @pl.when(layer == 0)
        def _():
            o_ref[0] = x_ref[0]

        x = o_ref[0]                                   # (S2, D) f32, resident across layers
        d_model = x.shape[-1]
        vec = vec_ref[0]                               # packed 1-row vectors: (9, D)
        ln1_g, ln1_b = vec[0:1], vec[1:2]
        q_b, k_b, v_b = vec[2:3], vec[3:4], vec[4:5]
        proj_b = vec[5:6]
        ln2_g, ln2_b = vec[6:7], vec[7:8]
        fc2_b = vec[8:9]

        # ---- attention branch: x += out_proj(attn(LN1(x))) ----
        h = _ln(x, ln1_g, ln1_b, eps).astype(jnp.bfloat16)
        qkv = jnp.dot(h, qkvw_ref[0], preferred_element_type=jnp.float32)   # (S2, 3D) f32
        q = qkv[:, 0:d_model] + q_b
        k = qkv[:, d_model:2 * d_model] + k_b
        v = (qkv[:, 2 * d_model:3 * d_model] + v_b).astype(jnp.bfloat16)
        heads = []
        for hh in range(num_heads):                    # independent per-head chains (tiny H here)
            lo = hh * head_dim
            qh = (q[:, lo:lo + head_dim] * scale).astype(jnp.bfloat16)
            kh = k[:, lo:lo + head_dim].astype(jnp.bfloat16)
            s = jax.lax.dot_general(qh, kh, (((1,), (1,)), ((), ())),
                                    preferred_element_type=jnp.float32)     # (S2, S2) f32
            s = s - jnp.max(s, axis=-1, keepdims=True)
            p = jnp.exp(s)
            p = p * pl.reciprocal(jnp.sum(p, axis=-1, keepdims=True), approx=True)
            heads.append(jnp.dot(p.astype(jnp.bfloat16), v[:, lo:lo + head_dim],
                                 preferred_element_type=jnp.float32))       # (S2, Dh)
        # concat heads on the lane axis -> ONE (S,D)@(D,D) output projection (no skinny K=Dh acc)
        o_heads = jnp.concatenate(heads, axis=-1).astype(jnp.bfloat16)      # (S2, D)
        x = x + jnp.dot(o_heads, projw_ref[0], preferred_element_type=jnp.float32) + proj_b
        # TODO(synk): at real sequence lengths on v7x, tile the KV axis with an online-softmax
        # accumulator (flash pattern) instead of full (S,S) scores per head.

        # ---- MLP branch: x += fc2(GELU(fc1(LN2(x)))) ----
        h2 = _ln(x, ln2_g, ln2_b, eps).astype(jnp.bfloat16)
        hid = _gelu(jnp.dot(h2, fc1w_ref[0], preferred_element_type=jnp.float32) + fc1b_ref[0])
        x = x + jnp.dot(hid.astype(jnp.bfloat16), fc2w_ref[0],
                        preferred_element_type=jnp.float32) + fc2_b

        o_ref[0] = x

        @pl.when(layer == num_layers - 1)              # fused final LayerNorm (layer_norm_first)
        def _():
            o_ref[0] = _ln(x, ng_ref[...], nb_ref[...], eps)

    return body


def transformer_stack(x, params):
    B, S2, D = x.shape
    L = params["qkv_w"].shape[0]
    H = params["fc1_w"].shape[-1]

    def xmap(b, l): return (b, 0, 0)
    def wmap(b, l): return (l, 0, 0)
    def cmap(b, l): return (0, 0)

    return pl.pallas_call(
        _stack_kernel(NUM_HEADS, HEAD_DIM, L, NORM_EPS),
        grid=(B, L),
        in_specs=[pl.BlockSpec((1, S2, D), xmap),
                  pl.BlockSpec((1, D, 3 * D), wmap),
                  pl.BlockSpec((1, D, D), wmap),
                  pl.BlockSpec((1, D, H), wmap),
                  pl.BlockSpec((1, H, D), wmap),
                  pl.BlockSpec((1, 9, D), wmap),
                  pl.BlockSpec((1, 1, H), wmap),
                  pl.BlockSpec(params["norm_g"].shape, cmap),
                  pl.BlockSpec(params["norm_b"].shape, cmap)],
        out_specs=pl.BlockSpec((1, S2, D), xmap),
        out_shape=jax.ShapeDtypeStruct((B, S2, D), jnp.float32),
        compiler_params=pltpu.CompilerParams(
            dimension_semantics=("parallel", "arbitrary")),
    )(x, params["qkv_w"], params["attn_proj_w"], params["fc1_w"], params["fc2_w"],
      params["blk_vec"], params["fc1_b"], params["norm_g"], params["norm_b"])


# ----------------------------- full forward -----------------------------
def emotion2vec_forward(source, params):
    """features_only forward: source (B, T_samples) -> features (B, S_frames, EMBED_DIM)."""
    # cfg.normalize: per-wave layer norm over the whole waveform (F.layer_norm(source, source.shape))
    mu = jnp.mean(source, axis=-1, keepdims=True)
    var = jnp.var(source, axis=-1, keepdims=True)
    source = (source - mu) * jax.lax.rsqrt(var + NORM_EPS)

    # conv feature extractor ("layer_norm" mode), time-major, bf16 activations between layers
    x = source[:, :, None]                            # (B, T, 1)
    for i, (cdim, k, s) in enumerate(CONV_FEATURE_LAYERS):
        x = conv_layer(x, params["conv"][i], k, s, cdim)   # (B, T_out, cdim) bf16

    # fused: LN + Linear projection -> grouped pos-conv + LN + GELU + residual -> extra tokens
    xemb = embed_stage(x, params)                     # (B, S+NE, D) f32

    # fused prenet + main AltBlocks + final LayerNorm
    out = transformer_stack(xemb, params)             # (B, S+NE, D) f32

    # remove extra tokens (remove_extra_tokens=True)
    return out[:, NUM_EXTRA_TOKENS:]


# ----------------------------- deterministic parameter init -----------------------------
def init_params(key):
    keys = iter(jax.random.split(key, 64))

    def nrm(shape, dtype=jnp.bfloat16, scale=0.02):
        return (scale * jax.random.normal(next(keys), shape, jnp.float32)).astype(dtype)

    def ones(shape):
        return jnp.ones(shape, jnp.float32)

    def zeros(shape):
        return jnp.zeros(shape, jnp.float32)

    p = {}

    # conv feature layers; torch weight (Cout, Cin, k) maps to (k*Cin, Cout) via transpose(2,1,0)
    conv = []
    cin = 1
    for (cdim, k, s) in CONV_FEATURE_LAYERS:
        conv.append({"w": nrm((k * cin, cdim)),
                     "ln_g": ones((1, cdim)),
                     "ln_b": zeros((1, cdim))})
        cin = cdim
    p["conv"] = conv

    # feature projection (LayerNorm + Linear)
    p["feat_ln_g"] = ones((1, cin))
    p["feat_ln_b"] = zeros((1, cin))
    p["feat_proj_w"] = nrm((cin, EMBED_DIM))
    p["feat_proj_b"] = nrm((1, EMBED_DIM), jnp.float32)

    # grouped positional conv stored per group (no block-diagonal zero padding):
    # torch (Cout, Cin/G, k); group g weight row (j*dg + c, oo) = W[g*dg + oo, c, j]
    dg = EMBED_DIM // CONV_POS_GROUPS
    p["pos_w"] = nrm((CONV_POS_GROUPS, CONV_POS_KERNEL * dg, dg))
    p["pos_b"] = nrm((1, EMBED_DIM), jnp.float32)

    p["extra_tokens"] = nrm((1, NUM_EXTRA_TOKENS, EMBED_DIM), jnp.float32)

    # transformer blocks stacked along a leading layer axis (prenet blocks first, then main)
    L = NUM_LAYERS
    D = EMBED_DIM
    hidden = int(EMBED_DIM * MLP_RATIO)
    p["qkv_w"] = nrm((L, D, 3 * D))
    p["attn_proj_w"] = nrm((L, D, D))
    p["fc1_w"] = nrm((L, D, hidden))
    p["fc2_w"] = nrm((L, hidden, D))
    # packed per-layer 1-row vectors: [ln1_g, ln1_b, q_b, k_b, v_b, proj_b, ln2_g, ln2_b, fc2_b]
    vec = jnp.zeros((L, 9, D), jnp.float32)
    vec = vec.at[:, 0].set(1.0).at[:, 6].set(1.0)
    vec = vec.at[:, 2:6].set(nrm((L, 4, D), jnp.float32))
    vec = vec.at[:, 8].set(nrm((L, D), jnp.float32))
    p["blk_vec"] = vec
    p["fc1_b"] = nrm((L, 1, hidden), jnp.float32)

    p["norm_g"] = ones((1, D))
    p["norm_b"] = zeros((1, D))
    return p


# ----------------------------- main -----------------------------
if __name__ == "__main__":
    key = jax.random.PRNGKey(0)
    pkey, dkey = jax.random.split(key)
    params = init_params(pkey)
    source = jax.random.normal(dkey, (BATCH, T_SAMPLES), dtype=jnp.float32)

    # expected frame count through the conv stack
    t = T_SAMPLES
    for (_, k, s) in CONV_FEATURE_LAYERS:
        t = (t - k) // s + 1

    fwd = jax.jit(emotion2vec_forward)
    out = jax.block_until_ready(fwd(source, params))

    assert out.shape == (BATCH, t, EMBED_DIM), out.shape
    assert out.dtype == jnp.float32
    assert bool(jnp.all(jnp.isfinite(out)))
    print("KERNEL_OK")
</pallas_src>

<mosaic_0001>
module attributes {stable_mosaic.version = 11 : i64} {
  func.func @body(%arg0: i32, %arg1: memref<1x160x5xf32, #tpu.memory_space<vmem>>, %arg2: memref<10x32xbf16, #tpu.memory_space<vmem>>, %arg3: memref<1x32xf32, #tpu.memory_space<vmem>>, %arg4: memref<1x32xf32, #tpu.memory_space<vmem>>, %arg5: memref<1x159x32xbf16, #tpu.memory_space<vmem>>) attributes {dimension_semantics = [#tpu.dimension_semantics<parallel>], iteration_bounds = array<i64: 2>, scalar_prefetch = 0 : i64, scratch_operands = 0 : i64, tpu.core_type = #tpu.core_type<tc>, window_params = [{transform_indices = @transform_0, window_bounds = array<i64: 1, 160, 5>}, {pipeline_mode = #tpu.pipeline_mode<synchronous>, transform_indices = @transform_1, window_bounds = array<i64: 10, 32>}, {pipeline_mode = #tpu.pipeline_mode<synchronous>, transform_indices = @transform_2, window_bounds = array<i64: 1, 32>}, {pipeline_mode = #tpu.pipeline_mode<synchronous>, transform_indices = @transform_3, window_bounds = array<i64: 1, 32>}, {transform_indices = @transform_4, window_bounds = array<i64: 1, 159, 32>}]} {
    %c0 = arith.constant 0 : index
    %c0_0 = arith.constant 0 : index
    %c0_1 = arith.constant 0 : index
    %0 = vector.load %arg1[%c0, %c0_0, %c0_1] : memref<1x160x5xf32, #tpu.memory_space<vmem>>, vector<1x160x5xf32>
    %1 = vector.shape_cast %0 : vector<1x160x5xf32> to vector<160x5xf32>
    %2 = vector.extract_strided_slice %1 {offsets = [0, 0], sizes = [159, 5], strides = [1, 1]} : vector<160x5xf32> to vector<159x5xf32>
    %3 = vector.extract_strided_slice %1 {offsets = [1, 0], sizes = [159, 5], strides = [1, 1]} : vector<160x5xf32> to vector<159x5xf32>
    %4 = tpu.concatenate %2, %3 in 1 : vector<159x5xf32>, vector<159x5xf32> -> vector<159x10xf32>
    %5 = arith.truncf %4 : vector<159x10xf32> to vector<159x10xbf16>
    %c0_2 = arith.constant 0 : index
    %c0_3 = arith.constant 0 : index
    %6 = vector.load %arg2[%c0_2, %c0_3] : memref<10x32xbf16, #tpu.memory_space<vmem>>, vector<10x32xbf16>
    %cst = arith.constant dense<0.000000e+00> : vector<159x32xf32>
    %7 = tpu.matmul %5, %6, %cst {dimension_numbers = #tpu.dot_dimension_numbers<[1], [0], [0], [1], [0, 0, 1, 1], [], []>} : vector<159x10xbf16>, vector<10x32xbf16>, vector<159x32xf32> -> vector<159x32xf32>
    %c0_4 = arith.constant 0 : index
    %c0_5 = arith.constant 0 : index
    %8 = vector.load %arg3[%c0_4, %c0_5] : memref<1x32xf32, #tpu.memory_space<vmem>>, vector<1x32xf32>
    %c0_6 = arith.constant 0 : index
    %c0_7 = arith.constant 0 : index
    %9 = vector.load %arg4[%c0_6, %c0_7] : memref<1x32xf32, #tpu.memory_space<vmem>>, vector<1x32xf32>
    %cst_8 = arith.constant dense<0.000000e+00> : vector<159xf32>
    %10 = vector.multi_reduction <add>, %7, %cst_8 [1] : vector<159x32xf32> to vector<159xf32>
    %11 = vector.shape_cast %10 : vector<159xf32> to vector<159x1xf32>
    %cst_9 = arith.constant 3.200000e+01 : f32
    %12 = vector.broadcast %cst_9 : f32 to vector<159x1xf32>
    %13 = arith.divf %11, %12 : vector<159x1xf32>
    %14 = vector.broadcast %13 : vector<159x1xf32> to vector<159x32xf32>
    %15 = arith.subf %7, %14 : vector<159x32xf32>
    %16 = arith.mulf %15, %15 : vector<159x32xf32>
    %cst_10 = arith.constant dense<0.000000e+00> : vector<159xf32>
    %17 = vector.multi_reduction <add>, %16, %cst_10 [1] : vector<159x32xf32> to vector<159xf32>
    %18 = vector.shape_cast %17 : vector<159xf32> to vector<159x1xf32>
    %cst_11 = arith.constant 3.200000e+01 : f32
    %19 = vector.broadcast %cst_11 : f32 to vector<159x1xf32>
    %20 = arith.divf %18, %19 : vector<159x1xf32>
    %21 = vector.broadcast %13 : vector<159x1xf32> to vector<159x32xf32>
    %22 = arith.subf %7, %21 : vector<159x32xf32>
    %cst_12 = arith.constant 9.99999974E-6 : f32
    %23 = vector.broadcast %cst_12 : f32 to vector<159x1xf32>
    %24 = arith.addf %20, %23 : vector<159x1xf32>
    %25 = math.rsqrt %24 : vector<159x1xf32>
    %26 = vector.broadcast %25 : vector<159x1xf32> to vector<159x32xf32>
    %27 = arith.mulf %22, %26 : vector<159x32xf32>
    %28 = vector.broadcast %8 : vector<1x32xf32> to vector<159x32xf32>
    %29 = arith.mulf %27, %28 : vector<159x32xf32>
    %30 = vector.broadcast %9 : vector<1x32xf32> to vector<159x32xf32>
    %31 = arith.addf %29, %30 : vector<159x32xf32>
    %cst_13 = arith.constant 5.000000e-01 : f32
    %32 = vector.broadcast %cst_13 : f32 to vector<159x32xf32>
    %33 = arith.mulf %32, %31 : vector<159x32xf32>
    %cst_14 = arith.constant 4.471500e-02 : f32
    %34 = vector.broadcast %cst_14 : f32 to vector<159x32xf32>
    %35 = arith.mulf %34, %31 : vector<159x32xf32>
    %36 = arith.mulf %35, %31 : vector<159x32xf32>
    %37 = arith.mulf %36, %31 : vector<159x32xf32>
    %38 = arith.addf %31, %37 : vector<159x32xf32>
    %cst_15 = arith.constant 0.797884583 : f32
    %39 = vector.broadcast %cst_15 : f32 to vector<159x32xf32>
    %40 = arith.mulf %39, %38 : vector<159x32xf32>
    %41 = math.tanh %40 : vector<159x32xf32>
    %cst_16 = arith.constant 1.000000e+00 : f32
    %42 = vector.broadcast %cst_16 : f32 to vector<159x32xf32>
    %43 = arith.addf %42, %41 : vector<159x32xf32>
    %44 = arith.mulf %33, %43 : vector<159x32xf32>
    %45 = arith.truncf %44 : vector<159x32xf32> to vector<159x32xbf16>
    %c0_17 = arith.constant 0 : index
    %c0_18 = arith.constant 0 : index
    %c0_19 = arith.constant 0 : index
    %46 = vector.load %arg5[%c0_17, %c0_18, %c0_19] : memref<1x159x32xbf16, #tpu.memory_space<vmem>>, vector<1x159x32xbf16>
    %47 = vector.shape_cast %46 : vector<1x159x32xbf16> to vector<159x32xbf16>
    %48 = vector.shape_cast %45 : vector<159x32xbf16> to vector<1x159x32xbf16>
    tpu.vector_store %arg5[%c0_17, %c0_18, %c0_19], %48 {strides = array<i32>} : memref<1x159x32xbf16, #tpu.memory_space<vmem>>, vector<1x159x32xbf16>,
    return
  }
  func.func @transform_0(%arg0: i32) -> (i32, i32, i32) {
    %c0_i32 = arith.constant 0 : i32
    %c0_i32_0 = arith.constant 0 : i32
    %c0_i32_1 = arith.constant 0 : i32
    return %arg0, %c0_i32, %c0_i32_0 : i32, i32, i32
  }
  func.func @transform_1(%arg0: i32) -> (i32, i32) {
    %c0_i32 = arith.constant 0 : i32
    %c0_i32_0 = arith.constant 0 : i32
    %c0_i32_1 = arith.constant 0 : i32
    return %c0_i32, %c0_i32_0 : i32, i32
  }
  func.func @transform_2(%arg0: i32) -> (i32, i32) {
    %c0_i32 = arith.constant 0 : i32
    %c0_i32_0 = arith.constant 0 : i32
    %c0_i32_1 = arith.constant 0 : i32
    return %c0_i32, %c0_i32_0 : i32, i32
  }
  func.func @transform_3(%arg0: i32) -> (i32, i32) {
    %c0_i32 = arith.constant 0 : i32
    %c0_i32_0 = arith.constant 0 : i32
    %c0_i32_1 = arith.constant 0 : i32
    return %c0_i32, %c0_i32_0 : i32, i32
  }
  func.func @transform_4(%arg0: i32) -> (i32, i32, i32) {
    %c0_i32 = arith.constant 0 : i32
    %c0_i32_0 = arith.constant 0 : i32
    %c0_i32_1 = arith.constant 0 : i32
    return %arg0, %c0_i32, %c0_i32_0 : i32, i32, i32
  }
}

module attributes {stable_mosaic.version = 11 : i64} {
  func.func @body(%arg0: i32, %arg1: memref<1x80x64xbf16, #tpu.memory_space<vmem>>, %arg2: memref<96x32xbf16, #tpu.memory_space<vmem>>, %arg3: memref<1x32xf32, #tpu.memory_space<vmem>>, %arg4: memref<1x32xf32, #tpu.memory_space<vmem>>, %arg5: memref<1x79x32xbf16, #tpu.memory_space<vmem>>) attributes {dimension_semantics = [#tpu.dimension_semantics<parallel>], iteration_bounds = array<i64: 2>, scalar_prefetch = 0 : i64, scratch_operands = 0 : i64, tpu.core_type = #tpu.core_type<tc>, window_params = [{transform_indices = @transform_0, window_bounds = array<i64: 1, 80, 64>}, {pipeline_mode = #tpu.pipeline_mode<synchronous>, transform_indices = @transform_1, window_bounds = array<i64: 96, 32>}, {pipeline_mode = #tpu.pipeline_mode<synchronous>, transform_indices = @transform_2, window_bounds = array<i64: 1, 32>}, {pipeline_mode = #tpu.pipeline_mode<synchronous>, transform_indices = @transform_3, window_bounds = array<i64: 1, 32>}, {transform_indices = @transform_4, window_bounds = array<i64: 1, 79, 32>}]} {
    %c0 = arith.constant 0 : index
    %c0_0 = arith.constant 0 : index
    %c0_1 = arith.constant 0 : index
    %0 = vector.load %arg1[%c0, %c0_0, %c0_1] : memref<1x80x64xbf16, #tpu.memory_space<vmem>>, vector<1x80x64xbf16>
    %1 = vector.shape_cast %0 : vector<1x80x64xbf16> to vector<80x64xbf16>
    %2 = vector.extract_strided_slice %1 {offsets = [0, 0], sizes = [79, 64], strides = [1, 1]} : vector<80x64xbf16> to vector<79x64xbf16>
    %3 = vector.extract_strided_slice %1 {offsets = [1, 0], sizes = [79, 32], strides = [1, 1]} : vector<80x64xbf16> to vector<79x32xbf16>
    %4 = tpu.concatenate %2, %3 in 1 : vector<79x64xbf16>, vector<79x32xbf16> -> vector<79x96xbf16>
    %c0_2 = arith.constant 0 : index
    %c0_3 = arith.constant 0 : index
    %5 = vector.load %arg2[%c0_2, %c0_3] : memref<96x32xbf16, #tpu.memory_space<vmem>>, vector<96x32xbf16>
    %cst = arith.constant dense<0.000000e+00> : vector<79x32xf32>
    %6 = tpu.matmul %4, %5, %cst {dimension_numbers = #tpu.dot_dimension_numbers<[1], [0], [0], [1], [0, 0, 1, 1], [], []>} : vector<79x96xbf16>, vector<96x32xbf16>, vector<79x32xf32> -> vector<79x32xf32>
    %c0_4 = arith.constant 0 : index
    %c0_5 = arith.constant 0 : index
    %7 = vector.load %arg3[%c0_4, %c0_5] : memref<1x32xf32, #tpu.memory_space<vmem>>, vector<1x32xf32>
    %c0_6 = arith.constant 0 : index
    %c0_7 = arith.constant 0 : index
    %8 = vector.load %arg4[%c0_6, %c0_7] : memref<1x32xf32, #tpu.memory_space<vmem>>, vector<1x32xf32>
    %cst_8 = arith.constant dense<0.000000e+00> : vector<79xf32>
    %9 = vector.multi_reduction <add>, %6, %cst_8 [1] : vector<79x32xf32> to vector<79xf32>
    %10 = vector.shape_cast %9 : vector<79xf32> to vector<79x1xf32>
    %cst_9 = arith.constant 3.200000e+01 : f32
    %11 = vector.broadcast %cst_9 : f32 to vector<79x1xf32>
    %12 = arith.divf %10, %11 : vector<79x1xf32>
    %13 = vector.broadcast %12 : vector<79x1xf32> to vector<79x32xf32>
    %14 = arith.subf %6, %13 : vector<79x32xf32>
    %15 = arith.mulf %14, %14 : vector<79x32xf32>
    %cst_10 = arith.constant dense<0.000000e+00> : vector<79xf32>
    %16 = vector.multi_reduction <add>, %15, %cst_10 [1] : vector<79x32xf32> to vector<79xf32>
    %17 = vector.shape_cast %16 : vector<79xf32> to vector<79x1xf32>
    %cst_11 = arith.constant 3.200000e+01 : f32
    %18 = vector.broadcast %cst_11 : f32 to vector<79x1xf32>
    %19 = arith.divf %17, %18 : vector<79x1xf32>
    %20 = vector.broadcast %12 : vector<79x1xf32> to vector<79x32xf32>
    %21 = arith.subf %6, %20 : vector<79x32xf32>
    %cst_12 = arith.constant 9.99999974E-6 : f32
    %22 = vector.broadcast %cst_12 : f32 to vector<79x1xf32>
    %23 = arith.addf %19, %22 : vector<79x1xf32>
    %24 = math.rsqrt %23 : vector<79x1xf32>
    %25 = vector.broadcast %24 : vector<79x1xf32> to vector<79x32xf32>
    %26 = arith.mulf %21, %25 : vector<79x32xf32>
    %27 = vector.broadcast %7 : vector<1x32xf32> to vector<79x32xf32>
    %28 = arith.mulf %26, %27 : vector<79x32xf32>
    %29 = vector.broadcast %8 : vector<1x32xf32> to vector<79x32xf32>
    %30 = arith.addf %28, %29 : vector<79x32xf32>
    %cst_13 = arith.constant 5.000000e-01 : f32
    %31 = vector.broadcast %cst_13 : f32 to vector<79x32xf32>
    %32 = arith.mulf %31, %30 : vector<79x32xf32>
    %cst_14 = arith.constant 4.471500e-02 : f32
    %33 = vector.broadcast %cst_14 : f32 to vector<79x32xf32>
    %34 = arith.mulf %33, %30 : vector<79x32xf32>
    %35 = arith.mulf %34, %30 : vector<79x32xf32>
    %36 = arith.mulf %35, %30 : vector<79x32xf32>
    %37 = arith.addf %30, %36 : vector<79x32xf32>
    %cst_15 = arith.constant 0.797884583 : f32
    %38 = vector.broadcast %cst_15 : f32 to vector<79x32xf32>
    %39 = arith.mulf %38, %37 : vector<79x32xf32>
    %40 = math.tanh %39 : vector<79x32xf32>
    %cst_16 = arith.constant 1.000000e+00 : f32
    %41 = vector.broadcast %cst_16 : f32 to vector<79x32xf32>
    %42 = arith.addf %41, %40 : vector<79x32xf32>
    %43 = arith.mulf %32, %42 : vector<79x32xf32>
    %44 = arith.truncf %43 : vector<79x32xf32> to vector<79x32xbf16>
    %c0_17 = arith.constant 0 : index
    %c0_18 = arith.constant 0 : index
    %c0_19 = arith.constant 0 : index
    %45 = vector.load %arg5[%c0_17, %c0_18, %c0_19] : memref<1x79x32xbf16, #tpu.memory_space<vmem>>, vector<1x79x32xbf16>
    %46 = vector.shape_cast %45 : vector<1x79x32xbf16> to vector<79x32xbf16>
    %47 = vector.shape_cast %44 : vector<79x32xbf16> to vector<1x79x32xbf16>
    tpu.vector_store %arg5[%c0_17, %c0_18, %c0_19], %47 {strides = array<i32>} : memref<1x79x32xbf16, #tpu.memory_space<vmem>>, vector<1x79x32xbf16>,
    return
  }
  func.func @transform_0(%arg0: i32) -> (i32, i32, i32) {
    %c0_i32 = arith.constant 0 : i32
    %c0_i32_0 = arith.constant 0 : i32
    %c0_i32_1 = arith.constant 0 : i32
    return %arg0, %c0_i32, %c0_i32_0 : i32, i32, i32
  }
  func.func @transform_1(%arg0: i32) -> (i32, i32) {
    %c0_i32 = arith.constant 0 : i32
    %c0_i32_0 = arith.constant 0 : i32
    %c0_i32_1 = arith.constant 0 : i32
    return %c0_i32, %c0_i32_0 : i32, i32
  }
  func.func @transform_2(%arg0: i32) -> (i32, i32) {
    %c0_i32 = arith.constant 0 : i32
    %c0_i32_0 = arith.constant 0 : i32
    %c0_i32_1 = arith.constant 0 : i32
    return %c0_i32, %c0_i32_0 : i32, i32
  }
  func.func @transform_3(%arg0: i32) -> (i32, i32) {
    %c0_i32 = arith.constant 0 : i32
    %c0_i32_0 = arith.constant 0 : i32
    %c0_i32_1 = arith.constant 0 : i32
    return %c0_i32, %c0_i32_0 : i32, i32
  }
  func.func @transform_4(%arg0: i32) -> (i32, i32, i32) {
    %c0_i32 = arith.constant 0 : i32
    %c0_i32_0 = arith.constant 0 : i32
    %c0_i32_1 = arith.constant 0 : i32
    return %arg0, %c0_i32, %c0_i32_0 : i32, i32, i32
  }
}

module attributes {stable_mosaic.version = 11 : i64} {
  func.func @body(%arg0: i32, %arg1: memref<1x39x64xbf16, #tpu.memory_space<vmem>>, %arg2: memref<64x32xbf16, #tpu.memory_space<vmem>>, %arg3: memref<1x32xf32, #tpu.memory_space<vmem>>, %arg4: memref<1x32xf32, #tpu.memory_space<vmem>>, %arg5: memref<1x39x32xbf16, #tpu.memory_space<vmem>>) attributes {dimension_semantics = [#tpu.dimension_semantics<parallel>], iteration_bounds = array<i64: 2>, scalar_prefetch = 0 : i64, scratch_operands = 0 : i64, tpu.core_type = #tpu.core_type<tc>, window_params = [{transform_indices = @transform_0, window_bounds = array<i64: 1, 39, 64>}, {pipeline_mode = #tpu.pipeline_mode<synchronous>, transform_indices = @transform_1, window_bounds = array<i64: 64, 32>}, {pipeline_mode = #tpu.pipeline_mode<synchronous>, transform_indices = @transform_2, window_bounds = array<i64: 1, 32>}, {pipeline_mode = #tpu.pipeline_mode<synchronous>, transform_indices = @transform_3, window_bounds = array<i64: 1, 32>}, {transform_indices = @transform_4, window_bounds = array<i64: 1, 39, 32>}]} {
    %c0 = arith.constant 0 : index
    %c0_0 = arith.constant 0 : index
    %c0_1 = arith.constant 0 : index
    %0 = vector.load %arg1[%c0, %c0_0, %c0_1] : memref<1x39x64xbf16, #tpu.memory_space<vmem>>, vector<1x39x64xbf16>
    %1 = vector.shape_cast %0 : vector<1x39x64xbf16> to vector<39x64xbf16>
    %c0_2 = arith.constant 0 : index
    %c0_3 = arith.constant 0 : index
    %2 = vector.load %arg2[%c0_2, %c0_3] : memref<64x32xbf16, #tpu.memory_space<vmem>>, vector<64x32xbf16>
    %cst = arith.constant dense<0.000000e+00> : vector<39x32xf32>
    %3 = tpu.matmul %1, %2, %cst {dimension_numbers = #tpu.dot_dimension_numbers<[1], [0], [0], [1], [0, 0, 1, 1], [], []>} : vector<39x64xbf16>, vector<64x32xbf16>, vector<39x32xf32> -> vector<39x32xf32>
    %c0_4 = arith.constant 0 : index
    %c0_5 = arith.constant 0 : index
    %4 = vector.load %arg3[%c0_4, %c0_5] : memref<1x32xf32, #tpu.memory_space<vmem>>, vector<1x32xf32>
    %c0_6 = arith.constant 0 : index
    %c0_7 = arith.constant 0 : index
    %5 = vector.load %arg4[%c0_6, %c0_7] : memref<1x32xf32, #tpu.memory_space<vmem>>, vector<1x32xf32>
    %cst_8 = arith.constant dense<0.000000e+00> : vector<39xf32>
    %6 = vector.multi_reduction <add>, %3, %cst_8 [1] : vector<39x32xf32> to vector<39xf32>
    %7 = vector.shape_cast %6 : vector<39xf32> to vector<39x1xf32>
    %cst_9 = arith.constant 3.200000e+01 : f32
    %8 = vector.broadcast %cst_9 : f32 to vector<39x1xf32>
    %9 = arith.divf %7, %8 : vector<39x1xf32>
    %10 = vector.broadcast %9 : vector<39x1xf32> to vector<39x32xf32>
    %11 = arith.subf %3, %10 : vector<39x32xf32>
    %12 = arith.mulf %11, %11 : vector<39x32xf32>
    %cst_10 = arith.constant dense<0.000000e+00> : vector<39xf32>
    %13 = vector.multi_reduction <add>, %12, %cst_10 [1] : vector<39x32xf32> to vector<39xf32>
    %14 = vector.shape_cast %13 : vector<39xf32> to vector<39x1xf32>
    %cst_11 = arith.constant 3.200000e+01 : f32
    %15 = vector.broadcast %cst_11 : f32 to vector<39x1xf32>
    %16 = arith.divf %14, %15 : vector<39x1xf32>
    %17 = vector.broadcast %9 : vector<39x1xf32> to vector<39x32xf32>
    %18 = arith.subf %3, %17 : vector<39x32xf32>
    %cst_12 = arith.constant 9.99999974E-6 : f32
    %19 = vector.broadcast %cst_12 : f32 to vector<39x1xf32>
    %20 = arith.addf %16, %19 : vector<39x1xf32>
    %21 = math.rsqrt %20 : vector<39x1xf32>
    %22 = vector.broadcast %21 : vector<39x1xf32> to vector<39x32xf32>
    %23 = arith.mulf %18, %22 : vector<39x32xf32>
    %24 = vector.broadcast %4 : vector<1x32xf32> to vector<39x32xf32>
    %25 = arith.mulf %23, %24 : vector<39x32xf32>
    %26 = vector.broadcast %5 : vector<1x32xf32> to vector<39x32xf32>
    %27 = arith.addf %25, %26 : vector<39x32xf32>
    %cst_13 = arith.constant 5.000000e-01 : f32
    %28 = vector.broadcast %cst_13 : f32 to vector<39x32xf32>
    %29 = arith.mulf %28, %27 : vector<39x32xf32>
    %cst_14 = arith.constant 4.471500e-02 : f32
    %30 = vector.broadcast %cst_14 : f32 to vector<39x32xf32>
    %31 = arith.mulf %30, %27 : vector<39x32xf32>
    %32 = arith.mulf %31, %27 : vector<39x32xf32>
    %33 = arith.mulf %32, %27 : vector<39x32xf32>
    %34 = arith.addf %27, %33 : vector<39x32xf32>
    %cst_15 = arith.constant 0.797884583 : f32
    %35 = vector.broadcast %cst_15 : f32 to vector<39x32xf32>
    %36 = arith.mulf %35, %34 : vector<39x32xf32>
    %37 = math.tanh %36 : vector<39x32xf32>
    %cst_16 = arith.constant 1.000000e+00 : f32
    %38 = vector.broadcast %cst_16 : f32 to vector<39x32xf32>
    %39 = arith.addf %38, %37 : vector<39x32xf32>
    %40 = arith.mulf %29, %39 : vector<39x32xf32>
    %41 = arith.truncf %40 : vector<39x32xf32> to vector<39x32xbf16>
    %c0_17 = arith.constant 0 : index
    %c0_18 = arith.constant 0 : index
    %c0_19 = arith.constant 0 : index
    %42 = vector.load %arg5[%c0_17, %c0_18, %c0_19] : memref<1x39x32xbf16, #tpu.memory_space<vmem>>, vector<1x39x32xbf16>
    %43 = vector.shape_cast %42 : vector<1x39x32xbf16> to vector<39x32xbf16>
    %44 = vector.shape_cast %41 : vector<39x32xbf16> to vector<1x39x32xbf16>
    tpu.vector_store %arg5[%c0_17, %c0_18, %c0_19], %44 {strides = array<i32>} : memref<1x39x32xbf16, #tpu.memory_space<vmem>>, vector<1x39x32xbf16>,
    return
  }
  func.func @transform_0(%arg0: i32) -> (i32, i32, i32) {
    %c0_i32 = arith.constant 0 : i32
    %c0_i32_0 = arith.constant 0 : i32
    %c0_i32_1 = arith.constant 0 : i32
    return %arg0, %c0_i32, %c0_i32_0 : i32, i32, i32
  }
  func.func @transform_1(%arg0: i32) -> (i32, i32) {
    %c0_i32 = arith.constant 0 : i32
    %c0_i32_0 = arith.constant 0 : i32
    %c0_i32_1 = arith.constant 0 : i32
    return %c0_i32, %c0_i32_0 : i32, i32
  }
  func.func @transform_2(%arg0: i32) -> (i32, i32) {
    %c0_i32 = arith.constant 0 : i32
    %c0_i32_0 = arith.constant 0 : i32
    %c0_i32_1 = arith.constant 0 : i32
    return %c0_i32, %c0_i32_0 : i32, i32
  }
  func.func @transform_3(%arg0: i32) -> (i32, i32) {
    %c0_i32 = arith.constant 0 : i32
    %c0_i32_0 = arith.constant 0 : i32
    %c0_i32_1 = arith.constant 0 : i32
    return %c0_i32, %c0_i32_0 : i32, i32
  }
  func.func @transform_4(%arg0: i32) -> (i32, i32, i32) {
    %c0_i32 = arith.constant 0 : i32
    %c0_i32_0 = arith.constant 0 : i32
    %c0_i32_1 = arith.constant 0 : i32
    return %arg0, %c0_i32, %c0_i32_0 : i32, i32, i32
  }
}

module attributes {stable_mosaic.version = 11 : i64} {
  func.func @body(%arg0: i32, %arg1: memref<1x39x32xbf16, #tpu.memory_space<vmem>>, %arg2: memref<1x32xf32, #tpu.memory_space<vmem>>, %arg3: memref<1x32xf32, #tpu.memory_space<vmem>>, %arg4: memref<32x32xbf16, #tpu.memory_space<vmem>>, %arg5: memref<1x32xf32, #tpu.memory_space<vmem>>, %arg6: memref<4x72x8xbf16, #tpu.memory_space<vmem>>, %arg7: memref<1x32xf32, #tpu.memory_space<vmem>>, %arg8: memref<1x1x32xf32, #tpu.memory_space<vmem>>, %arg9: memref<1x40x32xf32, #tpu.memory_space<vmem>>) attributes {dimension_semantics = [#tpu.dimension_semantics<parallel>], iteration_bounds = array<i64: 2>, scalar_prefetch = 0 : i64, scratch_operands = 0 : i64, tpu.core_type = #tpu.core_type<tc>, window_params = [{transform_indices = @transform_0, window_bounds = array<i64: 1, 39, 32>}, {pipeline_mode = #tpu.pipeline_mode<synchronous>, transform_indices = @transform_1, window_bounds = array<i64: 1, 32>}, {pipeline_mode = #tpu.pipeline_mode<synchronous>, transform_indices = @transform_2, window_bounds = array<i64: 1, 32>}, {pipeline_mode = #tpu.pipeline_mode<synchronous>, transform_indices = @transform_3, window_bounds = array<i64: 32, 32>}, {pipeline_mode = #tpu.pipeline_mode<synchronous>, transform_indices = @transform_4, window_bounds = array<i64: 1, 32>}, {pipeline_mode = #tpu.pipeline_mode<synchronous>, transform_indices = @transform_5, window_bounds = array<i64: 4, 72, 8>}, {pipeline_mode = #tpu.pipeline_mode<synchronous>, transform_indices = @transform_6, window_bounds = array<i64: 1, 32>}, {pipeline_mode = #tpu.pipeline_mode<synchronous>, transform_indices = @transform_7, window_bounds = array<i64: 1, 1, 32>}, {transform_indices = @transform_8, window_bounds = array<i64: 1, 40, 32>}]} {
    %c0 = arith.constant 0 : index
    %c0_0 = arith.constant 0 : index
    %c0_1 = arith.constant 0 : index
    %0 = vector.load %arg1[%c0, %c0_0, %c0_1] : memref<1x39x32xbf16, #tpu.memory_space<vmem>>, vector<1x39x32xbf16>
    %1 = vector.shape_cast %0 : vector<1x39x32xbf16> to vector<39x32xbf16>
    %2 = arith.extf %1 : vector<39x32xbf16> to vector<39x32xf32>
    %c0_2 = arith.constant 0 : index
    %c0_3 = arith.constant 0 : index
    %3 = vector.load %arg2[%c0_2, %c0_3] : memref<1x32xf32, #tpu.memory_space<vmem>>, vector<1x32xf32>
    %c0_4 = arith.constant 0 : index
    %c0_5 = arith.constant 0 : index
    %4 = vector.load %arg3[%c0_4, %c0_5] : memref<1x32xf32, #tpu.memory_space<vmem>>, vector<1x32xf32>
    %cst = arith.constant dense<0.000000e+00> : vector<39xf32>
    %5 = vector.multi_reduction <add>, %2, %cst [1] : vector<39x32xf32> to vector<39xf32>
    %6 = vector.shape_cast %5 : vector<39xf32> to vector<39x1xf32>
    %cst_6 = arith.constant 3.200000e+01 : f32
    %7 = vector.broadcast %cst_6 : f32 to vector<39x1xf32>
    %8 = arith.divf %6, %7 : vector<39x1xf32>
    %9 = vector.broadcast %8 : vector<39x1xf32> to vector<39x32xf32>
    %10 = arith.subf %2, %9 : vector<39x32xf32>
    %11 = arith.mulf %10, %10 : vector<39x32xf32>
    %cst_7 = arith.constant dense<0.000000e+00> : vector<39xf32>
    %12 = vector.multi_reduction <add>, %11, %cst_7 [1] : vector<39x32xf32> to vector<39xf32>
    %13 = vector.shape_cast %12 : vector<39xf32> to vector<39x1xf32>
    %cst_8 = arith.constant 3.200000e+01 : f32
    %14 = vector.broadcast %cst_8 : f32 to vector<39x1xf32>
    %15 = arith.divf %13, %14 : vector<39x1xf32>
    %16 = vector.broadcast %8 : vector<39x1xf32> to vector<39x32xf32>
    %17 = arith.subf %2, %16 : vector<39x32xf32>
    %cst_9 = arith.constant 9.99999974E-6 : f32
    %18 = vector.broadcast %cst_9 : f32 to vector<39x1xf32>
    %19 = arith.addf %15, %18 : vector<39x1xf32>
    %20 = math.rsqrt %19 : vector<39x1xf32>
    %21 = vector.broadcast %20 : vector<39x1xf32> to vector<39x32xf32>
    %22 = arith.mulf %17, %21 : vector<39x32xf32>
    %23 = vector.broadcast %3 : vector<1x32xf32> to vector<39x32xf32>
    %24 = arith.mulf %22, %23 : vector<39x32xf32>
    %25 = vector.broadcast %4 : vector<1x32xf32> to vector<39x32xf32>
    %26 = arith.addf %24, %25 : vector<39x32xf32>
    %27 = arith.truncf %26 : vector<39x32xf32> to vector<39x32xbf16>
    %c0_10 = arith.constant 0 : index
    %c0_11 = arith.constant 0 : index
    %28 = vector.load %arg4[%c0_10, %c0_11] : memref<32x32xbf16, #tpu.memory_space<vmem>>, vector<32x32xbf16>
    %cst_12 = arith.constant dense<0.000000e+00> : vector<39x32xf32>
    %29 = tpu.matmul %27, %28, %cst_12 {dimension_numbers = #tpu.dot_dimension_numbers<[1], [0], [0], [1], [0, 0, 1, 1], [], []>} : vector<39x32xbf16>, vector<32x32xbf16>, vector<39x32xf32> -> vector<39x32xf32>
    %c0_13 = arith.constant 0 : index
    %c0_14 = arith.constant 0 : index
    %30 = vector.load %arg5[%c0_13, %c0_14] : memref<1x32xf32, #tpu.memory_space<vmem>>, vector<1x32xf32>
    %31 = vector.broadcast %30 : vector<1x32xf32> to vector<39x32xf32>
    %32 = arith.addf %29, %31 : vector<39x32xf32>
    %cst_15 = arith.constant 0.000000e+00 : f32
    %33 = vector.broadcast %cst_15 : f32 to vector<4x32xf32>
    %34 = tpu.concatenate %33, %32, %33 in 0 : vector<4x32xf32>, vector<39x32xf32>, vector<4x32xf32> -> vector<47x32xf32>
    %35 = arith.truncf %34 : vector<47x32xf32> to vector<47x32xbf16>
    %c0_16 = arith.constant 0 : index
    %c0_17 = arith.constant 0 : index
    %c0_18 = arith.constant 0 : index
    %36 = vector.load %arg6[%c0_16, %c0_17, %c0_18] : memref<4x72x8xbf16, #tpu.memory_space<vmem>>, vector<4x72x8xbf16>
    %37 = vector.extract_strided_slice %35 {offsets = [0, 0], sizes = [39, 8], strides = [1, 1]} : vector<47x32xbf16> to vector<39x8xbf16>
    %38 = vector.extract_strided_slice %35 {offsets = [1, 0], sizes = [39, 8], strides = [1, 1]} : vector<47x32xbf16> to vector<39x8xbf16>
    %39 = vector.extract_strided_slice %35 {offsets = [2, 0], sizes = [39, 8], strides = [1, 1]} : vector<47x32xbf16> to vector<39x8xbf16>
    %40 = vector.extract_strided_slice %35 {offsets = [3, 0], sizes = [39, 8], strides = [1, 1]} : vector<47x32xbf16> to vector<39x8xbf16>
    %41 = vector.extract_strided_slice %35 {offsets = [4, 0], sizes = [39, 8], strides = [1, 1]} : vector<47x32xbf16> to vector<39x8xbf16>
    %42 = vector.extract_strided_slice %35 {offsets = [5, 0], sizes = [39, 8], strides = [1, 1]} : vector<47x32xbf16> to vector<39x8xbf16>
    %43 = vector.extract_strided_slice %35 {offsets = [6, 0], sizes = [39, 8], strides = [1, 1]} : vector<47x32xbf16> to vector<39x8xbf16>
    %44 = vector.extract_strided_slice %35 {offsets = [7, 0], sizes = [39, 8], strides = [1, 1]} : vector<47x32xbf16> to vector<39x8xbf16>
    %45 = vector.extract_strided_slice %35 {offsets = [8, 0], sizes = [39, 8], strides = [1, 1]} : vector<47x32xbf16> to vector<39x8xbf16>
    %46 = tpu.concatenate %37, %38, %39, %40, %41, %42, %43, %44, %45 in 1 : vector<39x8xbf16>, vector<39x8xbf16>, vector<39x8xbf16>, vector<39x8xbf16>, vector<39x8xbf16>, vector<39x8xbf16>, vector<39x8xbf16>, vector<39x8xbf16>, vector<39x8xbf16> -> vector<39x72xbf16>
    %47 = vector.extract_strided_slice %36 {offsets = [0, 0, 0], sizes = [1, 72, 8], strides = [1, 1, 1]} : vector<4x72x8xbf16> to vector<1x72x8xbf16>
    %48 = vector.shape_cast %47 : vector<1x72x8xbf16> to vector<72x8xbf16>
    %cst_19 = arith.constant dense<0.000000e+00> : vector<39x8xf32>
    %49 = tpu.matmul %46, %48, %cst_19 {dimension_numbers = #tpu.dot_dimension_numbers<[1], [0], [0], [1], [0, 0, 1, 1], [], []>} : vector<39x72xbf16>, vector<72x8xbf16>, vector<39x8xf32> -> vector<39x8xf32>
    %50 = vector.extract_strided_slice %35 {offsets = [0, 8], sizes = [39, 8], strides = [1, 1]} : vector<47x32xbf16> to vector<39x8xbf16>
    %51 = vector.extract_strided_slice %35 {offsets = [1, 8], sizes = [39, 8], strides = [1, 1]} : vector<47x32xbf16> to vector<39x8xbf16>
    %52 = vector.extract_strided_slice %35 {offsets = [2, 8], sizes = [39, 8], strides = [1, 1]} : vector<47x32xbf16> to vector<39x8xbf16>
    %53 = vector.extract_strided_slice %35 {offsets = [3, 8], sizes = [39, 8], strides = [1, 1]} : vector<47x32xbf16> to vector<39x8xbf16>
    %54 = vector.extract_strided_slice %35 {offsets = [4, 8], sizes = [39, 8], strides = [1, 1]} : vector<47x32xbf16> to vector<39x8xbf16>
    %55 = vector.extract_strided_slice %35 {offsets = [5, 8], sizes = [39, 8], strides = [1, 1]} : vector<47x32xbf16> to vector<39x8xbf16>
    %56 = vector.extract_strided_slice %35 {offsets = [6, 8], sizes = [39, 8], strides = [1, 1]} : vector<47x32xbf16> to vector<39x8xbf16>
    %57 = vector.extract_strided_slice %35 {offsets = [7, 8], sizes = [39, 8], strides = [1, 1]} : vector<47x32xbf16> to vector<39x8xbf16>
    %58 = vector.extract_strided_slice %35 {offsets = [8, 8], sizes = [39, 8], strides = [1, 1]} : vector<47x32xbf16> to vector<39x8xbf16>
    %59 = tpu.concatenate %50, %51, %52, %53, %54, %55, %56, %57, %58 in 1 : vector<39x8xbf16>, vector<39x8xbf16>, vector<39x8xbf16>, vector<39x8xbf16>, vector<39x8xbf16>, vector<39x8xbf16>, vector<39x8xbf16>, vector<39x8xbf16>, vector<39x8xbf16> -> vector<39x72xbf16>
    %60 = vector.extract_strided_slice %36 {offsets = [1, 0, 0], sizes = [1, 72, 8], strides = [1, 1, 1]} : vector<4x72x8xbf16> to vector<1x72x8xbf16>
    %61 = vector.shape_cast %60 : vector<1x72x8xbf16> to vector<72x8xbf16>
    %cst_20 = arith.constant dense<0.000000e+00> : vector<39x8xf32>
    %62 = tpu.matmul %59, %61, %cst_20 {dimension_numbers = #tpu.dot_dimension_numbers<[1], [0], [0], [1], [0, 0, 1, 1], [], []>} : vector<39x72xbf16>, vector<72x8xbf16>, vector<39x8xf32> -> vector<39x8xf32>
    %63 = vector.extract_strided_slice %35 {offsets = [0, 16], sizes = [39, 8], strides = [1, 1]} : vector<47x32xbf16> to vector<39x8xbf16>
    %64 = vector.extract_strided_slice %35 {offsets = [1, 16], sizes = [39, 8], strides = [1, 1]} : vector<47x32xbf16> to vector<39x8xbf16>
    %65 = vector.extract_strided_slice %35 {offsets = [2, 16], sizes = [39, 8], strides = [1, 1]} : vector<47x32xbf16> to vector<39x8xbf16>
    %66 = vector.extract_strided_slice %35 {offsets = [3, 16], sizes = [39, 8], strides = [1, 1]} : vector<47x32xbf16> to vector<39x8xbf16>
    %67 = vector.extract_strided_slice %35 {offsets = [4, 16], sizes = [39, 8], strides = [1, 1]} : vector<47x32xbf16> to vector<39x8xbf16>
    %68 = vector.extract_strided_slice %35 {offsets = [5, 16], sizes = [39, 8], strides = [1, 1]} : vector<47x32xbf16> to vector<39x8xbf16>
    %69 = vector.extract_strided_slice %35 {offsets = [6, 16], sizes = [39, 8], strides = [1, 1]} : vector<47x32xbf16> to vector<39x8xbf16>
    %70 = vector.extract_strided_slice %35 {offsets = [7, 16], sizes = [39, 8], strides = [1, 1]} : vector<47x32xbf16> to vector<39x8xbf16>
    %71 = vector.extract_strided_slice %35 {offsets = [8, 16], sizes = [39, 8], strides = [1, 1]} : vector<47x32xbf16> to vector<39x8xbf16>
    %72 = tpu.concatenate %63, %64, %65, %66, %67, %68, %69, %70, %71 in 1 : vector<39x8xbf16>, vector<39x8xbf16>, vector<39x8xbf16>, vector<39x8xbf16>, vector<39x8xbf16>, vector<39x8xbf16>, vector<39x8xbf16>, vector<39x8xbf16>, vector<39x8xbf16> -> vector<39x72xbf16>
    %73 = vector.extract_strided_slice %36 {offsets = [2, 0, 0], sizes = [1, 72, 8], strides = [1, 1, 1]} : vector<4x72x8xbf16> to vector<1x72x8xbf16>
    %74 = vector.shape_cast %73 : vector<1x72x8xbf16> to vector<72x8xbf16>
    %cst_21 = arith.constant dense<0.000000e+00> : vector<39x8xf32>
    %75 = tpu.matmul %72, %74, %cst_21 {dimension_numbers = #tpu.dot_dimension_numbers<[1], [0], [0], [1], [0, 0, 1, 1], [], []>} : vector<39x72xbf16>, vector<72x8xbf16>, vector<39x8xf32> -> vector<39x8xf32>
    %76 = vector.extract_strided_slice %35 {offsets = [0, 24], sizes = [39, 8], strides = [1, 1]} : vector<47x32xbf16> to vector<39x8xbf16>
    %77 = vector.extract_strided_slice %35 {offsets = [1, 24], sizes = [39, 8], strides = [1, 1]} : vector<47x32xbf16> to vector<39x8xbf16>
    %78 = vector.extract_strided_slice %35 {offsets = [2, 24], sizes = [39, 8], strides = [1, 1]} : vector<47x32xbf16> to vector<39x8xbf16>
    %79 = vector.extract_strided_slice %35 {offsets = [3, 24], sizes = [39, 8], strides = [1, 1]} : vector<47x32xbf16> to vector<39x8xbf16>
    %80 = vector.extract_strided_slice %35 {offsets = [4, 24], sizes = [39, 8], strides = [1, 1]} : vector<47x32xbf16> to vector<39x8xbf16>
    %81 = vector.extract_strided_slice %35 {offsets = [5, 24], sizes = [39, 8], strides = [1, 1]} : vector<47x32xbf16> to vector<39x8xbf16>
    %82 = vector.extract_strided_slice %35 {offsets = [6, 24], sizes = [39, 8], strides = [1, 1]} : vector<47x32xbf16> to vector<39x8xbf16>
    %83 = vector.extract_strided_slice %35 {offsets = [7, 24], sizes = [39, 8], strides = [1, 1]} : vector<47x32xbf16> to vector<39x8xbf16>
    %84 = vector.extract_strided_slice %35 {offsets = [8, 24], sizes = [39, 8], strides = [1, 1]} : vector<47x32xbf16> to vector<39x8xbf16>
    %85 = tpu.concatenate %76, %77, %78, %79, %80, %81, %82, %83, %84 in 1 : vector<39x8xbf16>, vector<39x8xbf16>, vector<39x8xbf16>, vector<39x8xbf16>, vector<39x8xbf16>, vector<39x8xbf16>, vector<39x8xbf16>, vector<39x8xbf16>, vector<39x8xbf16> -> vector<39x72xbf16>
    %86 = vector.extract_strided_slice %36 {offsets = [3, 0, 0], sizes = [1, 72, 8], strides = [1, 1, 1]} : vector<4x72x8xbf16> to vector<1x72x8xbf16>
    %87 = vector.shape_cast %86 : vector<1x72x8xbf16> to vector<72x8xbf16>
    %cst_22 = arith.constant dense<0.000000e+00> : vector<39x8xf32>
    %88 = tpu.matmul %85, %87, %cst_22 {dimension_numbers = #tpu.dot_dimension_numbers<[1], [0], [0], [1], [0, 0, 1, 1], [], []>} : vector<39x72xbf16>, vector<72x8xbf16>, vector<39x8xf32> -> vector<39x8xf32>
    %89 = tpu.concatenate %49, %62, %75, %88 in 1 : vector<39x8xf32>, vector<39x8xf32>, vector<39x8xf32>, vector<39x8xf32> -> vector<39x32xf32>
    %c0_23 = arith.constant 0 : index
    %c0_24 = arith.constant 0 : index
    %90 = vector.load %arg7[%c0_23, %c0_24] : memref<1x32xf32, #tpu.memory_space<vmem>>, vector<1x32xf32>
    %91 = vector.broadcast %90 : vector<1x32xf32> to vector<39x32xf32>
    %92 = arith.addf %89, %91 : vector<39x32xf32>
    %cst_25 = arith.constant dense<0.000000e+00> : vector<39xf32>
    %93 = vector.multi_reduction <add>, %92, %cst_25 [1] : vector<39x32xf32> to vector<39xf32>
    %94 = vector.shape_cast %93 : vector<39xf32> to vector<39x1xf32>
    %cst_26 = arith.constant 3.200000e+01 : f32
    %95 = vector.broadcast %cst_26 : f32 to vector<39x1xf32>
    %96 = arith.divf %94, %95 : vector<39x1xf32>
    %97 = vector.broadcast %96 : vector<39x1xf32> to vector<39x32xf32>
    %98 = arith.subf %92, %97 : vector<39x32xf32>
    %99 = arith.mulf %98, %98 : vector<39x32xf32>
    %cst_27 = arith.constant dense<0.000000e+00> : vector<39xf32>
    %100 = vector.multi_reduction <add>, %99, %cst_27 [1] : vector<39x32xf32> to vector<39xf32>
    %101 = vector.shape_cast %100 : vector<39xf32> to vector<39x1xf32>
    %cst_28 = arith.constant 3.200000e+01 : f32
    %102 = vector.broadcast %cst_28 : f32 to vector<39x1xf32>
    %103 = arith.divf %101, %102 : vector<39x1xf32>
    %104 = vector.broadcast %96 : vector<39x1xf32> to vector<39x32xf32>
    %105 = arith.subf %92, %104 : vector<39x32xf32>
    %cst_29 = arith.constant 9.99999974E-6 : f32
    %106 = vector.broadcast %cst_29 : f32 to vector<39x1xf32>
    %107 = arith.addf %103, %106 : vector<39x1xf32>
    %108 = math.rsqrt %107 : vector<39x1xf32>
    %109 = vector.broadcast %108 : vector<39x1xf32> to vector<39x32xf32>
    %110 = arith.mulf %105, %109 : vector<39x32xf32>
    %cst_30 = arith.constant 5.000000e-01 : f32
    %111 = vector.broadcast %cst_30 : f32 to vector<39x32xf32>
    %112 = arith.mulf %111, %110 : vector<39x32xf32>
    %cst_31 = arith.constant 4.471500e-02 : f32
    %113 = vector.broadcast %cst_31 : f32 to vector<39x32xf32>
    %114 = arith.mulf %113, %110 : vector<39x32xf32>
    %115 = arith.mulf %114, %110 : vector<39x32xf32>
    %116 = arith.mulf %115, %110 : vector<39x32xf32>
    %117 = arith.addf %110, %116 : vector<39x32xf32>
    %cst_32 = arith.constant 0.797884583 : f32
    %118 = vector.broadcast %cst_32 : f32 to vector<39x32xf32>
    %119 = arith.mulf %118, %117 : vector<39x32xf32>
    %120 = math.tanh %119 : vector<39x32xf32>
    %cst_33 = arith.constant 1.000000e+00 : f32
    %121 = vector.broadcast %cst_33 : f32 to vector<39x32xf32>
    %122 = arith.addf %121, %120 : vector<39x32xf32>
    %123 = arith.mulf %112, %122 : vector<39x32xf32>
    %124 = arith.addf %32, %123 : vector<39x32xf32>
    %c0_34 = arith.constant 0 : index
    %c0_35 = arith.constant 0 : index
    %c0_36 = arith.constant 0 : index
    %125 = vector.load %arg8[%c0_34, %c0_35, %c0_36] : memref<1x1x32xf32, #tpu.memory_space<vmem>>, vector<1x1x32xf32>
    %126 = vector.shape_cast %125 : vector<1x1x32xf32> to vector<1x32xf32>
    %127 = tpu.concatenate %126, %124 in 0 : vector<1x32xf32>, vector<39x32xf32> -> vector<40x32xf32>
    %c0_37 = arith.constant 0 : index
    %c0_38 = arith.constant 0 : index
    %c0_39 = arith.constant 0 : index
    %128 = vector.load %arg9[%c0_37, %c0_38, %c0_39] : memref<1x40x32xf32, #tpu.memory_space<vmem>>, vector<1x40x32xf32>
    %129 = vector.shape_cast %128 : vector<1x40x32xf32> to vector<40x32xf32>
    %130 = vector.shape_cast %127 : vector<40x32xf32> to vector<1x40x32xf32>
    tpu.vector_store %arg9[%c0_37, %c0_38, %c0_39], %130 {strides = array<i32>} : memref<1x40x32xf32, #tpu.memory_space<vmem>>, vector<1x40x32xf32>,
    return
  }
  func.func @transform_0(%arg0: i32) -> (i32, i32, i32) {
    %c0_i32 = arith.constant 0 : i32
    %c0_i32_0 = arith.constant 0 : i32
    %c0_i32_1 = arith.constant 0 : i32
    return %arg0, %c0_i32, %c0_i32_0 : i32, i32, i32
  }
  func.func @transform_1(%arg0: i32) -> (i32, i32) {
    %c0_i32 = arith.constant 0 : i32
    %c0_i32_0 = arith.constant 0 : i32
    %c0_i32_1 = arith.constant 0 : i32
    return %c0_i32, %c0_i32_0 : i32, i32
  }
  func.func @transform_2(%arg0: i32) -> (i32, i32) {
    %c0_i32 = arith.constant 0 : i32
    %c0_i32_0 = arith.constant 0 : i32
    %c0_i32_1 = arith.constant 0 : i32
    return %c0_i32, %c0_i32_0 : i32, i32
  }
  func.func @transform_3(%arg0: i32) -> (i32, i32) {
    %c0_i32 = arith.constant 0 : i32
    %c0_i32_0 = arith.constant 0 : i32
    %c0_i32_1 = arith.constant 0 : i32
    return %c0_i32, %c0_i32_0 : i32, i32
  }
  func.func @transform_4(%arg0: i32) -> (i32, i32) {
    %c0_i32 = arith.constant 0 : i32
    %c0_i32_0 = arith.constant 0 : i32
    %c0_i32_1 = arith.constant 0 : i32
    return %c0_i32, %c0_i32_0 : i32, i32
  }
  func.func @transform_5(%arg0: i32) -> (i32, i32, i32) {
    %c0_i32 = arith.constant 0 : i32
    %c0_i32_0 = arith.constant 0 : i32
    %c0_i32_1 = arith.constant 0 : i32
    %c0_i32_2 = arith.constant 0 : i32
    return %c0_i32, %c0_i32_0, %c0_i32_1 : i32, i32, i32
  }
  func.func @transform_6(%arg0: i32) -> (i32, i32) {
    %c0_i32 = arith.constant 0 : i32
    %c0_i32_0 = arith.constant 0 : i32
    %c0_i32_1 = arith.constant 0 : i32
    return %c0_i32, %c0_i32_0 : i32, i32
  }
  func.func @transform_7(%arg0: i32) -> (i32, i32, i32) {
    %c0_i32 = arith.constant 0 : i32
    %c0_i32_0 = arith.constant 0 : i32
    %c0_i32_1 = arith.constant 0 : i32
    %c0_i32_2 = arith.constant 0 : i32
    return %c0_i32, %c0_i32_0, %c0_i32_1 : i32, i32, i32
  }
  func.func @transform_8(%arg0: i32) -> (i32, i32, i32) {
    %c0_i32 = arith.constant 0 : i32
    %c0_i32_0 = arith.constant 0 : i32
    %c0_i32_1 = arith.constant 0 : i32
    return %arg0, %c0_i32, %c0_i32_0 : i32, i32, i32
  }
}

module attributes {stable_mosaic.version = 11 : i64} {
  func.func @body(%arg0: i32, %arg1: i32, %arg2: memref<1x40x32xf32, #tpu.memory_space<vmem>>, %arg3: memref<1x32x96xbf16, #tpu.memory_space<vmem>>, %arg4: memref<1x32x32xbf16, #tpu.memory_space<vmem>>, %arg5: memref<1x32x128xbf16, #tpu.memory_space<vmem>>, %arg6: memref<1x128x32xbf16, #tpu.memory_space<vmem>>, %arg7: memref<1x9x32xf32, #tpu.memory_space<vmem>>, %arg8: memref<1x1x128xf32, #tpu.memory_space<vmem>>, %arg9: memref<1x32xf32, #tpu.memory_space<vmem>>, %arg10: memref<1x32xf32, #tpu.memory_space<vmem>>, %arg11: memref<1x40x32xf32, #tpu.memory_space<vmem>>) attributes {dimension_semantics = [#tpu.dimension_semantics<parallel>, #tpu.dimension_semantics<arbitrary>], iteration_bounds = array<i64: 2, 3>, scalar_prefetch = 0 : i64, scratch_operands = 0 : i64, tpu.core_type = #tpu.core_type<tc>, window_params = [{transform_indices = @transform_0, window_bounds = array<i64: 1, 40, 32>}, {transform_indices = @transform_1, window_bounds = array<i64: 1, 32, 96>}, {transform_indices = @transform_2, window_bounds = array<i64: 1, 32, 32>}, {transform_indices = @transform_3, window_bounds = array<i64: 1, 32, 128>}, {transform_indices = @transform_4, window_bounds = array<i64: 1, 128, 32>}, {transform_indices = @transform_5, window_bounds = array<i64: 1, 9, 32>}, {transform_indices = @transform_6, window_bounds = array<i64: 1, 1, 128>}, {pipeline_mode = #tpu.pipeline_mode<synchronous>, transform_indices = @transform_7, window_bounds = array<i64: 1, 32>}, {pipeline_mode = #tpu.pipeline_mode<synchronous>, transform_indices = @transform_8, window_bounds = array<i64: 1, 32>}, {transform_indices = @transform_9, window_bounds = array<i64: 1, 40, 32>}]} {
    %c0_i32 = arith.constant 0 : i32
    %0 = arith.cmpi eq, %arg1, %c0_i32 : i32
    %1 = arith.extui %0 : i1 to i32
    %c0_i32_0 = arith.constant 0 : i32
    %2 = arith.cmpi ne, %1, %c0_i32_0 : i32
    scf.if %2 {
      %c0_62 = arith.constant 0 : index
      %c0_63 = arith.constant 0 : index
      %c0_64 = arith.constant 0 : index
      %196 = vector.load %arg2[%c0_62, %c0_63, %c0_64] : memref<1x40x32xf32, #tpu.memory_space<vmem>>, vector<1x40x32xf32>
      %197 = vector.shape_cast %196 : vector<1x40x32xf32> to vector<40x32xf32>
      %c0_65 = arith.constant 0 : index
      %c0_66 = arith.constant 0 : index
      %c0_67 = arith.constant 0 : index
      %198 = vector.load %arg11[%c0_65, %c0_66, %c0_67] : memref<1x40x32xf32, #tpu.memory_space<vmem>>, vector<1x40x32xf32>
      %199 = vector.shape_cast %198 : vector<1x40x32xf32> to vector<40x32xf32>
      %200 = vector.shape_cast %197 : vector<40x32xf32> to vector<1x40x32xf32>
      tpu.vector_store %arg11[%c0_65, %c0_66, %c0_67], %200 {strides = array<i32>} : memref<1x40x32xf32, #tpu.memory_space<vmem>>, vector<1x40x32xf32>,
    } else {
    }
    %c0 = arith.constant 0 : index
    %c0_1 = arith.constant 0 : index
    %c0_2 = arith.constant 0 : index
    %3 = vector.load %arg11[%c0, %c0_1, %c0_2] : memref<1x40x32xf32, #tpu.memory_space<vmem>>, vector<1x40x32xf32>
    %4 = vector.shape_cast %3 : vector<1x40x32xf32> to vector<40x32xf32>
    %c0_3 = arith.constant 0 : index
    %c0_4 = arith.constant 0 : index
    %c0_5 = arith.constant 0 : index
    %5 = vector.load %arg7[%c0_3, %c0_4, %c0_5] : memref<1x9x32xf32, #tpu.memory_space<vmem>>, vector<1x9x32xf32>
    %6 = vector.shape_cast %5 : vector<1x9x32xf32> to vector<9x32xf32>
    %7 = vector.extract_strided_slice %6 {offsets = [0, 0], sizes = [1, 32], strides = [1, 1]} : vector<9x32xf32> to vector<1x32xf32>
    %8 = vector.extract_strided_slice %6 {offsets = [1, 0], sizes = [1, 32], strides = [1, 1]} : vector<9x32xf32> to vector<1x32xf32>
    %9 = vector.extract_strided_slice %6 {offsets = [2, 0], sizes = [1, 32], strides = [1, 1]} : vector<9x32xf32> to vector<1x32xf32>
    %10 = vector.extract_strided_slice %6 {offsets = [3, 0], sizes = [1, 32], strides = [1, 1]} : vector<9x32xf32> to vector<1x32xf32>
    %11 = vector.extract_strided_slice %6 {offsets = [4, 0], sizes = [1, 32], strides = [1, 1]} : vector<9x32xf32> to vector<1x32xf32>
    %12 = vector.extract_strided_slice %6 {offsets = [5, 0], sizes = [1, 32], strides = [1, 1]} : vector<9x32xf32> to vector<1x32xf32>
    %13 = vector.extract_strided_slice %6 {offsets = [6, 0], sizes = [1, 32], strides = [1, 1]} : vector<9x32xf32> to vector<1x32xf32>
    %14 = vector.extract_strided_slice %6 {offsets = [7, 0], sizes = [1, 32], strides = [1, 1]} : vector<9x32xf32> to vector<1x32xf32>
    %15 = vector.extract_strided_slice %6 {offsets = [8, 0], sizes = [1, 32], strides = [1, 1]} : vector<9x32xf32> to vector<1x32xf32>
    %cst = arith.constant dense<0.000000e+00> : vector<40xf32>
    %16 = vector.multi_reduction <add>, %4, %cst [1] : vector<40x32xf32> to vector<40xf32>
    %17 = vector.shape_cast %16 : vector<40xf32> to vector<40x1xf32>
    %cst_6 = arith.constant 3.200000e+01 : f32
    %18 = vector.broadcast %cst_6 : f32 to vector<40x1xf32>
    %19 = arith.divf %17, %18 : vector<40x1xf32>
    %20 = vector.broadcast %19 : vector<40x1xf32> to vector<40x32xf32>
    %21 = arith.subf %4, %20 : vector<40x32xf32>
    %22 = arith.mulf %21, %21 : vector<40x32xf32>
    %cst_7 = arith.constant dense<0.000000e+00> : vector<40xf32>
    %23 = vector.multi_reduction <add>, %22, %cst_7 [1] : vector<40x32xf32> to vector<40xf32>
    %24 = vector.shape_cast %23 : vector<40xf32> to vector<40x1xf32>
    %cst_8 = arith.constant 3.200000e+01 : f32
    %25 = vector.broadcast %cst_8 : f32 to vector<40x1xf32>
    %26 = arith.divf %24, %25 : vector<40x1xf32>
    %27 = vector.broadcast %19 : vector<40x1xf32> to vector<40x32xf32>
    %28 = arith.subf %4, %27 : vector<40x32xf32>
    %cst_9 = arith.constant 9.99999974E-6 : f32
    %29 = vector.broadcast %cst_9 : f32 to vector<40x1xf32>
    %30 = arith.addf %26, %29 : vector<40x1xf32>
    %31 = math.rsqrt %30 : vector<40x1xf32>
    %32 = vector.broadcast %31 : vector<40x1xf32> to vector<40x32xf32>
    %33 = arith.mulf %28, %32 : vector<40x32xf32>
    %34 = vector.broadcast %7 : vector<1x32xf32> to vector<40x32xf32>
    %35 = arith.mulf %33, %34 : vector<40x32xf32>
    %36 = vector.broadcast %8 : vector<1x32xf32> to vector<40x32xf32>
    %37 = arith.addf %35, %36 : vector<40x32xf32>
    %38 = arith.truncf %37 : vector<40x32xf32> to vector<40x32xbf16>
    %c0_10 = arith.constant 0 : index
    %c0_11 = arith.constant 0 : index
    %c0_12 = arith.constant 0 : index
    %39 = vector.load %arg3[%c0_10, %c0_11, %c0_12] : memref<1x32x96xbf16, #tpu.memory_space<vmem>>, vector<1x32x96xbf16>
    %40 = vector.shape_cast %39 : vector<1x32x96xbf16> to vector<32x96xbf16>
    %cst_13 = arith.constant dense<0.000000e+00> : vector<40x96xf32>
    %41 = tpu.matmul %38, %40, %cst_13 {dimension_numbers = #tpu.dot_dimension_numbers<[1], [0], [0], [1], [0, 0, 1, 1], [], []>} : vector<40x32xbf16>, vector<32x96xbf16>, vector<40x96xf32> -> vector<40x96xf32>
    %42 = vector.extract_strided_slice %41 {offsets = [0, 0], sizes = [40, 32], strides = [1, 1]} : vector<40x96xf32> to vector<40x32xf32>
    %43 = vector.broadcast %9 : vector<1x32xf32> to vector<40x32xf32>
    %44 = arith.addf %42, %43 : vector<40x32xf32>
    %45 = vector.extract_strided_slice %41 {offsets = [0, 32], sizes = [40, 32], strides = [1, 1]} : vector<40x96xf32> to vector<40x32xf32>
    %46 = vector.broadcast %10 : vector<1x32xf32> to vector<40x32xf32>
    %47 = arith.addf %45, %46 : vector<40x32xf32>
    %48 = vector.extract_strided_slice %41 {offsets = [0, 64], sizes = [40, 32], strides = [1, 1]} : vector<40x96xf32> to vector<40x32xf32>
    %49 = vector.broadcast %11 : vector<1x32xf32> to vector<40x32xf32>
    %50 = arith.addf %48, %49 : vector<40x32xf32>
    %51 = arith.truncf %50 : vector<40x32xf32> to vector<40x32xbf16>
    %52 = vector.extract_strided_slice %44 {offsets = [0, 0], sizes = [40, 8], strides = [1, 1]} : vector<40x32xf32> to vector<40x8xf32>
    %cst_14 = arith.constant 0.353553385 : f32
    %53 = vector.broadcast %cst_14 : f32 to vector<40x8xf32>
    %54 = arith.mulf %52, %53 : vector<40x8xf32>
    %55 = arith.truncf %54 : vector<40x8xf32> to vector<40x8xbf16>
    %56 = vector.extract_strided_slice %47 {offsets = [0, 0], sizes = [40, 8], strides = [1, 1]} : vector<40x32xf32> to vector<40x8xf32>
    %57 = arith.truncf %56 : vector<40x8xf32> to vector<40x8xbf16>
    %cst_15 = arith.constant dense<0.000000e+00> : vector<40x40xf32>
    %58 = tpu.matmul %55, %57, %cst_15 {dimension_numbers = #tpu.dot_dimension_numbers<[1], [1], [0], [0], [0, 0, 1, 0], [], []>} : vector<40x8xbf16>, vector<40x8xbf16>, vector<40x40xf32> -> vector<40x40xf32>
    %cst_16 = arith.constant dense<0xFF800000> : vector<40xf32>
    %59 = vector.multi_reduction <maximumf>, %58, %cst_16 [1] : vector<40x40xf32> to vector<40xf32>
    %60 = vector.shape_cast %59 : vector<40xf32> to vector<40x1xf32>
    %61 = vector.broadcast %60 : vector<40x1xf32> to vector<40x40xf32>
    %62 = arith.subf %58, %61 : vector<40x40xf32>
    %63 = math.exp %62 : vector<40x40xf32>
    %cst_17 = arith.constant dense<0.000000e+00> : vector<40xf32>
    %64 = vector.multi_reduction <add>, %63, %cst_17 [1] : vector<40x40xf32> to vector<40xf32>
    %65 = vector.shape_cast %64 : vector<40xf32> to vector<40x1xf32>
    %66 = tpu.reciprocal %65 {approx = true} : vector<40x1xf32> -> vector<40x1xf32>
    %67 = vector.broadcast %66 : vector<40x1xf32> to vector<40x40xf32>
    %68 = arith.mulf %63, %67 : vector<40x40xf32>
    %69 = arith.truncf %68 : vector<40x40xf32> to vector<40x40xbf16>
    %70 = vector.extract_strided_slice %51 {offsets = [0, 0], sizes = [40, 8], strides = [1, 1]} : vector<40x32xbf16> to vector<40x8xbf16>
    %cst_18 = arith.constant dense<0.000000e+00> : vector<40x8xf32>
    %71 = tpu.matmul %69, %70, %cst_18 {dimension_numbers = #tpu.dot_dimension_numbers<[1], [0], [0], [1], [0, 0, 1, 1], [], []>} : vector<40x40xbf16>, vector<40x8xbf16>, vector<40x8xf32> -> vector<40x8xf32>
    %72 = vector.extract_strided_slice %44 {offsets = [0, 8], sizes = [40, 8], strides = [1, 1]} : vector<40x32xf32> to vector<40x8xf32>
    %cst_19 = arith.constant 0.353553385 : f32
    %73 = vector.broadcast %cst_19 : f32 to vector<40x8xf32>
    %74 = arith.mulf %72, %73 : vector<40x8xf32>
    %75 = arith.truncf %74 : vector<40x8xf32> to vector<40x8xbf16>
    %76 = vector.extract_strided_slice %47 {offsets = [0, 8], sizes = [40, 8], strides = [1, 1]} : vector<40x32xf32> to vector<40x8xf32>
    %77 = arith.truncf %76 : vector<40x8xf32> to vector<40x8xbf16>
    %cst_20 = arith.constant dense<0.000000e+00> : vector<40x40xf32>
    %78 = tpu.matmul %75, %77, %cst_20 {dimension_numbers = #tpu.dot_dimension_numbers<[1], [1], [0], [0], [0, 0, 1, 0], [], []>} : vector<40x8xbf16>, vector<40x8xbf16>, vector<40x40xf32> -> vector<40x40xf32>
    %cst_21 = arith.constant dense<0xFF800000> : vector<40xf32>
    %79 = vector.multi_reduction <maximumf>, %78, %cst_21 [1] : vector<40x40xf32> to vector<40xf32>
    %80 = vector.shape_cast %79 : vector<40xf32> to vector<40x1xf32>
    %81 = vector.broadcast %80 : vector<40x1xf32> to vector<40x40xf32>
    %82 = arith.subf %78, %81 : vector<40x40xf32>
    %83 = math.exp %82 : vector<40x40xf32>
    %cst_22 = arith.constant dense<0.000000e+00> : vector<40xf32>
    %84 = vector.multi_reduction <add>, %83, %cst_22 [1] : vector<40x40xf32> to vector<40xf32>
    %85 = vector.shape_cast %84 : vector<40xf32> to vector<40x1xf32>
    %86 = tpu.reciprocal %85 {approx = true} : vector<40x1xf32> -> vector<40x1xf32>
    %87 = vector.broadcast %86 : vector<40x1xf32> to vector<40x40xf32>
    %88 = arith.mulf %83, %87 : vector<40x40xf32>
    %89 = arith.truncf %88 : vector<40x40xf32> to vector<40x40xbf16>
    %90 = vector.extract_strided_slice %51 {offsets = [0, 8], sizes = [40, 8], strides = [1, 1]} : vector<40x32xbf16> to vector<40x8xbf16>
    %cst_23 = arith.constant dense<0.000000e+00> : vector<40x8xf32>
    %91 = tpu.matmul %89, %90, %cst_23 {dimension_numbers = #tpu.dot_dimension_numbers<[1], [0], [0], [1], [0, 0, 1, 1], [], []>} : vector<40x40xbf16>, vector<40x8xbf16>, vector<40x8xf32> -> vector<40x8xf32>
    %92 = vector.extract_strided_slice %44 {offsets = [0, 16], sizes = [40, 8], strides = [1, 1]} : vector<40x32xf32> to vector<40x8xf32>
    %cst_24 = arith.constant 0.353553385 : f32
    %93 = vector.broadcast %cst_24 : f32 to vector<40x8xf32>
    %94 = arith.mulf %92, %93 : vector<40x8xf32>
    %95 = arith.truncf %94 : vector<40x8xf32> to vector<40x8xbf16>
    %96 = vector.extract_strided_slice %47 {offsets = [0, 16], sizes = [40, 8], strides = [1, 1]} : vector<40x32xf32> to vector<40x8xf32>
    %97 = arith.truncf %96 : vector<40x8xf32> to vector<40x8xbf16>
    %cst_25 = arith.constant dense<0.000000e+00> : vector<40x40xf32>
    %98 = tpu.matmul %95, %97, %cst_25 {dimension_numbers = #tpu.dot_dimension_numbers<[1], [1], [0], [0], [0, 0, 1, 0], [], []>} : vector<40x8xbf16>, vector<40x8xbf16>, vector<40x40xf32> -> vector<40x40xf32>
    %cst_26 = arith.constant dense<0xFF800000> : vector<40xf32>
    %99 = vector.multi_reduction <maximumf>, %98, %cst_26 [1] : vector<40x40xf32> to vector<40xf32>
    %100 = vector.shape_cast %99 : vector<40xf32> to vector<40x1xf32>
    %101 = vector.broadcast %100 : vector<40x1xf32> to vector<40x40xf32>
    %102 = arith.subf %98, %101 : vector<40x40xf32>
    %103 = math.exp %102 : vector<40x40xf32>
    %cst_27 = arith.constant dense<0.000000e+00> : vector<40xf32>
    %104 = vector.multi_reduction <add>, %103, %cst_27 [1] : vector<40x40xf32> to vector<40xf32>
    %105 = vector.shape_cast %104 : vector<40xf32> to vector<40x1xf32>
    %106 = tpu.reciprocal %105 {approx = true} : vector<40x1xf32> -> vector<40x1xf32>
    %107 = vector.broadcast %106 : vector<40x1xf32> to vector<40x40xf32>
    %108 = arith.mulf %103, %107 : vector<40x40xf32>
    %109 = arith.truncf %108 : vector<40x40xf32> to vector<40x40xbf16>
    %110 = vector.extract_strided_slice %51 {offsets = [0, 16], sizes = [40, 8], strides = [1, 1]} : vector<40x32xbf16> to vector<40x8xbf16>
    %cst_28 = arith.constant dense<0.000000e+00> : vector<40x8xf32>
    %111 = tpu.matmul %109, %110, %cst_28 {dimension_numbers = #tpu.dot_dimension_numbers<[1], [0], [0], [1], [0, 0, 1, 1], [], []>} : vector<40x40xbf16>, vector<40x8xbf16>, vector<40x8xf32> -> vector<40x8xf32>
    %112 = vector.extract_strided_slice %44 {offsets = [0, 24], sizes = [40, 8], strides = [1, 1]} : vector<40x32xf32> to vector<40x8xf32>
    %cst_29 = arith.constant 0.353553385 : f32
    %113 = vector.broadcast %cst_29 : f32 to vector<40x8xf32>
    %114 = arith.mulf %112, %113 : vector<40x8xf32>
    %115 = arith.truncf %114 : vector<40x8xf32> to vector<40x8xbf16>
    %116 = vector.extract_strided_slice %47 {offsets = [0, 24], sizes = [40, 8], strides = [1, 1]} : vector<40x32xf32> to vector<40x8xf32>
    %117 = arith.truncf %116 : vector<40x8xf32> to vector<40x8xbf16>
    %cst_30 = arith.constant dense<0.000000e+00> : vector<40x40xf32>
    %118 = tpu.matmul %115, %117, %cst_30 {dimension_numbers = #tpu.dot_dimension_numbers<[1], [1], [0], [0], [0, 0, 1, 0], [], []>} : vector<40x8xbf16>, vector<40x8xbf16>, vector<40x40xf32> -> vector<40x40xf32>
    %cst_31 = arith.constant dense<0xFF800000> : vector<40xf32>
    %119 = vector.multi_reduction <maximumf>, %118, %cst_31 [1] : vector<40x40xf32> to vector<40xf32>
    %120 = vector.shape_cast %119 : vector<40xf32> to vector<40x1xf32>
    %121 = vector.broadcast %120 : vector<40x1xf32> to vector<40x40xf32>
    %122 = arith.subf %118, %121 : vector<40x40xf32>
    %123 = math.exp %122 : vector<40x40xf32>
    %cst_32 = arith.constant dense<0.000000e+00> : vector<40xf32>
    %124 = vector.multi_reduction <add>, %123, %cst_32 [1] : vector<40x40xf32> to vector<40xf32>
    %125 = vector.shape_cast %124 : vector<40xf32> to vector<40x1xf32>
    %126 = tpu.reciprocal %125 {approx = true} : vector<40x1xf32> -> vector<40x1xf32>
    %127 = vector.broadcast %126 : vector<40x1xf32> to vector<40x40xf32>
    %128 = arith.mulf %123, %127 : vector<40x40xf32>
    %129 = arith.truncf %128 : vector<40x40xf32> to vector<40x40xbf16>
    %130 = vector.extract_strided_slice %51 {offsets = [0, 24], sizes = [40, 8], strides = [1, 1]} : vector<40x32xbf16> to vector<40x8xbf16>
    %cst_33 = arith.constant dense<0.000000e+00> : vector<40x8xf32>
    %131 = tpu.matmul %129, %130, %cst_33 {dimension_numbers = #tpu.dot_dimension_numbers<[1], [0], [0], [1], [0, 0, 1, 1], [], []>} : vector<40x40xbf16>, vector<40x8xbf16>, vector<40x8xf32> -> vector<40x8xf32>
    %132 = tpu.concatenate %71, %91, %111, %131 in 1 : vector<40x8xf32>, vector<40x8xf32>, vector<40x8xf32>, vector<40x8xf32> -> vector<40x32xf32>
    %133 = arith.truncf %132 : vector<40x32xf32> to vector<40x32xbf16>
    %c0_34 = arith.constant 0 : index
    %c0_35 = arith.constant 0 : index
    %c0_36 = arith.constant 0 : index
    %134 = vector.load %arg4[%c0_34, %c0_35, %c0_36] : memref<1x32x32xbf16, #tpu.memory_space<vmem>>, vector<1x32x32xbf16>
    %135 = vector.shape_cast %134 : vector<1x32x32xbf16> to vector<32x32xbf16>
    %cst_37 = arith.constant dense<0.000000e+00> : vector<40x32xf32>
    %136 = tpu.matmul %133, %135, %cst_37 {dimension_numbers = #tpu.dot_dimension_numbers<[1], [0], [0], [1], [0, 0, 1, 1], [], []>} : vector<40x32xbf16>, vector<32x32xbf16>, vector<40x32xf32> -> vector<40x32xf32>
    %137 = arith.addf %4, %136 : vector<40x32xf32>
    %138 = vector.broadcast %12 : vector<1x32xf32> to vector<40x32xf32>
    %139 = arith.addf %137, %138 : vector<40x32xf32>
    %cst_38 = arith.constant dense<0.000000e+00> : vector<40xf32>
    %140 = vector.multi_reduction <add>, %139, %cst_38 [1] : vector<40x32xf32> to vector<40xf32>
    %141 = vector.shape_cast %140 : vector<40xf32> to vector<40x1xf32>
    %cst_39 = arith.constant 3.200000e+01 : f32
    %142 = vector.broadcast %cst_39 : f32 to vector<40x1xf32>
    %143 = arith.divf %141, %142 : vector<40x1xf32>
    %144 = vector.broadcast %143 : vector<40x1xf32> to vector<40x32xf32>
    %145 = arith.subf %139, %144 : vector<40x32xf32>
    %146 = arith.mulf %145, %145 : vector<40x32xf32>
    %cst_40 = arith.constant dense<0.000000e+00> : vector<40xf32>
    %147 = vector.multi_reduction <add>, %146, %cst_40 [1] : vector<40x32xf32> to vector<40xf32>
    %148 = vector.shape_cast %147 : vector<40xf32> to vector<40x1xf32>
    %cst_41 = arith.constant 3.200000e+01 : f32
    %149 = vector.broadcast %cst_41 : f32 to vector<40x1xf32>
    %150 = arith.divf %148, %149 : vector<40x1xf32>
    %151 = vector.broadcast %143 : vector<40x1xf32> to vector<40x32xf32>
    %152 = arith.subf %139, %151 : vector<40x32xf32>
    %cst_42 = arith.constant 9.99999974E-6 : f32
    %153 = vector.broadcast %cst_42 : f32 to vector<40x1xf32>
    %154 = arith.addf %150, %153 : vector<40x1xf32>
    %155 = math.rsqrt %154 : vector<40x1xf32>
    %156 = vector.broadcast %155 : vector<40x1xf32> to vector<40x32xf32>
    %157 = arith.mulf %152, %156 : vector<40x32xf32>
    %158 = vector.broadcast %13 : vector<1x32xf32> to vector<40x32xf32>
    %159 = arith.mulf %157, %158 : vector<40x32xf32>
    %160 = vector.broadcast %14 : vector<1x32xf32> to vector<40x32xf32>
    %161 = arith.addf %159, %160 : vector<40x32xf32>
    %162 = arith.truncf %161 : vector<40x32xf32> to vector<40x32xbf16>
    %c0_43 = arith.constant 0 : index
    %c0_44 = arith.constant 0 : index
    %c0_45 = arith.constant 0 : index
    %163 = vector.load %arg5[%c0_43, %c0_44, %c0_45] : memref<1x32x128xbf16, #tpu.memory_space<vmem>>, vector<1x32x128xbf16>
    %164 = vector.shape_cast %163 : vector<1x32x128xbf16> to vector<32x128xbf16>
    %cst_46 = arith.constant dense<0.000000e+00> : vector<40x128xf32>
    %165 = tpu.matmul %162, %164, %cst_46 {dimension_numbers = #tpu.dot_dimension_numbers<[1], [0], [0], [1], [0, 0, 1, 1], [], []>} : vector<40x32xbf16>, vector<32x128xbf16>, vector<40x128xf32> -> vector<40x128xf32>
    %c0_47 = arith.constant 0 : index
    %c0_48 = arith.constant 0 : index
    %c0_49 = arith.constant 0 : index
    %166 = vector.load %arg8[%c0_47, %c0_48, %c0_49] : memref<1x1x128xf32, #tpu.memory_space<vmem>>, vector<1x1x128xf32>
    %167 = vector.shape_cast %166 : vector<1x1x128xf32> to vector<1x128xf32>
    %168 = vector.broadcast %167 : vector<1x128xf32> to vector<40x128xf32>
    %169 = arith.addf %165, %168 : vector<40x128xf32>
    %cst_50 = arith.constant 5.000000e-01 : f32
    %170 = vector.broadcast %cst_50 : f32 to vector<40x128xf32>
    %171 = arith.mulf %170, %169 : vector<40x128xf32>
    %cst_51 = arith.constant 4.471500e-02 : f32
    %172 = vector.broadcast %cst_51 : f32 to vector<40x128xf32>
    %173 = arith.mulf %172, %169 : vector<40x128xf32>
    %174 = arith.mulf %173, %169 : vector<40x128xf32>
    %175 = arith.mulf %174, %169 : vector<40x128xf32>
    %176 = arith.addf %169, %175 : vector<40x128xf32>
    %cst_52 = arith.constant 0.797884583 : f32
    %177 = vector.broadcast %cst_52 : f32 to vector<40x128xf32>
    %178 = arith.mulf %177, %176 : vector<40x128xf32>
    %179 = math.tanh %178 : vector<40x128xf32>
    %cst_53 = arith.constant 1.000000e+00 : f32
    %180 = vector.broadcast %cst_53 : f32 to vector<40x128xf32>
    %181 = arith.addf %180, %179 : vector<40x128xf32>
    %182 = arith.mulf %171, %181 : vector<40x128xf32>
    %183 = arith.truncf %182 : vector<40x128xf32> to vector<40x128xbf16>
    %c0_54 = arith.constant 0 : index
    %c0_55 = arith.constant 0 : index
    %c0_56 = arith.constant 0 : index
    %184 = vector.load %arg6[%c0_54, %c0_55, %c0_56] : memref<1x128x32xbf16, #tpu.memory_space<vmem>>, vector<1x128x32xbf16>
    %185 = vector.shape_cast %184 : vector<1x128x32xbf16> to vector<128x32xbf16>
    %cst_57 = arith.constant dense<0.000000e+00> : vector<40x32xf32>
    %186 = tpu.matmul %183, %185, %cst_57 {dimension_numbers = #tpu.dot_dimension_numbers<[1], [0], [0], [1], [0, 0, 1, 1], [], []>} : vector<40x128xbf16>, vector<128x32xbf16>, vector<40x32xf32> -> vector<40x32xf32>
    %187 = arith.addf %139, %186 : vector<40x32xf32>
    %188 = vector.broadcast %15 : vector<1x32xf32> to vector<40x32xf32>
    %189 = arith.addf %187, %188 : vector<40x32xf32>
    %c0_58 = arith.constant 0 : index
    %c0_59 = arith.constant 0 : index
    %c0_60 = arith.constant 0 : index
    %190 = vector.load %arg11[%c0_58, %c0_59, %c0_60] : memref<1x40x32xf32, #tpu.memory_space<vmem>>, vector<1x40x32xf32>
    %191 = vector.shape_cast %190 : vector<1x40x32xf32> to vector<40x32xf32>
    %192 = vector.shape_cast %189 : vector<40x32xf32> to vector<1x40x32xf32>
    tpu.vector_store %arg11[%c0_58, %c0_59, %c0_60], %192 {strides = array<i32>} : memref<1x40x32xf32, #tpu.memory_space<vmem>>, vector<1x40x32xf32>,
    %c2_i32 = arith.constant 2 : i32
    %193 = arith.cmpi eq, %arg1, %c2_i32 : i32
    %194 = arith.extui %193 : i1 to i32
    %c0_i32_61 = arith.constant 0 : i32
    %195 = arith.cmpi ne, %194, %c0_i32_61 : i32
    scf.if %195 {
      %c0_62 = arith.constant 0 : index
      %c0_63 = arith.constant 0 : index
      %196 = vector.load %arg9[%c0_62, %c0_63] : memref<1x32xf32, #tpu.memory_space<vmem>>, vector<1x32xf32>
      %c0_64 = arith.constant 0 : index
      %c0_65 = arith.constant 0 : index
      %197 = vector.load %arg10[%c0_64, %c0_65] : memref<1x32xf32, #tpu.memory_space<vmem>>, vector<1x32xf32>
      %cst_66 = arith.constant dense<0.000000e+00> : vector<40xf32>
      %198 = vector.multi_reduction <add>, %189, %cst_66 [1] : vector<40x32xf32> to vector<40xf32>
      %199 = vector.shape_cast %198 : vector<40xf32> to vector<40x1xf32>
      %cst_67 = arith.constant 3.200000e+01 : f32
      %200 = vector.broadcast %cst_67 : f32 to vector<40x1xf32>
      %201 = arith.divf %199, %200 : vector<40x1xf32>
      %202 = vector.broadcast %201 : vector<40x1xf32> to vector<40x32xf32>
      %203 = arith.subf %189, %202 : vector<40x32xf32>
      %204 = arith.mulf %203, %203 : vector<40x32xf32>
      %cst_68 = arith.constant dense<0.000000e+00> : vector<40xf32>
      %205 = vector.multi_reduction <add>, %204, %cst_68 [1] : vector<40x32xf32> to vector<40xf32>
      %206 = vector.shape_cast %205 : vector<40xf32> to vector<40x1xf32>
      %cst_69 = arith.constant 3.200000e+01 : f32
      %207 = vector.broadcast %cst_69 : f32 to vector<40x1xf32>
      %208 = arith.divf %206, %207 : vector<40x1xf32>
      %209 = vector.broadcast %201 : vector<40x1xf32> to vector<40x32xf32>
      %210 = arith.subf %189, %209 : vector<40x32xf32>
      %cst_70 = arith.constant 9.99999974E-6 : f32
      %211 = vector.broadcast %cst_70 : f32 to vector<40x1xf32>
      %212 = arith.addf %208, %211 : vector<40x1xf32>
      %213 = math.rsqrt %212 : vector<40x1xf32>
      %214 = vector.broadcast %213 : vector<40x1xf32> to vector<40x32xf32>
      %215 = arith.mulf %210, %214 : vector<40x32xf32>
      %216 = vector.broadcast %196 : vector<1x32xf32> to vector<40x32xf32>
      %217 = arith.mulf %215, %216 : vector<40x32xf32>
      %218 = vector.broadcast %197 : vector<1x32xf32> to vector<40x32xf32>
      %219 = arith.addf %217, %218 : vector<40x32xf32>
      %c0_71 = arith.constant 0 : index
      %c0_72 = arith.constant 0 : index
      %c0_73 = arith.constant 0 : index
      %220 = vector.load %arg11[%c0_71, %c0_72, %c0_73] : memref<1x40x32xf32, #tpu.memory_space<vmem>>, vector<1x40x32xf32>
      %221 = vector.shape_cast %220 : vector<1x40x32xf32> to vector<40x32xf32>
      %222 = vector.shape_cast %219 : vector<40x32xf32> to vector<1x40x32xf32>
      tpu.vector_store %arg11[%c0_71, %c0_72, %c0_73], %222 {strides = array<i32>} : memref<1x40x32xf32, #tpu.memory_space<vmem>>, vector<1x40x32xf32>,
    } else {
    }
    return
  }
  func.func @transform_0(%arg0: i32, %arg1: i32) -> (i32, i32, i32) {
    %c0_i32 = arith.constant 0 : i32
    %c0_i32_0 = arith.constant 0 : i32
    %c0_i32_1 = arith.constant 0 : i32
    return %arg0, %c0_i32, %c0_i32_0 : i32, i32, i32
  }
  func.func @transform_1(%arg0: i32, %arg1: i32) -> (i32, i32, i32) {
    %c0_i32 = arith.constant 0 : i32
    %c0_i32_0 = arith.constant 0 : i32
    %c0_i32_1 = arith.constant 0 : i32
    return %arg1, %c0_i32, %c0_i32_0 : i32, i32, i32
  }
  func.func @transform_2(%arg0: i32, %arg1: i32) -> (i32, i32, i32) {
    %c0_i32 = arith.constant 0 : i32
    %c0_i32_0 = arith.constant 0 : i32
    %c0_i32_1 = arith.constant 0 : i32
    return %arg1, %c0_i32, %c0_i32_0 : i32, i32, i32
  }
  func.func @transform_3(%arg0: i32, %arg1: i32) -> (i32, i32, i32) {
    %c0_i32 = arith.constant 0 : i32
    %c0_i32_0 = arith.constant 0 : i32
    %c0_i32_1 = arith.constant 0 : i32
    return %arg1, %c0_i32, %c0_i32_0 : i32, i32, i32
  }
  func.func @transform_4(%arg0: i32, %arg1: i32) -> (i32, i32, i32) {
    %c0_i32 = arith.constant 0 : i32
    %c0_i32_0 = arith.constant 0 : i32
    %c0_i32_1 = arith.constant 0 : i32
    return %arg1, %c0_i32, %c0_i32_0 : i32, i32, i32
  }
  func.func @transform_5(%arg0: i32, %arg1: i32) -> (i32, i32, i32) {
    %c0_i32 = arith.constant 0 : i32
    %c0_i32_0 = arith.constant 0 : i32
    %c0_i32_1 = arith.constant 0 : i32
    return %arg1, %c0_i32, %c0_i32_0 : i32, i32, i32
  }
  func.func @transform_6(%arg0: i32, %arg1: i32) -> (i32, i32, i32) {
    %c0_i32 = arith.constant 0 : i32
    %c0_i32_0 = arith.constant 0 : i32
    %c0_i32_1 = arith.constant 0 : i32
    return %arg1, %c0_i32, %c0_i32_0 : i32, i32, i32
  }
  func.func @transform_7(%arg0: i32, %arg1: i32) -> (i32, i32) {
    %c0_i32 = arith.constant 0 : i32
    %c0_i32_0 = arith.constant 0 : i32
    %c0_i32_1 = arith.constant 0 : i32
    return %c0_i32, %c0_i32_0 : i32, i32
  }
  func.func @transform_8(%arg0: i32, %arg1: i32) -> (i32, i32) {
    %c0_i32 = arith.constant 0 : i32
    %c0_i32_0 = arith.constant 0 : i32
    %c0_i32_1 = arith.constant 0 : i32
    return %c0_i32, %c0_i32_0 : i32, i32
  }
  func.func @transform_9(%arg0: i32, %arg1: i32) -> (i32, i32, i32) {
    %c0_i32 = arith.constant 0 : i32
    %c0_i32_0 = arith.constant 0 : i32
    %c0_i32_1 = arith.constant 0 : i32
    return %arg0, %c0_i32, %c0_i32_0 : i32, i32, i32
  }
}

</mosaic_0001>

<llo_original>
// kernel: emotion2vec_forward.6
$region0: #{emotion2vec_forward.6}
  #allocation0 [shape = 'u32[]', space=smem, size = 0x4, offset = 0x4, fixed_abs, tag = 'smem constant byte address 0x4 - core index']
  #allocation1 [shape = 'u32[144,128]{1,0:T(1,128)}', space=vmem, size = 0x12000, scoped, tag = 'internal scratch']
  %s0 = inlined_call_operand.vmem [shape: bf16[2,80,64], index: 0, kind: input, shape index: {}]
  %s1 = inlined_call_operand.vmem [shape: bf16[96,32], index: 1, kind: input, shape index: {}]
  %s2 = inlined_call_operand.vmem [shape: f32[1,32], index: 2, kind: input, shape index: {}]
  %s3 = inlined_call_operand.vmem [shape: f32[1,32], index: 3, kind: input, shape index: {}]
  %s4 = inlined_call_operand.vmem [shape: bf16[2,79,32], index: 4, kind: output, shape index: {}]
  %s5 = sld [smem:[#allocation0]]
  $region49: #{emotion2vec_forward.6} parent=0
    _
  %s7 = ssub.s32 1, %s5
  %s8 = scalar_select 0, %s7, %s5
  loop: start=0, step=1, limit=4
  $region2: #{emotion2vec_forward.6} parent=0 // loop_pre_header
    _
  $region3: #{emotion2vec_forward.6} parent=0 // loop_header
    %s10 = sphi 0, %s14
    %p11 = scmp.ge.s32.totalorder %s10, 4
    %s20 = sphi 0, %s22
    %s23 = sphi 0, %s20
    %s24 = sphi 0, %s23
    %s40 = sphi 0, %s24
    %s44 = sphi 0, %s44
    %s46 = sphi 0, %s44
    %s47 = sphi 0, %s46
    %s61 = sphi 0, %s47
    %s65 = sphi 0, %s65
    %s67 = sphi 0, %s65
    %s68 = sphi 0, %s67
    %s82 = sphi 0, %s68
    %s86 = sphi 0, %s86
    %s88 = sphi 0, %s86
    %s89 = sphi 0, %s88
    %s103 = sphi 0, %s89
    %s109 = sphi 0, %s111
    %s112 = sphi 0, %s109
    %s113 = sphi 0, %s112
    %s129 = sphi 0, %s113
  $region4: #{emotion2vec_forward.6} parent=0 // loop_header_branch
    %13 = sbr.rel (%p11) target = $region8
  $region5: #{emotion2vec_forward.6} parent=0 // loop_body
    %s15 = ssub.s32 %s10, 1
    %s16 = ssub.s32 %s10, 2
    %s17 = sadd.s32 %s10, 1
    %s18 = ssub.s32 %s10, %s17
    %p19 = scmp.eq.s32.totalorder %s18, 0
    %s21 = sadd.s32 %s20, 1
    %s22 = scalar_select %p19, %s20, %s21
    %p25 = pneg %p19
    %p26 = scmp.eq.s32.totalorder %s10, 1
    %p27 = por %p25, %p26
    %p28 = scmp.ne.s32.totalorder %s20, %s23
    %p29 = scmp.eq.s32.totalorder %s10, 0
    %p30 = por %p28, %p29
    %p31 = scmp.ne.s32.totalorder %s20, %s23
    %p32 = scmp.eq.s32.totalorder %s15, 1
    %p33 = por %p31, %p32
    %p34 = scmp.ne.s32.totalorder %s23, %s24
    %p35 = scmp.eq.s32.totalorder %s15, 0
    %p36 = por %p34, %p35
    %p37 = scmp.ne.s32.totalorder %s23, %s24
    %p38 = scmp.eq.s32.totalorder %s16, 1
    %p39 = por %p37, %p38
    %p41 = scmp.ne.s32.totalorder %s24, %s40
    %p42 = scmp.eq.s32.totalorder %s16, 0
    %p43 = por %p41, %p42
    %s45 = sadd.s32 %s44, 1
    %p48 = scmp.eq.s32.totalorder %s10, 1
    %p49 = scmp.ne.s32.totalorder %s44, %s46
    %p50 = scmp.eq.s32.totalorder %s10, 0
    %p51 = por %p49, %p50
    %p52 = scmp.ne.s32.totalorder %s44, %s46
    %p53 = scmp.eq.s32.totalorder %s15, 1
    %p54 = por %p52, %p53
    %p55 = scmp.ne.s32.totalorder %s46, %s47
    %p56 = scmp.eq.s32.totalorder %s15, 0
    %p57 = por %p55, %p56
    %p58 = scmp.ne.s32.totalorder %s46, %s47
    %p59 = scmp.eq.s32.totalorder %s16, 1
    %p60 = por %p58, %p59
    %p62 = scmp.ne.s32.totalorder %s47, %s61
    %p63 = scmp.eq.s32.totalorder %s16, 0
    %p64 = por %p62, %p63
    %s66 = sadd.s32 %s65, 1
    %p69 = scmp.eq.s32.totalorder %s10, 1
    %p70 = scmp.ne.s32.totalorder %s65, %s67
    %p71 = scmp.eq.s32.totalorder %s10, 0
    %p72 = por %p70, %p71
    %p73 = scmp.ne.s32.totalorder %s65, %s67
    %p74 = scmp.eq.s32.totalorder %s15, 1
    %p75 = por %p73, %p74
    %p76 = scmp.ne.s32.totalorder %s67, %s68
    %p77 = scmp.eq.s32.totalorder %s15, 0
    %p78 = por %p76, %p77
    %p79 = scmp.ne.s32.totalorder %s67, %s68
    %p80 = scmp.eq.s32.totalorder %s16, 1
    %p81 = por %p79, %p80
    %p83 = scmp.ne.s32.totalorder %s68, %s82
    %p84 = scmp.eq.s32.totalorder %s16, 0
    %p85 = por %p83, %p84
    %s87 = sadd.s32 %s86, 1
    %p90 = scmp.eq.s32.totalorder %s10, 1
    %p91 = scmp.ne.s32.totalorder %s86, %s88
    %p92 = scmp.eq.s32.totalorder %s10, 0
    %p93 = por %p91, %p92
    %p94 = scmp.ne.s32.totalorder %s86, %s88
    %p95 = scmp.eq.s32.totalorder %s15, 1
    %p96 = por %p94, %p95
    %p97 = scmp.ne.s32.totalorder %s88, %s89
    %p98 = scmp.eq.s32.totalorder %s15, 0
    %p99 = por %p97, %p98
    %p100 = scmp.ne.s32.totalorder %s88, %s89
    %p101 = scmp.eq.s32.totalorder %s16, 1
    %p102 = por %p100, %p101
    %p104 = scmp.ne.s32.totalorder %s89, %s103
    %p105 = scmp.eq.s32.totalorder %s16, 0
    %p106 = por %p104, %p105
    %s107 = ssub.s32 %s10, %s17
    %p108 = scmp.eq.s32.totalorder %s107, 0
    %s110 = sadd.s32 %s109, 1
    %s111 = scalar_select %p108, %s109, %s110
    %p114 = pneg %p108
    %p115 = scmp.eq.s32.totalorder %s10, 1
    %p116 = por %p114, %p115
    %p117 = scmp.ne.s32.totalorder %s109, %s112
    %p118 = scmp.eq.s32.totalorder %s10, 0
    %p119 = por %p117, %p118
    %p120 = scmp.ne.s32.totalorder %s109, %s112
    %p121 = scmp.eq.s32.totalorder %s15, 1
    %p122 = por %p120, %p121
    %p123 = scmp.ne.s32.totalorder %s112, %s113
    %p124 = scmp.eq.s32.totalorder %s15, 0
    %p125 = por %p123, %p124
    %p126 = scmp.ne.s32.totalorder %s112, %s113
    %p127 = scmp.eq.s32.totalorder %s16, 1
    %p128 = por %p126, %p127
    %p130 = scmp.ne.s32.totalorder %s113, %s129
    %p131 = scmp.eq.s32.totalorder %s16, 0
    %p132 = por %p130, %p131
    %p133 = scmp.le.s32.totalorder 1, %s10
    %p134 = scmp.lt.s32.totalorder %s10, 3
    %p135 = pnand %p133, %p134
    %p136 = pneg %p135
    // Predicated region
    $region9: #{emotion2vec_forward.6} parent=5 // pred_check
      _
    $region10: #{emotion2vec_forward.6} parent=5 // pred_check_branch
      %138 = sbr.rel (%p135) target = $region12
    $region11: #{emotion2vec_forward.6} parent=5 // pred_region
      %s139 = ssub.s32 %s10, 1
      // Predicated region
      $region13: #{emotion2vec_forward.6} parent=11 // pred_check
        %p140 = pneg %p57
      $region14: #{emotion2vec_forward.6} parent=11 // pred_check_branch
        %142 = sbr.rel (%p140) target = $region16
      $region15: #{emotion2vec_forward.6} parent=11 // pred_region
        _
      $region16: #{emotion2vec_forward.6} parent=11 // pred_fallthru
        _
      // Predicated region
      $region17: #{emotion2vec_forward.6} parent=11 // pred_check
        %p143 = pneg %p78
      $region18: #{emotion2vec_forward.6} parent=11 // pred_check_branch
        %145 = sbr.rel (%p143) target = $region20
      $region19: #{emotion2vec_forward.6} parent=11 // pred_region
        _
      $region20: #{emotion2vec_forward.6} parent=11 // pred_fallthru
        _
      // Predicated region
      $region21: #{emotion2vec_forward.6} parent=11 // pred_check
        %p146 = pneg %p99
      $region22: #{emotion2vec_forward.6} parent=11 // pred_check_branch
        %148 = sbr.rel (%p146) target = $region24
      $region23: #{emotion2vec_forward.6} parent=11 // pred_region
        _
      $region24: #{emotion2vec_forward.6} parent=11 // pred_fallthru
        _
    $region12: #{emotion2vec_forward.6} parent=5 // pred_fallthru
      _
    %p149 = scmp.lt.s32.totalorder %s10, 2
    // Predicated region
    $region25: #{emotion2vec_forward.6} parent=5 // pred_check
      %p150 = pneg %p149
    $region26: #{emotion2vec_forward.6} parent=5 // pred_check_branch
      %152 = sbr.rel (%p150) target = $region28
    $region27: #{emotion2vec_forward.6} parent=5 // pred_region
      // Predicated region
      $region29: #{emotion2vec_forward.6} parent=27 // pred_check
        %p153 = pneg %p30
      $region30: #{emotion2vec_forward.6} parent=27 // pred_check_branch
        %155 = sbr.rel (%p153) target = $region32
      $region31: #{emotion2vec_forward.6} parent=27 // pred_region
        %p156 = scmp.lt.s32.totalorder %s10, 1
        %s157 = scalar_select %p156, %s10, 1
        %s158 = smul.addr %s157, 10
        %s159 = smul.addr %s158, 4
        %s160 = scalar_lea.vmem %s0, %s159
      $region32: #{emotion2vec_forward.6} parent=27 // pred_fallthru
        _
    $region28: #{emotion2vec_forward.6} parent=5 // pred_fallthru
      _
    %p161 = scmp.le.s32.totalorder 1, %s10
    %p162 = scmp.lt.s32.totalorder %s10, 3
    %p163 = pnand %p161, %p162
    %p164 = pneg %p163
    // Predicated region
    $region33: #{emotion2vec_forward.6} parent=5 // pred_check
      _
    $region34: #{emotion2vec_forward.6} parent=5 // pred_check_branch
      %166 = sbr.rel (%p163) target = $region36
    $region35: #{emotion2vec_forward.6} parent=5 // pred_region
      %s167 = ssub.s32 %s10, 1
      %p168 = scmp.lt.s32.totalorder %s15, 1
      %s169 = scalar_select %p168, %s15, 1
      %s170 = smul.addr %s169, 10
      %s171 = smul.addr %s170, 4
      %s172 = scalar_lea.vmem %s0, %s171
      %p173 = pneg %p36
      %p174 = pneg %p33
      %p175 = pneg %p57
      %p176 = pneg %p54
      %p177 = pneg %p78
      %p178 = pneg %p75
      %p179 = pneg %p99
      %p180 = pneg %p96
      %p181 = pneg %p125
      %p182 = pneg %p122
      %p183 = scmp.lt.s32.totalorder %s15, 1
      %s184 = scalar_select %p183, %s15, 1
      %s185 = smul.addr %s184, 10
      %s186 = smul.addr %s185, 4
      %s187 = scalar_lea.vmem %s4, %s186
      %p188 = scmp.lt.s32.totalorder %s15, 1
      %s189 = scalar_select %p188, %s15, 1
      %s190 = smul.addr %s189, 10
      %s191 = smul.addr %s190, 4
      %s192 = scalar_lea.vmem %s0, %s191
      %p193 = scmp.lt.s32.totalorder %s15, 1
      %s194 = scalar_select %p193, %s15, 1
      %s195 = smul.addr %s194, 10
      %s196 = smul.addr %s195, 4
      %s197 = scalar_lea.vmem %s4, %s196
      %v199 = vld [vmem:[%s192] sm:$0xf]
      %v200 = vld [vmem:[%s192 + $0x4] sm:$0xf]
      %v201 = vld [vmem:[%s192 + $0x8] sm:$0xf]
      %v202 = vld [vmem:[%s192 + $0xc] sm:$0xf]
      %v203 = vld [vmem:[%s192 + $0x10] sm:$0xf]
      %v204 = vld [vmem:[%s192 + $0x14] sm:$0xf]
      %v205 = vld [vmem:[%s192 + $0x18] sm:$0xf]
      %v206 = vld [vmem:[%s192 + $0x1c] sm:$0xf]
      %v207 = vld [vmem:[%s192 + $0x20] sm:$0xf]
      %v208 = vld [vmem:[%s192 + $0x24] sm:$0xf]
      %v219 = vunpack.c.l.b16 %v199
      %v220 = vunpack.c.l.b16 %v200
      %v221 = vunpack.c.l.b16 %v201
      %v222 = vunpack.c.l.b16 %v202
      %v223 = vunpack.c.l.b16 %v203
      %v224 = vunpack.c.l.b16 %v204
      %v225 = vunpack.c.l.b16 %v205
      %v226 = vunpack.c.l.b16 %v206
      %v227 = vunpack.c.l.b16 %v207
      %v228 = vunpack.c.l.b16 %v208
      %v229 = vpack.c.b16 %v220, %v219
      %v230 = vpack.c.b16 %v222, %v221
      %v231 = vpack.c.b16 %v224, %v223
      %v232 = vpack.c.b16 %v226, %v225
      %v233 = vpack.c.b16 %v228, %v227
      %vm234 = vsmask.f32 7424
      %v236 = vshrl.u32 %v229, 16
      %v238 = vshll.u32 %v229, 16
      %v240 = vrot.slane %v238, 1
      %v241 = vor.u32 %v236, %v240
      %v243 = vshll.u32 %v230, 16
      %v245 = vrot.slane %v243, 1
      %v246 = vsel %vm234, %v241, %v245
      %v247 = vshrl.u32 %v230, 16
      %v249 = vor.u32 %v247, %v245
      %v251 = vshll.u32 %v231, 16
      %v253 = vrot.slane %v251, 1
      %v254 = vsel %vm234, %v249, %v253
      %v255 = vshrl.u32 %v231, 16
      %v257 = vor.u32 %v255, %v253
      %v259 = vshll.u32 %v232, 16
      %v261 = vrot.slane %v259, 1
      %v262 = vsel %vm234, %v257, %v261
      %v263 = vshrl.u32 %v232, 16
      %v265 = vor.u32 %v263, %v261
      %v267 = vshll.u32 %v233, 16
      %v269 = vrot.slane %v267, 1
      %v270 = vsel %vm234, %v265, %v269
      %v271 = vshrl.u32 %v233, 16
      %v273 = vor.u32 %v271, %v269
      %274 = vrot.lane.b32.xlu0 %v246, 64
      %v275 = vpop.permute.xlu0 %274
      %276 = vrot.lane.b32.xlu0 %v254, 64
      %v277 = vpop.permute.xlu0 %276
      %278 = vrot.lane.b32.xlu0 %v262, 64
      %v279 = vpop.permute.xlu0 %278
      %280 = vrot.lane.b32.xlu0 %v270, 64
      %v281 = vpop.permute.xlu0 %280
      %282 = vrot.lane.b32.xlu0 %v273, 64
      %v283 = vpop.permute.xlu0 %282
      %vm284 = vcmask 523264
      %v286 = vsel %vm284, %v229, %v275
      %v288 = vsel %vm284, %v230, %v277
      %v290 = vsel %vm284, %v231, %v279
      %v292 = vsel %vm284, %v232, %v281
      %v294 = vsel %vm284, %v233, %v283
      %v295 = vld [vmem:[%s1] sm:$0xf]
      %v296 = vld [vmem:[%s1 + $0x4] sm:$0xf]
      %v297 = vld [vmem:[%s1 + $0x8] sm:$0xf]
      %v298 = vld [vmem:[%s1 + $0xc] sm:$0xf]
      %v299 = vld [vmem:[%s1 + $0x10] sm:$0xf]
      %v300 = vld [vmem:[%s1 + $0x14] sm:$0xf]
      %v301 = vld [vmem:[%s1 + $0x18] sm:$0xf]
      %v302 = vld [vmem:[%s1 + $0x1c] sm:$0xf]
      %v303 = vld [vmem:[%s1 + $0x20] sm:$0xf]
      %v304 = vld [vmem:[%s1 + $0x24] sm:$0xf]
      %v305 = vld [vmem:[%s1 + $0x28] sm:$0xf]
      %v306 = vld [vmem:[%s1 + $0x2c] sm:$0xf]
      %v319 = vunpack.c.l.b16 %v295
      %v320 = vunpack.c.l.b16 %v296
      %v321 = vunpack.c.l.b16 %v297
      %v322 = vunpack.c.l.b16 %v298
      %v323 = vunpack.c.l.b16 %v299
      %v324 = vunpack.c.l.b16 %v300
      %v325 = vunpack.c.l.b16 %v301
      %v326 = vunpack.c.l.b16 %v302
      %v327 = vunpack.c.l.b16 %v303
      %v328 = vunpack.c.l.b16 %v304
      %v329 = vunpack.c.l.b16 %v305
      %v330 = vunpack.c.l.b16 %v306
      %v331 = vpack.c.b16 %v320, %v319
      %v332 = vpack.c.b16 %v322, %v321
      %v333 = vpack.c.b16 %v324, %v323
      %v334 = vpack.c.b16 %v326, %v325
      %v335 = vpack.c.b16 %v328, %v327
      %v336 = vpack.c.b16 %v330, %v329
      %vm343 = vcmask 785408
      %v344 = vsel %vm343, %v286, 0
      %v346 = vsel %vm343, %v288, 0
      %v348 = vsel %vm343, %v290, 0
      %v350 = vsel %vm343, %v292, 0
      %v352 = vsel %vm343, %v294, 0
      %354 = vmatprep.subr.bf16.mxu0 0
      %355 = vmatpush1.bf16.msra.mxu0 0
      %356 = vmatprep.subr.bf16.mxu0 0
      %357 = vmatpush1.bf16.msra.mxu0 0
      %358 = vmatprep.subr.bf16.mxu0 0
      %359 = vmatpush1.bf16.msra.mxu0 %v336
      %360 = vmatprep.subr.bf16.mxu0 0
      %361 = vmatpush1.bf16.msra.mxu0 %v335
      %362 = vmatprep.subr.bf16.mxu0 0
      %363 = vmatpush1.bf16.msra.mxu0 %v334
      %364 = vmatprep.subr.bf16.mxu0 0
      %365 = vmatpush1.bf16.msra.mxu0 %v333
      %366 = vmatprep.subr.bf16.mxu0 0
      %367 = vmatpush1.bf16.msra.mxu0 %v332
      %368 = vmatprep.subr.bf16.mxu0 0
      %369 = vmatpush1.bf16.msra.mxu0 %v331
      %370 = vmatprep.subr.bf16.mxu0 0
      %371 = vmatpush2.bf16.msra.mxu0 0
      %372 = vmatprep.subr.bf16.mxu0 0
      %373 = vmatpush2.bf16.msra.mxu0 0
      %374 = vmatprep.subr.bf16.mxu0 0
      %375 = vmatpush2.bf16.msra.mxu0 0
      %376 = vmatprep.subr.bf16.mxu0 0
      %377 = vmatpush2.bf16.msra.mxu0 0
      %378 = vmatprep.subr.bf16.mxu0 0
      %379 = vmatpush2.bf16.msra.mxu0 0
      %380 = vmatprep.subr.bf16.mxu0 0
      %381 = vmatpush2.bf16.msra.mxu0 0
      %382 = vmatprep.subr.bf16.mxu0 0
      %383 = vmatpush2.bf16.msra.mxu0 0
      %384 = vmatprep.subr.bf16.mxu0 0
      %385 = vmatpush2.bf16.msra.mxu0 0
      %386 = vmatprep.mubr.bf16.mxu0 0
      %387 = vmatmul.mubr.bf16.gmra.mxu0 %v344
      %v388 = vpop.f32.mrf.mxu0
      %v389 = vadd.f32 0.0, %v388
      %v390 = vpop.f32.mrf.mxu0
      %v391 = vpop.f32.mrf.mxu0
      %v392 = vadd.f32 0.0, %v391
      %v393 = vpop.f32.mrf.mxu0
      %394 = vmatprep.mubr.bf16.mxu0 0
      %395 = vmatmul.mubr.bf16.gmra.mxu0 %v346
      %v396 = vpop.f32.mrf.mxu0
      %v397 = vadd.f32 0.0, %v396
      %v398 = vpop.f32.mrf.mxu0
      %v399 = vpop.f32.mrf.mxu0
      %v400 = vadd.f32 0.0, %v399
      %v401 = vpop.f32.mrf.mxu0
      %402 = vmatprep.mubr.bf16.mxu0 0
      %403 = vmatmul.mubr.bf16.gmra.mxu0 %v348
      %v404 = vpop.f32.mrf.mxu0
      %v405 = vadd.f32 0.0, %v404
      %v406 = vpop.f32.mrf.mxu0
      %v407 = vpop.f32.mrf.mxu0
      %v408 = vadd.f32 0.0, %v407
      %v409 = vpop.f32.mrf.mxu0
      %410 = vmatprep.mubr.bf16.mxu0 0
      %411 = vmatmul.mubr.bf16.gmra.mxu0 %v350
      %v412 = vpop.f32.mrf.mxu0
      %v413 = vadd.f32 0.0, %v412
      %v414 = vpop.f32.mrf.mxu0
      %v415 = vpop.f32.mrf.mxu0
      %v416 = vadd.f32 0.0, %v415
      %v417 = vpop.f32.mrf.mxu0
      %418 = vmatprep.mubr.bf16.mxu0 0
      %419 = vmatmul.mubr.bf16.gmra.mxu0 %v352
      %v420 = vpop.f32.mrf.mxu0
      %v421 = vadd.f32 0.0, %v420
      %v422 = vpop.f32.mrf.mxu0
      %v423 = vpop.f32.mrf.mxu0
      %v424 = vadd.f32 0.0, %v423
      %v425 = vpop.f32.mrf.mxu0
      %426 = vdwg.mxu0
      %v427 = vld [vmem:[%s2] sm:$0x1]
      %v428 = vld [vmem:[%s3] sm:$0x1]
      %vm429 = vcmask 261120
      %v430 = vsel %vm429, %v389, 0.0
      %431 = vadd.xlane.f32.xlu0 %v430
      %v432 = vpop.xlane.xlu0 %431
      %v433 = vsel %vm429, %v392, 0.0
      %434 = vadd.xlane.f32.xlu0 %v433
      %v435 = vpop.xlane.xlu0 %434
      %v436 = vsel %vm429, %v397, 0.0
      %437 = vadd.xlane.f32.xlu0 %v436
      %v438 = vpop.xlane.xlu0 %437
      %v439 = vsel %vm429, %v400, 0.0
      %440 = vadd.xlane.f32.xlu0 %v439
      %v441 = vpop.xlane.xlu0 %440
      %v442 = vsel %vm429, %v405, 0.0
      %443 = vadd.xlane.f32.xlu0 %v442
      %v444 = vpop.xlane.xlu0 %443
      %v445 = vsel %vm429, %v408, 0.0
      %446 = vadd.xlane.f32.xlu0 %v445
      %v447 = vpop.xlane.xlu0 %446
      %v448 = vsel %vm429, %v413, 0.0
      %449 = vadd.xlane.f32.xlu0 %v448
      %v450 = vpop.xlane.xlu0 %449
      %v451 = vsel %vm429, %v416, 0.0
      %452 = vadd.xlane.f32.xlu0 %v451
      %v453 = vpop.xlane.xlu0 %452
      %v454 = vsel %vm429, %v421, 0.0
      %455 = vadd.xlane.f32.xlu0 %v454
      %v456 = vpop.xlane.xlu0 %455
      %vm457 = vcmask 260096
      %v458 = vsel %vm457, %v424, 0.0
      %459 = vadd.xlane.f32.xlu0 %v458
      %v460 = vpop.xlane.xlu0 %459
      %v461 = vrcp.pop 32.0
      %v462 = vmul.f32 %v432, %v461
      %v463 = vmul.f32 %v435, %v461
      %v464 = vmul.f32 %v438, %v461
      %v465 = vmul.f32 %v441, %v461
      %v466 = vmul.f32 %v444, %v461
      %v467 = vmul.f32 %v447, %v461
      %v468 = vmul.f32 %v450, %v461
      %v469 = vmul.f32 %v453, %v461
      %v470 = vmul.f32 %v456, %v461
      %v471 = vmul.f32 %v460, %v461
      %v472 = vsub.f32 %v389, %v462
      %v473 = vsub.f32 %v392, %v463
      %v474 = vsub.f32 %v397, %v464
      %v475 = vsub.f32 %v400, %v465
      %v476 = vsub.f32 %v405, %v466
      %v477 = vsub.f32 %v408, %v467
      %v478 = vsub.f32 %v413, %v468
      %v479 = vsub.f32 %v416, %v469
      %v480 = vsub.f32 %v421, %v470
      %v481 = vsub.f32 %v424, %v471
      %v482 = vmul.f32 %v472, %v472
      %v483 = vmul.f32 %v473, %v473
      %v484 = vmul.f32 %v474, %v474
      %v485 = vmul.f32 %v475, %v475
      %v486 = vmul.f32 %v476, %v476
      %v487 = vmul.f32 %v477, %v477
      %v488 = vmul.f32 %v478, %v478
      %v489 = vmul.f32 %v479, %v479
      %v490 = vmul.f32 %v480, %v480
      %v491 = vmul.f32 %v481, %v481
      %v492 = vsel %vm429, %v482, 0.0
      %493 = vadd.xlane.f32.xlu0 %v492
      %v494 = vpop.xlane.xlu0 %493
      %v495 = vsel %vm429, %v483, 0.0
      %496 = vadd.xlane.f32.xlu0 %v495
      %v497 = vpop.xlane.xlu0 %496
      %v498 = vsel %vm429, %v484, 0.0
      %499 = vadd.xlane.f32.xlu0 %v498
      %v500 = vpop.xlane.xlu0 %499
      %v501 = vsel %vm429, %v485, 0.0
      %502 = vadd.xlane.f32.xlu0 %v501
      %v503 = vpop.xlane.xlu0 %502
      %v504 = vsel %vm429, %v486, 0.0
      %505 = vadd.xlane.f32.xlu0 %v504
      %v506 = vpop.xlane.xlu0 %505
      %v507 = vsel %vm429, %v487, 0.0
      %508 = vadd.xlane.f32.xlu0 %v507
      %v509 = vpop.xlane.xlu0 %508
      %v510 = vsel %vm429, %v488, 0.0
      %511 = vadd.xlane.f32.xlu0 %v510
      %v512 = vpop.xlane.xlu0 %511
      %v513 = vsel %vm429, %v489, 0.0
      %514 = vadd.xlane.f32.xlu0 %v513
      %v515 = vpop.xlane.xlu0 %514
      %v516 = vsel %vm429, %v490, 0.0
      %517 = vadd.xlane.f32.xlu0 %v516
      %v518 = vpop.xlane.xlu0 %517
      %v519 = vsel %vm457, %v491, 0.0
      %520 = vadd.xlane.f32.xlu0 %v519
      %v521 = vpop.xlane.xlu0 %520
      %v522 = vmul.f32 %v494, %v461
      %v523 = vmul.f32 %v497, %v461
      %v524 = vmul.f32 %v500, %v461
      %v525 = vmul.f32 %v503, %v461
      %v526 = vmul.f32 %v506, %v461
      %v527 = vmul.f32 %v509, %v461
      %v528 = vmul.f32 %v512, %v461
      %v529 = vmul.f32 %v515, %v461
      %v530 = vmul.f32 %v518, %v461
      %v531 = vmul.f32 %v521, %v461
      %v532 = vadd.f32 %v522, 1e-05
      %v533 = vadd.f32 %v523, 1e-05
      %v534 = vadd.f32 %v524, 1e-05
      %v535 = vadd.f32 %v525, 1e-05
      %v536 = vadd.f32 %v526, 1e-05
      %v537 = vadd.f32 %v527, 1e-05
      %v538 = vadd.f32 %v528, 1e-05
      %v539 = vadd.f32 %v529, 1e-05
      %v540 = vadd.f32 %v530, 1e-05
      %v541 = vadd.f32 %v531, 1e-05
      %v542 = vrsqrt.pop %v532
      %v543 = vrsqrt.pop %v533
      %v544 = vrsqrt.pop %v534
      %v545 = vrsqrt.pop %v535
      %v546 = vrsqrt.pop %v536
      %v547 = vrsqrt.pop %v537
      %v548 = vrsqrt.pop %v538
      %v549 = vrsqrt.pop %v539
      %v550 = vrsqrt.pop %v540
      %v551 = vrsqrt.pop %v541
      %v552 = vmul.f32 %v472, %v542
      %v553 = vmul.f32 %v473, %v543
      %v554 = vmul.f32 %v474, %v544
      %v555 = vmul.f32 %v475, %v545
      %v556 = vmul.f32 %v476, %v546
      %v557 = vmul.f32 %v477, %v547
      %v558 = vmul.f32 %v478, %v548
      %v559 = vmul.f32 %v479, %v549
      %v560 = vmul.f32 %v480, %v550
      %v561 = vmul.f32 %v481, %v551
      %v563 = vlaneseq
      %v564 = vshrl.u32 %v563, 7
      %v565 = vsub.s32 0, %v564
      %v566 = vrot.slane %v427, %v565
      %v568 = vmul.f32 %v552, %v566
      %v569 = vmul.f32 %v553, %v566
      %v570 = vmul.f32 %v554, %v566
      %v571 = vmul.f32 %v555, %v566
      %v572 = vmul.f32 %v556, %v566
      %v573 = vmul.f32 %v557, %v566
      %v574 = vmul.f32 %v558, %v566
      %v575 = vmul.f32 %v559, %v566
      %v576 = vmul.f32 %v560, %v566
      %v577 = vmul.f32 %v561, %v566
      %v579 = vlaneseq
      %v580 = vshrl.u32 %v579, 7
      %v581 = vsub.s32 0, %v580
      %v582 = vrot.slane %v428, %v581
      %v584 = vadd.f32 %v568, %v582
      %v585 = vadd.f32 %v569, %v582
      %v586 = vadd.f32 %v570, %v582
      %v587 = vadd.f32 %v571, %v582
      %v588 = vadd.f32 %v572, %v582
      %v589 = vadd.f32 %v573, %v582
      %v590 = vadd.f32 %v574, %v582
      %v591 = vadd.f32 %v575, %v582
      %v592 = vadd.f32 %v576, %v582
      %v593 = vadd.f32 %v577, %v582
      %v594 = vmul.f32 %v584, 0.5
      %v595 = vmul.f32 %v585, 0.5
      %v596 = vmul.f32 %v586, 0.5
      %v597 = vmul.f32 %v587, 0.5
      %v598 = vmul.f32 %v588, 0.5
      %v599 = vmul.f32 %v589, 0.5
      %v600 = vmul.f32 %v590, 0.5
      %v601 = vmul.f32 %v591, 0.5
      %v602 = vmul.f32 %v592, 0.5
      %v603 = vmul.f32 %v593, 0.5
      %v604 = vmul.f32 %v584, 0.044715
      %v605 = vmul.f32 %v585, 0.044715
      %v606 = vmul.f32 %v586, 0.044715
      %v607 = vmul.f32 %v587, 0.044715
      %v608 = vmul.f32 %v588, 0.044715
      %v609 = vmul.f32 %v589, 0.044715
      %v610 = vmul.f32 %v590, 0.044715
      %v611 = vmul.f32 %v591, 0.044715
      %v612 = vmul.f32 %v592, 0.044715
      %v613 = vmul.f32 %v593, 0.044715
      %v614 = vmul.f32 %v604, %v584
      %v615 = vmul.f32 %v605, %v585
      %v616 = vmul.f32 %v606, %v586
      %v617 = vmul.f32 %v607, %v587
      %v618 = vmul.f32 %v608, %v588
      %v619 = vmul.f32 %v609, %v589
      %v620 = vmul.f32 %v610, %v590
      %v621 = vmul.f32 %v611, %v591
      %v622 = vmul.f32 %v612, %v592
      %v623 = vmul.f32 %v613, %v593
      %v624 = vmul.f32 %v614, %v584
      %v625 = vmul.f32 %v615, %v585
      %v626 = vmul.f32 %v616, %v586
      %v627 = vmul.f32 %v617, %v587
      %v628 = vmul.f32 %v618, %v588
      %v629 = vmul.f32 %v619, %v589
      %v630 = vmul.f32 %v620, %v590
      %v631 = vmul.f32 %v621, %v591
      %v632 = vmul.f32 %v622, %v592
      %v633 = vmul.f32 %v623, %v593
      %v634 = vadd.f32 %v584, %v624
      %v635 = vadd.f32 %v585, %v625
      %v636 = vadd.f32 %v586, %v626
      %v637 = vadd.f32 %v587, %v627
      %v638 = vadd.f32 %v588, %v628
      %v639 = vadd.f32 %v589, %v629
      %v640 = vadd.f32 %v590, %v630
      %v641 = vadd.f32 %v591, %v631
      %v642 = vadd.f32 %v592, %v632
      %v643 = vadd.f32 %v593, %v633
      %v644 = vmul.f32 %v634, 0.7978846
      %v645 = vmul.f32 %v635, 0.7978846
      %v646 = vmul.f32 %v636, 0.7978846
      %v647 = vmul.f32 %v637, 0.7978846
      %v648 = vmul.f32 %v638, 0.7978846
      %v649 = vmul.f32 %v639, 0.7978846
      %v650 = vmul.f32 %v640, 0.7978846
      %v651 = vmul.f32 %v641, 0.7978846
      %v652 = vmul.f32 %v642, 0.7978846
      %v653 = vmul.f32 %v643, 0.7978846
      %v654 = vtanh.pop %v644
      %v655 = vtanh.pop %v645
      %v656 = vtanh.pop %v646
      %v657 = vtanh.pop %v647
      %v658 = vtanh.pop %v648
      %v659 = vtanh.pop %v649
      %v660 = vtanh.pop %v650
      %v661 = vtanh.pop %v651
      %v662 = vtanh.pop %v652
      %v663 = vtanh.pop %v653
      %v664 = vadd.f32 %v654, 1.0
      %v665 = vadd.f32 %v655, 1.0
      %v666 = vadd.f32 %v656, 1.0
      %v667 = vadd.f32 %v657, 1.0
      %v668 = vadd.f32 %v658, 1.0
      %v669 = vadd.f32 %v659, 1.0
      %v670 = vadd.f32 %v660, 1.0
      %v671 = vadd.f32 %v661, 1.0
      %v672 = vadd.f32 %v662, 1.0
      %v673 = vadd.f32 %v663, 1.0
      %v674 = vmul.f32 %v594, %v664
      %v675 = vmul.f32 %v595, %v665
      %v676 = vmul.f32 %v596, %v666
      %v677 = vmul.f32 %v597, %v667
      %v678 = vmul.f32 %v598, %v668
      %v679 = vmul.f32 %v599, %v669
      %v680 = vmul.f32 %v600, %v670
      %v681 = vmul.f32 %v601, %v671
      %v682 = vmul.f32 %v602, %v672
      %v683 = vmul.f32 %v603, %v673
      %v684 = vpack.c.bf16 %v675, %v674
      %v685 = vpack.c.bf16 %v677, %v676
      %v686 = vpack.c.bf16 %v679, %v678
      %v687 = vpack.c.bf16 %v681, %v680
      %v688 = vpack.c.bf16 %v683, %v682
      %v694 = vunpack.c.l.b16 %v684
      %v695 = vunpack.c.h.b16 %v684
      %v696 = vunpack.c.l.b16 %v685
      %v697 = vunpack.c.h.b16 %v685
      %v698 = vunpack.c.l.b16 %v686
      %v699 = vunpack.c.h.b16 %v686
      %v700 = vunpack.c.l.b16 %v687
      %v701 = vunpack.c.h.b16 %v687
      %v702 = vunpack.c.l.b16 %v688
      %v703 = vunpack.c.h.b16 %v688
      %v704 = vpack.c.b16 %v694, %v694
      %v705 = vpack.c.b16 %v695, %v695
      %v706 = vpack.c.b16 %v696, %v696
      %v707 = vpack.c.b16 %v697, %v697
      %v708 = vpack.c.b16 %v698, %v698
      %v709 = vpack.c.b16 %v699, %v699
      %v710 = vpack.c.b16 %v700, %v700
      %v711 = vpack.c.b16 %v701, %v701
      %v712 = vpack.c.b16 %v702, %v702
      %v713 = vpack.c.b16 %v703, %v703
      %vm724 = vcmask 257024
      %725 = vst.msk [vmem:[%s197] sm:$0xf] %vm724, %v704
      %726 = vst.msk [vmem:[%s197 + $0x4] sm:$0xf] %vm724, %v705
      %727 = vst.msk [vmem:[%s197 + $0x8] sm:$0xf] %vm724, %v706
      %728 = vst.msk [vmem:[%s197 + $0xc] sm:$0xf] %vm724, %v707
      %729 = vst.msk [vmem:[%s197 + $0x10] sm:$0xf] %vm724, %v708
      %730 = vst.msk [vmem:[%s197 + $0x14] sm:$0xf] %vm724, %v709
      %731 = vst.msk [vmem:[%s197 + $0x18] sm:$0xf] %vm724, %v710
      %732 = vst.msk [vmem:[%s197 + $0x1c] sm:$0xf] %vm724, %v711
      %733 = vst.msk [vmem:[%s197 + $0x20] sm:$0xf] %vm724, %v712
      %vm734 = vcmask 257024
      %vm735 = vsmask.f32 3328
      %vm736 = vmand %vm734, %vm735
      %v737 = vld [vmem:[%s197 + $0x24] sm:$0xf]
      %v738 = vsel %vm736, %v713, %v737
      %739 = vst [vmem:[%s197 + $0x24] sm:$0xf] %v738
      %p740 = scmp.lt.s32.totalorder %s15, 1
      %s741 = scalar_select %p740, %s15, 1
      %s742 = smul.addr %s741, 10
      %s743 = smul.addr %s742, 4
      %s744 = scalar_lea.vmem %s4, %s743
      // Predicated region
      $region37: #{emotion2vec_forward.6} parent=35 // pred_check
        %p745 = pneg %p122
      $region38: #{emotion2vec_forward.6} parent=35 // pred_check_branch
        %747 = sbr.rel (%p745) target = $region40
      $region39: #{emotion2vec_forward.6} parent=35 // pred_region
        _
      $region40: #{emotion2vec_forward.6} parent=35 // pred_fallthru
        _
    $region36: #{emotion2vec_forward.6} parent=5 // pred_fallthru
      _
    %p748 = scmp.le.s32.totalorder 2, %s10
    // Predicated region
    $region41: #{emotion2vec_forward.6} parent=5 // pred_check
      %p749 = pneg %p748
    $region42: #{emotion2vec_forward.6} parent=5 // pred_check_branch
      %751 = sbr.rel (%p749) target = $region44
    $region43: #{emotion2vec_forward.6} parent=5 // pred_region
      %s752 = ssub.s32 %s10, 2
      // Predicated region
      $region45: #{emotion2vec_forward.6} parent=43 // pred_check
        %p753 = pneg %p128
      $region46: #{emotion2vec_forward.6} parent=43 // pred_check_branch
        %755 = sbr.rel (%p753) target = $region48
      $region47: #{emotion2vec_forward.6} parent=43 // pred_region
        %p756 = scmp.lt.s32.totalorder %s16, 1
        %s757 = scalar_select %p756, %s16, 1
        %s758 = smul.addr %s757, 10
        %s759 = smul.addr %s758, 4
        %s760 = scalar_lea.vmem %s4, %s759
      $region48: #{emotion2vec_forward.6} parent=43 // pred_fallthru
        _
    $region44: #{emotion2vec_forward.6} parent=5 // pred_fallthru
      _
  $region6: #{emotion2vec_forward.6} parent=0 // loop_footer
    %s14 = sadd.s32 1, %s10
  $region7: #{emotion2vec_forward.6} parent=0 // loop_footer_branch
    %9 = sbr.rel target = $region3
  $region8: #{emotion2vec_forward.6} parent=0 // loop_exit
    _

// kernel: emotion2vec_forward.7
$region0: #{emotion2vec_forward.7}
  #allocation0 [shape = 'u32[]', space=smem, size = 0x4, offset = 0x4, fixed_abs, tag = 'smem constant byte address 0x4 - core index']
  #allocation1 [shape = 'u32[144,128]{1,0:T(1,128)}', space=vmem, size = 0x12000, scoped, tag = 'internal scratch']
  %s0 = inlined_call_operand.vmem [shape: bf16[2,39,64], index: 0, kind: input, shape index: {}]
  %s1 = inlined_call_operand.vmem [shape: bf16[64,32], index: 1, kind: input, shape index: {}]
  %s2 = inlined_call_operand.vmem [shape: f32[1,32], index: 2, kind: input, shape index: {}]
  %s3 = inlined_call_operand.vmem [shape: f32[1,32], index: 3, kind: input, shape index: {}]
  %s4 = inlined_call_operand.vmem [shape: bf16[2,39,32], index: 4, kind: output, shape index: {}]
  %s5 = sld [smem:[#allocation0]]
  $region49: #{emotion2vec_forward.7} parent=0
    _
  %s7 = ssub.s32 1, %s5
  %s8 = scalar_select 0, %s7, %s5
  loop: start=0, step=1, limit=4
  $region2: #{emotion2vec_forward.7} parent=0 // loop_pre_header
    _
  $region3: #{emotion2vec_forward.7} parent=0 // loop_header
    %s10 = sphi 0, %s14
    %p11 = scmp.ge.s32.totalorder %s10, 4
    %s20 = sphi 0, %s22
    %s23 = sphi 0, %s20
    %s24 = sphi 0, %s23
    %s40 = sphi 0, %s24
    %s44 = sphi 0, %s44
    %s46 = sphi 0, %s44
    %s47 = sphi 0, %s46
    %s61 = sphi 0, %s47
    %s65 = sphi 0, %s65
    %s67 = sphi 0, %s65
    %s68 = sphi 0, %s67
    %s82 = sphi 0, %s68
    %s86 = sphi 0, %s86
    %s88 = sphi 0, %s86
    %s89 = sphi 0, %s88
    %s103 = sphi 0, %s89
    %s109 = sphi 0, %s111
    %s112 = sphi 0, %s109
    %s113 = sphi 0, %s112
    %s129 = sphi 0, %s113
  $region4: #{emotion2vec_forward.7} parent=0 // loop_header_branch
    %13 = sbr.rel (%p11) target = $region8
  $region5: #{emotion2vec_forward.7} parent=0 // loop_body
    %s15 = ssub.s32 %s10, 1
    %s16 = ssub.s32 %s10, 2
    %s17 = sadd.s32 %s10, 1
    %s18 = ssub.s32 %s10, %s17
    %p19 = scmp.eq.s32.totalorder %s18, 0
    %s21 = sadd.s32 %s20, 1
    %s22 = scalar_select %p19, %s20, %s21
    %p25 = pneg %p19
    %p26 = scmp.eq.s32.totalorder %s10, 1
    %p27 = por %p25, %p26
    %p28 = scmp.ne.s32.totalorder %s20, %s23
    %p29 = scmp.eq.s32.totalorder %s10, 0
    %p30 = por %p28, %p29
    %p31 = scmp.ne.s32.totalorder %s20, %s23
    %p32 = scmp.eq.s32.totalorder %s15, 1
    %p33 = por %p31, %p32
    %p34 = scmp.ne.s32.totalorder %s23, %s24
    %p35 = scmp.eq.s32.totalorder %s15, 0
    %p36 = por %p34, %p35
    %p37 = scmp.ne.s32.totalorder %s23, %s24
    %p38 = scmp.eq.s32.totalorder %s16, 1
    %p39 = por %p37, %p38
    %p41 = scmp.ne.s32.totalorder %s24, %s40
    %p42 = scmp.eq.s32.totalorder %s16, 0
    %p43 = por %p41, %p42
    %s45 = sadd.s32 %s44, 1
    %p48 = scmp.eq.s32.totalorder %s10, 1
    %p49 = scmp.ne.s32.totalorder %s44, %s46
    %p50 = scmp.eq.s32.totalorder %s10, 0
    %p51 = por %p49, %p50
    %p52 = scmp.ne.s32.totalorder %s44, %s46
    %p53 = scmp.eq.s32.totalorder %s15, 1
    %p54 = por %p52, %p53
    %p55 = scmp.ne.s32.totalorder %s46, %s47
    %p56 = scmp.eq.s32.totalorder %s15, 0
    %p57 = por %p55, %p56
    %p58 = scmp.ne.s32.totalorder %s46, %s47
    %p59 = scmp.eq.s32.totalorder %s16, 1
    %p60 = por %p58, %p59
    %p62 = scmp.ne.s32.totalorder %s47, %s61
    %p63 = scmp.eq.s32.totalorder %s16, 0
    %p64 = por %p62, %p63
    %s66 = sadd.s32 %s65, 1
    %p69 = scmp.eq.s32.totalorder %s10, 1
    %p70 = scmp.ne.s32.totalorder %s65, %s67
    %p71 = scmp.eq.s32.totalorder %s10, 0
    %p72 = por %p70, %p71
    %p73 = scmp.ne.s32.totalorder %s65, %s67
    %p74 = scmp.eq.s32.totalorder %s15, 1
    %p75 = por %p73, %p74
    %p76 = scmp.ne.s32.totalorder %s67, %s68
    %p77 = scmp.eq.s32.totalorder %s15, 0
    %p78 = por %p76, %p77
    %p79 = scmp.ne.s32.totalorder %s67, %s68
    %p80 = scmp.eq.s32.totalorder %s16, 1
    %p81 = por %p79, %p80
    %p83 = scmp.ne.s32.totalorder %s68, %s82
    %p84 = scmp.eq.s32.totalorder %s16, 0
    %p85 = por %p83, %p84
    %s87 = sadd.s32 %s86, 1
    %p90 = scmp.eq.s32.totalorder %s10, 1
    %p91 = scmp.ne.s32.totalorder %s86, %s88
    %p92 = scmp.eq.s32.totalorder %s10, 0
    %p93 = por %p91, %p92
    %p94 = scmp.ne.s32.totalorder %s86, %s88
    %p95 = scmp.eq.s32.totalorder %s15, 1
    %p96 = por %p94, %p95
    %p97 = scmp.ne.s32.totalorder %s88, %s89
    %p98 = scmp.eq.s32.totalorder %s15, 0
    %p99 = por %p97, %p98
    %p100 = scmp.ne.s32.totalorder %s88, %s89
    %p101 = scmp.eq.s32.totalorder %s16, 1
    %p102 = por %p100, %p101
    %p104 = scmp.ne.s32.totalorder %s89, %s103
    %p105 = scmp.eq.s32.totalorder %s16, 0
    %p106 = por %p104, %p105
    %s107 = ssub.s32 %s10, %s17
    %p108 = scmp.eq.s32.totalorder %s107, 0
    %s110 = sadd.s32 %s109, 1
    %s111 = scalar_select %p108, %s109, %s110
    %p114 = pneg %p108
    %p115 = scmp.eq.s32.totalorder %s10, 1
    %p116 = por %p114, %p115
    %p117 = scmp.ne.s32.totalorder %s109, %s112
    %p118 = scmp.eq.s32.totalorder %s10, 0
    %p119 = por %p117, %p118
    %p120 = scmp.ne.s32.totalorder %s109, %s112
    %p121 = scmp.eq.s32.totalorder %s15, 1
    %p122 = por %p120, %p121
    %p123 = scmp.ne.s32.totalorder %s112, %s113
    %p124 = scmp.eq.s32.totalorder %s15, 0
    %p125 = por %p123, %p124
    %p126 = scmp.ne.s32.totalorder %s112, %s113
    %p127 = scmp.eq.s32.totalorder %s16, 1
    %p128 = por %p126, %p127
    %p130 = scmp.ne.s32.totalorder %s113, %s129
    %p131 = scmp.eq.s32.totalorder %s16, 0
    %p132 = por %p130, %p131
    %p133 = scmp.le.s32.totalorder 1, %s10
    %p134 = scmp.lt.s32.totalorder %s10, 3
    %p135 = pnand %p133, %p134
    %p136 = pneg %p135
    // Predicated region
    $region9: #{emotion2vec_forward.7} parent=5 // pred_check
      _
    $region10: #{emotion2vec_forward.7} parent=5 // pred_check_branch
      %138 = sbr.rel (%p135) target = $region12
    $region11: #{emotion2vec_forward.7} parent=5 // pred_region
      %s139 = ssub.s32 %s10, 1
      // Predicated region
      $region13: #{emotion2vec_forward.7} parent=11 // pred_check
        %p140 = pneg %p57
      $region14: #{emotion2vec_forward.7} parent=11 // pred_check_branch
        %142 = sbr.rel (%p140) target = $region16
      $region15: #{emotion2vec_forward.7} parent=11 // pred_region
        _
      $region16: #{emotion2vec_forward.7} parent=11 // pred_fallthru
        _
      // Predicated region
      $region17: #{emotion2vec_forward.7} parent=11 // pred_check
        %p143 = pneg %p78
      $region18: #{emotion2vec_forward.7} parent=11 // pred_check_branch
        %145 = sbr.rel (%p143) target = $region20
      $region19: #{emotion2vec_forward.7} parent=11 // pred_region
        _
      $region20: #{emotion2vec_forward.7} parent=11 // pred_fallthru
        _
      // Predicated region
      $region21: #{emotion2vec_forward.7} parent=11 // pred_check
        %p146 = pneg %p99
      $region22: #{emotion2vec_forward.7} parent=11 // pred_check_branch
        %148 = sbr.rel (%p146) target = $region24
      $region23: #{emotion2vec_forward.7} parent=11 // pred_region
        _
      $region24: #{emotion2vec_forward.7} parent=11 // pred_fallthru
        _
    $region12: #{emotion2vec_forward.7} parent=5 // pred_fallthru
      _
    %p149 = scmp.lt.s32.totalorder %s10, 2
    // Predicated region
    $region25: #{emotion2vec_forward.7} parent=5 // pred_check
      %p150 = pneg %p149
    $region26: #{emotion2vec_forward.7} parent=5 // pred_check_branch
      %152 = sbr.rel (%p150) target = $region28
    $region27: #{emotion2vec_forward.7} parent=5 // pred_region
      // Predicated region
      $region29: #{emotion2vec_forward.7} parent=27 // pred_check
        %p153 = pneg %p30
      $region30: #{emotion2vec_forward.7} parent=27 // pred_check_branch
        %155 = sbr.rel (%p153) target = $region32
      $region31: #{emotion2vec_forward.7} parent=27 // pred_region
        %p156 = scmp.lt.s32.totalorder %s10, 1
        %s157 = scalar_select %p156, %s10, 1
        %s158 = smul.addr %s157, 5
        %s159 = smul.addr %s158, 4
        %s160 = scalar_lea.vmem %s0, %s159
      $region32: #{emotion2vec_forward.7} parent=27 // pred_fallthru
        _
    $region28: #{emotion2vec_forward.7} parent=5 // pred_fallthru
      _
    %p161 = scmp.le.s32.totalorder 1, %s10
    %p162 = scmp.lt.s32.totalorder %s10, 3
    %p163 = pnand %p161, %p162
    %p164 = pneg %p163
    // Predicated region
    $region33: #{emotion2vec_forward.7} parent=5 // pred_check
      _
    $region34: #{emotion2vec_forward.7} parent=5 // pred_check_branch
      %166 = sbr.rel (%p163) target = $region36
    $region35: #{emotion2vec_forward.7} parent=5 // pred_region
      %s167 = ssub.s32 %s10, 1
      %p168 = scmp.lt.s32.totalorder %s15, 1
      %s169 = scalar_select %p168, %s15, 1
      %s170 = smul.addr %s169, 5
      %s171 = smul.addr %s170, 4
      %s172 = scalar_lea.vmem %s0, %s171
      %p173 = pneg %p36
      %p174 = pneg %p33
      %p175 = pneg %p57
      %p176 = pneg %p54
      %p177 = pneg %p78
      %p178 = pneg %p75
      %p179 = pneg %p99
      %p180 = pneg %p96
      %p181 = pneg %p125
      %p182 = pneg %p122
      %p183 = scmp.lt.s32.totalorder %s15, 1
      %s184 = scalar_select %p183, %s15, 1
      %s185 = smul.addr %s184, 5
      %s186 = smul.addr %s185, 4
      %s187 = scalar_lea.vmem %s4, %s186
      %p188 = scmp.lt.s32.totalorder %s15, 1
      %s189 = scalar_select %p188, %s15, 1
      %s190 = smul.addr %s189, 5
      %s191 = smul.addr %s190, 4
      %s192 = scalar_lea.vmem %s0, %s191
      %p193 = scmp.lt.s32.totalorder %s15, 1
      %s194 = scalar_select %p193, %s15, 1
      %s195 = smul.addr %s194, 5
      %s196 = smul.addr %s195, 4
      %s197 = scalar_lea.vmem %s4, %s196
      %v199 = vld [vmem:[%s192] sm:$0xf]
      %v200 = vld [vmem:[%s192 + $0x4] sm:$0xf]
      %v201 = vld [vmem:[%s192 + $0x8] sm:$0xf]
      %v202 = vld [vmem:[%s192 + $0xc] sm:$0xf]
      %v203 = vld [vmem:[%s192 + $0x10] sm:$0xf]
      %v204 = vld [vmem:[%s1] sm:$0xf]
      %v205 = vld [vmem:[%s1 + $0x4] sm:$0xf]
      %v206 = vld [vmem:[%s1 + $0x8] sm:$0xf]
      %v207 = vld [vmem:[%s1 + $0xc] sm:$0xf]
      %v208 = vld [vmem:[%s1 + $0x10] sm:$0xf]
      %v209 = vld [vmem:[%s1 + $0x14] sm:$0xf]
      %v210 = vld [vmem:[%s1 + $0x18] sm:$0xf]
      %v211 = vld [vmem:[%s1 + $0x1c] sm:$0xf]
      %v217 = vunpack.c.l.b16 %v199
      %v218 = vunpack.c.l.b16 %v200
      %v219 = vunpack.c.l.b16 %v201
      %v220 = vunpack.c.l.b16 %v202
      %v221 = vunpack.c.l.b16 %v203
      %v222 = vpack.c.b16 %v218, %v217
      %v223 = vpack.c.b16 %v220, %v219
      %v224 = vpack.c.b16 %v221, %v221
      %v233 = vunpack.c.l.b16 %v204
      %v234 = vunpack.c.l.b16 %v205
      %v235 = vunpack.c.l.b16 %v206
      %v236 = vunpack.c.l.b16 %v207
      %v237 = vunpack.c.l.b16 %v208
      %v238 = vunpack.c.l.b16 %v209
      %v239 = vunpack.c.l.b16 %v210
      %v240 = vunpack.c.l.b16 %v211
      %v241 = vpack.c.b16 %v234, %v233
      %v242 = vpack.c.b16 %v236, %v235
      %v243 = vpack.c.b16 %v238, %v237
      %v244 = vpack.c.b16 %v240, %v239
      %vm249 = vcmask 523264
      %v251 = vsel %vm249, %v222, 0
      %v254 = vsel %vm249, %v223, 0
      %v257 = vsel %vm249, %v224, 0
      %259 = vmatprep.subr.bf16.mxu0 0
      %260 = vmatpush1.bf16.msra.mxu0 0
      %261 = vmatprep.subr.bf16.mxu0 0
      %262 = vmatpush1.bf16.msra.mxu0 0
      %263 = vmatprep.subr.bf16.mxu0 0
      %264 = vmatpush1.bf16.msra.mxu0 0
      %265 = vmatprep.subr.bf16.mxu0 0
      %266 = vmatpush1.bf16.msra.mxu0 0
      %267 = vmatprep.subr.bf16.mxu0 0
      %268 = vmatpush1.bf16.msra.mxu0 %v244
      %269 = vmatprep.subr.bf16.mxu0 0
      %270 = vmatpush1.bf16.msra.mxu0 %v243
      %271 = vmatprep.subr.bf16.mxu0 0
      %272 = vmatpush1.bf16.msra.mxu0 %v242
      %273 = vmatprep.subr.bf16.mxu0 0
      %274 = vmatpush1.bf16.msra.mxu0 %v241
      %275 = vmatprep.subr.bf16.mxu0 0
      %276 = vmatpush2.bf16.msra.mxu0 0
      %277 = vmatprep.subr.bf16.mxu0 0
      %278 = vmatpush2.bf16.msra.mxu0 0
      %279 = vmatprep.subr.bf16.mxu0 0
      %280 = vmatpush2.bf16.msra.mxu0 0
      %281 = vmatprep.subr.bf16.mxu0 0
      %282 = vmatpush2.bf16.msra.mxu0 0
      %283 = vmatprep.subr.bf16.mxu0 0
      %284 = vmatpush2.bf16.msra.mxu0 0
      %285 = vmatprep.subr.bf16.mxu0 0
      %286 = vmatpush2.bf16.msra.mxu0 0
      %287 = vmatprep.subr.bf16.mxu0 0
      %288 = vmatpush2.bf16.msra.mxu0 0
      %289 = vmatprep.subr.bf16.mxu0 0
      %290 = vmatpush2.bf16.msra.mxu0 0
      %291 = vmatprep.mubr.bf16.mxu0 0
      %292 = vmatmul.mubr.bf16.gmra.mxu0 %v251
      %v293 = vpop.f32.mrf.mxu0
      %v294 = vadd.f32 0.0, %v293
      %v295 = vpop.f32.mrf.mxu0
      %v296 = vpop.f32.mrf.mxu0
      %v297 = vadd.f32 0.0, %v296
      %v298 = vpop.f32.mrf.mxu0
      %299 = vmatprep.mubr.bf16.mxu0 0
      %300 = vmatmul.mubr.bf16.gmra.mxu0 %v254
      %v301 = vpop.f32.mrf.mxu0
      %v302 = vadd.f32 0.0, %v301
      %v303 = vpop.f32.mrf.mxu0
      %v304 = vpop.f32.mrf.mxu0
      %v305 = vadd.f32 0.0, %v304
      %v306 = vpop.f32.mrf.mxu0
      %307 = vmatprep.mubr.bf16.mxu0 0
      %308 = vmatmul.mubr.bf16.gmra.mxu0 %v257
      %v309 = vpop.f32.mrf.mxu0
      %v310 = vadd.f32 0.0, %v309
      %v311 = vpop.f32.mrf.mxu0
      %v312 = vpop.f32.mrf.mxu0
      %v313 = vpop.f32.mrf.mxu0
      %314 = vdwg.mxu0
      %v315 = vld [vmem:[%s2] sm:$0x1]
      %v316 = vld [vmem:[%s3] sm:$0x1]
      %vm317 = vcmask 261120
      %v318 = vsel %vm317, %v294, 0.0
      %319 = vadd.xlane.f32.xlu0 %v318
      %v320 = vpop.xlane.xlu0 %319
      %v321 = vsel %vm317, %v297, 0.0
      %322 = vadd.xlane.f32.xlu0 %v321
      %v323 = vpop.xlane.xlu0 %322
      %v324 = vsel %vm317, %v302, 0.0
      %325 = vadd.xlane.f32.xlu0 %v324
      %v326 = vpop.xlane.xlu0 %325
      %v327 = vsel %vm317, %v305, 0.0
      %328 = vadd.xlane.f32.xlu0 %v327
      %v329 = vpop.xlane.xlu0 %328
      %vm330 = vcmask 260096
      %v331 = vsel %vm330, %v310, 0.0
      %332 = vadd.xlane.f32.xlu0 %v331
      %v333 = vpop.xlane.xlu0 %332
      %v334 = vrcp.pop 32.0
      %v335 = vmul.f32 %v320, %v334
      %v336 = vmul.f32 %v323, %v334
      %v337 = vmul.f32 %v326, %v334
      %v338 = vmul.f32 %v329, %v334
      %v339 = vmul.f32 %v333, %v334
      %v340 = vsub.f32 %v294, %v335
      %v341 = vsub.f32 %v297, %v336
      %v342 = vsub.f32 %v302, %v337
      %v343 = vsub.f32 %v305, %v338
      %v344 = vsub.f32 %v310, %v339
      %v345 = vmul.f32 %v340, %v340
      %v346 = vmul.f32 %v341, %v341
      %v347 = vmul.f32 %v342, %v342
      %v348 = vmul.f32 %v343, %v343
      %v349 = vmul.f32 %v344, %v344
      %v350 = vsel %vm317, %v345, 0.0
      %351 = vadd.xlane.f32.xlu0 %v350
      %v352 = vpop.xlane.xlu0 %351
      %v353 = vsel %vm317, %v346, 0.0
      %354 = vadd.xlane.f32.xlu0 %v353
      %v355 = vpop.xlane.xlu0 %354
      %v356 = vsel %vm317, %v347, 0.0
      %357 = vadd.xlane.f32.xlu0 %v356
      %v358 = vpop.xlane.xlu0 %357
      %v359 = vsel %vm317, %v348, 0.0
      %360 = vadd.xlane.f32.xlu0 %v359
      %v361 = vpop.xlane.xlu0 %360
      %v362 = vsel %vm330, %v349, 0.0
      %363 = vadd.xlane.f32.xlu0 %v362
      %v364 = vpop.xlane.xlu0 %363
      %v365 = vmul.f32 %v352, %v334
      %v366 = vmul.f32 %v355, %v334
      %v367 = vmul.f32 %v358, %v334
      %v368 = vmul.f32 %v361, %v334
      %v369 = vmul.f32 %v364, %v334
      %v370 = vadd.f32 %v365, 1e-05
      %v371 = vadd.f32 %v366, 1e-05
      %v372 = vadd.f32 %v367, 1e-05
      %v373 = vadd.f32 %v368, 1e-05
      %v374 = vadd.f32 %v369, 1e-05
      %v375 = vrsqrt.pop %v370
      %v376 = vrsqrt.pop %v371
      %v377 = vrsqrt.pop %v372
      %v378 = vrsqrt.pop %v373
      %v379 = vrsqrt.pop %v374
      %v380 = vmul.f32 %v340, %v375
      %v381 = vmul.f32 %v341, %v376
      %v382 = vmul.f32 %v342, %v377
      %v383 = vmul.f32 %v343, %v378
      %v384 = vmul.f32 %v344, %v379
      %v386 = vlaneseq
      %v387 = vshrl.u32 %v386, 7
      %v388 = vsub.s32 0, %v387
      %v389 = vrot.slane %v315, %v388
      %v391 = vmul.f32 %v380, %v389
      %v392 = vmul.f32 %v381, %v389
      %v393 = vmul.f32 %v382, %v389
      %v394 = vmul.f32 %v383, %v389
      %v395 = vmul.f32 %v384, %v389
      %v397 = vlaneseq
      %v398 = vshrl.u32 %v397, 7
      %v399 = vsub.s32 0, %v398
      %v400 = vrot.slane %v316, %v399
      %v402 = vadd.f32 %v391, %v400
      %v403 = vadd.f32 %v392, %v400
      %v404 = vadd.f32 %v393, %v400
      %v405 = vadd.f32 %v394, %v400
      %v406 = vadd.f32 %v395, %v400
      %v407 = vmul.f32 %v402, 0.5
      %v408 = vmul.f32 %v403, 0.5
      %v409 = vmul.f32 %v404, 0.5
      %v410 = vmul.f32 %v405, 0.5
      %v411 = vmul.f32 %v406, 0.5
      %v412 = vmul.f32 %v402, 0.044715
      %v413 = vmul.f32 %v403, 0.044715
      %v414 = vmul.f32 %v404, 0.044715
      %v415 = vmul.f32 %v405, 0.044715
      %v416 = vmul.f32 %v406, 0.044715
      %v417 = vmul.f32 %v412, %v402
      %v418 = vmul.f32 %v413, %v403
      %v419 = vmul.f32 %v414, %v404
      %v420 = vmul.f32 %v415, %v405
      %v421 = vmul.f32 %v416, %v406
      %v422 = vmul.f32 %v417, %v402
      %v423 = vmul.f32 %v418, %v403
      %v424 = vmul.f32 %v419, %v404
      %v425 = vmul.f32 %v420, %v405
      %v426 = vmul.f32 %v421, %v406
      %v427 = vadd.f32 %v402, %v422
      %v428 = vadd.f32 %v403, %v423
      %v429 = vadd.f32 %v404, %v424
      %v430 = vadd.f32 %v405, %v425
      %v431 = vadd.f32 %v406, %v426
      %v432 = vmul.f32 %v427, 0.7978846
      %v433 = vmul.f32 %v428, 0.7978846
      %v434 = vmul.f32 %v429, 0.7978846
      %v435 = vmul.f32 %v430, 0.7978846
      %v436 = vmul.f32 %v431, 0.7978846
      %v437 = vtanh.pop %v432
      %v438 = vtanh.pop %v433
      %v439 = vtanh.pop %v434
      %v440 = vtanh.pop %v435
      %v441 = vtanh.pop %v436
      %v442 = vadd.f32 %v437, 1.0
      %v443 = vadd.f32 %v438, 1.0
      %v444 = vadd.f32 %v439, 1.0
      %v445 = vadd.f32 %v440, 1.0
      %v446 = vadd.f32 %v441, 1.0
      %v447 = vmul.f32 %v407, %v442
      %v448 = vmul.f32 %v408, %v443
      %v449 = vmul.f32 %v409, %v444
      %v450 = vmul.f32 %v410, %v445
      %v451 = vmul.f32 %v411, %v446
      %v452 = vpack.c.bf16 %v448, %v447
      %v453 = vpack.c.bf16 %v450, %v449
      %v454 = vpack.c.bf16 %v451, %v451
      %v458 = vunpack.c.l.b16 %v452
      %v459 = vunpack.c.h.b16 %v452
      %v460 = vunpack.c.l.b16 %v453
      %v461 = vunpack.c.h.b16 %v453
      %v462 = vunpack.c.l.b16 %v454
      %v463 = vpack.c.b16 %v458, %v458
      %v464 = vpack.c.b16 %v459, %v459
      %v465 = vpack.c.b16 %v460, %v460
      %v466 = vpack.c.b16 %v461, %v461
      %v467 = vpack.c.b16 %v462, %v462
      %vm473 = vcmask 257024
      %474 = vst.msk [vmem:[%s197] sm:$0xf] %vm473, %v463
      %475 = vst.msk [vmem:[%s197 + $0x4] sm:$0xf] %vm473, %v464
      %476 = vst.msk [vmem:[%s197 + $0x8] sm:$0xf] %vm473, %v465
      %477 = vst.msk [vmem:[%s197 + $0xc] sm:$0xf] %vm473, %v466
      %vm478 = vcmask 257024
      %vm479 = vsmask.f32 3328
      %vm480 = vmand %vm478, %vm479
      %v481 = vld [vmem:[%s197 + $0x10] sm:$0xf]
      %v482 = vsel %vm480, %v467, %v481
      %483 = vst [vmem:[%s197 + $0x10] sm:$0xf] %v482
      %p484 = scmp.lt.s32.totalorder %s15, 1
      %s485 = scalar_select %p484, %s15, 1
      %s486 = smul.addr %s485, 5
      %s487 = smul.addr %s486, 4
      %s488 = scalar_lea.vmem %s4, %s487
      // Predicated region
      $region37: #{emotion2vec_forward.7} parent=35 // pred_check
        %p489 = pneg %p122
      $region38: #{emotion2vec_forward.7} parent=35 // pred_check_branch
        %491 = sbr.rel (%p489) target = $region40
      $region39: #{emotion2vec_forward.7} parent=35 // pred_region
        _
      $region40: #{emotion2vec_forward.7} parent=35 // pred_fallthru
        _
    $region36: #{emotion2vec_forward.7} parent=5 // pred_fallthru
      _
    %p492 = scmp.le.s32.totalorder 2, %s10
    // Predicated region
    $region41: #{emotion2vec_forward.7} parent=5 // pred_check
      %p493 = pneg %p492
    $region42: #{emotion2vec_forward.7} parent=5 // pred_check_branch
      %495 = sbr.rel (%p493) target = $region44
    $region43: #{emotion2vec_forward.7} parent=5 // pred_region
      %s496 = ssub.s32 %s10, 2
      // Predicated region
      $region45: #{emotion2vec_forward.7} parent=43 // pred_check
        %p497 = pneg %p128
      $region46: #{emotion2vec_forward.7} parent=43 // pred_check_branch
        %499 = sbr.rel (%p497) target = $region48
      $region47: #{emotion2vec_forward.7} parent=43 // pred_region
        %p500 = scmp.lt.s32.totalorder %s16, 1
        %s501 = scalar_select %p500, %s16, 1
        %s502 = smul.addr %s501, 5
        %s503 = smul.addr %s502, 4
        %s504 = scalar_lea.vmem %s4, %s503
      $region48: #{emotion2vec_forward.7} parent=43 // pred_fallthru
        _
    $region44: #{emotion2vec_forward.7} parent=5 // pred_fallthru
      _
  $region6: #{emotion2vec_forward.7} parent=0 // loop_footer
    %s14 = sadd.s32 1, %s10
  $region7: #{emotion2vec_forward.7} parent=0 // loop_footer_branch
    %9 = sbr.rel target = $region3
  $region8: #{emotion2vec_forward.7} parent=0 // loop_exit
    _

// kernel: emotion2vec_forward.5
$region0: #{emotion2vec_forward.5}
  #allocation0 [shape = 'u32[]', space=smem, size = 0x4, offset = 0x4, fixed_abs, tag = 'smem constant byte address 0x4 - core index']
  #allocation1 [shape = 'u32[144,128]{1,0:T(1,128)}', space=vmem, size = 0x12000, scoped, tag = 'internal scratch']
  %s0 = inlined_call_operand.vmem [shape: f32[2,160,5], index: 0, kind: input, shape index: {}]
  %s1 = inlined_call_operand.vmem [shape: bf16[10,32], index: 1, kind: input, shape index: {}]
  %s2 = inlined_call_operand.vmem [shape: f32[1,32], index: 2, kind: input, shape index: {}]
  %s3 = inlined_call_operand.vmem [shape: f32[1,32], index: 3, kind: input, shape index: {}]
  %s4 = inlined_call_operand.vmem [shape: bf16[2,159,32], index: 4, kind: output, shape index: {}]
  %s5 = sld [smem:[#allocation0]]
  $region49: #{emotion2vec_forward.5} parent=0
    _
  %s7 = ssub.s32 1, %s5
  %s8 = scalar_select 0, %s7, %s5
  loop: start=0, step=1, limit=4
  $region2: #{emotion2vec_forward.5} parent=0 // loop_pre_header
    _
  $region3: #{emotion2vec_forward.5} parent=0 // loop_header
    %s10 = sphi 0, %s14
    %p11 = scmp.ge.s32.totalorder %s10, 4
    %s20 = sphi 0, %s22
    %s23 = sphi 0, %s20
    %s24 = sphi 0, %s23
    %s40 = sphi 0, %s24
    %s44 = sphi 0, %s44
    %s46 = sphi 0, %s44
    %s47 = sphi 0, %s46
    %s61 = sphi 0, %s47
    %s65 = sphi 0, %s65
    %s67 = sphi 0, %s65
    %s68 = sphi 0, %s67
    %s82 = sphi 0, %s68
    %s86 = sphi 0, %s86
    %s88 = sphi 0, %s86
    %s89 = sphi 0, %s88
    %s103 = sphi 0, %s89
    %s109 = sphi 0, %s111
    %s112 = sphi 0, %s109
    %s113 = sphi 0, %s112
    %s129 = sphi 0, %s113
  $region4: #{emotion2vec_forward.5} parent=0 // loop_header_branch
    %13 = sbr.rel (%p11) target = $region8
  $region5: #{emotion2vec_forward.5} parent=0 // loop_body
    %s15 = ssub.s32 %s10, 1
    %s16 = ssub.s32 %s10, 2
    %s17 = sadd.s32 %s10, 1
    %s18 = ssub.s32 %s10, %s17
    %p19 = scmp.eq.s32.totalorder %s18, 0
    %s21 = sadd.s32 %s20, 1
    %s22 = scalar_select %p19, %s20, %s21
    %p25 = pneg %p19
    %p26 = scmp.eq.s32.totalorder %s10, 1
    %p27 = por %p25, %p26
    %p28 = scmp.ne.s32.totalorder %s20, %s23
    %p29 = scmp.eq.s32.totalorder %s10, 0
    %p30 = por %p28, %p29
    %p31 = scmp.ne.s32.totalorder %s20, %s23
    %p32 = scmp.eq.s32.totalorder %s15, 1
    %p33 = por %p31, %p32
    %p34 = scmp.ne.s32.totalorder %s23, %s24
    %p35 = scmp.eq.s32.totalorder %s15, 0
    %p36 = por %p34, %p35
    %p37 = scmp.ne.s32.totalorder %s23, %s24
    %p38 = scmp.eq.s32.totalorder %s16, 1
    %p39 = por %p37, %p38
    %p41 = scmp.ne.s32.totalorder %s24, %s40
    %p42 = scmp.eq.s32.totalorder %s16, 0
    %p43 = por %p41, %p42
    %s45 = sadd.s32 %s44, 1
    %p48 = scmp.eq.s32.totalorder %s10, 1
    %p49 = scmp.ne.s32.totalorder %s44, %s46
    %p50 = scmp.eq.s32.totalorder %s10, 0
    %p51 = por %p49, %p50
    %p52 = scmp.ne.s32.totalorder %s44, %s46
    %p53 = scmp.eq.s32.totalorder %s15, 1
    %p54 = por %p52, %p53
    %p55 = scmp.ne.s32.totalorder %s46, %s47
    %p56 = scmp.eq.s32.totalorder %s15, 0
    %p57 = por %p55, %p56
    %p58 = scmp.ne.s32.totalorder %s46, %s47
    %p59 = scmp.eq.s32.totalorder %s16, 1
    %p60 = por %p58, %p59
    %p62 = scmp.ne.s32.totalorder %s47, %s61
    %p63 = scmp.eq.s32.totalorder %s16, 0
    %p64 = por %p62, %p63
    %s66 = sadd.s32 %s65, 1
    %p69 = scmp.eq.s32.totalorder %s10, 1
    %p70 = scmp.ne.s32.totalorder %s65, %s67
    %p71 = scmp.eq.s32.totalorder %s10, 0
    %p72 = por %p70, %p71
    %p73 = scmp.ne.s32.totalorder %s65, %s67
    %p74 = scmp.eq.s32.totalorder %s15, 1
    %p75 = por %p73, %p74
    %p76 = scmp.ne.s32.totalorder %s67, %s68
    %p77 = scmp.eq.s32.totalorder %s15, 0
    %p78 = por %p76, %p77
    %p79 = scmp.ne.s32.totalorder %s67, %s68
    %p80 = scmp.eq.s32.totalorder %s16, 1
    %p81 = por %p79, %p80
    %p83 = scmp.ne.s32.totalorder %s68, %s82
    %p84 = scmp.eq.s32.totalorder %s16, 0
    %p85 = por %p83, %p84
    %s87 = sadd.s32 %s86, 1
    %p90 = scmp.eq.s32.totalorder %s10, 1
    %p91 = scmp.ne.s32.totalorder %s86, %s88
    %p92 = scmp.eq.s32.totalorder %s10, 0
    %p93 = por %p91, %p92
    %p94 = scmp.ne.s32.totalorder %s86, %s88
    %p95 = scmp.eq.s32.totalorder %s15, 1
    %p96 = por %p94, %p95
    %p97 = scmp.ne.s32.totalorder %s88, %s89
    %p98 = scmp.eq.s32.totalorder %s15, 0
    %p99 = por %p97, %p98
    %p100 = scmp.ne.s32.totalorder %s88, %s89
    %p101 = scmp.eq.s32.totalorder %s16, 1
    %p102 = por %p100, %p101
    %p104 = scmp.ne.s32.totalorder %s89, %s103
    %p105 = scmp.eq.s32.totalorder %s16, 0
    %p106 = por %p104, %p105
    %s107 = ssub.s32 %s10, %s17
    %p108 = scmp.eq.s32.totalorder %s107, 0
    %s110 = sadd.s32 %s109, 1
    %s111 = scalar_select %p108, %s109, %s110
    %p114 = pneg %p108
    %p115 = scmp.eq.s32.totalorder %s10, 1
    %p116 = por %p114, %p115
    %p117 = scmp.ne.s32.totalorder %s109, %s112
    %p118 = scmp.eq.s32.totalorder %s10, 0
    %p119 = por %p117, %p118
    %p120 = scmp.ne.s32.totalorder %s109, %s112
    %p121 = scmp.eq.s32.totalorder %s15, 1
    %p122 = por %p120, %p121
    %p123 = scmp.ne.s32.totalorder %s112, %s113
    %p124 = scmp.eq.s32.totalorder %s15, 0
    %p125 = por %p123, %p124
    %p126 = scmp.ne.s32.totalorder %s112, %s113
    %p127 = scmp.eq.s32.totalorder %s16, 1
    %p128 = por %p126, %p127
    %p130 = scmp.ne.s32.totalorder %s113, %s129
    %p131 = scmp.eq.s32.totalorder %s16, 0
    %p132 = por %p130, %p131
    %p133 = scmp.le.s32.totalorder 1, %s10
    %p134 = scmp.lt.s32.totalorder %s10, 3
    %p135 = pnand %p133, %p134
    %p136 = pneg %p135
    // Predicated region
    $region9: #{emotion2vec_forward.5} parent=5 // pred_check
      _
    $region10: #{emotion2vec_forward.5} parent=5 // pred_check_branch
      %138 = sbr.rel (%p135) target = $region12
    $region11: #{emotion2vec_forward.5} parent=5 // pred_region
      %s139 = ssub.s32 %s10, 1
      // Predicated region
      $region13: #{emotion2vec_forward.5} parent=11 // pred_check
        %p140 = pneg %p57
      $region14: #{emotion2vec_forward.5} parent=11 // pred_check_branch
        %142 = sbr.rel (%p140) target = $region16
      $region15: #{emotion2vec_forward.5} parent=11 // pred_region
        _
      $region16: #{emotion2vec_forward.5} parent=11 // pred_fallthru
        _
      // Predicated region
      $region17: #{emotion2vec_forward.5} parent=11 // pred_check
        %p143 = pneg %p78
      $region18: #{emotion2vec_forward.5} parent=11 // pred_check_branch
        %145 = sbr.rel (%p143) target = $region20
      $region19: #{emotion2vec_forward.5} parent=11 // pred_region
        _
      $region20: #{emotion2vec_forward.5} parent=11 // pred_fallthru
        _
      // Predicated region
      $region21: #{emotion2vec_forward.5} parent=11 // pred_check
        %p146 = pneg %p99
      $region22: #{emotion2vec_forward.5} parent=11 // pred_check_branch
        %148 = sbr.rel (%p146) target = $region24
      $region23: #{emotion2vec_forward.5} parent=11 // pred_region
        _
      $region24: #{emotion2vec_forward.5} parent=11 // pred_fallthru
        _
    $region12: #{emotion2vec_forward.5} parent=5 // pred_fallthru
      _
    %p149 = scmp.lt.s32.totalorder %s10, 2
    // Predicated region
    $region25: #{emotion2vec_forward.5} parent=5 // pred_check
      %p150 = pneg %p149
    $region26: #{emotion2vec_forward.5} parent=5 // pred_check_branch
      %152 = sbr.rel (%p150) target = $region28
    $region27: #{emotion2vec_forward.5} parent=5 // pred_region
      // Predicated region
      $region29: #{emotion2vec_forward.5} parent=27 // pred_check
        %p153 = pneg %p30
      $region30: #{emotion2vec_forward.5} parent=27 // pred_check_branch
        %155 = sbr.rel (%p153) target = $region32
      $region31: #{emotion2vec_forward.5} parent=27 // pred_region
        %p156 = scmp.lt.s32.totalorder %s10, 1
        %s157 = scalar_select %p156, %s10, 1
        %s158 = smul.addr %s157, 20
        %s159 = smul.addr %s158, 8
        %s160 = scalar_lea.vmem %s0, %s159
      $region32: #{emotion2vec_forward.5} parent=27 // pred_fallthru
        _
    $region28: #{emotion2vec_forward.5} parent=5 // pred_fallthru
      _
    %p161 = scmp.le.s32.totalorder 1, %s10
    %p162 = scmp.lt.s32.totalorder %s10, 3
    %p163 = pnand %p161, %p162
    %p164 = pneg %p163
    // Predicated region
    $region33: #{emotion2vec_forward.5} parent=5 // pred_check
      _
    $region34: #{emotion2vec_forward.5} parent=5 // pred_check_branch
      %166 = sbr.rel (%p163) target = $region36
    $region35: #{emotion2vec_forward.5} parent=5 // pred_region
      %s167 = ssub.s32 %s10, 1
      %p168 = scmp.lt.s32.totalorder %s15, 1
      %s169 = scalar_select %p168, %s15, 1
      %s170 = smul.addr %s169, 20
      %s171 = smul.addr %s170, 8
      %s172 = scalar_lea.vmem %s0, %s171
      %p173 = pneg %p36
      %p174 = pneg %p33
      %p175 = pneg %p57
      %p176 = pneg %p54
      %p177 = pneg %p78
      %p178 = pneg %p75
      %p179 = pneg %p99
      %p180 = pneg %p96
      %p181 = pneg %p125
      %p182 = pneg %p122
      %p183 = scmp.lt.s32.totalorder %s15, 1
      %s184 = scalar_select %p183, %s15, 1
      %s185 = smul.addr %s184, 20
      %s186 = smul.addr %s185, 4
      %s187 = scalar_lea.vmem %s4, %s186
      %p188 = scmp.lt.s32.totalorder %s15, 1
      %s189 = scalar_select %p188, %s15, 1
      %s190 = smul.addr %s189, 20
      %s191 = smul.addr %s190, 8
      %s192 = scalar_lea.vmem %s0, %s191
      %p193 = scmp.lt.s32.totalorder %s15, 1
      %s194 = scalar_select %p193, %s15, 1
      %s195 = smul.addr %s194, 20
      %s196 = smul.addr %s195, 4
      %s197 = scalar_lea.vmem %s4, %s196
      %v199 = vld [vmem:[%s192] sm:$0xff]
      %v200 = vld [vmem:[%s192 + $0x8] sm:$0xff]
      %v201 = vld [vmem:[%s192 + $0x10] sm:$0xff]
      %v202 = vld [vmem:[%s192 + $0x18] sm:$0xff]
      %v203 = vld [vmem:[%s192 + $0x20] sm:$0xff]
      %v204 = vld [vmem:[%s192 + $0x28] sm:$0xff]
      %v205 = vld [vmem:[%s192 + $0x30] sm:$0xff]
      %v206 = vld [vmem:[%s192 + $0x38] sm:$0xff]
      %v207 = vld [vmem:[%s192 + $0x40] sm:$0xff]
      %v208 = vld [vmem:[%s192 + $0x48] sm:$0xff]
      %v209 = vld [vmem:[%s192 + $0x50] sm:$0xff]
      %v210 = vld [vmem:[%s192 + $0x58] sm:$0xff]
      %v211 = vld [vmem:[%s192 + $0x60] sm:$0xff]
      %v212 = vld [vmem:[%s192 + $0x68] sm:$0xff]
      %v213 = vld [vmem:[%s192 + $0x70] sm:$0xff]
      %v214 = vld [vmem:[%s192 + $0x78] sm:$0xff]
      %v215 = vld [vmem:[%s192 + $0x80] sm:$0xff]
      %v216 = vld [vmem:[%s192 + $0x88] sm:$0xff]
      %v217 = vld [vmem:[%s192 + $0x90] sm:$0xff]
      %v218 = vld [vmem:[%s192 + $0x98] sm:$0xff]
      %vm239 = vcmask 1046528
      %v240 = vrot.slane %v199, 1
      %v241 = vrot.slane %v200, 1
      %v242 = vsel %vm239, %v240, %v241
      %v243 = vrot.slane %v201, 1
      %v244 = vsel %vm239, %v241, %v243
      %v245 = vrot.slane %v202, 1
      %v246 = vsel %vm239, %v243, %v245
      %v247 = vrot.slane %v203, 1
      %v248 = vsel %vm239, %v245, %v247
      %v249 = vrot.slane %v204, 1
      %v250 = vsel %vm239, %v247, %v249
      %v251 = vrot.slane %v205, 1
      %v252 = vsel %vm239, %v249, %v251
      %v253 = vrot.slane %v206, 1
      %v254 = vsel %vm239, %v251, %v253
      %v255 = vrot.slane %v207, 1
      %v256 = vsel %vm239, %v253, %v255
      %v257 = vrot.slane %v208, 1
      %v258 = vsel %vm239, %v255, %v257
      %v259 = vrot.slane %v209, 1
      %v260 = vsel %vm239, %v257, %v259
      %v261 = vrot.slane %v210, 1
      %v262 = vsel %vm239, %v259, %v261
      %v263 = vrot.slane %v211, 1
      %v264 = vsel %vm239, %v261, %v263
      %v265 = vrot.slane %v212, 1
      %v266 = vsel %vm239, %v263, %v265
      %v267 = vrot.slane %v213, 1
      %v268 = vsel %vm239, %v265, %v267
      %v269 = vrot.slane %v214, 1
      %v270 = vsel %vm239, %v267, %v269
      %v271 = vrot.slane %v215, 1
      %v272 = vsel %vm239, %v269, %v271
      %v273 = vrot.slane %v216, 1
      %v274 = vsel %vm239, %v271, %v273
      %v275 = vrot.slane %v217, 1
      %v276 = vsel %vm239, %v273, %v275
      %v277 = vrot.slane %v218, 1
      %v278 = vsel %vm239, %v275, %v277
      %279 = vrot.lane.b32.xlu0 %v242, 5
      %v280 = vpop.permute.xlu0 %279
      %281 = vrot.lane.b32.xlu0 %v244, 5
      %v282 = vpop.permute.xlu0 %281
      %283 = vrot.lane.b32.xlu0 %v246, 5
      %v284 = vpop.permute.xlu0 %283
      %285 = vrot.lane.b32.xlu0 %v248, 5
      %v286 = vpop.permute.xlu0 %285
      %287 = vrot.lane.b32.xlu0 %v250, 5
      %v288 = vpop.permute.xlu0 %287
      %289 = vrot.lane.b32.xlu0 %v252, 5
      %v290 = vpop.permute.xlu0 %289
      %291 = vrot.lane.b32.xlu0 %v254, 5
      %v292 = vpop.permute.xlu0 %291
      %293 = vrot.lane.b32.xlu0 %v256, 5
      %v294 = vpop.permute.xlu0 %293
      %295 = vrot.lane.b32.xlu0 %v258, 5
      %v296 = vpop.permute.xlu0 %295
      %297 = vrot.lane.b32.xlu0 %v260, 5
      %v298 = vpop.permute.xlu0 %297
      %299 = vrot.lane.b32.xlu0 %v262, 5
      %v300 = vpop.permute.xlu0 %299
      %301 = vrot.lane.b32.xlu0 %v264, 5
      %v302 = vpop.permute.xlu0 %301
      %303 = vrot.lane.b32.xlu0 %v266, 5
      %v304 = vpop.permute.xlu0 %303
      %305 = vrot.lane.b32.xlu0 %v268, 5
      %v306 = vpop.permute.xlu0 %305
      %307 = vrot.lane.b32.xlu0 %v270, 5
      %v308 = vpop.permute.xlu0 %307
      %309 = vrot.lane.b32.xlu0 %v272, 5
      %v310 = vpop.permute.xlu0 %309
      %311 = vrot.lane.b32.xlu0 %v274, 5
      %v312 = vpop.permute.xlu0 %311
      %313 = vrot.lane.b32.xlu0 %v276, 5
      %v314 = vpop.permute.xlu0 %313
      %315 = vrot.lane.b32.xlu0 %v278, 5
      %v316 = vpop.permute.xlu0 %315
      %317 = vrot.lane.b32.xlu0 %v277, 5
      %v318 = vpop.permute.xlu0 %317
      %vm339 = vcmask 39936
      %v340 = vsel %vm339, %v199, %v280
      %v341 = vsel %vm339, %v200, %v282
      %v342 = vsel %vm339, %v201, %v284
      %v343 = vsel %vm339, %v202, %v286
      %v344 = vsel %vm339, %v203, %v288
      %v345 = vsel %vm339, %v204, %v290
      %v346 = vsel %vm339, %v205, %v292
      %v347 = vsel %vm339, %v206, %v294
      %v348 = vsel %vm339, %v207, %v296
      %v349 = vsel %vm339, %v208, %v298
      %v350 = vsel %vm339, %v209, %v300
      %v351 = vsel %vm339, %v210, %v302
      %v352 = vsel %vm339, %v211, %v304
      %v353 = vsel %vm339, %v212, %v306
      %v354 = vsel %vm339, %v213, %v308
      %v355 = vsel %vm339, %v214, %v310
      %v356 = vsel %vm339, %v215, %v312
      %v357 = vsel %vm339, %v216, %v314
      %v358 = vsel %vm339, %v217, %v316
      %v359 = vsel %vm339, %v218, %v318
      %v360 = vpack.c.bf16 %v341, %v340
      %v361 = vpack.c.bf16 %v343, %v342
      %v362 = vpack.c.bf16 %v345, %v344
      %v363 = vpack.c.bf16 %v347, %v346
      %v364 = vpack.c.bf16 %v349, %v348
      %v365 = vpack.c.bf16 %v351, %v350
      %v366 = vpack.c.bf16 %v353, %v352
      %v367 = vpack.c.bf16 %v355, %v354
      %v368 = vpack.c.bf16 %v357, %v356
      %v369 = vpack.c.bf16 %v359, %v358
      %v370 = vld [vmem:[%s1] sm:$0xf]
      %v371 = vld [vmem:[%s1 + $0x4] sm:$0x1]
      %v374 = vunpack.c.l.b16 %v370
      %v375 = vunpack.c.l.b16 %v371
      %v376 = vpack.c.b16 %v375, %v374
      %vm377 = vcmask 80896
      %v379 = vsel %vm377, %v360, 0
      %v382 = vsel %vm377, %v361, 0
      %v385 = vsel %vm377, %v362, 0
      %v388 = vsel %vm377, %v363, 0
      %v391 = vsel %vm377, %v364, 0
      %v394 = vsel %vm377, %v365, 0
      %v397 = vsel %vm377, %v366, 0
      %v400 = vsel %vm377, %v367, 0
      %v403 = vsel %vm377, %v368, 0
      %v406 = vsel %vm377, %v369, 0
      %vm408 = vcmask 1044480
      %v410 = vsel %vm408, %v376, 0
      %412 = vmatprep.subr.bf16.mxu0 0
      %413 = vmatpush1.bf16.msra.mxu0 0
      %414 = vmatprep.subr.bf16.mxu0 0
      %415 = vmatpush1.bf16.msra.mxu0 0
      %416 = vmatprep.subr.bf16.mxu0 0
      %417 = vmatpush1.bf16.msra.mxu0 0
      %418 = vmatprep.subr.bf16.mxu0 0
      %419 = vmatpush1.bf16.msra.mxu0 0
      %420 = vmatprep.subr.bf16.mxu0 0
      %421 = vmatpush1.bf16.msra.mxu0 0
      %422 = vmatprep.subr.bf16.mxu0 0
      %423 = vmatpush1.bf16.msra.mxu0 0
      %424 = vmatprep.subr.bf16.mxu0 0
      %425 = vmatpush1.bf16.msra.mxu0 0
      %426 = vmatprep.subr.bf16.mxu0 0
      %427 = vmatpush1.bf16.msra.mxu0 %v410
      %428 = vmatprep.subr.bf16.mxu0 0
      %429 = vmatpush2.bf16.msra.mxu0 0
      %430 = vmatprep.subr.bf16.mxu0 0
      %431 = vmatpush2.bf16.msra.mxu0 0
      %432 = vmatprep.subr.bf16.mxu0 0
      %433 = vmatpush2.bf16.msra.mxu0 0
      %434 = vmatprep.subr.bf16.mxu0 0
      %435 = vmatpush2.bf16.msra.mxu0 0
      %436 = vmatprep.subr.bf16.mxu0 0
      %437 = vmatpush2.bf16.msra.mxu0 0
      %438 = vmatprep.subr.bf16.mxu0 0
      %439 = vmatpush2.bf16.msra.mxu0 0
      %440 = vmatprep.subr.bf16.mxu0 0
      %441 = vmatpush2.bf16.msra.mxu0 0
      %442 = vmatprep.subr.bf16.mxu0 0
      %443 = vmatpush2.bf16.msra.mxu0 0
      %444 = vmatprep.mubr.bf16.mxu0 0
      %445 = vmatmul.mubr.bf16.gmra.mxu0 %v379
      %v446 = vpop.f32.mrf.mxu0
      %v447 = vadd.f32 0.0, %v446
      %v448 = vpop.f32.mrf.mxu0
      %v449 = vpop.f32.mrf.mxu0
      %v450 = vadd.f32 0.0, %v449
      %v451 = vpop.f32.mrf.mxu0
      %452 = vmatprep.mubr.bf16.mxu0 0
      %453 = vmatmul.mubr.bf16.gmra.mxu0 %v382
      %v454 = vpop.f32.mrf.mxu0
      %v455 = vadd.f32 0.0, %v454
      %v456 = vpop.f32.mrf.mxu0
      %v457 = vpop.f32.mrf.mxu0
      %v458 = vadd.f32 0.0, %v457
      %v459 = vpop.f32.mrf.mxu0
      %460 = vmatprep.mubr.bf16.mxu0 0
      %461 = vmatmul.mubr.bf16.gmra.mxu0 %v385
      %v462 = vpop.f32.mrf.mxu0
      %v463 = vadd.f32 0.0, %v462
      %v464 = vpop.f32.mrf.mxu0
      %v465 = vpop.f32.mrf.mxu0
      %v466 = vadd.f32 0.0, %v465
      %v467 = vpop.f32.mrf.mxu0
      %468 = vmatprep.mubr.bf16.mxu0 0
      %469 = vmatmul.mubr.bf16.gmra.mxu0 %v388
      %v470 = vpop.f32.mrf.mxu0
      %v471 = vadd.f32 0.0, %v470
      %v472 = vpop.f32.mrf.mxu0
      %v473 = vpop.f32.mrf.mxu0
      %v474 = vadd.f32 0.0, %v473
      %v475 = vpop.f32.mrf.mxu0
      %476 = vmatprep.mubr.bf16.mxu0 0
      %477 = vmatmul.mubr.bf16.gmra.mxu0 %v391
      %v478 = vpop.f32.mrf.mxu0
      %v479 = vadd.f32 0.0, %v478
      %v480 = vpop.f32.mrf.mxu0
      %v481 = vpop.f32.mrf.mxu0
      %v482 = vadd.f32 0.0, %v481
      %v483 = vpop.f32.mrf.mxu0
      %484 = vmatprep.mubr.bf16.mxu0 0
      %485 = vmatmul.mubr.bf16.gmra.mxu0 %v394
      %v486 = vpop.f32.mrf.mxu0
      %v487 = vadd.f32 0.0, %v486
      %v488 = vpop.f32.mrf.mxu0
      %v489 = vpop.f32.mrf.mxu0
      %v490 = vadd.f32 0.0, %v489
      %v491 = vpop.f32.mrf.mxu0
      %492 = vmatprep.mubr.bf16.mxu0 0
      %493 = vmatmul.mubr.bf16.gmra.mxu0 %v397
      %v494 = vpop.f32.mrf.mxu0
      %v495 = vadd.f32 0.0, %v494
      %v496 = vpop.f32.mrf.mxu0
      %v497 = vpop.f32.mrf.mxu0
      %v498 = vadd.f32 0.0, %v497
      %v499 = vpop.f32.mrf.mxu0
      %500 = vmatprep.mubr.bf16.mxu0 0
      %501 = vmatmul.mubr.bf16.gmra.mxu0 %v400
      %v502 = vpop.f32.mrf.mxu0
      %v503 = vadd.f32 0.0, %v502
      %v504 = vpop.f32.mrf.mxu0
      %v505 = vpop.f32.mrf.mxu0
      %v506 = vadd.f32 0.0, %v505
      %v507 = vpop.f32.mrf.mxu0
      %508 = vmatprep.mubr.bf16.mxu0 0
      %509 = vmatmul.mubr.bf16.gmra.mxu0 %v403
      %v510 = vpop.f32.mrf.mxu0
      %v511 = vadd.f32 0.0, %v510
      %v512 = vpop.f32.mrf.mxu0
      %v513 = vpop.f32.mrf.mxu0
      %v514 = vadd.f32 0.0, %v513
      %v515 = vpop.f32.mrf.mxu0
      %516 = vmatprep.mubr.bf16.mxu0 0
      %517 = vmatmul.mubr.bf16.gmra.mxu0 %v406
      %v518 = vpop.f32.mrf.mxu0
      %v519 = vadd.f32 0.0, %v518
      %v520 = vpop.f32.mrf.mxu0
      %v521 = vpop.f32.mrf.mxu0
      %v522 = vadd.f32 0.0, %v521
      %v523 = vpop.f32.mrf.mxu0
      %524 = vdwg.mxu0
      %v525 = vld [vmem:[%s2] sm:$0x1]
      %v526 = vld [vmem:[%s3] sm:$0x1]
      %vm527 = vcmask 261120
      %v528 = vsel %vm527, %v447, 0.0
      %529 = vadd.xlane.f32.xlu0 %v528
      %v530 = vpop.xlane.xlu0 %529
      %v531 = vsel %vm527, %v450, 0.0
      %532 = vadd.xlane.f32.xlu0 %v531
      %v533 = vpop.xlane.xlu0 %532
      %v534 = vsel %vm527, %v455, 0.0
      %535 = vadd.xlane.f32.xlu0 %v534
      %v536 = vpop.xlane.xlu0 %535
      %v537 = vsel %vm527, %v458, 0.0
      %538 = vadd.xlane.f32.xlu0 %v537
      %v539 = vpop.xlane.xlu0 %538
      %v540 = vsel %vm527, %v463, 0.0
      %541 = vadd.xlane.f32.xlu0 %v540
      %v542 = vpop.xlane.xlu0 %541
      %v543 = vsel %vm527, %v466, 0.0
      %544 = vadd.xlane.f32.xlu0 %v543
      %v545 = vpop.xlane.xlu0 %544
      %v546 = vsel %vm527, %v471, 0.0
      %547 = vadd.xlane.f32.xlu0 %v546
      %v548 = vpop.xlane.xlu0 %547
      %v549 = vsel %vm527, %v474, 0.0
      %550 = vadd.xlane.f32.xlu0 %v549
      %v551 = vpop.xlane.xlu0 %550
      %v552 = vsel %vm527, %v479, 0.0
      %553 = vadd.xlane.f32.xlu0 %v552
      %v554 = vpop.xlane.xlu0 %553
      %v555 = vsel %vm527, %v482, 0.0
      %556 = vadd.xlane.f32.xlu0 %v555
      %v557 = vpop.xlane.xlu0 %556
      %v558 = vsel %vm527, %v487, 0.0
      %559 = vadd.xlane.f32.xlu0 %v558
      %v560 = vpop.xlane.xlu0 %559
      %v561 = vsel %vm527, %v490, 0.0
      %562 = vadd.xlane.f32.xlu0 %v561
      %v563 = vpop.xlane.xlu0 %562
      %v564 = vsel %vm527, %v495, 0.0
      %565 = vadd.xlane.f32.xlu0 %v564
      %v566 = vpop.xlane.xlu0 %565
      %v567 = vsel %vm527, %v498, 0.0
      %568 = vadd.xlane.f32.xlu0 %v567
      %v569 = vpop.xlane.xlu0 %568
      %v570 = vsel %vm527, %v503, 0.0
      %571 = vadd.xlane.f32.xlu0 %v570
      %v572 = vpop.xlane.xlu0 %571
      %v573 = vsel %vm527, %v506, 0.0
      %574 = vadd.xlane.f32.xlu0 %v573
      %v575 = vpop.xlane.xlu0 %574
      %v576 = vsel %vm527, %v511, 0.0
      %577 = vadd.xlane.f32.xlu0 %v576
      %v578 = vpop.xlane.xlu0 %577
      %v579 = vsel %vm527, %v514, 0.0
      %580 = vadd.xlane.f32.xlu0 %v579
      %v581 = vpop.xlane.xlu0 %580
      %v582 = vsel %vm527, %v519, 0.0
      %583 = vadd.xlane.f32.xlu0 %v582
      %v584 = vpop.xlane.xlu0 %583
      %vm585 = vcmask 260096
      %v586 = vsel %vm585, %v522, 0.0
      %587 = vadd.xlane.f32.xlu0 %v586
      %v588 = vpop.xlane.xlu0 %587
      %v589 = vrcp.pop 32.0
      %v590 = vmul.f32 %v530, %v589
      %v591 = vmul.f32 %v533, %v589
      %v592 = vmul.f32 %v536, %v589
      %v593 = vmul.f32 %v539, %v589
      %v594 = vmul.f32 %v542, %v589
      %v595 = vmul.f32 %v545, %v589
      %v596 = vmul.f32 %v548, %v589
      %v597 = vmul.f32 %v551, %v589
      %v598 = vmul.f32 %v554, %v589
      %v599 = vmul.f32 %v557, %v589
      %v600 = vmul.f32 %v560, %v589
      %v601 = vmul.f32 %v563, %v589
      %v602 = vmul.f32 %v566, %v589
      %v603 = vmul.f32 %v569, %v589
      %v604 = vmul.f32 %v572, %v589
      %v605 = vmul.f32 %v575, %v589
      %v606 = vmul.f32 %v578, %v589
      %v607 = vmul.f32 %v581, %v589
      %v608 = vmul.f32 %v584, %v589
      %v609 = vmul.f32 %v588, %v589
      %v610 = vsub.f32 %v447, %v590
      %v611 = vsub.f32 %v450, %v591
      %v612 = vsub.f32 %v455, %v592
      %v613 = vsub.f32 %v458, %v593
      %v614 = vsub.f32 %v463, %v594
      %v615 = vsub.f32 %v466, %v595
      %v616 = vsub.f32 %v471, %v596
      %v617 = vsub.f32 %v474, %v597
      %v618 = vsub.f32 %v479, %v598
      %v619 = vsub.f32 %v482, %v599
      %v620 = vsub.f32 %v487, %v600
      %v621 = vsub.f32 %v490, %v601
      %v622 = vsub.f32 %v495, %v602
      %v623 = vsub.f32 %v498, %v603
      %v624 = vsub.f32 %v503, %v604
      %v625 = vsub.f32 %v506, %v605
      %v626 = vsub.f32 %v511, %v606
      %v627 = vsub.f32 %v514, %v607
      %v628 = vsub.f32 %v519, %v608
      %v629 = vsub.f32 %v522, %v609
      %v630 = vmul.f32 %v610, %v610
      %v631 = vmul.f32 %v611, %v611
      %v632 = vmul.f32 %v612, %v612
      %v633 = vmul.f32 %v613, %v613
      %v634 = vmul.f32 %v614, %v614
      %v635 = vmul.f32 %v615, %v615
      %v636 = vmul.f32 %v616, %v616
      %v637 = vmul.f32 %v617, %v617
      %v638 = vmul.f32 %v618, %v618
      %v639 = vmul.f32 %v619, %v619
      %v640 = vmul.f32 %v620, %v620
      %v641 = vmul.f32 %v621, %v621
      %v642 = vmul.f32 %v622, %v622
      %v643 = vmul.f32 %v623, %v623
      %v644 = vmul.f32 %v624, %v624
      %v645 = vmul.f32 %v625, %v625
      %v646 = vmul.f32 %v626, %v626
      %v647 = vmul.f32 %v627, %v627
      %v648 = vmul.f32 %v628, %v628
      %v649 = vmul.f32 %v629, %v629
      %v650 = vsel %vm527, %v630, 0.0
      %651 = vadd.xlane.f32.xlu0 %v650
      %v652 = vpop.xlane.xlu0 %651
      %v653 = vsel %vm527, %v631, 0.0
      %654 = vadd.xlane.f32.xlu0 %v653
      %v655 = vpop.xlane.xlu0 %654
      %v656 = vsel %vm527, %v632, 0.0
      %657 = vadd.xlane.f32.xlu0 %v656
      %v658 = vpop.xlane.xlu0 %657
      %v659 = vsel %vm527, %v633, 0.0
      %660 = vadd.xlane.f32.xlu0 %v659
      %v661 = vpop.xlane.xlu0 %660
      %v662 = vsel %vm527, %v634, 0.0
      %663 = vadd.xlane.f32.xlu0 %v662
      %v664 = vpop.xlane.xlu0 %663
      %v665 = vsel %vm527, %v635, 0.0
      %666 = vadd.xlane.f32.xlu0 %v665
      %v667 = vpop.xlane.xlu0 %666
      %v668 = vsel %vm527, %v636, 0.0
      %669 = vadd.xlane.f32.xlu0 %v668
      %v670 = vpop.xlane.xlu0 %669
      %v671 = vsel %vm527, %v637, 0.0
      %672 = vadd.xlane.f32.xlu0 %v671
      %v673 = vpop.xlane.xlu0 %672
      %v674 = vsel %vm527, %v638, 0.0
      %675 = vadd.xlane.f32.xlu0 %v674
      %v676 = vpop.xlane.xlu0 %675
      %v677 = vsel %vm527, %v639, 0.0
      %678 = vadd.xlane.f32.xlu0 %v677
      %v679 = vpop.xlane.xlu0 %678
      %v680 = vsel %vm527, %v640, 0.0
      %681 = vadd.xlane.f32.xlu0 %v680
      %v682 = vpop.xlane.xlu0 %681
      %v683 = vsel %vm527, %v641, 0.0
      %684 = vadd.xlane.f32.xlu0 %v683
      %v685 = vpop.xlane.xlu0 %684
      %v686 = vsel %vm527, %v642, 0.0
      %687 = vadd.xlane.f32.xlu0 %v686
      %v688 = vpop.xlane.xlu0 %687
      %v689 = vsel %vm527, %v643, 0.0
      %690 = vadd.xlane.f32.xlu0 %v689
      %v691 = vpop.xlane.xlu0 %690
      %v692 = vsel %vm527, %v644, 0.0
      %693 = vadd.xlane.f32.xlu0 %v692
      %v694 = vpop.xlane.xlu0 %693
      %v695 = vsel %vm527, %v645, 0.0
      %696 = vadd.xlane.f32.xlu0 %v695
      %v697 = vpop.xlane.xlu0 %696
      %v698 = vsel %vm527, %v646, 0.0
      %699 = vadd.xlane.f32.xlu0 %v698
      %v700 = vpop.xlane.xlu0 %699
      %v701 = vsel %vm527, %v647, 0.0
      %702 = vadd.xlane.f32.xlu0 %v701
      %v703 = vpop.xlane.xlu0 %702
      %v704 = vsel %vm527, %v648, 0.0
      %705 = vadd.xlane.f32.xlu0 %v704
      %v706 = vpop.xlane.xlu0 %705
      %v707 = vsel %vm585, %v649, 0.0
      %708 = vadd.xlane.f32.xlu0 %v707
      %v709 = vpop.xlane.xlu0 %708
      %v710 = vmul.f32 %v652, %v589
      %v711 = vmul.f32 %v655, %v589
      %v712 = vmul.f32 %v658, %v589
      %v713 = vmul.f32 %v661, %v589
      %v714 = vmul.f32 %v664, %v589
      %v715 = vmul.f32 %v667, %v589
      %v716 = vmul.f32 %v670, %v589
      %v717 = vmul.f32 %v673, %v589
      %v718 = vmul.f32 %v676, %v589
      %v719 = vmul.f32 %v679, %v589
      %v720 = vmul.f32 %v682, %v589
      %v721 = vmul.f32 %v685, %v589
      %v722 = vmul.f32 %v688, %v589
      %v723 = vmul.f32 %v691, %v589
      %v724 = vmul.f32 %v694, %v589
      %v725 = vmul.f32 %v697, %v589
      %v726 = vmul.f32 %v700, %v589
      %v727 = vmul.f32 %v703, %v589
      %v728 = vmul.f32 %v706, %v589
      %v729 = vmul.f32 %v709, %v589
      %v730 = vadd.f32 %v710, 1e-05
      %v731 = vadd.f32 %v711, 1e-05
      %v732 = vadd.f32 %v712, 1e-05
      %v733 = vadd.f32 %v713, 1e-05
      %v734 = vadd.f32 %v714, 1e-05
      %v735 = vadd.f32 %v715, 1e-05
      %v736 = vadd.f32 %v716, 1e-05
      %v737 = vadd.f32 %v717, 1e-05
      %v738 = vadd.f32 %v718, 1e-05
      %v739 = vadd.f32 %v719, 1e-05
      %v740 = vadd.f32 %v720, 1e-05
      %v741 = vadd.f32 %v721, 1e-05
      %v742 = vadd.f32 %v722, 1e-05
      %v743 = vadd.f32 %v723, 1e-05
      %v744 = vadd.f32 %v724, 1e-05
      %v745 = vadd.f32 %v725, 1e-05
      %v746 = vadd.f32 %v726, 1e-05
      %v747 = vadd.f32 %v727, 1e-05
      %v748 = vadd.f32 %v728, 1e-05
      %v749 = vadd.f32 %v729, 1e-05
      %v750 = vrsqrt.pop %v730
      %v751 = vrsqrt.pop %v731
      %v752 = vrsqrt.pop %v732
      %v753 = vrsqrt.pop %v733
      %v754 = vrsqrt.pop %v734
      %v755 = vrsqrt.pop %v735
      %v756 = vrsqrt.pop %v736
      %v757 = vrsqrt.pop %v737
      %v758 = vrsqrt.pop %v738
      %v759 = vrsqrt.pop %v739
      %v760 = vrsqrt.pop %v740
      %v761 = vrsqrt.pop %v741
      %v762 = vrsqrt.pop %v742
      %v763 = vrsqrt.pop %v743
      %v764 = vrsqrt.pop %v744
      %v765 = vrsqrt.pop %v745
      %v766 = vrsqrt.pop %v746
      %v767 = vrsqrt.pop %v747
      %v768 = vrsqrt.pop %v748
      %v769 = vrsqrt.pop %v749
      %v770 = vmul.f32 %v610, %v750
      %v771 = vmul.f32 %v611, %v751
      %v772 = vmul.f32 %v612, %v752
      %v773 = vmul.f32 %v613, %v753
      %v774 = vmul.f32 %v614, %v754
      %v775 = vmul.f32 %v615, %v755
      %v776 = vmul.f32 %v616, %v756
      %v777 = vmul.f32 %v617, %v757
      %v778 = vmul.f32 %v618, %v758
      %v779 = vmul.f32 %v619, %v759
      %v780 = vmul.f32 %v620, %v760
      %v781 = vmul.f32 %v621, %v761
      %v782 = vmul.f32 %v622, %v762
      %v783 = vmul.f32 %v623, %v763
      %v784 = vmul.f32 %v624, %v764
      %v785 = vmul.f32 %v625, %v765
      %v786 = vmul.f32 %v626, %v766
      %v787 = vmul.f32 %v627, %v767
      %v788 = vmul.f32 %v628, %v768
      %v789 = vmul.f32 %v629, %v769
      %v791 = vlaneseq
      %v792 = vshrl.u32 %v791, 7
      %v793 = vsub.s32 0, %v792
      %v794 = vrot.slane %v525, %v793
      %v796 = vmul.f32 %v770, %v794
      %v797 = vmul.f32 %v771, %v794
      %v798 = vmul.f32 %v772, %v794
      %v799 = vmul.f32 %v773, %v794
      %v800 = vmul.f32 %v774, %v794
      %v801 = vmul.f32 %v775, %v794
      %v802 = vmul.f32 %v776, %v794
      %v803 = vmul.f32 %v777, %v794
      %v804 = vmul.f32 %v778, %v794
      %v805 = vmul.f32 %v779, %v794
      %v806 = vmul.f32 %v780, %v794
      %v807 = vmul.f32 %v781, %v794
      %v808 = vmul.f32 %v782, %v794
      %v809 = vmul.f32 %v783, %v794
      %v810 = vmul.f32 %v784, %v794
      %v811 = vmul.f32 %v785, %v794
      %v812 = vmul.f32 %v786, %v794
      %v813 = vmul.f32 %v787, %v794
      %v814 = vmul.f32 %v788, %v794
      %v815 = vmul.f32 %v789, %v794
      %v817 = vlaneseq
      %v818 = vshrl.u32 %v817, 7
      %v819 = vsub.s32 0, %v818
      %v820 = vrot.slane %v526, %v819
      %v822 = vadd.f32 %v796, %v820
      %v823 = vadd.f32 %v797, %v820
      %v824 = vadd.f32 %v798, %v820
      %v825 = vadd.f32 %v799, %v820
      %v826 = vadd.f32 %v800, %v820
      %v827 = vadd.f32 %v801, %v820
      %v828 = vadd.f32 %v802, %v820
      %v829 = vadd.f32 %v803, %v820
      %v830 = vadd.f32 %v804, %v820
      %v831 = vadd.f32 %v805, %v820
      %v832 = vadd.f32 %v806, %v820
      %v833 = vadd.f32 %v807, %v820
      %v834 = vadd.f32 %v808, %v820
      %v835 = vadd.f32 %v809, %v820
      %v836 = vadd.f32 %v810, %v820
      %v837 = vadd.f32 %v811, %v820
      %v838 = vadd.f32 %v812, %v820
      %v839 = vadd.f32 %v813, %v820
      %v840 = vadd.f32 %v814, %v820
      %v841 = vadd.f32 %v815, %v820
      %v842 = vmul.f32 %v822, 0.5
      %v843 = vmul.f32 %v823, 0.5
      %v844 = vmul.f32 %v824, 0.5
      %v845 = vmul.f32 %v825, 0.5
      %v846 = vmul.f32 %v826, 0.5
      %v847 = vmul.f32 %v827, 0.5
      %v848 = vmul.f32 %v828, 0.5
      %v849 = vmul.f32 %v829, 0.5
      %v850 = vmul.f32 %v830, 0.5
      %v851 = vmul.f32 %v831, 0.5
      %v852 = vmul.f32 %v832, 0.5
      %v853 = vmul.f32 %v833, 0.5
      %v854 = vmul.f32 %v834, 0.5
      %v855 = vmul.f32 %v835, 0.5
      %v856 = vmul.f32 %v836, 0.5
      %v857 = vmul.f32 %v837, 0.5
      %v858 = vmul.f32 %v838, 0.5
      %v859 = vmul.f32 %v839, 0.5
      %v860 = vmul.f32 %v840, 0.5
      %v861 = vmul.f32 %v841, 0.5
      %v862 = vmul.f32 %v822, 0.044715
      %v863 = vmul.f32 %v823, 0.044715
      %v864 = vmul.f32 %v824, 0.044715
      %v865 = vmul.f32 %v825, 0.044715
      %v866 = vmul.f32 %v826, 0.044715
      %v867 = vmul.f32 %v827, 0.044715
      %v868 = vmul.f32 %v828, 0.044715
      %v869 = vmul.f32 %v829, 0.044715
      %v870 = vmul.f32 %v830, 0.044715
      %v871 = vmul.f32 %v831, 0.044715
      %v872 = vmul.f32 %v832, 0.044715
      %v873 = vmul.f32 %v833, 0.044715
      %v874 = vmul.f32 %v834, 0.044715
      %v875 = vmul.f32 %v835, 0.044715
      %v876 = vmul.f32 %v836, 0.044715
      %v877 = vmul.f32 %v837, 0.044715
      %v878 = vmul.f32 %v838, 0.044715
      %v879 = vmul.f32 %v839, 0.044715
      %v880 = vmul.f32 %v840, 0.044715
      %v881 = vmul.f32 %v841, 0.044715
      %v882 = vmul.f32 %v862, %v822
      %v883 = vmul.f32 %v863, %v823
      %v884 = vmul.f32 %v864, %v824
      %v885 = vmul.f32 %v865, %v825
      %v886 = vmul.f32 %v866, %v826
      %v887 = vmul.f32 %v867, %v827
      %v888 = vmul.f32 %v868, %v828
      %v889 = vmul.f32 %v869, %v829
      %v890 = vmul.f32 %v870, %v830
      %v891 = vmul.f32 %v871, %v831
      %v892 = vmul.f32 %v872, %v832
      %v893 = vmul.f32 %v873, %v833
      %v894 = vmul.f32 %v874, %v834
      %v895 = vmul.f32 %v875, %v835
      %v896 = vmul.f32 %v876, %v836
      %v897 = vmul.f32 %v877, %v837
      %v898 = vmul.f32 %v878, %v838
      %v899 = vmul.f32 %v879, %v839
      %v900 = vmul.f32 %v880, %v840
      %v901 = vmul.f32 %v881, %v841
      %v902 = vmul.f32 %v882, %v822
      %v903 = vmul.f32 %v883, %v823
      %v904 = vmul.f32 %v884, %v824
      %v905 = vmul.f32 %v885, %v825
      %v906 = vmul.f32 %v886, %v826
      %v907 = vmul.f32 %v887, %v827
      %v908 = vmul.f32 %v888, %v828
      %v909 = vmul.f32 %v889, %v829
      %v910 = vmul.f32 %v890, %v830
      %v911 = vmul.f32 %v891, %v831
      %v912 = vmul.f32 %v892, %v832
      %v913 = vmul.f32 %v893, %v833
      %v914 = vmul.f32 %v894, %v834
      %v915 = vmul.f32 %v895, %v835
      %v916 = vmul.f32 %v896, %v836
      %v917 = vmul.f32 %v897, %v837
      %v918 = vmul.f32 %v898, %v838
      %v919 = vmul.f32 %v899, %v839
      %v920 = vmul.f32 %v900, %v840
      %v921 = vmul.f32 %v901, %v841
      %v922 = vadd.f32 %v822, %v902
      %v923 = vadd.f32 %v823, %v903
      %v924 = vadd.f32 %v824, %v904
      %v925 = vadd.f32 %v825, %v905
      %v926 = vadd.f32 %v826, %v906
      %v927 = vadd.f32 %v827, %v907
      %v928 = vadd.f32 %v828, %v908
      %v929 = vadd.f32 %v829, %v909
      %v930 = vadd.f32 %v830, %v910
      %v931 = vadd.f32 %v831, %v911
      %v932 = vadd.f32 %v832, %v912
      %v933 = vadd.f32 %v833, %v913
      %v934 = vadd.f32 %v834, %v914
      %v935 = vadd.f32 %v835, %v915
      %v936 = vadd.f32 %v836, %v916
      %v937 = vadd.f32 %v837, %v917
      %v938 = vadd.f32 %v838, %v918
      %v939 = vadd.f32 %v839, %v919
      %v940 = vadd.f32 %v840, %v920
      %v941 = vadd.f32 %v841, %v921
      %v942 = vmul.f32 %v922, 0.7978846
      %v943 = vmul.f32 %v923, 0.7978846
      %v944 = vmul.f32 %v924, 0.7978846
      %v945 = vmul.f32 %v925, 0.7978846
      %v946 = vmul.f32 %v926, 0.7978846
      %v947 = vmul.f32 %v927, 0.7978846
      %v948 = vmul.f32 %v928, 0.7978846
      %v949 = vmul.f32 %v929, 0.7978846
      %v950 = vmul.f32 %v930, 0.7978846
      %v951 = vmul.f32 %v931, 0.7978846
      %v952 = vmul.f32 %v932, 0.7978846
      %v953 = vmul.f32 %v933, 0.7978846
      %v954 = vmul.f32 %v934, 0.7978846
      %v955 = vmul.f32 %v935, 0.7978846
      %v956 = vmul.f32 %v936, 0.7978846
      %v957 = vmul.f32 %v937, 0.7978846
      %v958 = vmul.f32 %v938, 0.7978846
      %v959 = vmul.f32 %v939, 0.7978846
      %v960 = vmul.f32 %v940, 0.7978846
      %v961 = vmul.f32 %v941, 0.7978846
      %v962 = vtanh.pop %v942
      %v963 = vtanh.pop %v943
      %v964 = vtanh.pop %v944
      %v965 = vtanh.pop %v945
      %v966 = vtanh.pop %v946
      %v967 = vtanh.pop %v947
      %v968 = vtanh.pop %v948
      %v969 = vtanh.pop %v949
      %v970 = vtanh.pop %v950
      %v971 = vtanh.pop %v951
      %v972 = vtanh.pop %v952
      %v973 = vtanh.pop %v953
      %v974 = vtanh.pop %v954
      %v975 = vtanh.pop %v955
      %v976 = vtanh.pop %v956
      %v977 = vtanh.pop %v957
      %v978 = vtanh.pop %v958
      %v979 = vtanh.pop %v959
      %v980 = vtanh.pop %v960
      %v981 = vtanh.pop %v961
      %v982 = vadd.f32 %v962, 1.0
      %v983 = vadd.f32 %v963, 1.0
      %v984 = vadd.f32 %v964, 1.0
      %v985 = vadd.f32 %v965, 1.0
      %v986 = vadd.f32 %v966, 1.0
      %v987 = vadd.f32 %v967, 1.0
      %v988 = vadd.f32 %v968, 1.0
      %v989 = vadd.f32 %v969, 1.0
      %v990 = vadd.f32 %v970, 1.0
      %v991 = vadd.f32 %v971, 1.0
      %v992 = vadd.f32 %v972, 1.0
      %v993 = vadd.f32 %v973, 1.0
      %v994 = vadd.f32 %v974, 1.0
      %v995 = vadd.f32 %v975, 1.0
      %v996 = vadd.f32 %v976, 1.0
      %v997 = vadd.f32 %v977, 1.0
      %v998 = vadd.f32 %v978, 1.0
      %v999 = vadd.f32 %v979, 1.0
      %v1000 = vadd.f32 %v980, 1.0
      %v1001 = vadd.f32 %v981, 1.0
      %v1002 = vmul.f32 %v842, %v982
      %v1003 = vmul.f32 %v843, %v983
      %v1004 = vmul.f32 %v844, %v984
      %v1005 = vmul.f32 %v845, %v985
      %v1006 = vmul.f32 %v846, %v986
      %v1007 = vmul.f32 %v847, %v987
      %v1008 = vmul.f32 %v848, %v988
      %v1009 = vmul.f32 %v849, %v989
      %v1010 = vmul.f32 %v850, %v990
      %v1011 = vmul.f32 %v851, %v991
      %v1012 = vmul.f32 %v852, %v992
      %v1013 = vmul.f32 %v853, %v993
      %v1014 = vmul.f32 %v854, %v994
      %v1015 = vmul.f32 %v855, %v995
      %v1016 = vmul.f32 %v856, %v996
      %v1017 = vmul.f32 %v857, %v997
      %v1018 = vmul.f32 %v858, %v998
      %v1019 = vmul.f32 %v859, %v999
      %v1020 = vmul.f32 %v860, %v1000
      %v1021 = vmul.f32 %v861, %v1001
      %v1022 = vpack.c.bf16 %v1003, %v1002
      %v1023 = vpack.c.bf16 %v1005, %v1004
      %v1024 = vpack.c.bf16 %v1007, %v1006
      %v1025 = vpack.c.bf16 %v1009, %v1008
      %v1026 = vpack.c.bf16 %v1011, %v1010
      %v1027 = vpack.c.bf16 %v1013, %v1012
      %v1028 = vpack.c.bf16 %v1015, %v1014
      %v1029 = vpack.c.bf16 %v1017, %v1016
      %v1030 = vpack.c.bf16 %v1019, %v1018
      %v1031 = vpack.c.bf16 %v1021, %v1020
      %v1042 = vunpack.c.l.b16 %v1022
      %v1043 = vunpack.c.h.b16 %v1022
      %v1044 = vunpack.c.l.b16 %v1023
      %v1045 = vunpack.c.h.b16 %v1023
      %v1046 = vunpack.c.l.b16 %v1024
      %v1047 = vunpack.c.h.b16 %v1024
      %v1048 = vunpack.c.l.b16 %v1025
      %v1049 = vunpack.c.h.b16 %v1025
      %v1050 = vunpack.c.l.b16 %v1026
      %v1051 = vunpack.c.h.b16 %v1026
      %v1052 = vunpack.c.l.b16 %v1027
      %v1053 = vunpack.c.h.b16 %v1027
      %v1054 = vunpack.c.l.b16 %v1028
      %v1055 = vunpack.c.h.b16 %v1028
      %v1056 = vunpack.c.l.b16 %v1029
      %v1057 = vunpack.c.h.b16 %v1029
      %v1058 = vunpack.c.l.b16 %v1030
      %v1059 = vunpack.c.h.b16 %v1030
      %v1060 = vunpack.c.l.b16 %v1031
      %v1061 = vunpack.c.h.b16 %v1031
      %v1062 = vpack.c.b16 %v1042, %v1042
      %v1063 = vpack.c.b16 %v1043, %v1043
      %v1064 = vpack.c.b16 %v1044, %v1044
      %v1065 = vpack.c.b16 %v1045, %v1045
      %v1066 = vpack.c.b16 %v1046, %v1046
      %v1067 = vpack.c.b16 %v1047, %v1047
      %v1068 = vpack.c.b16 %v1048, %v1048
      %v1069 = vpack.c.b16 %v1049, %v1049
      %v1070 = vpack.c.b16 %v1050, %v1050
      %v1071 = vpack.c.b16 %v1051, %v1051
      %v1072 = vpack.c.b16 %v1052, %v1052
      %v1073 = vpack.c.b16 %v1053, %v1053
      %v1074 = vpack.c.b16 %v1054, %v1054
      %v1075 = vpack.c.b16 %v1055, %v1055
      %v1076 = vpack.c.b16 %v1056, %v1056
      %v1077 = vpack.c.b16 %v1057, %v1057
      %v1078 = vpack.c.b16 %v1058, %v1058
      %v1079 = vpack.c.b16 %v1059, %v1059
      %v1080 = vpack.c.b16 %v1060, %v1060
      %v1081 = vpack.c.b16 %v1061, %v1061
      %vm1102 = vcmask 257024
      %1103 = vst.msk [vmem:[%s197] sm:$0xf] %vm1102, %v1062
      %1104 = vst.msk [vmem:[%s197 + $0x4] sm:$0xf] %vm1102, %v1063
      %1105 = vst.msk [vmem:[%s197 + $0x8] sm:$0xf] %vm1102, %v1064
      %1106 = vst.msk [vmem:[%s197 + $0xc] sm:$0xf] %vm1102, %v1065
      %1107 = vst.msk [vmem:[%s197 + $0x10] sm:$0xf] %vm1102, %v1066
      %1108 = vst.msk [vmem:[%s197 + $0x14] sm:$0xf] %vm1102, %v1067
      %1109 = vst.msk [vmem:[%s197 + $0x18] sm:$0xf] %vm1102, %v1068
      %1110 = vst.msk [vmem:[%s197 + $0x1c] sm:$0xf] %vm1102, %v1069
      %1111 = vst.msk [vmem:[%s197 + $0x20] sm:$0xf] %vm1102, %v1070
      %1112 = vst.msk [vmem:[%s197 + $0x24] sm:$0xf] %vm1102, %v1071
      %1113 = vst.msk [vmem:[%s197 + $0x28] sm:$0xf] %vm1102, %v1072
      %1114 = vst.msk [vmem:[%s197 + $0x2c] sm:$0xf] %vm1102, %v1073
      %1115 = vst.msk [vmem:[%s197 + $0x30] sm:$0xf] %vm1102, %v1074
      %1116 = vst.msk [vmem:[%s197 + $0x34] sm:$0xf] %vm1102, %v1075
      %1117 = vst.msk [vmem:[%s197 + $0x38] sm:$0xf] %vm1102, %v1076
      %1118 = vst.msk [vmem:[%s197 + $0x3c] sm:$0xf] %vm1102, %v1077
      %1119 = vst.msk [vmem:[%s197 + $0x40] sm:$0xf] %vm1102, %v1078
      %1120 = vst.msk [vmem:[%s197 + $0x44] sm:$0xf] %vm1102, %v1079
      %1121 = vst.msk [vmem:[%s197 + $0x48] sm:$0xf] %vm1102, %v1080
      %vm1122 = vcmask 257024
      %vm1123 = vsmask.f32 3328
      %vm1124 = vmand %vm1122, %vm1123
      %v1125 = vld [vmem:[%s197 + $0x4c] sm:$0xf]
      %v1126 = vsel %vm1124, %v1081, %v1125
      %1127 = vst [vmem:[%s197 + $0x4c] sm:$0xf] %v1126
      %p1128 = scmp.lt.s32.totalorder %s15, 1
      %s1129 = scalar_select %p1128, %s15, 1
      %s1130 = smul.addr %s1129, 20
      %s1131 = smul.addr %s1130, 4
      %s1132 = scalar_lea.vmem %s4, %s1131
      // Predicated region
      $region37: #{emotion2vec_forward.5} parent=35 // pred_check
        %p1133 = pneg %p122
      $region38: #{emotion2vec_forward.5} parent=35 // pred_check_branch
        %1135 = sbr.rel (%p1133) target = $region40
      $region39: #{emotion2vec_forward.5} parent=35 // pred_region
        _
      $region40: #{emotion2vec_forward.5} parent=35 // pred_fallthru
        _
    $region36: #{emotion2vec_forward.5} parent=5 // pred_fallthru
      _
    %p1136 = scmp.le.s32.totalorder 2, %s10
    // Predicated region
    $region41: #{emotion2vec_forward.5} parent=5 // pred_check
      %p1137 = pneg %p1136
    $region42: #{emotion2vec_forward.5} parent=5 // pred_check_branch
      %1139 = sbr.rel (%p1137) target = $region44
    $region43: #{emotion2vec_forward.5} parent=5 // pred_region
      %s1140 = ssub.s32 %s10, 2
      // Predicated region
      $region45: #{emotion2vec_forward.5} parent=43 // pred_check
        %p1141 = pneg %p128
      $region46: #{emotion2vec_forward.5} parent=43 // pred_check_branch
        %1143 = sbr.rel (%p1141) target = $region48
      $region47: #{emotion2vec_forward.5} parent=43 // pred_region
        %p1144 = scmp.lt.s32.totalorder %s16, 1
        %s1145 = scalar_select %p1144, %s16, 1
        %s1146 = smul.addr %s1145, 20
        %s1147 = smul.addr %s1146, 4
        %s1148 = scalar_lea.vmem %s4, %s1147
      $region48: #{emotion2vec_forward.5} parent=43 // pred_fallthru
        _
    $region44: #{emotion2vec_forward.5} parent=5 // pred_fallthru
      _
  $region6: #{emotion2vec_forward.5} parent=0 // loop_footer
    %s14 = sadd.s32 1, %s10
  $region7: #{emotion2vec_forward.5} parent=0 // loop_footer_branch
    %9 = sbr.rel target = $region3
  $region8: #{emotion2vec_forward.5} parent=0 // loop_exit
    _

// kernel: emotion2vec_forward.8
$region0: #{emotion2vec_forward.8}
  #allocation0 [shape = 'u32[]', space=smem, size = 0x4, offset = 0x4, fixed_abs, tag = 'smem constant byte address 0x4 - core index']
  #allocation1 [shape = 'u32[144,128]{1,0:T(1,128)}', space=vmem, size = 0x12000, scoped, tag = 'internal scratch']
  %s0 = inlined_call_operand.vmem [shape: bf16[2,39,32], index: 0, kind: input, shape index: {}]
  %s1 = inlined_call_operand.vmem [shape: f32[1,32], index: 1, kind: input, shape index: {}]
  %s2 = inlined_call_operand.vmem [shape: f32[1,32], index: 2, kind: input, shape index: {}]
  %s3 = inlined_call_operand.vmem [shape: bf16[32,32], index: 3, kind: input, shape index: {}]
  %s4 = inlined_call_operand.vmem [shape: f32[1,32], index: 4, kind: input, shape index: {}]
  %s5 = inlined_call_operand.vmem [shape: bf16[4,72,8], index: 5, kind: input, shape index: {}]
  %s6 = inlined_call_operand.vmem [shape: f32[1,32], index: 6, kind: input, shape index: {}]
  %s7 = inlined_call_operand.vmem [shape: f32[1,1,32], index: 7, kind: input, shape index: {}]
  %s8 = inlined_call_operand.vmem [shape: f32[2,40,32], index: 8, kind: output, shape index: {}]
  %s9 = sld [smem:[#allocation0]]
  $region65: #{emotion2vec_forward.8} parent=0
    _
  %s11 = ssub.s32 1, %s9
  %s12 = scalar_select 0, %s11, %s9
  loop: start=0, step=1, limit=4
  $region2: #{emotion2vec_forward.8} parent=0 // loop_pre_header
    _
  $region3: #{emotion2vec_forward.8} parent=0 // loop_header
    %s14 = sphi 0, %s18
    %p15 = scmp.ge.s32.totalorder %s14, 4
    %s24 = sphi 0, %s26
    %s27 = sphi 0, %s24
    %s28 = sphi 0, %s27
    %s44 = sphi 0, %s28
    %s48 = sphi 0, %s48
    %s50 = sphi 0, %s48
    %s51 = sphi 0, %s50
    %s65 = sphi 0, %s51
    %s69 = sphi 0, %s69
    %s71 = sphi 0, %s69
    %s72 = sphi 0, %s71
    %s86 = sphi 0, %s72
    %s90 = sphi 0, %s90
    %s92 = sphi 0, %s90
    %s93 = sphi 0, %s92
    %s107 = sphi 0, %s93
    %s111 = sphi 0, %s111
    %s113 = sphi 0, %s111
    %s114 = sphi 0, %s113
    %s128 = sphi 0, %s114
    %s132 = sphi 0, %s132
    %s134 = sphi 0, %s132
    %s135 = sphi 0, %s134
    %s149 = sphi 0, %s135
    %s153 = sphi 0, %s153
    %s155 = sphi 0, %s153
    %s156 = sphi 0, %s155
    %s170 = sphi 0, %s156
    %s174 = sphi 0, %s174
    %s176 = sphi 0, %s174
    %s177 = sphi 0, %s176
    %s191 = sphi 0, %s177
    %s197 = sphi 0, %s199
    %s200 = sphi 0, %s197
    %s201 = sphi 0, %s200
    %s217 = sphi 0, %s201
  $region4: #{emotion2vec_forward.8} parent=0 // loop_header_branch
    %17 = sbr.rel (%p15) target = $region8
  $region5: #{emotion2vec_forward.8} parent=0 // loop_body
    %s19 = ssub.s32 %s14, 1
    %s20 = ssub.s32 %s14, 2
    %s21 = sadd.s32 %s14, 1
    %s22 = ssub.s32 %s14, %s21
    %p23 = scmp.eq.s32.totalorder %s22, 0
    %s25 = sadd.s32 %s24, 1
    %s26 = scalar_select %p23, %s24, %s25
    %p29 = pneg %p23
    %p30 = scmp.eq.s32.totalorder %s14, 1
    %p31 = por %p29, %p30
    %p32 = scmp.ne.s32.totalorder %s24, %s27
    %p33 = scmp.eq.s32.totalorder %s14, 0
    %p34 = por %p32, %p33
    %p35 = scmp.ne.s32.totalorder %s24, %s27
    %p36 = scmp.eq.s32.totalorder %s19, 1
    %p37 = por %p35, %p36
    %p38 = scmp.ne.s32.totalorder %s27, %s28
    %p39 = scmp.eq.s32.totalorder %s19, 0
    %p40 = por %p38, %p39
    %p41 = scmp.ne.s32.totalorder %s27, %s28
    %p42 = scmp.eq.s32.totalorder %s20, 1
    %p43 = por %p41, %p42
    %p45 = scmp.ne.s32.totalorder %s28, %s44
    %p46 = scmp.eq.s32.totalorder %s20, 0
    %p47 = por %p45, %p46
    %s49 = sadd.s32 %s48, 1
    %p52 = scmp.eq.s32.totalorder %s14, 1
    %p53 = scmp.ne.s32.totalorder %s48, %s50
    %p54 = scmp.eq.s32.totalorder %s14, 0
    %p55 = por %p53, %p54
    %p56 = scmp.ne.s32.totalorder %s48, %s50
    %p57 = scmp.eq.s32.totalorder %s19, 1
    %p58 = por %p56, %p57
    %p59 = scmp.ne.s32.totalorder %s50, %s51
    %p60 = scmp.eq.s32.totalorder %s19, 0
    %p61 = por %p59, %p60
    %p62 = scmp.ne.s32.totalorder %s50, %s51
    %p63 = scmp.eq.s32.totalorder %s20, 1
    %p64 = por %p62, %p63
    %p66 = scmp.ne.s32.totalorder %s51, %s65
    %p67 = scmp.eq.s32.totalorder %s20, 0
    %p68 = por %p66, %p67
    %s70 = sadd.s32 %s69, 1
    %p73 = scmp.eq.s32.totalorder %s14, 1
    %p74 = scmp.ne.s32.totalorder %s69, %s71
    %p75 = scmp.eq.s32.totalorder %s14, 0
    %p76 = por %p74, %p75
    %p77 = scmp.ne.s32.totalorder %s69, %s71
    %p78 = scmp.eq.s32.totalorder %s19, 1
    %p79 = por %p77, %p78
    %p80 = scmp.ne.s32.totalorder %s71, %s72
    %p81 = scmp.eq.s32.totalorder %s19, 0
    %p82 = por %p80, %p81
    %p83 = scmp.ne.s32.totalorder %s71, %s72
    %p84 = scmp.eq.s32.totalorder %s20, 1
    %p85 = por %p83, %p84
    %p87 = scmp.ne.s32.totalorder %s72, %s86
    %p88 = scmp.eq.s32.totalorder %s20, 0
    %p89 = por %p87, %p88
    %s91 = sadd.s32 %s90, 1
    %p94 = scmp.eq.s32.totalorder %s14, 1
    %p95 = scmp.ne.s32.totalorder %s90, %s92
    %p96 = scmp.eq.s32.totalorder %s14, 0
    %p97 = por %p95, %p96
    %p98 = scmp.ne.s32.totalorder %s90, %s92
    %p99 = scmp.eq.s32.totalorder %s19, 1
    %p100 = por %p98, %p99
    %p101 = scmp.ne.s32.totalorder %s92, %s93
    %p102 = scmp.eq.s32.totalorder %s19, 0
    %p103 = por %p101, %p102
    %p104 = scmp.ne.s32.totalorder %s92, %s93
    %p105 = scmp.eq.s32.totalorder %s20, 1
    %p106 = por %p104, %p105
    %p108 = scmp.ne.s32.totalorder %s93, %s107
    %p109 = scmp.eq.s32.totalorder %s20, 0
    %p110 = por %p108, %p109
    %s112 = sadd.s32 %s111, 1
    %p115 = scmp.eq.s32.totalorder %s14, 1
    %p116 = scmp.ne.s32.totalorder %s111, %s113
    %p117 = scmp.eq.s32.totalorder %s14, 0
    %p118 = por %p116, %p117
    %p119 = scmp.ne.s32.totalorder %s111, %s113
    %p120 = scmp.eq.s32.totalorder %s19, 1
    %p121 = por %p119, %p120
    %p122 = scmp.ne.s32.totalorder %s113, %s114
    %p123 = scmp.eq.s32.totalorder %s19, 0
    %p124 = por %p122, %p123
    %p125 = scmp.ne.s32.totalorder %s113, %s114
    %p126 = scmp.eq.s32.totalorder %s20, 1
    %p127 = por %p125, %p126
    %p129 = scmp.ne.s32.totalorder %s114, %s128
    %p130 = scmp.eq.s32.totalorder %s20, 0
    %p131 = por %p129, %p130
    %s133 = sadd.s32 %s132, 1
    %p136 = scmp.eq.s32.totalorder %s14, 1
    %p137 = scmp.ne.s32.totalorder %s132, %s134
    %p138 = scmp.eq.s32.totalorder %s14, 0
    %p139 = por %p137, %p138
    %p140 = scmp.ne.s32.totalorder %s132, %s134
    %p141 = scmp.eq.s32.totalorder %s19, 1
    %p142 = por %p140, %p141
    %p143 = scmp.ne.s32.totalorder %s134, %s135
    %p144 = scmp.eq.s32.totalorder %s19, 0
    %p145 = por %p143, %p144
    %p146 = scmp.ne.s32.totalorder %s134, %s135
    %p147 = scmp.eq.s32.totalorder %s20, 1
    %p148 = por %p146, %p147
    %p150 = scmp.ne.s32.totalorder %s135, %s149
    %p151 = scmp.eq.s32.totalorder %s20, 0
    %p152 = por %p150, %p151
    %s154 = sadd.s32 %s153, 1
    %p157 = scmp.eq.s32.totalorder %s14, 1
    %p158 = scmp.ne.s32.totalorder %s153, %s155
    %p159 = scmp.eq.s32.totalorder %s14, 0
    %p160 = por %p158, %p159
    %p161 = scmp.ne.s32.totalorder %s153, %s155
    %p162 = scmp.eq.s32.totalorder %s19, 1
    %p163 = por %p161, %p162
    %p164 = scmp.ne.s32.totalorder %s155, %s156
    %p165 = scmp.eq.s32.totalorder %s19, 0
    %p166 = por %p164, %p165
    %p167 = scmp.ne.s32.totalorder %s155, %s156
    %p168 = scmp.eq.s32.totalorder %s20, 1
    %p169 = por %p167, %p168
    %p171 = scmp.ne.s32.totalorder %s156, %s170
    %p172 = scmp.eq.s32.totalorder %s20, 0
    %p173 = por %p171, %p172
    %s175 = sadd.s32 %s174, 1
    %p178 = scmp.eq.s32.totalorder %s14, 1
    %p179 = scmp.ne.s32.totalorder %s174, %s176
    %p180 = scmp.eq.s32.totalorder %s14, 0
    %p181 = por %p179, %p180
    %p182 = scmp.ne.s32.totalorder %s174, %s176
    %p183 = scmp.eq.s32.totalorder %s19, 1
    %p184 = por %p182, %p183
    %p185 = scmp.ne.s32.totalorder %s176, %s177
    %p186 = scmp.eq.s32.totalorder %s19, 0
    %p187 = por %p185, %p186
    %p188 = scmp.ne.s32.totalorder %s176, %s177
    %p189 = scmp.eq.s32.totalorder %s20, 1
    %p190 = por %p188, %p189
    %p192 = scmp.ne.s32.totalorder %s177, %s191
    %p193 = scmp.eq.s32.totalorder %s20, 0
    %p194 = por %p192, %p193
    %s195 = ssub.s32 %s14, %s21
    %p196 = scmp.eq.s32.totalorder %s195, 0
    %s198 = sadd.s32 %s197, 1
    %s199 = scalar_select %p196, %s197, %s198
    %p202 = pneg %p196
    %p203 = scmp.eq.s32.totalorder %s14, 1
    %p204 = por %p202, %p203
    %p205 = scmp.ne.s32.totalorder %s197, %s200
    %p206 = scmp.eq.s32.totalorder %s14, 0
    %p207 = por %p205, %p206
    %p208 = scmp.ne.s32.totalorder %s197, %s200
    %p209 = scmp.eq.s32.totalorder %s19, 1
    %p210 = por %p208, %p209
    %p211 = scmp.ne.s32.totalorder %s200, %s201
    %p212 = scmp.eq.s32.totalorder %s19, 0
    %p213 = por %p211, %p212
    %p214 = scmp.ne.s32.totalorder %s200, %s201
    %p215 = scmp.eq.s32.totalorder %s20, 1
    %p216 = por %p214, %p215
    %p218 = scmp.ne.s32.totalorder %s201, %s217
    %p219 = scmp.eq.s32.totalorder %s20, 0
    %p220 = por %p218, %p219
    %p221 = scmp.le.s32.totalorder 1, %s14
    %p222 = scmp.lt.s32.totalorder %s14, 3
    %p223 = pnand %p221, %p222
    %p224 = pneg %p223
    // Predicated region
    $region9: #{emotion2vec_forward.8} parent=5 // pred_check
      _
    $region10: #{emotion2vec_forward.8} parent=5 // pred_check_branch
      %226 = sbr.rel (%p223) target = $region12
    $region11: #{emotion2vec_forward.8} parent=5 // pred_region
      %s227 = ssub.s32 %s14, 1
      // Predicated region
      $region13: #{emotion2vec_forward.8} parent=11 // pred_check
        %p228 = pneg %p61
      $region14: #{emotion2vec_forward.8} parent=11 // pred_check_branch
        %230 = sbr.rel (%p228) target = $region16
      $region15: #{emotion2vec_forward.8} parent=11 // pred_region
        _
      $region16: #{emotion2vec_forward.8} parent=11 // pred_fallthru
        _
      // Predicated region
      $region17: #{emotion2vec_forward.8} parent=11 // pred_check
        %p231 = pneg %p82
      $region18: #{emotion2vec_forward.8} parent=11 // pred_check_branch
        %233 = sbr.rel (%p231) target = $region20
      $region19: #{emotion2vec_forward.8} parent=11 // pred_region
        _
      $region20: #{emotion2vec_forward.8} parent=11 // pred_fallthru
        _
      // Predicated region
      $region21: #{emotion2vec_forward.8} parent=11 // pred_check
        %p234 = pneg %p103
      $region22: #{emotion2vec_forward.8} parent=11 // pred_check_branch
        %236 = sbr.rel (%p234) target = $region24
      $region23: #{emotion2vec_forward.8} parent=11 // pred_region
        _
      $region24: #{emotion2vec_forward.8} parent=11 // pred_fallthru
        _
      // Predicated region
      $region25: #{emotion2vec_forward.8} parent=11 // pred_check
        %p237 = pneg %p124
      $region26: #{emotion2vec_forward.8} parent=11 // pred_check_branch
        %239 = sbr.rel (%p237) target = $region28
      $region27: #{emotion2vec_forward.8} parent=11 // pred_region
        _
      $region28: #{emotion2vec_forward.8} parent=11 // pred_fallthru
        _
      // Predicated region
      $region29: #{emotion2vec_forward.8} parent=11 // pred_check
        %p240 = pneg %p145
      $region30: #{emotion2vec_forward.8} parent=11 // pred_check_branch
        %242 = sbr.rel (%p240) target = $region32
      $region31: #{emotion2vec_forward.8} parent=11 // pred_region
        _
      $region32: #{emotion2vec_forward.8} parent=11 // pred_fallthru
        _
      // Predicated region
      $region33: #{emotion2vec_forward.8} parent=11 // pred_check
        %p243 = pneg %p166
      $region34: #{emotion2vec_forward.8} parent=11 // pred_check_branch
        %245 = sbr.rel (%p243) target = $region36
      $region35: #{emotion2vec_forward.8} parent=11 // pred_region
        _
      $region36: #{emotion2vec_forward.8} parent=11 // pred_fallthru
        _
      // Predicated region
      $region37: #{emotion2vec_forward.8} parent=11 // pred_check
        %p246 = pneg %p187
      $region38: #{emotion2vec_forward.8} parent=11 // pred_check_branch
        %248 = sbr.rel (%p246) target = $region40
      $region39: #{emotion2vec_forward.8} parent=11 // pred_region
        _
      $region40: #{emotion2vec_forward.8} parent=11 // pred_fallthru
        _
    $region12: #{emotion2vec_forward.8} parent=5 // pred_fallthru
      _
    %p249 = scmp.lt.s32.totalorder %s14, 2
    // Predicated region
    $region41: #{emotion2vec_forward.8} parent=5 // pred_check
      %p250 = pneg %p249
    $region42: #{emotion2vec_forward.8} parent=5 // pred_check_branch
      %252 = sbr.rel (%p250) target = $region44
    $region43: #{emotion2vec_forward.8} parent=5 // pred_region
      // Predicated region
      $region45: #{emotion2vec_forward.8} parent=43 // pred_check
        %p253 = pneg %p34
      $region46: #{emotion2vec_forward.8} parent=43 // pred_check_branch
        %255 = sbr.rel (%p253) target = $region48
      $region47: #{emotion2vec_forward.8} parent=43 // pred_region
        %p256 = scmp.lt.s32.totalorder %s14, 1
        %s257 = scalar_select %p256, %s14, 1
        %s258 = smul.addr %s257, 5
        %s259 = smul.addr %s258, 4
        %s260 = scalar_lea.vmem %s0, %s259
      $region48: #{emotion2vec_forward.8} parent=43 // pred_fallthru
        _
    $region44: #{emotion2vec_forward.8} parent=5 // pred_fallthru
      _
    %p261 = scmp.le.s32.totalorder 1, %s14
    %p262 = scmp.lt.s32.totalorder %s14, 3
    %p263 = pnand %p261, %p262
    %p264 = pneg %p263
    // Predicated region
    $region49: #{emotion2vec_forward.8} parent=5 // pred_check
      _
    $region50: #{emotion2vec_forward.8} parent=5 // pred_check_branch
      %266 = sbr.rel (%p263) target = $region52
    $region51: #{emotion2vec_forward.8} parent=5 // pred_region
      %s267 = ssub.s32 %s14, 1
      %p268 = scmp.lt.s32.totalorder %s19, 1
      %s269 = scalar_select %p268, %s19, 1
      %s270 = smul.addr %s269, 5
      %s271 = smul.addr %s270, 4
      %s272 = scalar_lea.vmem %s0, %s271
      %p273 = pneg %p40
      %p274 = pneg %p37
      %p275 = pneg %p61
      %p276 = pneg %p58
      %p277 = pneg %p82
      %p278 = pneg %p79
      %p279 = pneg %p103
      %p280 = pneg %p100
      %p281 = pneg %p124
      %p282 = pneg %p121
      %p283 = pneg %p145
      %p284 = pneg %p142
      %p285 = pneg %p166
      %p286 = pneg %p163
      %p287 = pneg %p187
      %p288 = pneg %p184
      %p289 = pneg %p213
      %p290 = pneg %p210
      %p291 = scmp.lt.s32.totalorder %s19, 1
      %s292 = scalar_select %p291, %s19, 1
      %s293 = smul.addr %s292, 5
      %s294 = smul.addr %s293, 8
      %s295 = scalar_lea.vmem %s8, %s294
      %p296 = scmp.lt.s32.totalorder %s19, 1
      %s297 = scalar_select %p296, %s19, 1
      %s298 = smul.addr %s297, 5
      %s299 = smul.addr %s298, 4
      %s300 = scalar_lea.vmem %s0, %s299
      %p301 = scmp.lt.s32.totalorder %s19, 1
      %s302 = scalar_select %p301, %s19, 1
      %s303 = smul.addr %s302, 5
      %s304 = smul.addr %s303, 8
      %s305 = scalar_lea.vmem %s8, %s304
      %v307 = vld [vmem:[%s300] sm:$0xf]
      %v308 = vld [vmem:[%s300 + $0x4] sm:$0xf]
      %v309 = vld [vmem:[%s300 + $0x8] sm:$0xf]
      %v310 = vld [vmem:[%s300 + $0xc] sm:$0xf]
      %v311 = vld [vmem:[%s300 + $0x10] sm:$0xf]
      %v312 = vunpack.c.l.bf16 %v307
      %v313 = vunpack.c.l.bf16 %v308
      %v314 = vunpack.c.l.bf16 %v309
      %v315 = vunpack.c.l.bf16 %v310
      %v316 = vunpack.c.l.bf16 %v311
      %v317 = vld [vmem:[%s1] sm:$0x1]
      %v318 = vld [vmem:[%s2] sm:$0x1]
      %vm319 = vcmask 261120
      %v320 = vsel %vm319, %v312, 0.0
      %321 = vadd.xlane.f32.xlu0 %v320
      %v322 = vpop.xlane.xlu0 %321
      %v323 = vsel %vm319, %v313, 0.0
      %324 = vadd.xlane.f32.xlu0 %v323
      %v325 = vpop.xlane.xlu0 %324
      %v326 = vsel %vm319, %v314, 0.0
      %327 = vadd.xlane.f32.xlu0 %v326
      %v328 = vpop.xlane.xlu0 %327
      %v329 = vsel %vm319, %v315, 0.0
      %330 = vadd.xlane.f32.xlu0 %v329
      %v331 = vpop.xlane.xlu0 %330
      %vm332 = vcmask 260096
      %v333 = vsel %vm332, %v316, 0.0
      %334 = vadd.xlane.f32.xlu0 %v333
      %v335 = vpop.xlane.xlu0 %334
      %v336 = vrcp.pop 32.0
      %v337 = vmul.f32 %v322, %v336
      %v338 = vmul.f32 %v325, %v336
      %v339 = vmul.f32 %v328, %v336
      %v340 = vmul.f32 %v331, %v336
      %v341 = vmul.f32 %v335, %v336
      %v342 = vsub.f32 %v312, %v337
      %v343 = vsub.f32 %v313, %v338
      %v344 = vsub.f32 %v314, %v339
      %v345 = vsub.f32 %v315, %v340
      %v346 = vsub.f32 %v316, %v341
      %v347 = vmul.f32 %v342, %v342
      %v348 = vmul.f32 %v343, %v343
      %v349 = vmul.f32 %v344, %v344
      %v350 = vmul.f32 %v345, %v345
      %v351 = vmul.f32 %v346, %v346
      %v352 = vsel %vm319, %v347, 0.0
      %353 = vadd.xlane.f32.xlu0 %v352
      %v354 = vpop.xlane.xlu0 %353
      %v355 = vsel %vm319, %v348, 0.0
      %356 = vadd.xlane.f32.xlu0 %v355
      %v357 = vpop.xlane.xlu0 %356
      %v358 = vsel %vm319, %v349, 0.0
      %359 = vadd.xlane.f32.xlu0 %v358
      %v360 = vpop.xlane.xlu0 %359
      %v361 = vsel %vm319, %v350, 0.0
      %362 = vadd.xlane.f32.xlu0 %v361
      %v363 = vpop.xlane.xlu0 %362
      %v364 = vsel %vm332, %v351, 0.0
      %365 = vadd.xlane.f32.xlu0 %v364
      %v366 = vpop.xlane.xlu0 %365
      %v367 = vmul.f32 %v354, %v336
      %v368 = vmul.f32 %v357, %v336
      %v369 = vmul.f32 %v360, %v336
      %v370 = vmul.f32 %v363, %v336
      %v371 = vmul.f32 %v366, %v336
      %v372 = vadd.f32 %v367, 1e-05
      %v373 = vadd.f32 %v368, 1e-05
      %v374 = vadd.f32 %v369, 1e-05
      %v375 = vadd.f32 %v370, 1e-05
      %v376 = vadd.f32 %v371, 1e-05
      %v377 = vrsqrt.pop %v372
      %v378 = vrsqrt.pop %v373
      %v379 = vrsqrt.pop %v374
      %v380 = vrsqrt.pop %v375
      %v381 = vrsqrt.pop %v376
      %v382 = vmul.f32 %v342, %v377
      %v383 = vmul.f32 %v343, %v378
      %v384 = vmul.f32 %v344, %v379
      %v385 = vmul.f32 %v345, %v380
      %v386 = vmul.f32 %v346, %v381
      %v388 = vlaneseq
      %v389 = vshrl.u32 %v388, 7
      %v390 = vsub.s32 0, %v389
      %v391 = vrot.slane %v317, %v390
      %v393 = vmul.f32 %v382, %v391
      %v394 = vmul.f32 %v383, %v391
      %v395 = vmul.f32 %v384, %v391
      %v396 = vmul.f32 %v385, %v391
      %v397 = vmul.f32 %v386, %v391
      %v399 = vlaneseq
      %v400 = vshrl.u32 %v399, 7
      %v401 = vsub.s32 0, %v400
      %v402 = vrot.slane %v318, %v401
      %v404 = vadd.f32 %v393, %v402
      %v405 = vadd.f32 %v394, %v402
      %v406 = vadd.f32 %v395, %v402
      %v407 = vadd.f32 %v396, %v402
      %v408 = vadd.f32 %v397, %v402
      %v409 = vpack.c.bf16 %v405, %v404
      %v410 = vpack.c.bf16 %v407, %v406
      %v411 = vpack.c.bf16 %v408, %v408
      %v412 = vld [vmem:[%s3] sm:$0xf]
      %v413 = vld [vmem:[%s3 + $0x4] sm:$0xf]
      %v414 = vld [vmem:[%s3 + $0x8] sm:$0xf]
      %v415 = vld [vmem:[%s3 + $0xc] sm:$0xf]
      %v416 = vld [vmem:[%s4] sm:$0x1]
      %v418 = vlaneseq
      %v419 = vshrl.u32 %v418, 7
      %v420 = vsub.s32 0, %v419
      %v421 = vrot.slane %v416, %v420
      %v427 = vunpack.c.l.b16 %v412
      %v428 = vunpack.c.l.b16 %v413
      %v429 = vunpack.c.l.b16 %v414
      %v430 = vunpack.c.l.b16 %v415
      %v431 = vpack.c.b16 %v428, %v427
      %v432 = vpack.c.b16 %v430, %v429
      %v436 = vsel %vm319, %v409, 0
      %v439 = vsel %vm319, %v410, 0
      %v442 = vsel %vm319, %v411, 0
      %444 = vmatprep.subr.bf16.mxu0 0
      %445 = vmatpush1.bf16.msra.mxu0 0
      %446 = vmatprep.subr.bf16.mxu0 0
      %447 = vmatpush1.bf16.msra.mxu0 0
      %448 = vmatprep.subr.bf16.mxu0 0
      %449 = vmatpush1.bf16.msra.mxu0 0
      %450 = vmatprep.subr.bf16.mxu0 0
      %451 = vmatpush1.bf16.msra.mxu0 0
      %452 = vmatprep.subr.bf16.mxu0 0
      %453 = vmatpush1.bf16.msra.mxu0 0
      %454 = vmatprep.subr.bf16.mxu0 0
      %455 = vmatpush1.bf16.msra.mxu0 0
      %456 = vmatprep.subr.bf16.mxu0 0
      %457 = vmatpush1.bf16.msra.mxu0 %v432
      %458 = vmatprep.subr.bf16.mxu0 0
      %459 = vmatpush1.bf16.msra.mxu0 %v431
      %460 = vmatprep.subr.bf16.mxu0 0
      %461 = vmatpush2.bf16.msra.mxu0 0
      %462 = vmatprep.subr.bf16.mxu0 0
      %463 = vmatpush2.bf16.msra.mxu0 0
      %464 = vmatprep.subr.bf16.mxu0 0
      %465 = vmatpush2.bf16.msra.mxu0 0
      %466 = vmatprep.subr.bf16.mxu0 0
      %467 = vmatpush2.bf16.msra.mxu0 0
      %468 = vmatprep.subr.bf16.mxu0 0
      %469 = vmatpush2.bf16.msra.mxu0 0
      %470 = vmatprep.subr.bf16.mxu0 0
      %471 = vmatpush2.bf16.msra.mxu0 0
      %472 = vmatprep.subr.bf16.mxu0 0
      %473 = vmatpush2.bf16.msra.mxu0 0
      %474 = vmatprep.subr.bf16.mxu0 0
      %475 = vmatpush2.bf16.msra.mxu0 0
      %476 = vmatprep.mubr.bf16.mxu0 0
      %477 = vmatmul.mubr.bf16.gmra.mxu0 %v436
      %v478 = vpop.f32.mrf.mxu0
      %v479 = vadd.f32 %v421, %v478
      %v480 = vpop.f32.mrf.mxu0
      %v481 = vpop.f32.mrf.mxu0
      %v482 = vadd.f32 %v421, %v481
      %v483 = vpop.f32.mrf.mxu0
      %484 = vmatprep.mubr.bf16.mxu0 0
      %485 = vmatmul.mubr.bf16.gmra.mxu0 %v439
      %v486 = vpop.f32.mrf.mxu0
      %v487 = vadd.f32 %v421, %v486
      %v488 = vpop.f32.mrf.mxu0
      %v489 = vpop.f32.mrf.mxu0
      %v490 = vadd.f32 %v421, %v489
      %v491 = vpop.f32.mrf.mxu0
      %492 = vmatprep.mubr.bf16.mxu0 0
      %493 = vmatmul.mubr.bf16.gmra.mxu0 %v442
      %v494 = vpop.f32.mrf.mxu0
      %v495 = vadd.f32 %v421, %v494
      %v496 = vpop.f32.mrf.mxu0
      %v497 = vpop.f32.mrf.mxu0
      %v498 = vpop.f32.mrf.mxu0
      %499 = vdwg.mxu0
      %vm505 = vcmask 1043456
      %v506 = vrot.slane %v479, 4
      %v507 = vrot.slane %v482, 4
      %v508 = vsel %vm505, %v506, %v507
      %v509 = vrot.slane %v487, 4
      %v510 = vsel %vm505, %v507, %v509
      %v511 = vrot.slane %v490, 4
      %v512 = vsel %vm505, %v509, %v511
      %v513 = vrot.slane %v495, 4
      %v514 = vsel %vm505, %v511, %v513
      %v521 = vsel %vm505, 0.0, %v506
      %vm522 = vcmask 1042432
      %v523 = vsel %vm522, %v513, 0.0
      %v524 = vpack.c.bf16 %v508, %v521
      %v525 = vpack.c.bf16 %v512, %v510
      %v526 = vpack.c.bf16 %v523, %v514
      %v527 = vld [vmem:[%s5] sm:$0xf]
      %v528 = vld [vmem:[%s5 + $0x4] sm:$0xf]
      %v529 = vld [vmem:[%s5 + $0x8] sm:$0xf]
      %v530 = vld [vmem:[%s5 + $0xc] sm:$0xf]
      %v531 = vld [vmem:[%s5 + $0x10] sm:$0xf]
      %v532 = vld [vmem:[%s5 + $0x14] sm:$0xf]
      %v533 = vld [vmem:[%s5 + $0x18] sm:$0xf]
      %v534 = vld [vmem:[%s5 + $0x1c] sm:$0xf]
      %v535 = vld [vmem:[%s5 + $0x20] sm:$0xf]
      %v536 = vld [vmem:[%s5 + $0x24] sm:$0xf]
      %v537 = vld [vmem:[%s5 + $0x28] sm:$0xf]
      %v538 = vld [vmem:[%s5 + $0x2c] sm:$0xf]
      %v539 = vld [vmem:[%s5 + $0x30] sm:$0xf]
      %v540 = vld [vmem:[%s5 + $0x34] sm:$0xf]
      %v541 = vld [vmem:[%s5 + $0x38] sm:$0xf]
      %v542 = vld [vmem:[%s5 + $0x3c] sm:$0xf]
      %v543 = vld [vmem:[%s5 + $0x40] sm:$0xf]
      %v544 = vld [vmem:[%s5 + $0x44] sm:$0xf]
      %v545 = vld [vmem:[%s5 + $0x48] sm:$0xf]
      %v546 = vld [vmem:[%s5 + $0x4c] sm:$0xf]
      %v547 = vld [vmem:[%s5 + $0x50] sm:$0xf]
      %v548 = vld [vmem:[%s5 + $0x54] sm:$0xf]
      %v549 = vld [vmem:[%s5 + $0x58] sm:$0xf]
      %v550 = vld [vmem:[%s5 + $0x5c] sm:$0xf]
      %v551 = vld [vmem:[%s5 + $0x60] sm:$0xf]
      %v552 = vld [vmem:[%s5 + $0x64] sm:$0xf]
      %v553 = vld [vmem:[%s5 + $0x68] sm:$0xf]
      %v554 = vld [vmem:[%s5 + $0x6c] sm:$0xf]
      %v555 = vld [vmem:[%s5 + $0x70] sm:$0xf]
      %v556 = vld [vmem:[%s5 + $0x74] sm:$0xf]
      %v557 = vld [vmem:[%s5 + $0x78] sm:$0xf]
      %v558 = vld [vmem:[%s5 + $0x7c] sm:$0xf]
      %v559 = vld [vmem:[%s5 + $0x80] sm:$0xf]
      %v560 = vld [vmem:[%s5 + $0x84] sm:$0xf]
      %v561 = vld [vmem:[%s5 + $0x88] sm:$0xf]
      %v562 = vld [vmem:[%s5 + $0x8c] sm:$0xf]
      %vm563 = vsmask.f32 7424
      %v565 = vshrl.u32 %v524, 16
      %v567 = vshll.u32 %v524, 16
      %v569 = vrot.slane %v567, 1
      %v570 = vor.u32 %v565, %v569
      %v572 = vshll.u32 %v525, 16
      %v574 = vrot.slane %v572, 1
      %v575 = vsel %vm563, %v570, %v574
      %v576 = vshrl.u32 %v525, 16
      %v578 = vor.u32 %v576, %v574
      %v580 = vshll.u32 %v526, 16
      %v582 = vrot.slane %v580, 1
      %v583 = vsel %vm563, %v578, %v582
      %v584 = vshrl.u32 %v526, 16
      %v586 = vor.u32 %v584, %v582
      %587 = vrot.lane.b32.xlu0 %v575, 8
      %v588 = vpop.permute.xlu0 %587
      %589 = vrot.lane.b32.xlu0 %v583, 8
      %v590 = vpop.permute.xlu0 %589
      %591 = vrot.lane.b32.xlu0 %v586, 8
      %v592 = vpop.permute.xlu0 %591
      %vm596 = vcmask 1046528
      %v597 = vrot.slane %v524, 1
      %v598 = vrot.slane %v525, 1
      %v599 = vsel %vm596, %v597, %v598
      %v600 = vrot.slane %v526, 1
      %v601 = vsel %vm596, %v598, %v600
      %602 = vrot.lane.b32.xlu0 %v599, 16
      %v603 = vpop.permute.xlu0 %602
      %604 = vrot.lane.b32.xlu0 %v601, 16
      %v605 = vpop.permute.xlu0 %604
      %606 = vrot.lane.b32.xlu0 %v600, 16
      %v607 = vpop.permute.xlu0 %606
      %vm608 = vsmask.f32 6400
      %v609 = vrot.slane %v565, 1
      %v610 = vrot.slane %v567, 2
      %v611 = vor.u32 %v609, %v610
      %v612 = vrot.slane %v576, 1
      %v613 = vrot.slane %v572, 2
      %v614 = vor.u32 %v612, %v613
      %v615 = vsel %vm608, %v611, %v614
      %v616 = vrot.slane %v584, 1
      %v617 = vrot.slane %v580, 2
      %v618 = vor.u32 %v616, %v617
      %v619 = vsel %vm608, %v614, %v618
      %620 = vrot.lane.b32.xlu0 %v615, 24
      %v621 = vpop.permute.xlu0 %620
      %622 = vrot.lane.b32.xlu0 %v619, 24
      %v623 = vpop.permute.xlu0 %622
      %624 = vrot.lane.b32.xlu0 %v618, 24
      %v625 = vpop.permute.xlu0 %624
      %vm626 = vcmask 1045504
      %v627 = vrot.slane %v524, 2
      %v628 = vrot.slane %v525, 2
      %v629 = vsel %vm626, %v627, %v628
      %v630 = vrot.slane %v526, 2
      %v631 = vsel %vm626, %v628, %v630
      %632 = vrot.lane.b32.xlu0 %v629, 32
      %v633 = vpop.permute.xlu0 %632
      %634 = vrot.lane.b32.xlu0 %v631, 32
      %v635 = vpop.permute.xlu0 %634
      %636 = vrot.lane.b32.xlu0 %v630, 32
      %v637 = vpop.permute.xlu0 %636
      %vm638 = vsmask.f32 5376
      %v639 = vrot.slane %v565, 2
      %v640 = vrot.slane %v567, 3
      %v641 = vor.u32 %v639, %v640
      %v642 = vrot.slane %v576, 2
      %v643 = vrot.slane %v572, 3
      %v644 = vor.u32 %v642, %v643
      %v645 = vsel %vm638, %v641, %v644
      %v646 = vrot.slane %v584, 2
      %v647 = vrot.slane %v580, 3
      %v648 = vor.u32 %v646, %v647
      %v649 = vsel %vm638, %v644, %v648
      %650 = vrot.lane.b32.xlu0 %v645, 40
      %v651 = vpop.permute.xlu0 %650
      %652 = vrot.lane.b32.xlu0 %v649, 40
      %v653 = vpop.permute.xlu0 %652
      %654 = vrot.lane.b32.xlu0 %v648, 40
      %v655 = vpop.permute.xlu0 %654
      %vm656 = vcmask 1044480
      %v657 = vrot.slane %v524, 3
      %v658 = vrot.slane %v525, 3
      %v659 = vsel %vm656, %v657, %v658
      %v660 = vrot.slane %v526, 3
      %v661 = vsel %vm656, %v658, %v660
      %662 = vrot.lane.b32.xlu0 %v659, 48
      %v663 = vpop.permute.xlu0 %662
      %664 = vrot.lane.b32.xlu0 %v661, 48
      %v665 = vpop.permute.xlu0 %664
      %666 = vrot.lane.b32.xlu0 %v660, 48
      %v667 = vpop.permute.xlu0 %666
      %vm668 = vsmask.f32 4352
      %v669 = vrot.slane %v565, 3
      %v670 = vrot.slane %v567, 4
      %v671 = vor.u32 %v669, %v670
      %v672 = vrot.slane %v576, 3
      %v673 = vrot.slane %v572, 4
      %v674 = vor.u32 %v672, %v673
      %v675 = vsel %vm668, %v671, %v674
      %v676 = vrot.slane %v584, 3
      %v677 = vrot.slane %v580, 4
      %v678 = vor.u32 %v676, %v677
      %v679 = vsel %vm668, %v674, %v678
      %680 = vrot.lane.b32.xlu0 %v675, 56
      %v681 = vpop.permute.xlu0 %680
      %682 = vrot.lane.b32.xlu0 %v679, 56
      %v683 = vpop.permute.xlu0 %682
      %684 = vrot.lane.b32.xlu0 %v678, 56
      %v685 = vpop.permute.xlu0 %684
      %vm686 = vcmask 1043456
      %v687 = vrot.slane %v524, 4
      %v688 = vrot.slane %v525, 4
      %v689 = vsel %vm686, %v687, %v688
      %v690 = vrot.slane %v526, 4
      %v691 = vsel %vm686, %v688, %v690
      %692 = vrot.lane.b32.xlu0 %v689, 64
      %v693 = vpop.permute.xlu0 %692
      %694 = vrot.lane.b32.xlu0 %v691, 64
      %v695 = vpop.permute.xlu0 %694
      %696 = vrot.lane.b32.xlu0 %v690, 64
      %v697 = vpop.permute.xlu0 %696
      %vm698 = vcmask 64512
      %v700 = vsel %vm698, %v524, %v588
      %v702 = vsel %vm698, %v525, %v590
      %v704 = vsel %vm698, %v526, %v592
      %vm705 = vcmask 130048
      %v707 = vsel %vm705, %v700, %v603
      %v709 = vsel %vm705, %v702, %v605
      %v711 = vsel %vm705, %v704, %v607
      %vm712 = vcmask 195584
      %v714 = vsel %vm712, %v707, %v621
      %v716 = vsel %vm712, %v709, %v623
      %v718 = vsel %vm712, %v711, %v625
      %v720 = vsel %vm319, %v714, %v633
      %v722 = vsel %vm319, %v716, %v635
      %v724 = vsel %vm319, %v718, %v637
      %vm725 = vcmask 326656
      %v727 = vsel %vm725, %v720, %v651
      %v729 = vsel %vm725, %v722, %v653
      %v731 = vsel %vm725, %v724, %v655
      %vm732 = vcmask 392192
      %v734 = vsel %vm732, %v727, %v663
      %v736 = vsel %vm732, %v729, %v665
      %v738 = vsel %vm732, %v731, %v667
      %vm739 = vcmask 457728
      %v741 = vsel %vm739, %v734, %v681
      %v743 = vsel %vm739, %v736, %v683
      %v745 = vsel %vm739, %v738, %v685
      %vm746 = vcmask 523264
      %v748 = vsel %vm746, %v741, %v693
      %v750 = vsel %vm746, %v743, %v695
      %v752 = vsel %vm746, %v745, %v697
      %v762 = vunpack.c.l.b16 %v527
      %v763 = vunpack.c.l.b16 %v528
      %v764 = vunpack.c.l.b16 %v529
      %v765 = vunpack.c.l.b16 %v530
      %v766 = vunpack.c.l.b16 %v531
      %v767 = vunpack.c.l.b16 %v532
      %v768 = vunpack.c.l.b16 %v533
      %v769 = vunpack.c.l.b16 %v534
      %v770 = vunpack.c.l.b16 %v535
      %v771 = vpack.c.b16 %v763, %v762
      %v772 = vpack.c.b16 %v765, %v764
      %v773 = vpack.c.b16 %v767, %v766
      %v774 = vpack.c.b16 %v769, %v768
      %v775 = vpack.c.b16 %v770, %v770
      %vm780 = vcmask 588800
      %v781 = vsel %vm780, %v748, 0
      %v783 = vsel %vm780, %v750, 0
      %v785 = vsel %vm780, %v752, 0
      %v788 = vsel %vm505, %v775, 0
      %790 = vmatprep.subr.bf16.mxu0 0
      %791 = vmatpush1.bf16.msra.mxu0 0
      %792 = vmatprep.subr.bf16.mxu0 0
      %793 = vmatpush1.bf16.msra.mxu0 0
      %794 = vmatprep.subr.bf16.mxu0 0
      %795 = vmatpush1.bf16.msra.mxu0 0
      %796 = vmatprep.subr.bf16.mxu0 0
      %797 = vmatpush1.bf16.msra.mxu0 %v788
      %798 = vmatprep.subr.bf16.mxu0 0
      %799 = vmatpush1.bf16.msra.mxu0 %v774
      %800 = vmatprep.subr.bf16.mxu0 0
      %801 = vmatpush1.bf16.msra.mxu0 %v773
      %802 = vmatprep.subr.bf16.mxu0 0
      %803 = vmatpush1.bf16.msra.mxu0 %v772
      %804 = vmatprep.subr.bf16.mxu0 0
      %805 = vmatpush1.bf16.msra.mxu0 %v771
      %806 = vmatprep.subr.bf16.mxu0 0
      %807 = vmatpush2.bf16.msra.mxu0 0
      %808 = vmatprep.subr.bf16.mxu0 0
      %809 = vmatpush2.bf16.msra.mxu0 0
      %810 = vmatprep.subr.bf16.mxu0 0
      %811 = vmatpush2.bf16.msra.mxu0 0
      %812 = vmatprep.subr.bf16.mxu0 0
      %813 = vmatpush2.bf16.msra.mxu0 0
      %814 = vmatprep.subr.bf16.mxu0 0
      %815 = vmatpush2.bf16.msra.mxu0 0
      %816 = vmatprep.subr.bf16.mxu0 0
      %817 = vmatpush2.bf16.msra.mxu0 0
      %818 = vmatprep.subr.bf16.mxu0 0
      %819 = vmatpush2.bf16.msra.mxu0 0
      %820 = vmatprep.subr.bf16.mxu0 0
      %821 = vmatpush2.bf16.msra.mxu0 0
      %822 = vmatprep.mubr.bf16.mxu0 0
      %823 = vmatmul.mubr.bf16.gmra.mxu0 %v781
      %v824 = vpop.f32.mrf.mxu0
      %v825 = vadd.f32 0.0, %v824
      %v826 = vpop.f32.mrf.mxu0
      %v827 = vpop.f32.mrf.mxu0
      %v828 = vadd.f32 0.0, %v827
      %v829 = vpop.f32.mrf.mxu0
      %830 = vmatprep.mubr.bf16.mxu0 0
      %831 = vmatmul.mubr.bf16.gmra.mxu0 %v783
      %v832 = vpop.f32.mrf.mxu0
      %v833 = vadd.f32 0.0, %v832
      %v834 = vpop.f32.mrf.mxu0
      %v835 = vpop.f32.mrf.mxu0
      %v836 = vadd.f32 0.0, %v835
      %v837 = vpop.f32.mrf.mxu0
      %838 = vmatprep.mubr.bf16.mxu0 0
      %839 = vmatmul.mubr.bf16.gmra.mxu0 %v785
      %v840 = vpop.f32.mrf.mxu0
      %v841 = vadd.f32 0.0, %v840
      %v842 = vpop.f32.mrf.mxu0
      %v843 = vpop.f32.mrf.mxu0
      %v844 = vpop.f32.mrf.mxu0
      %845 = vdwg.mxu0
      %846 = vrot.lane.b32.xlu0 %v524, 120
      %v847 = vpop.permute.xlu0 %846
      %848 = vrot.lane.b32.xlu0 %v525, 120
      %v849 = vpop.permute.xlu0 %848
      %850 = vrot.lane.b32.xlu0 %v526, 120
      %v851 = vpop.permute.xlu0 %850
      %852 = vrot.lane.b32.xlu0 %v599, 8
      %v853 = vpop.permute.xlu0 %852
      %854 = vrot.lane.b32.xlu0 %v601, 8
      %v855 = vpop.permute.xlu0 %854
      %856 = vrot.lane.b32.xlu0 %v600, 8
      %v857 = vpop.permute.xlu0 %856
      %858 = vrot.lane.b32.xlu0 %v615, 16
      %v859 = vpop.permute.xlu0 %858
      %860 = vrot.lane.b32.xlu0 %v619, 16
      %v861 = vpop.permute.xlu0 %860
      %862 = vrot.lane.b32.xlu0 %v618, 16
      %v863 = vpop.permute.xlu0 %862
      %864 = vrot.lane.b32.xlu0 %v629, 24
      %v865 = vpop.permute.xlu0 %864
      %866 = vrot.lane.b32.xlu0 %v631, 24
      %v867 = vpop.permute.xlu0 %866
      %868 = vrot.lane.b32.xlu0 %v630, 24
      %v869 = vpop.permute.xlu0 %868
      %870 = vrot.lane.b32.xlu0 %v645, 32
      %v871 = vpop.permute.xlu0 %870
      %872 = vrot.lane.b32.xlu0 %v649, 32
      %v873 = vpop.permute.xlu0 %872
      %874 = vrot.lane.b32.xlu0 %v648, 32
      %v875 = vpop.permute.xlu0 %874
      %876 = vrot.lane.b32.xlu0 %v659, 40
      %v877 = vpop.permute.xlu0 %876
      %878 = vrot.lane.b32.xlu0 %v661, 40
      %v879 = vpop.permute.xlu0 %878
      %880 = vrot.lane.b32.xlu0 %v660, 40
      %v881 = vpop.permute.xlu0 %880
      %882 = vrot.lane.b32.xlu0 %v675, 48
      %v883 = vpop.permute.xlu0 %882
      %884 = vrot.lane.b32.xlu0 %v679, 48
      %v885 = vpop.permute.xlu0 %884
      %886 = vrot.lane.b32.xlu0 %v678, 48
      %v887 = vpop.permute.xlu0 %886
      %888 = vrot.lane.b32.xlu0 %v689, 56
      %v889 = vpop.permute.xlu0 %888
      %890 = vrot.lane.b32.xlu0 %v691, 56
      %v891 = vpop.permute.xlu0 %890
      %892 = vrot.lane.b32.xlu0 %v690, 56
      %v893 = vpop.permute.xlu0 %892
      %v896 = vsel %vm698, %v847, %v575
      %v899 = vsel %vm698, %v849, %v583
      %v902 = vsel %vm698, %v851, %v586
      %v904 = vsel %vm705, %v896, %v853
      %v906 = vsel %vm705, %v899, %v855
      %v908 = vsel %vm705, %v902, %v857
      %v910 = vsel %vm712, %v904, %v859
      %v912 = vsel %vm712, %v906, %v861
      %v914 = vsel %vm712, %v908, %v863
      %v916 = vsel %vm319, %v910, %v865
      %v918 = vsel %vm319, %v912, %v867
      %v920 = vsel %vm319, %v914, %v869
      %v922 = vsel %vm725, %v916, %v871
      %v924 = vsel %vm725, %v918, %v873
      %v926 = vsel %vm725, %v920, %v875
      %v928 = vsel %vm732, %v922, %v877
      %v930 = vsel %vm732, %v924, %v879
      %v932 = vsel %vm732, %v926, %v881
      %v934 = vsel %vm739, %v928, %v883
      %v936 = vsel %vm739, %v930, %v885
      %v938 = vsel %vm739, %v932, %v887
      %v940 = vsel %vm746, %v934, %v889
      %v942 = vsel %vm746, %v936, %v891
      %v944 = vsel %vm746, %v938, %v893
      %v954 = vunpack.c.l.b16 %v536
      %v955 = vunpack.c.l.b16 %v537
      %v956 = vunpack.c.l.b16 %v538
      %v957 = vunpack.c.l.b16 %v539
      %v958 = vunpack.c.l.b16 %v540
      %v959 = vunpack.c.l.b16 %v541
      %v960 = vunpack.c.l.b16 %v542
      %v961 = vunpack.c.l.b16 %v543
      %v962 = vunpack.c.l.b16 %v544
      %v963 = vpack.c.b16 %v955, %v954
      %v964 = vpack.c.b16 %v957, %v956
      %v965 = vpack.c.b16 %v959, %v958
      %v966 = vpack.c.b16 %v961, %v960
      %v967 = vpack.c.b16 %v962, %v962
      %v972 = vsel %vm780, %v940, 0
      %v974 = vsel %vm780, %v942, 0
      %v976 = vsel %vm780, %v944, 0
      %v979 = vsel %vm505, %v967, 0
      %981 = vmatprep.subr.bf16.mxu0 0
      %982 = vmatpush1.bf16.msra.mxu0 0
      %983 = vmatprep.subr.bf16.mxu0 0
      %984 = vmatpush1.bf16.msra.mxu0 0
      %985 = vmatprep.subr.bf16.mxu0 0
      %986 = vmatpush1.bf16.msra.mxu0 0
      %987 = vmatprep.subr.bf16.mxu0 0
      %988 = vmatpush1.bf16.msra.mxu0 %v979
      %989 = vmatprep.subr.bf16.mxu0 0
      %990 = vmatpush1.bf16.msra.mxu0 %v966
      %991 = vmatprep.subr.bf16.mxu0 0
      %992 = vmatpush1.bf16.msra.mxu0 %v965
      %993 = vmatprep.subr.bf16.mxu0 0
      %994 = vmatpush1.bf16.msra.mxu0 %v964
      %995 = vmatprep.subr.bf16.mxu0 0
      %996 = vmatpush1.bf16.msra.mxu0 %v963
      %997 = vmatprep.subr.bf16.mxu0 0
      %998 = vmatpush2.bf16.msra.mxu0 0
      %999 = vmatprep.subr.bf16.mxu0 0
      %1000 = vmatpush2.bf16.msra.mxu0 0
      %1001 = vmatprep.subr.bf16.mxu0 0
      %1002 = vmatpush2.bf16.msra.mxu0 0
      %1003 = vmatprep.subr.bf16.mxu0 0
      %1004 = vmatpush2.bf16.msra.mxu0 0
      %1005 = vmatprep.subr.bf16.mxu0 0
      %1006 = vmatpush2.bf16.msra.mxu0 0
      %1007 = vmatprep.subr.bf16.mxu0 0
      %1008 = vmatpush2.bf16.msra.mxu0 0
      %1009 = vmatprep.subr.bf16.mxu0 0
      %1010 = vmatpush2.bf16.msra.mxu0 0
      %1011 = vmatprep.subr.bf16.mxu0 0
      %1012 = vmatpush2.bf16.msra.mxu0 0
      %1013 = vmatprep.mubr.bf16.mxu0 0
      %1014 = vmatmul.mubr.bf16.gmra.mxu0 %v972
      %v1015 = vpop.f32.mrf.mxu0
      %v1016 = vadd.f32 0.0, %v1015
      %v1017 = vpop.f32.mrf.mxu0
      %v1018 = vpop.f32.mrf.mxu0
      %v1019 = vadd.f32 0.0, %v1018
      %v1020 = vpop.f32.mrf.mxu0
      %1021 = vmatprep.mubr.bf16.mxu0 0
      %1022 = vmatmul.mubr.bf16.gmra.mxu0 %v974
      %v1023 = vpop.f32.mrf.mxu0
      %v1024 = vadd.f32 0.0, %v1023
      %v1025 = vpop.f32.mrf.mxu0
      %v1026 = vpop.f32.mrf.mxu0
      %v1027 = vadd.f32 0.0, %v1026
      %v1028 = vpop.f32.mrf.mxu0
      %1029 = vmatprep.mubr.bf16.mxu0 0
      %1030 = vmatmul.mubr.bf16.gmra.mxu0 %v976
      %v1031 = vpop.f32.mrf.mxu0
      %v1032 = vadd.f32 0.0, %v1031
      %v1033 = vpop.f32.mrf.mxu0
      %v1034 = vpop.f32.mrf.mxu0
      %v1035 = vpop.f32.mrf.mxu0
      %1036 = vdwg.mxu0
      %1037 = vrot.lane.b32.xlu0 %v524, 112
      %v1038 = vpop.permute.xlu0 %1037
      %1039 = vrot.lane.b32.xlu0 %v525, 112
      %v1040 = vpop.permute.xlu0 %1039
      %1041 = vrot.lane.b32.xlu0 %v526, 112
      %v1042 = vpop.permute.xlu0 %1041
      %1043 = vrot.lane.b32.xlu0 %v575, 120
      %v1044 = vpop.permute.xlu0 %1043
      %1045 = vrot.lane.b32.xlu0 %v583, 120
      %v1046 = vpop.permute.xlu0 %1045
      %1047 = vrot.lane.b32.xlu0 %v586, 120
      %v1048 = vpop.permute.xlu0 %1047
      %1049 = vrot.lane.b32.xlu0 %v615, 8
      %v1050 = vpop.permute.xlu0 %1049
      %1051 = vrot.lane.b32.xlu0 %v619, 8
      %v1052 = vpop.permute.xlu0 %1051
      %1053 = vrot.lane.b32.xlu0 %v618, 8
      %v1054 = vpop.permute.xlu0 %1053
      %1055 = vrot.lane.b32.xlu0 %v629, 16
      %v1056 = vpop.permute.xlu0 %1055
      %1057 = vrot.lane.b32.xlu0 %v631, 16
      %v1058 = vpop.permute.xlu0 %1057
      %1059 = vrot.lane.b32.xlu0 %v630, 16
      %v1060 = vpop.permute.xlu0 %1059
      %1061 = vrot.lane.b32.xlu0 %v645, 24
      %v1062 = vpop.permute.xlu0 %1061
      %1063 = vrot.lane.b32.xlu0 %v649, 24
      %v1064 = vpop.permute.xlu0 %1063
      %1065 = vrot.lane.b32.xlu0 %v648, 24
      %v1066 = vpop.permute.xlu0 %1065
      %1067 = vrot.lane.b32.xlu0 %v659, 32
      %v1068 = vpop.permute.xlu0 %1067
      %1069 = vrot.lane.b32.xlu0 %v661, 32
      %v1070 = vpop.permute.xlu0 %1069
      %1071 = vrot.lane.b32.xlu0 %v660, 32
      %v1072 = vpop.permute.xlu0 %1071
      %1073 = vrot.lane.b32.xlu0 %v675, 40
      %v1074 = vpop.permute.xlu0 %1073
      %1075 = vrot.lane.b32.xlu0 %v679, 40
      %v1076 = vpop.permute.xlu0 %1075
      %1077 = vrot.lane.b32.xlu0 %v678, 40
      %v1078 = vpop.permute.xlu0 %1077
      %1079 = vrot.lane.b32.xlu0 %v689, 48
      %v1080 = vpop.permute.xlu0 %1079
      %1081 = vrot.lane.b32.xlu0 %v691, 48
      %v1082 = vpop.permute.xlu0 %1081
      %1083 = vrot.lane.b32.xlu0 %v690, 48
      %v1084 = vpop.permute.xlu0 %1083
      %v1087 = vsel %vm698, %v1038, %v1044
      %v1090 = vsel %vm698, %v1040, %v1046
      %v1093 = vsel %vm698, %v1042, %v1048
      %v1095 = vsel %vm705, %v1087, %v599
      %v1097 = vsel %vm705, %v1090, %v601
      %v1099 = vsel %vm705, %v1093, %v600
      %v1101 = vsel %vm712, %v1095, %v1050
      %v1103 = vsel %vm712, %v1097, %v1052
      %v1105 = vsel %vm712, %v1099, %v1054
      %v1107 = vsel %vm319, %v1101, %v1056
      %v1109 = vsel %vm319, %v1103, %v1058
      %v1111 = vsel %vm319, %v1105, %v1060
      %v1113 = vsel %vm725, %v1107, %v1062
      %v1115 = vsel %vm725, %v1109, %v1064
      %v1117 = vsel %vm725, %v1111, %v1066
      %v1119 = vsel %vm732, %v1113, %v1068
      %v1121 = vsel %vm732, %v1115, %v1070
      %v1123 = vsel %vm732, %v1117, %v1072
      %v1125 = vsel %vm739, %v1119, %v1074
      %v1127 = vsel %vm739, %v1121, %v1076
      %v1129 = vsel %vm739, %v1123, %v1078
      %v1131 = vsel %vm746, %v1125, %v1080
      %v1133 = vsel %vm746, %v1127, %v1082
      %v1135 = vsel %vm746, %v1129, %v1084
      %v1145 = vunpack.c.l.b16 %v545
      %v1146 = vunpack.c.l.b16 %v546
      %v1147 = vunpack.c.l.b16 %v547
      %v1148 = vunpack.c.l.b16 %v548
      %v1149 = vunpack.c.l.b16 %v549
      %v1150 = vunpack.c.l.b16 %v550
      %v1151 = vunpack.c.l.b16 %v551
      %v1152 = vunpack.c.l.b16 %v552
      %v1153 = vunpack.c.l.b16 %v553
      %v1154 = vpack.c.b16 %v1146, %v1145
      %v1155 = vpack.c.b16 %v1148, %v1147
      %v1156 = vpack.c.b16 %v1150, %v1149
      %v1157 = vpack.c.b16 %v1152, %v1151
      %v1158 = vpack.c.b16 %v1153, %v1153
      %v1163 = vsel %vm780, %v1131, 0
      %v1165 = vsel %vm780, %v1133, 0
      %v1167 = vsel %vm780, %v1135, 0
      %v1170 = vsel %vm505, %v1158, 0
      %1172 = vmatprep.subr.bf16.mxu0 0
      %1173 = vmatpush1.bf16.msra.mxu0 0
      %1174 = vmatprep.subr.bf16.mxu0 0
      %1175 = vmatpush1.bf16.msra.mxu0 0
      %1176 = vmatprep.subr.bf16.mxu0 0
      %1177 = vmatpush1.bf16.msra.mxu0 0
      %1178 = vmatprep.subr.bf16.mxu0 0
      %1179 = vmatpush1.bf16.msra.mxu0 %v1170
      %1180 = vmatprep.subr.bf16.mxu0 0
      %1181 = vmatpush1.bf16.msra.mxu0 %v1157
      %1182 = vmatprep.subr.bf16.mxu0 0
      %1183 = vmatpush1.bf16.msra.mxu0 %v1156
      %1184 = vmatprep.subr.bf16.mxu0 0
      %1185 = vmatpush1.bf16.msra.mxu0 %v1155
      %1186 = vmatprep.subr.bf16.mxu0 0
      %1187 = vmatpush1.bf16.msra.mxu0 %v1154
      %1188 = vmatprep.subr.bf16.mxu0 0
      %1189 = vmatpush2.bf16.msra.mxu0 0
      %1190 = vmatprep.subr.bf16.mxu0 0
      %1191 = vmatpush2.bf16.msra.mxu0 0
      %1192 = vmatprep.subr.bf16.mxu0 0
      %1193 = vmatpush2.bf16.msra.mxu0 0
      %1194 = vmatprep.subr.bf16.mxu0 0
      %1195 = vmatpush2.bf16.msra.mxu0 0
      %1196 = vmatprep.subr.bf16.mxu0 0
      %1197 = vmatpush2.bf16.msra.mxu0 0
      %1198 = vmatprep.subr.bf16.mxu0 0
      %1199 = vmatpush2.bf16.msra.mxu0 0
      %1200 = vmatprep.subr.bf16.mxu0 0
      %1201 = vmatpush2.bf16.msra.mxu0 0
      %1202 = vmatprep.subr.bf16.mxu0 0
      %1203 = vmatpush2.bf16.msra.mxu0 0
      %1204 = vmatprep.mubr.bf16.mxu0 0
      %1205 = vmatmul.mubr.bf16.gmra.mxu0 %v1163
      %v1206 = vpop.f32.mrf.mxu0
      %v1207 = vadd.f32 0.0, %v1206
      %v1208 = vpop.f32.mrf.mxu0
      %v1209 = vpop.f32.mrf.mxu0
      %v1210 = vadd.f32 0.0, %v1209
      %v1211 = vpop.f32.mrf.mxu0
      %1212 = vmatprep.mubr.bf16.mxu0 0
      %1213 = vmatmul.mubr.bf16.gmra.mxu0 %v1165
      %v1214 = vpop.f32.mrf.mxu0
      %v1215 = vadd.f32 0.0, %v1214
      %v1216 = vpop.f32.mrf.mxu0
      %v1217 = vpop.f32.mrf.mxu0
      %v1218 = vadd.f32 0.0, %v1217
      %v1219 = vpop.f32.mrf.mxu0
      %1220 = vmatprep.mubr.bf16.mxu0 0
      %1221 = vmatmul.mubr.bf16.gmra.mxu0 %v1167
      %v1222 = vpop.f32.mrf.mxu0
      %v1223 = vadd.f32 0.0, %v1222
      %v1224 = vpop.f32.mrf.mxu0
      %v1225 = vpop.f32.mrf.mxu0
      %v1226 = vpop.f32.mrf.mxu0
      %1227 = vdwg.mxu0
      %1228 = vrot.lane.b32.xlu0 %v524, 104
      %v1229 = vpop.permute.xlu0 %1228
      %1230 = vrot.lane.b32.xlu0 %v525, 104
      %v1231 = vpop.permute.xlu0 %1230
      %1232 = vrot.lane.b32.xlu0 %v526, 104
      %v1233 = vpop.permute.xlu0 %1232
      %1234 = vrot.lane.b32.xlu0 %v575, 112
      %v1235 = vpop.permute.xlu0 %1234
      %1236 = vrot.lane.b32.xlu0 %v583, 112
      %v1237 = vpop.permute.xlu0 %1236
      %1238 = vrot.lane.b32.xlu0 %v586, 112
      %v1239 = vpop.permute.xlu0 %1238
      %1240 = vrot.lane.b32.xlu0 %v599, 120
      %v1241 = vpop.permute.xlu0 %1240
      %1242 = vrot.lane.b32.xlu0 %v601, 120
      %v1243 = vpop.permute.xlu0 %1242
      %1244 = vrot.lane.b32.xlu0 %v600, 120
      %v1245 = vpop.permute.xlu0 %1244
      %1246 = vrot.lane.b32.xlu0 %v629, 8
      %v1247 = vpop.permute.xlu0 %1246
      %1248 = vrot.lane.b32.xlu0 %v631, 8
      %v1249 = vpop.permute.xlu0 %1248
      %1250 = vrot.lane.b32.xlu0 %v630, 8
      %v1251 = vpop.permute.xlu0 %1250
      %1252 = vrot.lane.b32.xlu0 %v645, 16
      %v1253 = vpop.permute.xlu0 %1252
      %1254 = vrot.lane.b32.xlu0 %v649, 16
      %v1255 = vpop.permute.xlu0 %1254
      %1256 = vrot.lane.b32.xlu0 %v648, 16
      %v1257 = vpop.permute.xlu0 %1256
      %1258 = vrot.lane.b32.xlu0 %v659, 24
      %v1259 = vpop.permute.xlu0 %1258
      %1260 = vrot.lane.b32.xlu0 %v661, 24
      %v1261 = vpop.permute.xlu0 %1260
      %1262 = vrot.lane.b32.xlu0 %v660, 24
      %v1263 = vpop.permute.xlu0 %1262
      %1264 = vrot.lane.b32.xlu0 %v675, 32
      %v1265 = vpop.permute.xlu0 %1264
      %1266 = vrot.lane.b32.xlu0 %v679, 32
      %v1267 = vpop.permute.xlu0 %1266
      %1268 = vrot.lane.b32.xlu0 %v678, 32
      %v1269 = vpop.permute.xlu0 %1268
      %1270 = vrot.lane.b32.xlu0 %v689, 40
      %v1271 = vpop.permute.xlu0 %1270
      %1272 = vrot.lane.b32.xlu0 %v691, 40
      %v1273 = vpop.permute.xlu0 %1272
      %1274 = vrot.lane.b32.xlu0 %v690, 40
      %v1275 = vpop.permute.xlu0 %1274
      %v1278 = vsel %vm698, %v1229, %v1235
      %v1281 = vsel %vm698, %v1231, %v1237
      %v1284 = vsel %vm698, %v1233, %v1239
      %v1286 = vsel %vm705, %v1278, %v1241
      %v1288 = vsel %vm705, %v1281, %v1243
      %v1290 = vsel %vm705, %v1284, %v1245
      %v1292 = vsel %vm712, %v1286, %v615
      %v1294 = vsel %vm712, %v1288, %v619
      %v1296 = vsel %vm712, %v1290, %v618
      %v1298 = vsel %vm319, %v1292, %v1247
      %v1300 = vsel %vm319, %v1294, %v1249
      %v1302 = vsel %vm319, %v1296, %v1251
      %v1304 = vsel %vm725, %v1298, %v1253
      %v1306 = vsel %vm725, %v1300, %v1255
      %v1308 = vsel %vm725, %v1302, %v1257
      %v1310 = vsel %vm732, %v1304, %v1259
      %v1312 = vsel %vm732, %v1306, %v1261
      %v1314 = vsel %vm732, %v1308, %v1263
      %v1316 = vsel %vm739, %v1310, %v1265
      %v1318 = vsel %vm739, %v1312, %v1267
      %v1320 = vsel %vm739, %v1314, %v1269
      %v1322 = vsel %vm746, %v1316, %v1271
      %v1324 = vsel %vm746, %v1318, %v1273
      %v1326 = vsel %vm746, %v1320, %v1275
      %v1336 = vunpack.c.l.b16 %v554
      %v1337 = vunpack.c.l.b16 %v555
      %v1338 = vunpack.c.l.b16 %v556
      %v1339 = vunpack.c.l.b16 %v557
      %v1340 = vunpack.c.l.b16 %v558
      %v1341 = vunpack.c.l.b16 %v559
      %v1342 = vunpack.c.l.b16 %v560
      %v1343 = vunpack.c.l.b16 %v561
      %v1344 = vunpack.c.l.b16 %v562
      %v1345 = vpack.c.b16 %v1337, %v1336
      %v1346 = vpack.c.b16 %v1339, %v1338
      %v1347 = vpack.c.b16 %v1341, %v1340
      %v1348 = vpack.c.b16 %v1343, %v1342
      %v1349 = vpack.c.b16 %v1344, %v1344
      %v1354 = vsel %vm780, %v1322, 0
      %v1356 = vsel %vm780, %v1324, 0
      %v1358 = vsel %vm780, %v1326, 0
      %v1361 = vsel %vm505, %v1349, 0
      %1363 = vmatprep.subr.bf16.mxu0 0
      %1364 = vmatpush1.bf16.msra.mxu0 0
      %1365 = vmatprep.subr.bf16.mxu0 0
      %1366 = vmatpush1.bf16.msra.mxu0 0
      %1367 = vmatprep.subr.bf16.mxu0 0
      %1368 = vmatpush1.bf16.msra.mxu0 0
      %1369 = vmatprep.subr.bf16.mxu0 0
      %1370 = vmatpush1.bf16.msra.mxu0 %v1361
      %1371 = vmatprep.subr.bf16.mxu0 0
      %1372 = vmatpush1.bf16.msra.mxu0 %v1348
      %1373 = vmatprep.subr.bf16.mxu0 0
      %1374 = vmatpush1.bf16.msra.mxu0 %v1347
      %1375 = vmatprep.subr.bf16.mxu0 0
      %1376 = vmatpush1.bf16.msra.mxu0 %v1346
      %1377 = vmatprep.subr.bf16.mxu0 0
      %1378 = vmatpush1.bf16.msra.mxu0 %v1345
      %1379 = vmatprep.subr.bf16.mxu0 0
      %1380 = vmatpush2.bf16.msra.mxu0 0
      %1381 = vmatprep.subr.bf16.mxu0 0
      %1382 = vmatpush2.bf16.msra.mxu0 0
      %1383 = vmatprep.subr.bf16.mxu0 0
      %1384 = vmatpush2.bf16.msra.mxu0 0
      %1385 = vmatprep.subr.bf16.mxu0 0
      %1386 = vmatpush2.bf16.msra.mxu0 0
      %1387 = vmatprep.subr.bf16.mxu0 0
      %1388 = vmatpush2.bf16.msra.mxu0 0
      %1389 = vmatprep.subr.bf16.mxu0 0
      %1390 = vmatpush2.bf16.msra.mxu0 0
      %1391 = vmatprep.subr.bf16.mxu0 0
      %1392 = vmatpush2.bf16.msra.mxu0 0
      %1393 = vmatprep.subr.bf16.mxu0 0
      %1394 = vmatpush2.bf16.msra.mxu0 0
      %1395 = vmatprep.mubr.bf16.mxu0 0
      %1396 = vmatmul.mubr.bf16.gmra.mxu0 %v1354
      %v1397 = vpop.f32.mrf.mxu0
      %v1398 = vadd.f32 0.0, %v1397
      %v1399 = vpop.f32.mrf.mxu0
      %v1400 = vpop.f32.mrf.mxu0
      %v1401 = vadd.f32 0.0, %v1400
      %v1402 = vpop.f32.mrf.mxu0
      %1403 = vmatprep.mubr.bf16.mxu0 0
      %1404 = vmatmul.mubr.bf16.gmra.mxu0 %v1356
      %v1405 = vpop.f32.mrf.mxu0
      %v1406 = vadd.f32 0.0, %v1405
      %v1407 = vpop.f32.mrf.mxu0
      %v1408 = vpop.f32.mrf.mxu0
      %v1409 = vadd.f32 0.0, %v1408
      %v1410 = vpop.f32.mrf.mxu0
      %1411 = vmatprep.mubr.bf16.mxu0 0
      %1412 = vmatmul.mubr.bf16.gmra.mxu0 %v1358
      %v1413 = vpop.f32.mrf.mxu0
      %v1414 = vadd.f32 0.0, %v1413
      %v1415 = vpop.f32.mrf.mxu0
      %v1416 = vpop.f32.mrf.mxu0
      %v1417 = vpop.f32.mrf.mxu0
      %1418 = vdwg.mxu0
      %1424 = vrot.lane.b32.xlu0 %v1016, 8
      %v1425 = vpop.permute.xlu0 %1424
      %1426 = vrot.lane.b32.xlu0 %v1019, 8
      %v1427 = vpop.permute.xlu0 %1426
      %1428 = vrot.lane.b32.xlu0 %v1024, 8
      %v1429 = vpop.permute.xlu0 %1428
      %1430 = vrot.lane.b32.xlu0 %v1027, 8
      %v1431 = vpop.permute.xlu0 %1430
      %1432 = vrot.lane.b32.xlu0 %v1032, 8
      %v1433 = vpop.permute.xlu0 %1432
      %1444 = vrot.lane.b32.xlu0 %v1207, 16
      %v1445 = vpop.permute.xlu0 %1444
      %1446 = vrot.lane.b32.xlu0 %v1210, 16
      %v1447 = vpop.permute.xlu0 %1446
      %1448 = vrot.lane.b32.xlu0 %v1215, 16
      %v1449 = vpop.permute.xlu0 %1448
      %1450 = vrot.lane.b32.xlu0 %v1218, 16
      %v1451 = vpop.permute.xlu0 %1450
      %1452 = vrot.lane.b32.xlu0 %v1223, 16
      %v1453 = vpop.permute.xlu0 %1452
      %1464 = vrot.lane.b32.xlu0 %v1398, 24
      %v1465 = vpop.permute.xlu0 %1464
      %1466 = vrot.lane.b32.xlu0 %v1401, 24
      %v1467 = vpop.permute.xlu0 %1466
      %1468 = vrot.lane.b32.xlu0 %v1406, 24
      %v1469 = vpop.permute.xlu0 %1468
      %1470 = vrot.lane.b32.xlu0 %v1409, 24
      %v1471 = vpop.permute.xlu0 %1470
      %1472 = vrot.lane.b32.xlu0 %v1414, 24
      %v1473 = vpop.permute.xlu0 %1472
      %v1479 = vsel %vm698, %v825, %v1425
      %v1480 = vsel %vm698, %v828, %v1427
      %v1481 = vsel %vm698, %v833, %v1429
      %v1482 = vsel %vm698, %v836, %v1431
      %v1483 = vsel %vm698, %v841, %v1433
      %v1484 = vsel %vm705, %v1479, %v1445
      %v1485 = vsel %vm705, %v1480, %v1447
      %v1486 = vsel %vm705, %v1481, %v1449
      %v1487 = vsel %vm705, %v1482, %v1451
      %v1488 = vsel %vm705, %v1483, %v1453
      %v1489 = vsel %vm712, %v1484, %v1465
      %v1490 = vsel %vm712, %v1485, %v1467
      %v1491 = vsel %vm712, %v1486, %v1469
      %v1492 = vsel %vm712, %v1487, %v1471
      %v1493 = vsel %vm712, %v1488, %v1473
      %v1494 = vld [vmem:[%s6] sm:$0x1]
      %v1496 = vlaneseq
      %v1497 = vshrl.u32 %v1496, 7
      %v1498 = vsub.s32 0, %v1497
      %v1499 = vrot.slane %v1494, %v1498
      %v1501 = vadd.f32 %v1489, %v1499
      %v1502 = vadd.f32 %v1490, %v1499
      %v1503 = vadd.f32 %v1491, %v1499
      %v1504 = vadd.f32 %v1492, %v1499
      %v1505 = vadd.f32 %v1493, %v1499
      %v1506 = vsel %vm319, %v1501, 0.0
      %1507 = vadd.xlane.f32.xlu0 %v1506
      %v1508 = vpop.xlane.xlu0 %1507
      %v1509 = vsel %vm319, %v1502, 0.0
      %1510 = vadd.xlane.f32.xlu0 %v1509
      %v1511 = vpop.xlane.xlu0 %1510
      %v1512 = vsel %vm319, %v1503, 0.0
      %1513 = vadd.xlane.f32.xlu0 %v1512
      %v1514 = vpop.xlane.xlu0 %1513
      %v1515 = vsel %vm319, %v1504, 0.0
      %1516 = vadd.xlane.f32.xlu0 %v1515
      %v1517 = vpop.xlane.xlu0 %1516
      %v1518 = vsel %vm332, %v1505, 0.0
      %1519 = vadd.xlane.f32.xlu0 %v1518
      %v1520 = vpop.xlane.xlu0 %1519
      %v1521 = vmul.f32 %v1508, %v336
      %v1522 = vmul.f32 %v1511, %v336
      %v1523 = vmul.f32 %v1514, %v336
      %v1524 = vmul.f32 %v1517, %v336
      %v1525 = vmul.f32 %v1520, %v336
      %v1526 = vsub.f32 %v1501, %v1521
      %v1527 = vsub.f32 %v1502, %v1522
      %v1528 = vsub.f32 %v1503, %v1523
      %v1529 = vsub.f32 %v1504, %v1524
      %v1530 = vsub.f32 %v1505, %v1525
      %v1531 = vmul.f32 %v1526, %v1526
      %v1532 = vmul.f32 %v1527, %v1527
      %v1533 = vmul.f32 %v1528, %v1528
      %v1534 = vmul.f32 %v1529, %v1529
      %v1535 = vmul.f32 %v1530, %v1530
      %v1536 = vsel %vm319, %v1531, 0.0
      %1537 = vadd.xlane.f32.xlu0 %v1536
      %v1538 = vpop.xlane.xlu0 %1537
      %v1539 = vsel %vm319, %v1532, 0.0
      %1540 = vadd.xlane.f32.xlu0 %v1539
      %v1541 = vpop.xlane.xlu0 %1540
      %v1542 = vsel %vm319, %v1533, 0.0
      %1543 = vadd.xlane.f32.xlu0 %v1542
      %v1544 = vpop.xlane.xlu0 %1543
      %v1545 = vsel %vm319, %v1534, 0.0
      %1546 = vadd.xlane.f32.xlu0 %v1545
      %v1547 = vpop.xlane.xlu0 %1546
      %v1548 = vsel %vm332, %v1535, 0.0
      %1549 = vadd.xlane.f32.xlu0 %v1548
      %v1550 = vpop.xlane.xlu0 %1549
      %v1551 = vmul.f32 %v1538, %v336
      %v1552 = vmul.f32 %v1541, %v336
      %v1553 = vmul.f32 %v1544, %v336
      %v1554 = vmul.f32 %v1547, %v336
      %v1555 = vmul.f32 %v1550, %v336
      %v1556 = vadd.f32 %v1551, 1e-05
      %v1557 = vadd.f32 %v1552, 1e-05
      %v1558 = vadd.f32 %v1553, 1e-05
      %v1559 = vadd.f32 %v1554, 1e-05
      %v1560 = vadd.f32 %v1555, 1e-05
      %v1561 = vrsqrt.pop %v1556
      %v1562 = vrsqrt.pop %v1557
      %v1563 = vrsqrt.pop %v1558
      %v1564 = vrsqrt.pop %v1559
      %v1565 = vrsqrt.pop %v1560
      %v1566 = vmul.f32 %v1526, %v1561
      %v1567 = vmul.f32 %v1527, %v1562
      %v1568 = vmul.f32 %v1528, %v1563
      %v1569 = vmul.f32 %v1529, %v1564
      %v1570 = vmul.f32 %v1530, %v1565
      %v1571 = vmul.f32 %v1566, 0.5
      %v1572 = vmul.f32 %v1567, 0.5
      %v1573 = vmul.f32 %v1568, 0.5
      %v1574 = vmul.f32 %v1569, 0.5
      %v1575 = vmul.f32 %v1570, 0.5
      %v1576 = vmul.f32 %v1566, 0.044715
      %v1577 = vmul.f32 %v1567, 0.044715
      %v1578 = vmul.f32 %v1568, 0.044715
      %v1579 = vmul.f32 %v1569, 0.044715
      %v1580 = vmul.f32 %v1570, 0.044715
      %v1581 = vmul.f32 %v1576, %v1566
      %v1582 = vmul.f32 %v1577, %v1567
      %v1583 = vmul.f32 %v1578, %v1568
      %v1584 = vmul.f32 %v1579, %v1569
      %v1585 = vmul.f32 %v1580, %v1570
      %v1586 = vmul.f32 %v1581, %v1566
      %v1587 = vmul.f32 %v1582, %v1567
      %v1588 = vmul.f32 %v1583, %v1568
      %v1589 = vmul.f32 %v1584, %v1569
      %v1590 = vmul.f32 %v1585, %v1570
      %v1591 = vadd.f32 %v1566, %v1586
      %v1592 = vadd.f32 %v1567, %v1587
      %v1593 = vadd.f32 %v1568, %v1588
      %v1594 = vadd.f32 %v1569, %v1589
      %v1595 = vadd.f32 %v1570, %v1590
      %v1596 = vmul.f32 %v1591, 0.7978846
      %v1597 = vmul.f32 %v1592, 0.7978846
      %v1598 = vmul.f32 %v1593, 0.7978846
      %v1599 = vmul.f32 %v1594, 0.7978846
      %v1600 = vmul.f32 %v1595, 0.7978846
      %v1601 = vtanh.pop %v1596
      %v1602 = vtanh.pop %v1597
      %v1603 = vtanh.pop %v1598
      %v1604 = vtanh.pop %v1599
      %v1605 = vtanh.pop %v1600
      %v1606 = vadd.f32 %v1601, 1.0
      %v1607 = vadd.f32 %v1602, 1.0
      %v1608 = vadd.f32 %v1603, 1.0
      %v1609 = vadd.f32 %v1604, 1.0
      %v1610 = vadd.f32 %v1605, 1.0
      %v1611 = vmul.f32 %v1571, %v1606
      %v1612 = vmul.f32 %v1572, %v1607
      %v1613 = vmul.f32 %v1573, %v1608
      %v1614 = vmul.f32 %v1574, %v1609
      %v1615 = vmul.f32 %v1575, %v1610
      %v1616 = vadd.f32 %v479, %v1611
      %v1617 = vadd.f32 %v482, %v1612
      %v1618 = vadd.f32 %v487, %v1613
      %v1619 = vadd.f32 %v490, %v1614
      %v1620 = vadd.f32 %v495, %v1615
      %v1621 = vld [vmem:[%s7] sm:$0x1]
      %vm1627 = vcmask 1040384
      %v1628 = vrot.slane %v1616, 7
      %v1629 = vrot.slane %v1617, 7
      %v1630 = vsel %vm1627, %v1628, %v1629
      %v1631 = vrot.slane %v1618, 7
      %v1632 = vsel %vm1627, %v1629, %v1631
      %v1633 = vrot.slane %v1619, 7
      %v1634 = vsel %vm1627, %v1631, %v1633
      %v1635 = vrot.slane %v1620, 7
      %v1636 = vsel %vm1627, %v1633, %v1635
      %v1642 = vsel %vm1627, %v1621, %v1628
      %1643 = vst.msk [vmem:[%s305] sm:$0xff] %vm319, %v1642
      %1644 = vst.msk [vmem:[%s305 + $0x8] sm:$0xff] %vm319, %v1630
      %1645 = vst.msk [vmem:[%s305 + $0x10] sm:$0xff] %vm319, %v1632
      %1646 = vst.msk [vmem:[%s305 + $0x18] sm:$0xff] %vm319, %v1634
      %1647 = vst.msk [vmem:[%s305 + $0x20] sm:$0xff] %vm319, %v1636
      %p1648 = scmp.lt.s32.totalorder %s19, 1
      %s1649 = scalar_select %p1648, %s19, 1
      %s1650 = smul.addr %s1649, 5
      %s1651 = smul.addr %s1650, 8
      %s1652 = scalar_lea.vmem %s8, %s1651
      // Predicated region
      $region53: #{emotion2vec_forward.8} parent=51 // pred_check
        %p1653 = pneg %p210
      $region54: #{emotion2vec_forward.8} parent=51 // pred_check_branch
        %1655 = sbr.rel (%p1653) target = $region56
      $region55: #{emotion2vec_forward.8} parent=51 // pred_region
        _
      $region56: #{emotion2vec_forward.8} parent=51 // pred_fallthru
        _
    $region52: #{emotion2vec_forward.8} parent=5 // pred_fallthru
      _
    %p1656 = scmp.le.s32.totalorder 2, %s14
    // Predicated region
    $region57: #{emotion2vec_forward.8} parent=5 // pred_check
      %p1657 = pneg %p1656
    $region58: #{emotion2vec_forward.8} parent=5 // pred_check_branch
      %1659 = sbr.rel (%p1657) target = $region60
    $region59: #{emotion2vec_forward.8} parent=5 // pred_region
      %s1660 = ssub.s32 %s14, 2
      // Predicated region
      $region61: #{emotion2vec_forward.8} parent=59 // pred_check
        %p1661 = pneg %p216
      $region62: #{emotion2vec_forward.8} parent=59 // pred_check_branch
        %1663 = sbr.rel (%p1661) target = $region64
      $region63: #{emotion2vec_forward.8} parent=59 // pred_region
        %p1664 = scmp.lt.s32.totalorder %s20, 1
        %s1665 = scalar_select %p1664, %s20, 1
        %s1666 = smul.addr %s1665, 5
        %s1667 = smul.addr %s1666, 8
        %s1668 = scalar_lea.vmem %s8, %s1667
      $region64: #{emotion2vec_forward.8} parent=59 // pred_fallthru
        _
    $region60: #{emotion2vec_forward.8} parent=5 // pred_fallthru
      _
  $region6: #{emotion2vec_forward.8} parent=0 // loop_footer
    %s18 = sadd.s32 1, %s14
  $region7: #{emotion2vec_forward.8} parent=0 // loop_footer_branch
    %13 = sbr.rel target = $region3
  $region8: #{emotion2vec_forward.8} parent=0 // loop_exit
    _

// kernel: emotion2vec_forward.9
$region0: #{emotion2vec_forward.9}
  #allocation0 [shape = 'u32[]', space=smem, size = 0x4, offset = 0x4, fixed_abs, tag = 'smem constant byte address 0x4 - core index']
  #allocation1 [shape = 'u32[144,128]{1,0:T(1,128)}', space=vmem, size = 0x12000, scoped, tag = 'internal scratch']
  %s0 = inlined_call_operand.vmem [shape: f32[2,40,32], index: 0, kind: input, shape index: {}]
  %s1 = inlined_call_operand.vmem [shape: bf16[3,32,96], index: 1, kind: input, shape index: {}]
  %s2 = inlined_call_operand.vmem [shape: bf16[3,32,32], index: 2, kind: input, shape index: {}]
  %s3 = inlined_call_operand.vmem [shape: bf16[3,32,128], index: 3, kind: input, shape index: {}]
  %s4 = inlined_call_operand.vmem [shape: bf16[3,128,32], index: 4, kind: input, shape index: {}]
  %s5 = inlined_call_operand.vmem [shape: f32[3,9,32], index: 5, kind: input, shape index: {}]
  %s6 = inlined_call_operand.vmem [shape: f32[3,1,128], index: 6, kind: input, shape index: {}]
  %s7 = inlined_call_operand.vmem [shape: f32[1,32], index: 7, kind: input, shape index: {}]
  %s8 = inlined_call_operand.vmem [shape: f32[1,32], index: 8, kind: input, shape index: {}]
  %s9 = inlined_call_operand.vmem [shape: f32[2,40,32], index: 9, kind: output, shape index: {}]
  %s10 = sld [smem:[#allocation0]]
  $region77: #{emotion2vec_forward.9} parent=0
    _
  %s12 = ssub.s32 1, %s10
  %s13 = scalar_select 0, %s12, %s10
  loop: start=0, step=1, limit=8
  $region2: #{emotion2vec_forward.9} parent=0 // loop_pre_header
    _
  $region3: #{emotion2vec_forward.9} parent=0 // loop_header
    %s15 = sphi 0, %s19
    %p16 = scmp.ge.s32.totalorder %s15, 8
    %s22 = sphi 0, %s34
    %s23 = sphi 0, %s30
    %s24 = sphi 0, %s22
    %s25 = sphi 0, %s23
    %s26 = sphi 0, %s24
    %s27 = sphi 0, %s25
    %s37 = sphi 0, %s39
    %s40 = sphi 0, %s37
    %s41 = sphi 0, %s40
    %s57 = sphi 0, %s41
    %s63 = sphi 0, %s65
    %s66 = sphi 0, %s63
    %s67 = sphi 0, %s66
    %s83 = sphi 0, %s67
    %s89 = sphi 0, %s91
    %s92 = sphi 0, %s89
    %s93 = sphi 0, %s92
    %s109 = sphi 0, %s93
    %s115 = sphi 0, %s117
    %s118 = sphi 0, %s115
    %s119 = sphi 0, %s118
    %s135 = sphi 0, %s119
    %s141 = sphi 0, %s143
    %s144 = sphi 0, %s141
    %s145 = sphi 0, %s144
    %s161 = sphi 0, %s145
    %s167 = sphi 0, %s169
    %s170 = sphi 0, %s167
    %s171 = sphi 0, %s170
    %s187 = sphi 0, %s171
    %s193 = sphi 0, %s195
    %s196 = sphi 0, %s193
    %s197 = sphi 0, %s196
    %s213 = sphi 0, %s197
    %s217 = sphi 0, %s217
    %s219 = sphi 0, %s217
    %s220 = sphi 0, %s219
    %s234 = sphi 0, %s220
    %s238 = sphi 0, %s238
    %s240 = sphi 0, %s238
    %s241 = sphi 0, %s240
    %s255 = sphi 0, %s241
    %s261 = sphi 0, %s263
    %s264 = sphi 0, %s261
    %s265 = sphi 0, %s264
    %s281 = sphi 0, %s265
  $region4: #{emotion2vec_forward.9} parent=0 // loop_header_branch
    %18 = sbr.rel (%p16) target = $region8
  $region5: #{emotion2vec_forward.9} parent=0 // loop_body
    %s20 = ssub.s32 %s15, 1
    %s21 = ssub.s32 %s15, 2
    %s28 = sadd.s32 1, %s23
    %p29 = scmp.ge.s32.totalorder %s28, 3
    %s30 = scalar_select %p29, 0, %s28
    %s31 = sadd.s32 1, %s22
    %s32 = scalar_select %p29, %s31, %s22
    %p33 = scmp.ge.s32.totalorder %s32, 2
    %s34 = scalar_select %p33, 0, %s32
    %s35 = ssub.s32 %s22, %s34
    %p36 = scmp.eq.s32.totalorder %s35, 0
    %s38 = sadd.s32 %s37, 1
    %s39 = scalar_select %p36, %s37, %s38
    %p42 = pneg %p36
    %p43 = scmp.eq.s32.totalorder %s15, 5
    %p44 = por %p42, %p43
    %p45 = scmp.ne.s32.totalorder %s37, %s40
    %p46 = scmp.eq.s32.totalorder %s15, 0
    %p47 = por %p45, %p46
    %p48 = scmp.ne.s32.totalorder %s37, %s40
    %p49 = scmp.eq.s32.totalorder %s20, 5
    %p50 = por %p48, %p49
    %p51 = scmp.ne.s32.totalorder %s40, %s41
    %p52 = scmp.eq.s32.totalorder %s20, 0
    %p53 = por %p51, %p52
    %p54 = scmp.ne.s32.totalorder %s40, %s41
    %p55 = scmp.eq.s32.totalorder %s21, 5
    %p56 = por %p54, %p55
    %p58 = scmp.ne.s32.totalorder %s41, %s57
    %p59 = scmp.eq.s32.totalorder %s21, 0
    %p60 = por %p58, %p59
    %s61 = ssub.s32 %s23, %s30
    %p62 = scmp.eq.s32.totalorder %s61, 0
    %s64 = sadd.s32 %s63, 1
    %s65 = scalar_select %p62, %s63, %s64
    %p68 = pneg %p62
    %p69 = scmp.eq.s32.totalorder %s15, 5
    %p70 = por %p68, %p69
    %p71 = scmp.ne.s32.totalorder %s63, %s66
    %p72 = scmp.eq.s32.totalorder %s15, 0
    %p73 = por %p71, %p72
    %p74 = scmp.ne.s32.totalorder %s63, %s66
    %p75 = scmp.eq.s32.totalorder %s20, 5
    %p76 = por %p74, %p75
    %p77 = scmp.ne.s32.totalorder %s66, %s67
    %p78 = scmp.eq.s32.totalorder %s20, 0
    %p79 = por %p77, %p78
    %p80 = scmp.ne.s32.totalorder %s66, %s67
    %p81 = scmp.eq.s32.totalorder %s21, 5
    %p82 = por %p80, %p81
    %p84 = scmp.ne.s32.totalorder %s67, %s83
    %p85 = scmp.eq.s32.totalorder %s21, 0
    %p86 = por %p84, %p85
    %s87 = ssub.s32 %s23, %s30
    %p88 = scmp.eq.s32.totalorder %s87, 0
    %s90 = sadd.s32 %s89, 1
    %s91 = scalar_select %p88, %s89, %s90
    %p94 = pneg %p88
    %p95 = scmp.eq.s32.totalorder %s15, 5
    %p96 = por %p94, %p95
    %p97 = scmp.ne.s32.totalorder %s89, %s92
    %p98 = scmp.eq.s32.totalorder %s15, 0
    %p99 = por %p97, %p98
    %p100 = scmp.ne.s32.totalorder %s89, %s92
    %p101 = scmp.eq.s32.totalorder %s20, 5
    %p102 = por %p100, %p101
    %p103 = scmp.ne.s32.totalorder %s92, %s93
    %p104 = scmp.eq.s32.totalorder %s20, 0
    %p105 = por %p103, %p104
    %p106 = scmp.ne.s32.totalorder %s92, %s93
    %p107 = scmp.eq.s32.totalorder %s21, 5
    %p108 = por %p106, %p107
    %p110 = scmp.ne.s32.totalorder %s93, %s109
    %p111 = scmp.eq.s32.totalorder %s21, 0
    %p112 = por %p110, %p111
    %s113 = ssub.s32 %s23, %s30
    %p114 = scmp.eq.s32.totalorder %s113, 0
    %s116 = sadd.s32 %s115, 1
    %s117 = scalar_select %p114, %s115, %s116
    %p120 = pneg %p114
    %p121 = scmp.eq.s32.totalorder %s15, 5
    %p122 = por %p120, %p121
    %p123 = scmp.ne.s32.totalorder %s115, %s118
    %p124 = scmp.eq.s32.totalorder %s15, 0
    %p125 = por %p123, %p124
    %p126 = scmp.ne.s32.totalorder %s115, %s118
    %p127 = scmp.eq.s32.totalorder %s20, 5
    %p128 = por %p126, %p127
    %p129 = scmp.ne.s32.totalorder %s118, %s119
    %p130 = scmp.eq.s32.totalorder %s20, 0
    %p131 = por %p129, %p130
    %p132 = scmp.ne.s32.totalorder %s118, %s119
    %p133 = scmp.eq.s32.totalorder %s21, 5
    %p134 = por %p132, %p133
    %p136 = scmp.ne.s32.totalorder %s119, %s135
    %p137 = scmp.eq.s32.totalorder %s21, 0
    %p138 = por %p136, %p137
    %s139 = ssub.s32 %s23, %s30
    %p140 = scmp.eq.s32.totalorder %s139, 0
    %s142 = sadd.s32 %s141, 1
    %s143 = scalar_select %p140, %s141, %s142
    %p146 = pneg %p140
    %p147 = scmp.eq.s32.totalorder %s15, 5
    %p148 = por %p146, %p147
    %p149 = scmp.ne.s32.totalorder %s141, %s144
    %p150 = scmp.eq.s32.totalorder %s15, 0
    %p151 = por %p149, %p150
    %p152 = scmp.ne.s32.totalorder %s141, %s144
    %p153 = scmp.eq.s32.totalorder %s20, 5
    %p154 = por %p152, %p153
    %p155 = scmp.ne.s32.totalorder %s144, %s145
    %p156 = scmp.eq.s32.totalorder %s20, 0
    %p157 = por %p155, %p156
    %p158 = scmp.ne.s32.totalorder %s144, %s145
    %p159 = scmp.eq.s32.totalorder %s21, 5
    %p160 = por %p158, %p159
    %p162 = scmp.ne.s32.totalorder %s145, %s161
    %p163 = scmp.eq.s32.totalorder %s21, 0
    %p164 = por %p162, %p163
    %s165 = ssub.s32 %s23, %s30
    %p166 = scmp.eq.s32.totalorder %s165, 0
    %s168 = sadd.s32 %s167, 1
    %s169 = scalar_select %p166, %s167, %s168
    %p172 = pneg %p166
    %p173 = scmp.eq.s32.totalorder %s15, 5
    %p174 = por %p172, %p173
    %p175 = scmp.ne.s32.totalorder %s167, %s170
    %p176 = scmp.eq.s32.totalorder %s15, 0
    %p177 = por %p175, %p176
    %p178 = scmp.ne.s32.totalorder %s167, %s170
    %p179 = scmp.eq.s32.totalorder %s20, 5
    %p180 = por %p178, %p179
    %p181 = scmp.ne.s32.totalorder %s170, %s171
    %p182 = scmp.eq.s32.totalorder %s20, 0
    %p183 = por %p181, %p182
    %p184 = scmp.ne.s32.totalorder %s170, %s171
    %p185 = scmp.eq.s32.totalorder %s21, 5
    %p186 = por %p184, %p185
    %p188 = scmp.ne.s32.totalorder %s171, %s187
    %p189 = scmp.eq.s32.totalorder %s21, 0
    %p190 = por %p188, %p189
    %s191 = ssub.s32 %s23, %s30
    %p192 = scmp.eq.s32.totalorder %s191, 0
    %s194 = sadd.s32 %s193, 1
    %s195 = scalar_select %p192, %s193, %s194
    %p198 = pneg %p192
    %p199 = scmp.eq.s32.totalorder %s15, 5
    %p200 = por %p198, %p199
    %p201 = scmp.ne.s32.totalorder %s193, %s196
    %p202 = scmp.eq.s32.totalorder %s15, 0
    %p203 = por %p201, %p202
    %p204 = scmp.ne.s32.totalorder %s193, %s196
    %p205 = scmp.eq.s32.totalorder %s20, 5
    %p206 = por %p204, %p205
    %p207 = scmp.ne.s32.totalorder %s196, %s197
    %p208 = scmp.eq.s32.totalorder %s20, 0
    %p209 = por %p207, %p208
    %p210 = scmp.ne.s32.totalorder %s196, %s197
    %p211 = scmp.eq.s32.totalorder %s21, 5
    %p212 = por %p210, %p211
    %p214 = scmp.ne.s32.totalorder %s197, %s213
    %p215 = scmp.eq.s32.totalorder %s21, 0
    %p216 = por %p214, %p215
    %s218 = sadd.s32 %s217, 1
    %p221 = scmp.eq.s32.totalorder %s15, 5
    %p222 = scmp.ne.s32.totalorder %s217, %s219
    %p223 = scmp.eq.s32.totalorder %s15, 0
    %p224 = por %p222, %p223
    %p225 = scmp.ne.s32.totalorder %s217, %s219
    %p226 = scmp.eq.s32.totalorder %s20, 5
    %p227 = por %p225, %p226
    %p228 = scmp.ne.s32.totalorder %s219, %s220
    %p229 = scmp.eq.s32.totalorder %s20, 0
    %p230 = por %p228, %p229
    %p231 = scmp.ne.s32.totalorder %s219, %s220
    %p232 = scmp.eq.s32.totalorder %s21, 5
    %p233 = por %p231, %p232
    %p235 = scmp.ne.s32.totalorder %s220, %s234
    %p236 = scmp.eq.s32.totalorder %s21, 0
    %p237 = por %p235, %p236
    %s239 = sadd.s32 %s238, 1
    %p242 = scmp.eq.s32.totalorder %s15, 5
    %p243 = scmp.ne.s32.totalorder %s238, %s240
    %p244 = scmp.eq.s32.totalorder %s15, 0
    %p245 = por %p243, %p244
    %p246 = scmp.ne.s32.totalorder %s238, %s240
    %p247 = scmp.eq.s32.totalorder %s20, 5
    %p248 = por %p246, %p247
    %p249 = scmp.ne.s32.totalorder %s240, %s241
    %p250 = scmp.eq.s32.totalorder %s20, 0
    %p251 = por %p249, %p250
    %p252 = scmp.ne.s32.totalorder %s240, %s241
    %p253 = scmp.eq.s32.totalorder %s21, 5
    %p254 = por %p252, %p253
    %p256 = scmp.ne.s32.totalorder %s241, %s255
    %p257 = scmp.eq.s32.totalorder %s21, 0
    %p258 = por %p256, %p257
    %s259 = ssub.s32 %s22, %s34
    %p260 = scmp.eq.s32.totalorder %s259, 0
    %s262 = sadd.s32 %s261, 1
    %s263 = scalar_select %p260, %s261, %s262
    %p266 = pneg %p260
    %p267 = scmp.eq.s32.totalorder %s15, 5
    %p268 = por %p266, %p267
    %p269 = scmp.ne.s32.totalorder %s261, %s264
    %p270 = scmp.eq.s32.totalorder %s15, 0
    %p271 = por %p269, %p270
    %p272 = scmp.ne.s32.totalorder %s261, %s264
    %p273 = scmp.eq.s32.totalorder %s20, 5
    %p274 = por %p272, %p273
    %p275 = scmp.ne.s32.totalorder %s264, %s265
    %p276 = scmp.eq.s32.totalorder %s20, 0
    %p277 = por %p275, %p276
    %p278 = scmp.ne.s32.totalorder %s264, %s265
    %p279 = scmp.eq.s32.totalorder %s21, 5
    %p280 = por %p278, %p279
    %p282 = scmp.ne.s32.totalorder %s265, %s281
    %p283 = scmp.eq.s32.totalorder %s21, 0
    %p284 = por %p282, %p283
    %p285 = scmp.le.s32.totalorder 1, %s15
    %p286 = scmp.lt.s32.totalorder %s15, 7
    %p287 = pnand %p285, %p286
    %p288 = pneg %p287
    // Predicated region
    $region9: #{emotion2vec_forward.9} parent=5 // pred_check
      _
    $region10: #{emotion2vec_forward.9} parent=5 // pred_check_branch
      %290 = sbr.rel (%p287) target = $region12
    $region11: #{emotion2vec_forward.9} parent=5 // pred_region
      %s291 = ssub.s32 %s15, 1
      // Predicated region
      $region13: #{emotion2vec_forward.9} parent=11 // pred_check
        %p292 = pneg %p230
      $region14: #{emotion2vec_forward.9} parent=11 // pred_check_branch
        %294 = sbr.rel (%p292) target = $region16
      $region15: #{emotion2vec_forward.9} parent=11 // pred_region
        _
      $region16: #{emotion2vec_forward.9} parent=11 // pred_fallthru
        _
      // Predicated region
      $region17: #{emotion2vec_forward.9} parent=11 // pred_check
        %p295 = pneg %p251
      $region18: #{emotion2vec_forward.9} parent=11 // pred_check_branch
        %297 = sbr.rel (%p295) target = $region20
      $region19: #{emotion2vec_forward.9} parent=11 // pred_region
        _
      $region20: #{emotion2vec_forward.9} parent=11 // pred_fallthru
        _
    $region12: #{emotion2vec_forward.9} parent=5 // pred_fallthru
      _
    %p298 = scmp.lt.s32.totalorder %s15, 6
    // Predicated region
    $region21: #{emotion2vec_forward.9} parent=5 // pred_check
      %p299 = pneg %p298
    $region22: #{emotion2vec_forward.9} parent=5 // pred_check_branch
      %301 = sbr.rel (%p299) target = $region24
    $region23: #{emotion2vec_forward.9} parent=5 // pred_region
      // Predicated region
      $region25: #{emotion2vec_forward.9} parent=23 // pred_check
        %p302 = pneg %p47
      $region26: #{emotion2vec_forward.9} parent=23 // pred_check_branch
        %304 = sbr.rel (%p302) target = $region28
      $region27: #{emotion2vec_forward.9} parent=23 // pred_region
        %p305 = scmp.lt.s32.totalorder %s22, 1
        %s306 = scalar_select %p305, %s22, 1
        %s307 = smul.addr %s306, 5
        %s308 = smul.addr %s307, 8
        %s309 = scalar_lea.vmem %s0, %s308
      $region28: #{emotion2vec_forward.9} parent=23 // pred_fallthru
        _
      // Predicated region
      $region29: #{emotion2vec_forward.9} parent=23 // pred_check
        %p310 = pneg %p73
      $region30: #{emotion2vec_forward.9} parent=23 // pred_check_branch
        %312 = sbr.rel (%p310) target = $region32
      $region31: #{emotion2vec_forward.9} parent=23 // pred_region
        %p313 = scmp.lt.s32.totalorder %s23, 2
        %s314 = scalar_select %p313, %s23, 2
        %s315 = smul.addr %s314, 4
        %s316 = smul.addr %s315, 4
        %s317 = scalar_lea.vmem %s1, %s316
      $region32: #{emotion2vec_forward.9} parent=23 // pred_fallthru
        _
      // Predicated region
      $region33: #{emotion2vec_forward.9} parent=23 // pred_check
        %p318 = pneg %p99
      $region34: #{emotion2vec_forward.9} parent=23 // pred_check_branch
        %320 = sbr.rel (%p318) target = $region36
      $region35: #{emotion2vec_forward.9} parent=23 // pred_region
        %p321 = scmp.lt.s32.totalorder %s23, 2
        %s322 = scalar_select %p321, %s23, 2
        %s323 = smul.addr %s322, 4
        %s324 = smul.addr %s323, 4
        %s325 = scalar_lea.vmem %s2, %s324
      $region36: #{emotion2vec_forward.9} parent=23 // pred_fallthru
        _
      // Predicated region
      $region37: #{emotion2vec_forward.9} parent=23 // pred_check
        %p326 = pneg %p125
      $region38: #{emotion2vec_forward.9} parent=23 // pred_check_branch
        %328 = sbr.rel (%p326) target = $region40
      $region39: #{emotion2vec_forward.9} parent=23 // pred_region
        %p329 = scmp.lt.s32.totalorder %s23, 2
        %s330 = scalar_select %p329, %s23, 2
        %s331 = smul.addr %s330, 4
        %s332 = smul.addr %s331, 4
        %s333 = scalar_lea.vmem %s3, %s332
      $region40: #{emotion2vec_forward.9} parent=23 // pred_fallthru
        _
      // Predicated region
      $region41: #{emotion2vec_forward.9} parent=23 // pred_check
        %p334 = pneg %p151
      $region42: #{emotion2vec_forward.9} parent=23 // pred_check_branch
        %336 = sbr.rel (%p334) target = $region44
      $region43: #{emotion2vec_forward.9} parent=23 // pred_region
        %p337 = scmp.lt.s32.totalorder %s23, 2
        %s338 = scalar_select %p337, %s23, 2
        %s339 = smul.addr %s338, 16
        %s340 = smul.addr %s339, 4
        %s341 = scalar_lea.vmem %s4, %s340
      $region44: #{emotion2vec_forward.9} parent=23 // pred_fallthru
        _
      // Predicated region
      $region45: #{emotion2vec_forward.9} parent=23 // pred_check
        %p342 = pneg %p177
      $region46: #{emotion2vec_forward.9} parent=23 // pred_check_branch
        %344 = sbr.rel (%p342) target = $region48
      $region47: #{emotion2vec_forward.9} parent=23 // pred_region
        %p345 = scmp.lt.s32.totalorder %s23, 2
        %s346 = scalar_select %p345, %s23, 2
        %s347 = smul.addr %s346, 2
        %s348 = smul.addr %s347, 8
        %s349 = scalar_lea.vmem %s5, %s348
      $region48: #{emotion2vec_forward.9} parent=23 // pred_fallthru
        _
      // Predicated region
      $region49: #{emotion2vec_forward.9} parent=23 // pred_check
        %p350 = pneg %p203
      $region50: #{emotion2vec_forward.9} parent=23 // pred_check_branch
        %352 = sbr.rel (%p350) target = $region52
      $region51: #{emotion2vec_forward.9} parent=23 // pred_region
        %p353 = scmp.lt.s32.totalorder %s23, 2
        %s354 = scalar_select %p353, %s23, 2
        %s355 = scalar_lea.vmem %s6, %s354
      $region52: #{emotion2vec_forward.9} parent=23 // pred_fallthru
        _
    $region24: #{emotion2vec_forward.9} parent=5 // pred_fallthru
      _
    %p356 = scmp.le.s32.totalorder 1, %s15
    %p357 = scmp.lt.s32.totalorder %s15, 7
    %p358 = pnand %p356, %p357
    %p359 = pneg %p358
    // Predicated region
    $region53: #{emotion2vec_forward.9} parent=5 // pred_check
      _
    $region54: #{emotion2vec_forward.9} parent=5 // pred_check_branch
      %361 = sbr.rel (%p358) target = $region56
    $region55: #{emotion2vec_forward.9} parent=5 // pred_region
      %s362 = ssub.s32 %s15, 1
      %p363 = scmp.lt.s32.totalorder %s24, 1
      %s364 = scalar_select %p363, %s24, 1
      %s365 = smul.addr %s364, 5
      %s366 = smul.addr %s365, 8
      %s367 = scalar_lea.vmem %s0, %s366
      %p368 = pneg %p53
      %p369 = pneg %p50
      %p370 = scmp.lt.s32.totalorder %s25, 2
      %s371 = scalar_select %p370, %s25, 2
      %s372 = smul.addr %s371, 4
      %s373 = smul.addr %s372, 4
      %s374 = scalar_lea.vmem %s1, %s373
      %p375 = pneg %p79
      %p376 = pneg %p76
      %p377 = scmp.lt.s32.totalorder %s25, 2
      %s378 = scalar_select %p377, %s25, 2
      %s379 = smul.addr %s378, 4
      %s380 = smul.addr %s379, 4
      %s381 = scalar_lea.vmem %s2, %s380
      %p382 = pneg %p105
      %p383 = pneg %p102
      %p384 = scmp.lt.s32.totalorder %s25, 2
      %s385 = scalar_select %p384, %s25, 2
      %s386 = smul.addr %s385, 4
      %s387 = smul.addr %s386, 4
      %s388 = scalar_lea.vmem %s3, %s387
      %p389 = pneg %p131
      %p390 = pneg %p128
      %p391 = scmp.lt.s32.totalorder %s25, 2
      %s392 = scalar_select %p391, %s25, 2
      %s393 = smul.addr %s392, 16
      %s394 = smul.addr %s393, 4
      %s395 = scalar_lea.vmem %s4, %s394
      %p396 = pneg %p157
      %p397 = pneg %p154
      %p398 = scmp.lt.s32.totalorder %s25, 2
      %s399 = scalar_select %p398, %s25, 2
      %s400 = smul.addr %s399, 2
      %s401 = smul.addr %s400, 8
      %s402 = scalar_lea.vmem %s5, %s401
      %p403 = pneg %p183
      %p404 = pneg %p180
      %p405 = scmp.lt.s32.totalorder %s25, 2
      %s406 = scalar_select %p405, %s25, 2
      %s407 = scalar_lea.vmem %s6, %s406
      %p408 = pneg %p209
      %p409 = pneg %p206
      %p410 = pneg %p230
      %p411 = pneg %p227
      %p412 = pneg %p251
      %p413 = pneg %p248
      %p414 = pneg %p277
      %p415 = pneg %p274
      %p416 = scmp.lt.s32.totalorder %s24, 1
      %s417 = scalar_select %p416, %s24, 1
      %s418 = smul.addr %s417, 5
      %s419 = smul.addr %s418, 8
      %s420 = scalar_lea.vmem %s9, %s419
      %p421 = scmp.lt.s32.totalorder %s24, 1
      %s422 = scalar_select %p421, %s24, 1
      %s423 = smul.addr %s422, 5
      %s424 = smul.addr %s423, 8
      %s425 = scalar_lea.vmem %s0, %s424
      %p426 = scmp.lt.s32.totalorder %s25, 2
      %s427 = scalar_select %p426, %s25, 2
      %s428 = smul.addr %s427, 4
      %s429 = smul.addr %s428, 4
      %s430 = scalar_lea.vmem %s1, %s429
      %p431 = scmp.lt.s32.totalorder %s25, 2
      %s432 = scalar_select %p431, %s25, 2
      %s433 = smul.addr %s432, 4
      %s434 = smul.addr %s433, 4
      %s435 = scalar_lea.vmem %s2, %s434
      %p436 = scmp.lt.s32.totalorder %s25, 2
      %s437 = scalar_select %p436, %s25, 2
      %s438 = smul.addr %s437, 4
      %s439 = smul.addr %s438, 4
      %s440 = scalar_lea.vmem %s3, %s439
      %p441 = scmp.lt.s32.totalorder %s25, 2
      %s442 = scalar_select %p441, %s25, 2
      %s443 = smul.addr %s442, 16
      %s444 = smul.addr %s443, 4
      %s445 = scalar_lea.vmem %s4, %s444
      %p446 = scmp.lt.s32.totalorder %s25, 2
      %s447 = scalar_select %p446, %s25, 2
      %s448 = smul.addr %s447, 2
      %s449 = smul.addr %s448, 8
      %s450 = scalar_lea.vmem %s5, %s449
      %p451 = scmp.lt.s32.totalorder %s25, 2
      %s452 = scalar_select %p451, %s25, 2
      %s453 = scalar_lea.vmem %s6, %s452
      %p454 = scmp.lt.s32.totalorder %s24, 1
      %s455 = scalar_select %p454, %s24, 1
      %s456 = smul.addr %s455, 5
      %s457 = smul.addr %s456, 8
      %s458 = scalar_lea.vmem %s9, %s457
      %p460 = scmp.eq.s32.totalorder %s25, 0
      // Predicated region
      $region57: #{emotion2vec_forward.9} parent=55 // pred_check
        %p461 = pneg %p460
      $region58: #{emotion2vec_forward.9} parent=55 // pred_check_branch
        %463 = sbr.rel (%p461) target = $region60
      $region59: #{emotion2vec_forward.9} parent=55 // pred_region
        %v464 = vld [vmem:[%s425] sm:$0xff]
        %v465 = vld [vmem:[%s425 + $0x8] sm:$0xff]
        %v466 = vld [vmem:[%s425 + $0x10] sm:$0xff]
        %v467 = vld [vmem:[%s425 + $0x18] sm:$0xff]
        %v468 = vld [vmem:[%s425 + $0x20] sm:$0xff]
        %vm469 = vcmask 261120
        %470 = vst.msk [vmem:[%s458] sm:$0xff] %vm469, %v464
        %471 = vst.msk [vmem:[%s458 + $0x8] sm:$0xff] %vm469, %v465
        %472 = vst.msk [vmem:[%s458 + $0x10] sm:$0xff] %vm469, %v466
        %473 = vst.msk [vmem:[%s458 + $0x18] sm:$0xff] %vm469, %v467
        %474 = vst.msk [vmem:[%s458 + $0x20] sm:$0xff] %vm469, %v468
      $region60: #{emotion2vec_forward.9} parent=55 // pred_fallthru
        _
      %v475 = vld [vmem:[%s458] sm:$0xff]
      %v476 = vld [vmem:[%s458 + $0x8] sm:$0xff]
      %v477 = vld [vmem:[%s458 + $0x10] sm:$0xff]
      %v478 = vld [vmem:[%s458 + $0x18] sm:$0xff]
      %v479 = vld [vmem:[%s458 + $0x20] sm:$0xff]
      %v480 = vld [vmem:[%s450] sm:$0xff]
      %v481 = vld [vmem:[%s450 + $0x8] sm:$0x1]
      %vm482 = vcmask 261120
      %v483 = vsel %vm482, %v475, 0.0
      %484 = vadd.xlane.f32.xlu0 %v483
      %v485 = vpop.xlane.xlu0 %484
      %v486 = vsel %vm482, %v476, 0.0
      %487 = vadd.xlane.f32.xlu0 %v486
      %v488 = vpop.xlane.xlu0 %487
      %v489 = vsel %vm482, %v477, 0.0
      %490 = vadd.xlane.f32.xlu0 %v489
      %v491 = vpop.xlane.xlu0 %490
      %v492 = vsel %vm482, %v478, 0.0
      %493 = vadd.xlane.f32.xlu0 %v492
      %v494 = vpop.xlane.xlu0 %493
      %v495 = vsel %vm482, %v479, 0.0
      %496 = vadd.xlane.f32.xlu0 %v495
      %v497 = vpop.xlane.xlu0 %496
      %v498 = vrcp.pop 32.0
      %v499 = vmul.f32 %v485, %v498
      %v500 = vmul.f32 %v488, %v498
      %v501 = vmul.f32 %v491, %v498
      %v502 = vmul.f32 %v494, %v498
      %v503 = vmul.f32 %v497, %v498
      %v504 = vsub.f32 %v475, %v499
      %v505 = vsub.f32 %v476, %v500
      %v506 = vsub.f32 %v477, %v501
      %v507 = vsub.f32 %v478, %v502
      %v508 = vsub.f32 %v479, %v503
      %v509 = vmul.f32 %v504, %v504
      %v510 = vmul.f32 %v505, %v505
      %v511 = vmul.f32 %v506, %v506
      %v512 = vmul.f32 %v507, %v507
      %v513 = vmul.f32 %v508, %v508
      %v514 = vsel %vm482, %v509, 0.0
      %515 = vadd.xlane.f32.xlu0 %v514
      %v516 = vpop.xlane.xlu0 %515
      %v517 = vsel %vm482, %v510, 0.0
      %518 = vadd.xlane.f32.xlu0 %v517
      %v519 = vpop.xlane.xlu0 %518
      %v520 = vsel %vm482, %v511, 0.0
      %521 = vadd.xlane.f32.xlu0 %v520
      %v522 = vpop.xlane.xlu0 %521
      %v523 = vsel %vm482, %v512, 0.0
      %524 = vadd.xlane.f32.xlu0 %v523
      %v525 = vpop.xlane.xlu0 %524
      %v526 = vsel %vm482, %v513, 0.0
      %527 = vadd.xlane.f32.xlu0 %v526
      %v528 = vpop.xlane.xlu0 %527
      %v529 = vmul.f32 %v516, %v498
      %v530 = vmul.f32 %v519, %v498
      %v531 = vmul.f32 %v522, %v498
      %v532 = vmul.f32 %v525, %v498
      %v533 = vmul.f32 %v528, %v498
      %v534 = vadd.f32 %v529, 1e-05
      %v535 = vadd.f32 %v530, 1e-05
      %v536 = vadd.f32 %v531, 1e-05
      %v537 = vadd.f32 %v532, 1e-05
      %v538 = vadd.f32 %v533, 1e-05
      %v539 = vrsqrt.pop %v534
      %v540 = vrsqrt.pop %v535
      %v541 = vrsqrt.pop %v536
      %v542 = vrsqrt.pop %v537
      %v543 = vrsqrt.pop %v538
      %v544 = vmul.f32 %v504, %v539
      %v545 = vmul.f32 %v505, %v540
      %v546 = vmul.f32 %v506, %v541
      %v547 = vmul.f32 %v507, %v542
      %v548 = vmul.f32 %v508, %v543
      %v549 = vlaneseq
      %v550 = vshrl.u32 %v549, 7
      %v551 = vsub.s32 0, %v550
      %v552 = vrot.slane %v480, %v551
      %v553 = vmul.f32 %v544, %v552
      %v554 = vmul.f32 %v545, %v552
      %v555 = vmul.f32 %v546, %v552
      %v556 = vmul.f32 %v547, %v552
      %v557 = vmul.f32 %v548, %v552
      %v558 = vlaneseq
      %v559 = vshrl.u32 %v558, 7
      %v560 = vsub.s32 1, %v559
      %v561 = vrot.slane %v480, %v560
      %v562 = vadd.f32 %v553, %v561
      %v563 = vadd.f32 %v554, %v561
      %v564 = vadd.f32 %v555, %v561
      %v565 = vadd.f32 %v556, %v561
      %v566 = vadd.f32 %v557, %v561
      %v567 = vpack.c.bf16 %v563, %v562
      %v568 = vpack.c.bf16 %v565, %v564
      %v569 = vpack.c.bf16 %v566, %v566
      %v570 = vld [vmem:[%s430] sm:$0xf]
      %v571 = vld [vmem:[%s430 + $0x4] sm:$0xf]
      %v572 = vld [vmem:[%s430 + $0x8] sm:$0xf]
      %v573 = vld [vmem:[%s430 + $0xc] sm:$0xf]
      %v578 = vunpack.c.l.b16 %v570
      %v579 = vunpack.c.l.b16 %v571
      %v580 = vunpack.c.l.b16 %v572
      %v581 = vunpack.c.l.b16 %v573
      %v582 = vpack.c.b16 %v579, %v578
      %v583 = vpack.c.b16 %v581, %v580
      %v587 = vsel %vm482, %v567, 0
      %v590 = vsel %vm482, %v568, 0
      %v593 = vsel %vm482, %v569, 0
      %595 = vmatprep.subr.bf16.mxu0 0
      %596 = vmatpush1.bf16.msra.mxu0 0
      %597 = vmatprep.subr.bf16.mxu0 0
      %598 = vmatpush1.bf16.msra.mxu0 0
      %599 = vmatprep.subr.bf16.mxu0 0
      %600 = vmatpush1.bf16.msra.mxu0 0
      %601 = vmatprep.subr.bf16.mxu0 0
      %602 = vmatpush1.bf16.msra.mxu0 0
      %603 = vmatprep.subr.bf16.mxu0 0
      %604 = vmatpush1.bf16.msra.mxu0 0
      %605 = vmatprep.subr.bf16.mxu0 0
      %606 = vmatpush1.bf16.msra.mxu0 0
      %607 = vmatprep.subr.bf16.mxu0 0
      %608 = vmatpush1.bf16.msra.mxu0 %v583
      %609 = vmatprep.subr.bf16.mxu0 0
      %610 = vmatpush1.bf16.msra.mxu0 %v582
      %611 = vmatprep.subr.bf16.mxu0 0
      %612 = vmatpush2.bf16.msra.mxu0 0
      %613 = vmatprep.subr.bf16.mxu0 0
      %614 = vmatpush2.bf16.msra.mxu0 0
      %615 = vmatprep.subr.bf16.mxu0 0
      %616 = vmatpush2.bf16.msra.mxu0 0
      %617 = vmatprep.subr.bf16.mxu0 0
      %618 = vmatpush2.bf16.msra.mxu0 0
      %619 = vmatprep.subr.bf16.mxu0 0
      %620 = vmatpush2.bf16.msra.mxu0 0
      %621 = vmatprep.subr.bf16.mxu0 0
      %622 = vmatpush2.bf16.msra.mxu0 0
      %623 = vmatprep.subr.bf16.mxu0 0
      %624 = vmatpush2.bf16.msra.mxu0 0
      %625 = vmatprep.subr.bf16.mxu0 0
      %626 = vmatpush2.bf16.msra.mxu0 0
      %627 = vmatprep.mubr.bf16.mxu0 0
      %628 = vmatmul.mubr.bf16.gmra.mxu0 %v587
      %v629 = vpop.f32.mrf.mxu0
      %v630 = vadd.f32 0.0, %v629
      %v631 = vpop.f32.mrf.mxu0
      %v632 = vpop.f32.mrf.mxu0
      %v633 = vadd.f32 0.0, %v632
      %v634 = vpop.f32.mrf.mxu0
      %635 = vmatprep.mubr.bf16.mxu0 0
      %636 = vmatmul.mubr.bf16.gmra.mxu0 %v590
      %v637 = vpop.f32.mrf.mxu0
      %v638 = vadd.f32 0.0, %v637
      %v639 = vpop.f32.mrf.mxu0
      %v640 = vpop.f32.mrf.mxu0
      %v641 = vadd.f32 0.0, %v640
      %v642 = vpop.f32.mrf.mxu0
      %643 = vmatprep.mubr.bf16.mxu0 0
      %644 = vmatmul.mubr.bf16.gmra.mxu0 %v593
      %v645 = vpop.f32.mrf.mxu0
      %v646 = vadd.f32 0.0, %v645
      %v647 = vpop.f32.mrf.mxu0
      %v648 = vpop.f32.mrf.mxu0
      %v649 = vpop.f32.mrf.mxu0
      %650 = vdwg.mxu0
      %v651 = vlaneseq
      %v652 = vshrl.u32 %v651, 7
      %v653 = vsub.s32 2, %v652
      %v654 = vrot.slane %v480, %v653
      %v655 = vadd.f32 %v630, %v654
      %v656 = vadd.f32 %v633, %v654
      %v657 = vadd.f32 %v638, %v654
      %v658 = vadd.f32 %v641, %v654
      %v659 = vadd.f32 %v646, %v654
      %v660 = vlaneseq
      %v661 = vshrl.u32 %v660, 7
      %v662 = vsub.s32 3, %v661
      %v663 = vrot.slane %v480, %v662
      %665 = vrot.lane.b32.xlu0 %v663, 32
      %v666 = vpop.permute.xlu0 %665
      %v668 = vadd.f32 %v630, %v666
      %v669 = vadd.f32 %v633, %v666
      %v670 = vadd.f32 %v638, %v666
      %v671 = vadd.f32 %v641, %v666
      %v672 = vadd.f32 %v646, %v666
      %v673 = vlaneseq
      %v674 = vshrl.u32 %v673, 7
      %v675 = vsub.s32 4, %v674
      %v676 = vrot.slane %v480, %v675
      %678 = vrot.lane.b32.xlu0 %v676, 64
      %v679 = vpop.permute.xlu0 %678
      %v681 = vadd.f32 %v630, %v679
      %v682 = vadd.f32 %v633, %v679
      %v683 = vadd.f32 %v638, %v679
      %v684 = vadd.f32 %v641, %v679
      %v685 = vadd.f32 %v646, %v679
      %v686 = vpack.c.bf16 %v682, %v681
      %v687 = vpack.c.bf16 %v684, %v683
      %v688 = vpack.c.bf16 %v685, %v685
      %v689 = vmul.f32 %v655, 0.35355338
      %v690 = vmul.f32 %v656, 0.35355338
      %v691 = vmul.f32 %v657, 0.35355338
      %v692 = vmul.f32 %v658, 0.35355338
      %v693 = vmul.f32 %v659, 0.35355338
      %v694 = vpack.c.bf16 %v690, %v689
      %v695 = vpack.c.bf16 %v692, %v691
      %v696 = vpack.c.bf16 %v693, %v693
      %v697 = vpack.c.bf16 %v669, %v668
      %v698 = vpack.c.bf16 %v671, %v670
      %v699 = vpack.c.bf16 %v672, %v672
      %703 = vrot.lane.b32.xlu0 %v697, 96
      %v704 = vpop.permute.xlu0 %703
      %705 = vrot.lane.b32.xlu0 %v698, 96
      %v706 = vpop.permute.xlu0 %705
      %707 = vrot.lane.b32.xlu0 %v699, 96
      %v708 = vpop.permute.xlu0 %707
      %vm709 = vcmask 64512
      %v711 = vsel %vm709, %v694, 0
      %v714 = vsel %vm709, %v695, 0
      %v717 = vsel %vm709, %v696, 0
      %v720 = vsel %vm709, %v704, 0
      %v723 = vsel %vm709, %v706, 0
      %v726 = vsel %vm709, %v708, 0
      %728 = vmatprep.subr.bf16.mxu0 0
      %729 = vmatpush1.bf16.xpose.msra.mxu0 0
      %730 = vmatprep.subr.bf16.mxu0 0
      %731 = vmatpush1.bf16.xpose.msra.mxu0 0
      %732 = vmatprep.subr.bf16.mxu0 0
      %733 = vmatpush1.bf16.xpose.msra.mxu0 0
      %734 = vmatprep.subr.bf16.mxu0 0
      %735 = vmatpush1.bf16.xpose.msra.mxu0 0
      %736 = vmatprep.subr.bf16.mxu0 0
      %737 = vmatpush1.bf16.xpose.msra.mxu0 0
      %738 = vmatprep.subr.bf16.mxu0 0
      %739 = vmatpush1.bf16.xpose.msra.mxu0 %v726
      %740 = vmatprep.subr.bf16.mxu0 0
      %741 = vmatpush1.bf16.xpose.msra.mxu0 %v723
      %742 = vmatprep.subr.bf16.mxu0 0
      %743 = vmatpush1.bf16.xpose.msra.mxu0 %v720
      %744 = vmatprep.subr.bf16.mxu0 0
      %745 = vmatpush2.bf16.xpose.msra.mxu0 0
      %746 = vmatprep.subr.bf16.mxu0 0
      %747 = vmatpush2.bf16.xpose.msra.mxu0 0
      %748 = vmatprep.subr.bf16.mxu0 0
      %749 = vmatpush2.bf16.xpose.msra.mxu0 0
      %750 = vmatprep.subr.bf16.mxu0 0
      %751 = vmatpush2.bf16.xpose.msra.mxu0 0
      %752 = vmatprep.subr.bf16.mxu0 0
      %753 = vmatpush2.bf16.xpose.msra.mxu0 0
      %754 = vmatprep.subr.bf16.mxu0 0
      %755 = vmatpush2.bf16.xpose.msra.mxu0 0
      %756 = vmatprep.subr.bf16.mxu0 0
      %757 = vmatpush2.bf16.xpose.msra.mxu0 0
      %758 = vmatprep.subr.bf16.mxu0 0
      %759 = vmatpush2.bf16.xpose.msra.mxu0 0
      %760 = vmatprep.mubr.bf16.mxu0 0
      %761 = vmatmul.mubr.bf16.gmra.mxu0 %v711
      %v762 = vpop.f32.mrf.mxu0
      %v763 = vadd.f32 0.0, %v762
      %v764 = vpop.f32.mrf.mxu0
      %v765 = vpop.f32.mrf.mxu0
      %v766 = vadd.f32 0.0, %v765
      %v767 = vpop.f32.mrf.mxu0
      %768 = vmatprep.mubr.bf16.mxu0 0
      %769 = vmatmul.mubr.bf16.gmra.mxu0 %v714
      %v770 = vpop.f32.mrf.mxu0
      %v771 = vadd.f32 0.0, %v770
      %v772 = vpop.f32.mrf.mxu0
      %v773 = vpop.f32.mrf.mxu0
      %v774 = vadd.f32 0.0, %v773
      %v775 = vpop.f32.mrf.mxu0
      %776 = vmatprep.mubr.bf16.mxu0 0
      %777 = vmatmul.mubr.bf16.gmra.mxu0 %v717
      %v778 = vpop.f32.mrf.mxu0
      %v779 = vadd.f32 0.0, %v778
      %v780 = vpop.f32.mrf.mxu0
      %v781 = vpop.f32.mrf.mxu0
      %v782 = vpop.f32.mrf.mxu0
      %783 = vdwg.mxu0
      %vm784 = vcmask 326656
      %v785 = vsel %vm784, %v763, -inf
      %786 = vmax.xlane.f32.xlu0 %v785
      %v787 = vpop.xlane.xlu0 %786
      %v788 = vsel %vm784, %v766, -inf
      %789 = vmax.xlane.f32.xlu0 %v788
      %v790 = vpop.xlane.xlu0 %789
      %v791 = vsel %vm784, %v771, -inf
      %792 = vmax.xlane.f32.xlu0 %v791
      %v793 = vpop.xlane.xlu0 %792
      %v794 = vsel %vm784, %v774, -inf
      %795 = vmax.xlane.f32.xlu0 %v794
      %v796 = vpop.xlane.xlu0 %795
      %v797 = vsel %vm784, %v779, -inf
      %798 = vmax.xlane.f32.xlu0 %v797
      %v799 = vpop.xlane.xlu0 %798
      %v800 = vsub.f32 %v763, %v787
      %v801 = vsub.f32 %v766, %v790
      %v802 = vsub.f32 %v771, %v793
      %v803 = vsub.f32 %v774, %v796
      %v804 = vsub.f32 %v779, %v799
      %v805 = vmul.f32 %v800, 1.442695
      %v806 = vpow.pop %v805
      %v807 = vmul.f32 %v801, 1.442695
      %v808 = vpow.pop %v807
      %v809 = vmul.f32 %v802, 1.442695
      %v810 = vpow.pop %v809
      %v811 = vmul.f32 %v803, 1.442695
      %v812 = vpow.pop %v811
      %v813 = vmul.f32 %v804, 1.442695
      %v814 = vpow.pop %v813
      %v815 = vsel %vm784, %v806, 0.0
      %816 = vadd.xlane.f32.xlu0 %v815
      %v817 = vpop.xlane.xlu0 %816
      %v818 = vsel %vm784, %v808, 0.0
      %819 = vadd.xlane.f32.xlu0 %v818
      %v820 = vpop.xlane.xlu0 %819
      %v821 = vsel %vm784, %v810, 0.0
      %822 = vadd.xlane.f32.xlu0 %v821
      %v823 = vpop.xlane.xlu0 %822
      %v824 = vsel %vm784, %v812, 0.0
      %825 = vadd.xlane.f32.xlu0 %v824
      %v826 = vpop.xlane.xlu0 %825
      %v827 = vsel %vm784, %v814, 0.0
      %828 = vadd.xlane.f32.xlu0 %v827
      %v829 = vpop.xlane.xlu0 %828
      %v830 = vrcp.pop %v817
      %v831 = vrcp.pop %v820
      %v832 = vrcp.pop %v823
      %v833 = vrcp.pop %v826
      %v834 = vrcp.pop %v829
      %v835 = vmul.f32 %v806, %v830
      %v836 = vmul.f32 %v808, %v831
      %v837 = vmul.f32 %v810, %v832
      %v838 = vmul.f32 %v812, %v833
      %v839 = vmul.f32 %v814, %v834
      %v840 = vpack.c.bf16 %v836, %v835
      %v841 = vpack.c.bf16 %v838, %v837
      %v842 = vpack.c.bf16 %v839, %v839
      %846 = vrot.lane.b32.xlu0 %v686, 64
      %v847 = vpop.permute.xlu0 %846
      %848 = vrot.lane.b32.xlu0 %v687, 64
      %v849 = vpop.permute.xlu0 %848
      %850 = vrot.lane.b32.xlu0 %v688, 64
      %v851 = vpop.permute.xlu0 %850
      %v855 = vsel %vm784, %v840, 0
      %v858 = vsel %vm784, %v841, 0
      %v861 = vsel %vm784, %v842, 0
      %vm863 = vcmask 1043456
      %v865 = vsel %vm863, %v851, 0
      %867 = vmatprep.subr.bf16.mxu0 0
      %868 = vmatpush1.bf16.msra.mxu0 0
      %869 = vmatprep.subr.bf16.mxu0 0
      %870 = vmatpush1.bf16.msra.mxu0 0
      %871 = vmatprep.subr.bf16.mxu0 0
      %872 = vmatpush1.bf16.msra.mxu0 0
      %873 = vmatprep.subr.bf16.mxu0 0
      %874 = vmatpush1.bf16.msra.mxu0 0
      %875 = vmatprep.subr.bf16.mxu0 0
      %876 = vmatpush1.bf16.msra.mxu0 0
      %877 = vmatprep.subr.bf16.mxu0 0
      %878 = vmatpush1.bf16.msra.mxu0 %v865
      %879 = vmatprep.subr.bf16.mxu0 0
      %880 = vmatpush1.bf16.msra.mxu0 %v849
      %881 = vmatprep.subr.bf16.mxu0 0
      %882 = vmatpush1.bf16.msra.mxu0 %v847
      %883 = vmatprep.subr.bf16.mxu0 0
      %884 = vmatpush2.bf16.msra.mxu0 0
      %885 = vmatprep.subr.bf16.mxu0 0
      %886 = vmatpush2.bf16.msra.mxu0 0
      %887 = vmatprep.subr.bf16.mxu0 0
      %888 = vmatpush2.bf16.msra.mxu0 0
      %889 = vmatprep.subr.bf16.mxu0 0
      %890 = vmatpush2.bf16.msra.mxu0 0
      %891 = vmatprep.subr.bf16.mxu0 0
      %892 = vmatpush2.bf16.msra.mxu0 0
      %893 = vmatprep.subr.bf16.mxu0 0
      %894 = vmatpush2.bf16.msra.mxu0 0
      %895 = vmatprep.subr.bf16.mxu0 0
      %896 = vmatpush2.bf16.msra.mxu0 0
      %897 = vmatprep.subr.bf16.mxu0 0
      %898 = vmatpush2.bf16.msra.mxu0 0
      %899 = vmatprep.mubr.bf16.mxu0 0
      %900 = vmatmul.mubr.bf16.gmra.mxu0 %v855
      %v901 = vpop.f32.mrf.mxu0
      %v902 = vadd.f32 0.0, %v901
      %v903 = vpop.f32.mrf.mxu0
      %v904 = vpop.f32.mrf.mxu0
      %v905 = vadd.f32 0.0, %v904
      %v906 = vpop.f32.mrf.mxu0
      %907 = vmatprep.mubr.bf16.mxu0 0
      %908 = vmatmul.mubr.bf16.gmra.mxu0 %v858
      %v909 = vpop.f32.mrf.mxu0
      %v910 = vadd.f32 0.0, %v909
      %v911 = vpop.f32.mrf.mxu0
      %v912 = vpop.f32.mrf.mxu0
      %v913 = vadd.f32 0.0, %v912
      %v914 = vpop.f32.mrf.mxu0
      %915 = vmatprep.mubr.bf16.mxu0 0
      %916 = vmatmul.mubr.bf16.gmra.mxu0 %v861
      %v917 = vpop.f32.mrf.mxu0
      %v918 = vadd.f32 0.0, %v917
      %v919 = vpop.f32.mrf.mxu0
      %v920 = vpop.f32.mrf.mxu0
      %v921 = vpop.f32.mrf.mxu0
      %922 = vdwg.mxu0
      %926 = vrot.lane.b32.xlu0 %v694, 120
      %v927 = vpop.permute.xlu0 %926
      %928 = vrot.lane.b32.xlu0 %v695, 120
      %v929 = vpop.permute.xlu0 %928
      %930 = vrot.lane.b32.xlu0 %v696, 120
      %v931 = vpop.permute.xlu0 %930
      %932 = vrot.lane.b32.xlu0 %v697, 88
      %v933 = vpop.permute.xlu0 %932
      %934 = vrot.lane.b32.xlu0 %v698, 88
      %v935 = vpop.permute.xlu0 %934
      %936 = vrot.lane.b32.xlu0 %v699, 88
      %v937 = vpop.permute.xlu0 %936
      %v939 = vsel %vm709, %v927, 0
      %v942 = vsel %vm709, %v929, 0
      %v945 = vsel %vm709, %v931, 0
      %v948 = vsel %vm709, %v933, 0
      %v951 = vsel %vm709, %v935, 0
      %v954 = vsel %vm709, %v937, 0
      %956 = vmatprep.subr.bf16.mxu0 0
      %957 = vmatpush1.bf16.xpose.msra.mxu0 0
      %958 = vmatprep.subr.bf16.mxu0 0
      %959 = vmatpush1.bf16.xpose.msra.mxu0 0
      %960 = vmatprep.subr.bf16.mxu0 0
      %961 = vmatpush1.bf16.xpose.msra.mxu0 0
      %962 = vmatprep.subr.bf16.mxu0 0
      %963 = vmatpush1.bf16.xpose.msra.mxu0 0
      %964 = vmatprep.subr.bf16.mxu0 0
      %965 = vmatpush1.bf16.xpose.msra.mxu0 0
      %966 = vmatprep.subr.bf16.mxu0 0
      %967 = vmatpush1.bf16.xpose.msra.mxu0 %v954
      %968 = vmatprep.subr.bf16.mxu0 0
      %969 = vmatpush1.bf16.xpose.msra.mxu0 %v951
      %970 = vmatprep.subr.bf16.mxu0 0
      %971 = vmatpush1.bf16.xpose.msra.mxu0 %v948
      %972 = vmatprep.subr.bf16.mxu0 0
      %973 = vmatpush2.bf16.xpose.msra.mxu0 0
      %974 = vmatprep.subr.bf16.mxu0 0
      %975 = vmatpush2.bf16.xpose.msra.mxu0 0
      %976 = vmatprep.subr.bf16.mxu0 0
      %977 = vmatpush2.bf16.xpose.msra.mxu0 0
      %978 = vmatprep.subr.bf16.mxu0 0
      %979 = vmatpush2.bf16.xpose.msra.mxu0 0
      %980 = vmatprep.subr.bf16.mxu0 0
      %981 = vmatpush2.bf16.xpose.msra.mxu0 0
      %982 = vmatprep.subr.bf16.mxu0 0
      %983 = vmatpush2.bf16.xpose.msra.mxu0 0
      %984 = vmatprep.subr.bf16.mxu0 0
      %985 = vmatpush2.bf16.xpose.msra.mxu0 0
      %986 = vmatprep.subr.bf16.mxu0 0
      %987 = vmatpush2.bf16.xpose.msra.mxu0 0
      %988 = vmatprep.mubr.bf16.mxu0 0
      %989 = vmatmul.mubr.bf16.gmra.mxu0 %v939
      %v990 = vpop.f32.mrf.mxu0
      %v991 = vadd.f32 0.0, %v990
      %v992 = vpop.f32.mrf.mxu0
      %v993 = vpop.f32.mrf.mxu0
      %v994 = vadd.f32 0.0, %v993
      %v995 = vpop.f32.mrf.mxu0
      %996 = vmatprep.mubr.bf16.mxu0 0
      %997 = vmatmul.mubr.bf16.gmra.mxu0 %v942
      %v998 = vpop.f32.mrf.mxu0
      %v999 = vadd.f32 0.0, %v998
      %v1000 = vpop.f32.mrf.mxu0
      %v1001 = vpop.f32.mrf.mxu0
      %v1002 = vadd.f32 0.0, %v1001
      %v1003 = vpop.f32.mrf.mxu0
      %1004 = vmatprep.mubr.bf16.mxu0 0
      %1005 = vmatmul.mubr.bf16.gmra.mxu0 %v945
      %v1006 = vpop.f32.mrf.mxu0
      %v1007 = vadd.f32 0.0, %v1006
      %v1008 = vpop.f32.mrf.mxu0
      %v1009 = vpop.f32.mrf.mxu0
      %v1010 = vpop.f32.mrf.mxu0
      %1011 = vdwg.mxu0
      %v1012 = vsel %vm784, %v991, -inf
      %1013 = vmax.xlane.f32.xlu0 %v1012
      %v1014 = vpop.xlane.xlu0 %1013
      %v1015 = vsel %vm784, %v994, -inf
      %1016 = vmax.xlane.f32.xlu0 %v1015
      %v1017 = vpop.xlane.xlu0 %1016
      %v1018 = vsel %vm784, %v999, -inf
      %1019 = vmax.xlane.f32.xlu0 %v1018
      %v1020 = vpop.xlane.xlu0 %1019
      %v1021 = vsel %vm784, %v1002, -inf
      %1022 = vmax.xlane.f32.xlu0 %v1021
      %v1023 = vpop.xlane.xlu0 %1022
      %v1024 = vsel %vm784, %v1007, -inf
      %1025 = vmax.xlane.f32.xlu0 %v1024
      %v1026 = vpop.xlane.xlu0 %1025
      %v1027 = vsub.f32 %v991, %v1014
      %v1028 = vsub.f32 %v994, %v1017
      %v1029 = vsub.f32 %v999, %v1020
      %v1030 = vsub.f32 %v1002, %v1023
      %v1031 = vsub.f32 %v1007, %v1026
      %v1032 = vmul.f32 %v1027, 1.442695
      %v1033 = vpow.pop %v1032
      %v1034 = vmul.f32 %v1028, 1.442695
      %v1035 = vpow.pop %v1034
      %v1036 = vmul.f32 %v1029, 1.442695
      %v1037 = vpow.pop %v1036
      %v1038 = vmul.f32 %v1030, 1.442695
      %v1039 = vpow.pop %v1038
      %v1040 = vmul.f32 %v1031, 1.442695
      %v1041 = vpow.pop %v1040
      %v1042 = vsel %vm784, %v1033, 0.0
      %1043 = vadd.xlane.f32.xlu0 %v1042
      %v1044 = vpop.xlane.xlu0 %1043
      %v1045 = vsel %vm784, %v1035, 0.0
      %1046 = vadd.xlane.f32.xlu0 %v1045
      %v1047 = vpop.xlane.xlu0 %1046
      %v1048 = vsel %vm784, %v1037, 0.0
      %1049 = vadd.xlane.f32.xlu0 %v1048
      %v1050 = vpop.xlane.xlu0 %1049
      %v1051 = vsel %vm784, %v1039, 0.0
      %1052 = vadd.xlane.f32.xlu0 %v1051
      %v1053 = vpop.xlane.xlu0 %1052
      %v1054 = vsel %vm784, %v1041, 0.0
      %1055 = vadd.xlane.f32.xlu0 %v1054
      %v1056 = vpop.xlane.xlu0 %1055
      %v1057 = vrcp.pop %v1044
      %v1058 = vrcp.pop %v1047
      %v1059 = vrcp.pop %v1050
      %v1060 = vrcp.pop %v1053
      %v1061 = vrcp.pop %v1056
      %v1062 = vmul.f32 %v1033, %v1057
      %v1063 = vmul.f32 %v1035, %v1058
      %v1064 = vmul.f32 %v1037, %v1059
      %v1065 = vmul.f32 %v1039, %v1060
      %v1066 = vmul.f32 %v1041, %v1061
      %v1067 = vpack.c.bf16 %v1063, %v1062
      %v1068 = vpack.c.bf16 %v1065, %v1064
      %v1069 = vpack.c.bf16 %v1066, %v1066
      %1070 = vrot.lane.b32.xlu0 %v686, 56
      %v1071 = vpop.permute.xlu0 %1070
      %1072 = vrot.lane.b32.xlu0 %v687, 56
      %v1073 = vpop.permute.xlu0 %1072
      %1074 = vrot.lane.b32.xlu0 %v688, 56
      %v1075 = vpop.permute.xlu0 %1074
      %v1079 = vsel %vm784, %v1067, 0
      %v1082 = vsel %vm784, %v1068, 0
      %v1085 = vsel %vm784, %v1069, 0
      %v1088 = vsel %vm863, %v1075, 0
      %1090 = vmatprep.subr.bf16.mxu0 0
      %1091 = vmatpush1.bf16.msra.mxu0 0
      %1092 = vmatprep.subr.bf16.mxu0 0
      %1093 = vmatpush1.bf16.msra.mxu0 0
      %1094 = vmatprep.subr.bf16.mxu0 0
      %1095 = vmatpush1.bf16.msra.mxu0 0
      %1096 = vmatprep.subr.bf16.mxu0 0
      %1097 = vmatpush1.bf16.msra.mxu0 0
      %1098 = vmatprep.subr.bf16.mxu0 0
      %1099 = vmatpush1.bf16.msra.mxu0 0
      %1100 = vmatprep.subr.bf16.mxu0 0
      %1101 = vmatpush1.bf16.msra.mxu0 %v1088
      %1102 = vmatprep.subr.bf16.mxu0 0
      %1103 = vmatpush1.bf16.msra.mxu0 %v1073
      %1104 = vmatprep.subr.bf16.mxu0 0
      %1105 = vmatpush1.bf16.msra.mxu0 %v1071
      %1106 = vmatprep.subr.bf16.mxu0 0
      %1107 = vmatpush2.bf16.msra.mxu0 0
      %1108 = vmatprep.subr.bf16.mxu0 0
      %1109 = vmatpush2.bf16.msra.mxu0 0
      %1110 = vmatprep.subr.bf16.mxu0 0
      %1111 = vmatpush2.bf16.msra.mxu0 0
      %1112 = vmatprep.subr.bf16.mxu0 0
      %1113 = vmatpush2.bf16.msra.mxu0 0
      %1114 = vmatprep.subr.bf16.mxu0 0
      %1115 = vmatpush2.bf16.msra.mxu0 0
      %1116 = vmatprep.subr.bf16.mxu0 0
      %1117 = vmatpush2.bf16.msra.mxu0 0
      %1118 = vmatprep.subr.bf16.mxu0 0
      %1119 = vmatpush2.bf16.msra.mxu0 0
      %1120 = vmatprep.subr.bf16.mxu0 0
      %1121 = vmatpush2.bf16.msra.mxu0 0
      %1122 = vmatprep.mubr.bf16.mxu0 0
      %1123 = vmatmul.mubr.bf16.gmra.mxu0 %v1079
      %v1124 = vpop.f32.mrf.mxu0
      %v1125 = vadd.f32 0.0, %v1124
      %v1126 = vpop.f32.mrf.mxu0
      %v1127 = vpop.f32.mrf.mxu0
      %v1128 = vadd.f32 0.0, %v1127
      %v1129 = vpop.f32.mrf.mxu0
      %1130 = vmatprep.mubr.bf16.mxu0 0
      %1131 = vmatmul.mubr.bf16.gmra.mxu0 %v1082
      %v1132 = vpop.f32.mrf.mxu0
      %v1133 = vadd.f32 0.0, %v1132
      %v1134 = vpop.f32.mrf.mxu0
      %v1135 = vpop.f32.mrf.mxu0
      %v1136 = vadd.f32 0.0, %v1135
      %v1137 = vpop.f32.mrf.mxu0
      %1138 = vmatprep.mubr.bf16.mxu0 0
      %1139 = vmatmul.mubr.bf16.gmra.mxu0 %v1085
      %v1140 = vpop.f32.mrf.mxu0
      %v1141 = vadd.f32 0.0, %v1140
      %v1142 = vpop.f32.mrf.mxu0
      %v1143 = vpop.f32.mrf.mxu0
      %v1144 = vpop.f32.mrf.mxu0
      %1145 = vdwg.mxu0
      %1146 = vrot.lane.b32.xlu0 %v694, 112
      %v1147 = vpop.permute.xlu0 %1146
      %1148 = vrot.lane.b32.xlu0 %v695, 112
      %v1149 = vpop.permute.xlu0 %1148
      %1150 = vrot.lane.b32.xlu0 %v696, 112
      %v1151 = vpop.permute.xlu0 %1150
      %1152 = vrot.lane.b32.xlu0 %v697, 80
      %v1153 = vpop.permute.xlu0 %1152
      %1154 = vrot.lane.b32.xlu0 %v698, 80
      %v1155 = vpop.permute.xlu0 %1154
      %1156 = vrot.lane.b32.xlu0 %v699, 80
      %v1157 = vpop.permute.xlu0 %1156
      %v1159 = vsel %vm709, %v1147, 0
      %v1162 = vsel %vm709, %v1149, 0
      %v1165 = vsel %vm709, %v1151, 0
      %v1168 = vsel %vm709, %v1153, 0
      %v1171 = vsel %vm709, %v1155, 0
      %v1174 = vsel %vm709, %v1157, 0
      %1176 = vmatprep.subr.bf16.mxu0 0
      %1177 = vmatpush1.bf16.xpose.msra.mxu0 0
      %1178 = vmatprep.subr.bf16.mxu0 0
      %1179 = vmatpush1.bf16.xpose.msra.mxu0 0
      %1180 = vmatprep.subr.bf16.mxu0 0
      %1181 = vmatpush1.bf16.xpose.msra.mxu0 0
      %1182 = vmatprep.subr.bf16.mxu0 0
      %1183 = vmatpush1.bf16.xpose.msra.mxu0 0
      %1184 = vmatprep.subr.bf16.mxu0 0
      %1185 = vmatpush1.bf16.xpose.msra.mxu0 0
      %1186 = vmatprep.subr.bf16.mxu0 0
      %1187 = vmatpush1.bf16.xpose.msra.mxu0 %v1174
      %1188 = vmatprep.subr.bf16.mxu0 0
      %1189 = vmatpush1.bf16.xpose.msra.mxu0 %v1171
      %1190 = vmatprep.subr.bf16.mxu0 0
      %1191 = vmatpush1.bf16.xpose.msra.mxu0 %v1168
      %1192 = vmatprep.subr.bf16.mxu0 0
      %1193 = vmatpush2.bf16.xpose.msra.mxu0 0
      %1194 = vmatprep.subr.bf16.mxu0 0
      %1195 = vmatpush2.bf16.xpose.msra.mxu0 0
      %1196 = vmatprep.subr.bf16.mxu0 0
      %1197 = vmatpush2.bf16.xpose.msra.mxu0 0
      %1198 = vmatprep.subr.bf16.mxu0 0
      %1199 = vmatpush2.bf16.xpose.msra.mxu0 0
      %1200 = vmatprep.subr.bf16.mxu0 0
      %1201 = vmatpush2.bf16.xpose.msra.mxu0 0
      %1202 = vmatprep.subr.bf16.mxu0 0
      %1203 = vmatpush2.bf16.xpose.msra.mxu0 0
      %1204 = vmatprep.subr.bf16.mxu0 0
      %1205 = vmatpush2.bf16.xpose.msra.mxu0 0
      %1206 = vmatprep.subr.bf16.mxu0 0
      %1207 = vmatpush2.bf16.xpose.msra.mxu0 0
      %1208 = vmatprep.mubr.bf16.mxu0 0
      %1209 = vmatmul.mubr.bf16.gmra.mxu0 %v1159
      %v1210 = vpop.f32.mrf.mxu0
      %v1211 = vadd.f32 0.0, %v1210
      %v1212 = vpop.f32.mrf.mxu0
      %v1213 = vpop.f32.mrf.mxu0
      %v1214 = vadd.f32 0.0, %v1213
      %v1215 = vpop.f32.mrf.mxu0
      %1216 = vmatprep.mubr.bf16.mxu0 0
      %1217 = vmatmul.mubr.bf16.gmra.mxu0 %v1162
      %v1218 = vpop.f32.mrf.mxu0
      %v1219 = vadd.f32 0.0, %v1218
      %v1220 = vpop.f32.mrf.mxu0
      %v1221 = vpop.f32.mrf.mxu0
      %v1222 = vadd.f32 0.0, %v1221
      %v1223 = vpop.f32.mrf.mxu0
      %1224 = vmatprep.mubr.bf16.mxu0 0
      %1225 = vmatmul.mubr.bf16.gmra.mxu0 %v1165
      %v1226 = vpop.f32.mrf.mxu0
      %v1227 = vadd.f32 0.0, %v1226
      %v1228 = vpop.f32.mrf.mxu0
      %v1229 = vpop.f32.mrf.mxu0
      %v1230 = vpop.f32.mrf.mxu0
      %1231 = vdwg.mxu0
      %v1232 = vsel %vm784, %v1211, -inf
      %1233 = vmax.xlane.f32.xlu0 %v1232
      %v1234 = vpop.xlane.xlu0 %1233
      %v1235 = vsel %vm784, %v1214, -inf
      %1236 = vmax.xlane.f32.xlu0 %v1235
      %v1237 = vpop.xlane.xlu0 %1236
      %v1238 = vsel %vm784, %v1219, -inf
      %1239 = vmax.xlane.f32.xlu0 %v1238
      %v1240 = vpop.xlane.xlu0 %1239
      %v1241 = vsel %vm784, %v1222, -inf
      %1242 = vmax.xlane.f32.xlu0 %v1241
      %v1243 = vpop.xlane.xlu0 %1242
      %v1244 = vsel %vm784, %v1227, -inf
      %1245 = vmax.xlane.f32.xlu0 %v1244
      %v1246 = vpop.xlane.xlu0 %1245
      %v1247 = vsub.f32 %v1211, %v1234
      %v1248 = vsub.f32 %v1214, %v1237
      %v1249 = vsub.f32 %v1219, %v1240
      %v1250 = vsub.f32 %v1222, %v1243
      %v1251 = vsub.f32 %v1227, %v1246
      %v1252 = vmul.f32 %v1247, 1.442695
      %v1253 = vpow.pop %v1252
      %v1254 = vmul.f32 %v1248, 1.442695
      %v1255 = vpow.pop %v1254
      %v1256 = vmul.f32 %v1249, 1.442695
      %v1257 = vpow.pop %v1256
      %v1258 = vmul.f32 %v1250, 1.442695
      %v1259 = vpow.pop %v1258
      %v1260 = vmul.f32 %v1251, 1.442695
      %v1261 = vpow.pop %v1260
      %v1262 = vsel %vm784, %v1253, 0.0
      %1263 = vadd.xlane.f32.xlu0 %v1262
      %v1264 = vpop.xlane.xlu0 %1263
      %v1265 = vsel %vm784, %v1255, 0.0
      %1266 = vadd.xlane.f32.xlu0 %v1265
      %v1267 = vpop.xlane.xlu0 %1266
      %v1268 = vsel %vm784, %v1257, 0.0
      %1269 = vadd.xlane.f32.xlu0 %v1268
      %v1270 = vpop.xlane.xlu0 %1269
      %v1271 = vsel %vm784, %v1259, 0.0
      %1272 = vadd.xlane.f32.xlu0 %v1271
      %v1273 = vpop.xlane.xlu0 %1272
      %v1274 = vsel %vm784, %v1261, 0.0
      %1275 = vadd.xlane.f32.xlu0 %v1274
      %v1276 = vpop.xlane.xlu0 %1275
      %v1277 = vrcp.pop %v1264
      %v1278 = vrcp.pop %v1267
      %v1279 = vrcp.pop %v1270
      %v1280 = vrcp.pop %v1273
      %v1281 = vrcp.pop %v1276
      %v1282 = vmul.f32 %v1253, %v1277
      %v1283 = vmul.f32 %v1255, %v1278
      %v1284 = vmul.f32 %v1257, %v1279
      %v1285 = vmul.f32 %v1259, %v1280
      %v1286 = vmul.f32 %v1261, %v1281
      %v1287 = vpack.c.bf16 %v1283, %v1282
      %v1288 = vpack.c.bf16 %v1285, %v1284
      %v1289 = vpack.c.bf16 %v1286, %v1286
      %1290 = vrot.lane.b32.xlu0 %v686, 48
      %v1291 = vpop.permute.xlu0 %1290
      %1292 = vrot.lane.b32.xlu0 %v687, 48
      %v1293 = vpop.permute.xlu0 %1292
      %1294 = vrot.lane.b32.xlu0 %v688, 48
      %v1295 = vpop.permute.xlu0 %1294
      %v1299 = vsel %vm784, %v1287, 0
      %v1302 = vsel %vm784, %v1288, 0
      %v1305 = vsel %vm784, %v1289, 0
      %v1308 = vsel %vm863, %v1295, 0
      %1310 = vmatprep.subr.bf16.mxu0 0
      %1311 = vmatpush1.bf16.msra.mxu0 0
      %1312 = vmatprep.subr.bf16.mxu0 0
      %1313 = vmatpush1.bf16.msra.mxu0 0
      %1314 = vmatprep.subr.bf16.mxu0 0
      %1315 = vmatpush1.bf16.msra.mxu0 0
      %1316 = vmatprep.subr.bf16.mxu0 0
      %1317 = vmatpush1.bf16.msra.mxu0 0
      %1318 = vmatprep.subr.bf16.mxu0 0
      %1319 = vmatpush1.bf16.msra.mxu0 0
      %1320 = vmatprep.subr.bf16.mxu0 0
      %1321 = vmatpush1.bf16.msra.mxu0 %v1308
      %1322 = vmatprep.subr.bf16.mxu0 0
      %1323 = vmatpush1.bf16.msra.mxu0 %v1293
      %1324 = vmatprep.subr.bf16.mxu0 0
      %1325 = vmatpush1.bf16.msra.mxu0 %v1291
      %1326 = vmatprep.subr.bf16.mxu0 0
      %1327 = vmatpush2.bf16.msra.mxu0 0
      %1328 = vmatprep.subr.bf16.mxu0 0
      %1329 = vmatpush2.bf16.msra.mxu0 0
      %1330 = vmatprep.subr.bf16.mxu0 0
      %1331 = vmatpush2.bf16.msra.mxu0 0
      %1332 = vmatprep.subr.bf16.mxu0 0
      %1333 = vmatpush2.bf16.msra.mxu0 0
      %1334 = vmatprep.subr.bf16.mxu0 0
      %1335 = vmatpush2.bf16.msra.mxu0 0
      %1336 = vmatprep.subr.bf16.mxu0 0
      %1337 = vmatpush2.bf16.msra.mxu0 0
      %1338 = vmatprep.subr.bf16.mxu0 0
      %1339 = vmatpush2.bf16.msra.mxu0 0
      %1340 = vmatprep.subr.bf16.mxu0 0
      %1341 = vmatpush2.bf16.msra.mxu0 0
      %1342 = vmatprep.mubr.bf16.mxu0 0
      %1343 = vmatmul.mubr.bf16.gmra.mxu0 %v1299
      %v1344 = vpop.f32.mrf.mxu0
      %v1345 = vadd.f32 0.0, %v1344
      %v1346 = vpop.f32.mrf.mxu0
      %v1347 = vpop.f32.mrf.mxu0
      %v1348 = vadd.f32 0.0, %v1347
      %v1349 = vpop.f32.mrf.mxu0
      %1350 = vmatprep.mubr.bf16.mxu0 0
      %1351 = vmatmul.mubr.bf16.gmra.mxu0 %v1302
      %v1352 = vpop.f32.mrf.mxu0
      %v1353 = vadd.f32 0.0, %v1352
      %v1354 = vpop.f32.mrf.mxu0
      %v1355 = vpop.f32.mrf.mxu0
      %v1356 = vadd.f32 0.0, %v1355
      %v1357 = vpop.f32.mrf.mxu0
      %1358 = vmatprep.mubr.bf16.mxu0 0
      %1359 = vmatmul.mubr.bf16.gmra.mxu0 %v1305
      %v1360 = vpop.f32.mrf.mxu0
      %v1361 = vadd.f32 0.0, %v1360
      %v1362 = vpop.f32.mrf.mxu0
      %v1363 = vpop.f32.mrf.mxu0
      %v1364 = vpop.f32.mrf.mxu0
      %1365 = vdwg.mxu0
      %1366 = vrot.lane.b32.xlu0 %v694, 104
      %v1367 = vpop.permute.xlu0 %1366
      %1368 = vrot.lane.b32.xlu0 %v695, 104
      %v1369 = vpop.permute.xlu0 %1368
      %1370 = vrot.lane.b32.xlu0 %v696, 104
      %v1371 = vpop.permute.xlu0 %1370
      %1372 = vrot.lane.b32.xlu0 %v697, 72
      %v1373 = vpop.permute.xlu0 %1372
      %1374 = vrot.lane.b32.xlu0 %v698, 72
      %v1375 = vpop.permute.xlu0 %1374
      %1376 = vrot.lane.b32.xlu0 %v699, 72
      %v1377 = vpop.permute.xlu0 %1376
      %v1379 = vsel %vm709, %v1367, 0
      %v1382 = vsel %vm709, %v1369, 0
      %v1385 = vsel %vm709, %v1371, 0
      %v1388 = vsel %vm709, %v1373, 0
      %v1391 = vsel %vm709, %v1375, 0
      %v1394 = vsel %vm709, %v1377, 0
      %1396 = vmatprep.subr.bf16.mxu0 0
      %1397 = vmatpush1.bf16.xpose.msra.mxu0 0
      %1398 = vmatprep.subr.bf16.mxu0 0
      %1399 = vmatpush1.bf16.xpose.msra.mxu0 0
      %1400 = vmatprep.subr.bf16.mxu0 0
      %1401 = vmatpush1.bf16.xpose.msra.mxu0 0
      %1402 = vmatprep.subr.bf16.mxu0 0
      %1403 = vmatpush1.bf16.xpose.msra.mxu0 0
      %1404 = vmatprep.subr.bf16.mxu0 0
      %1405 = vmatpush1.bf16.xpose.msra.mxu0 0
      %1406 = vmatprep.subr.bf16.mxu0 0
      %1407 = vmatpush1.bf16.xpose.msra.mxu0 %v1394
      %1408 = vmatprep.subr.bf16.mxu0 0
      %1409 = vmatpush1.bf16.xpose.msra.mxu0 %v1391
      %1410 = vmatprep.subr.bf16.mxu0 0
      %1411 = vmatpush1.bf16.xpose.msra.mxu0 %v1388
      %1412 = vmatprep.subr.bf16.mxu0 0
      %1413 = vmatpush2.bf16.xpose.msra.mxu0 0
      %1414 = vmatprep.subr.bf16.mxu0 0
      %1415 = vmatpush2.bf16.xpose.msra.mxu0 0
      %1416 = vmatprep.subr.bf16.mxu0 0
      %1417 = vmatpush2.bf16.xpose.msra.mxu0 0
      %1418 = vmatprep.subr.bf16.mxu0 0
      %1419 = vmatpush2.bf16.xpose.msra.mxu0 0
      %1420 = vmatprep.subr.bf16.mxu0 0
      %1421 = vmatpush2.bf16.xpose.msra.mxu0 0
      %1422 = vmatprep.subr.bf16.mxu0 0
      %1423 = vmatpush2.bf16.xpose.msra.mxu0 0
      %1424 = vmatprep.subr.bf16.mxu0 0
      %1425 = vmatpush2.bf16.xpose.msra.mxu0 0
      %1426 = vmatprep.subr.bf16.mxu0 0
      %1427 = vmatpush2.bf16.xpose.msra.mxu0 0
      %1428 = vmatprep.mubr.bf16.mxu0 0
      %1429 = vmatmul.mubr.bf16.gmra.mxu0 %v1379
      %v1430 = vpop.f32.mrf.mxu0
      %v1431 = vadd.f32 0.0, %v1430
      %v1432 = vpop.f32.mrf.mxu0
      %v1433 = vpop.f32.mrf.mxu0
      %v1434 = vadd.f32 0.0, %v1433
      %v1435 = vpop.f32.mrf.mxu0
      %1436 = vmatprep.mubr.bf16.mxu0 0
      %1437 = vmatmul.mubr.bf16.gmra.mxu0 %v1382
      %v1438 = vpop.f32.mrf.mxu0
      %v1439 = vadd.f32 0.0, %v1438
      %v1440 = vpop.f32.mrf.mxu0
      %v1441 = vpop.f32.mrf.mxu0
      %v1442 = vadd.f32 0.0, %v1441
      %v1443 = vpop.f32.mrf.mxu0
      %1444 = vmatprep.mubr.bf16.mxu0 0
      %1445 = vmatmul.mubr.bf16.gmra.mxu0 %v1385
      %v1446 = vpop.f32.mrf.mxu0
      %v1447 = vadd.f32 0.0, %v1446
      %v1448 = vpop.f32.mrf.mxu0
      %v1449 = vpop.f32.mrf.mxu0
      %v1450 = vpop.f32.mrf.mxu0
      %1451 = vdwg.mxu0
      %v1452 = vsel %vm784, %v1431, -inf
      %1453 = vmax.xlane.f32.xlu0 %v1452
      %v1454 = vpop.xlane.xlu0 %1453
      %v1455 = vsel %vm784, %v1434, -inf
      %1456 = vmax.xlane.f32.xlu0 %v1455
      %v1457 = vpop.xlane.xlu0 %1456
      %v1458 = vsel %vm784, %v1439, -inf
      %1459 = vmax.xlane.f32.xlu0 %v1458
      %v1460 = vpop.xlane.xlu0 %1459
      %v1461 = vsel %vm784, %v1442, -inf
      %1462 = vmax.xlane.f32.xlu0 %v1461
      %v1463 = vpop.xlane.xlu0 %1462
      %v1464 = vsel %vm784, %v1447, -inf
      %1465 = vmax.xlane.f32.xlu0 %v1464
      %v1466 = vpop.xlane.xlu0 %1465
      %v1467 = vsub.f32 %v1431, %v1454
      %v1468 = vsub.f32 %v1434, %v1457
      %v1469 = vsub.f32 %v1439, %v1460
      %v1470 = vsub.f32 %v1442, %v1463
      %v1471 = vsub.f32 %v1447, %v1466
      %v1472 = vmul.f32 %v1467, 1.442695
      %v1473 = vpow.pop %v1472
      %v1474 = vmul.f32 %v1468, 1.442695
      %v1475 = vpow.pop %v1474
      %v1476 = vmul.f32 %v1469, 1.442695
      %v1477 = vpow.pop %v1476
      %v1478 = vmul.f32 %v1470, 1.442695
      %v1479 = vpow.pop %v1478
      %v1480 = vmul.f32 %v1471, 1.442695
      %v1481 = vpow.pop %v1480
      %v1482 = vsel %vm784, %v1473, 0.0
      %1483 = vadd.xlane.f32.xlu0 %v1482
      %v1484 = vpop.xlane.xlu0 %1483
      %v1485 = vsel %vm784, %v1475, 0.0
      %1486 = vadd.xlane.f32.xlu0 %v1485
      %v1487 = vpop.xlane.xlu0 %1486
      %v1488 = vsel %vm784, %v1477, 0.0
      %1489 = vadd.xlane.f32.xlu0 %v1488
      %v1490 = vpop.xlane.xlu0 %1489
      %v1491 = vsel %vm784, %v1479, 0.0
      %1492 = vadd.xlane.f32.xlu0 %v1491
      %v1493 = vpop.xlane.xlu0 %1492
      %v1494 = vsel %vm784, %v1481, 0.0
      %1495 = vadd.xlane.f32.xlu0 %v1494
      %v1496 = vpop.xlane.xlu0 %1495
      %v1497 = vrcp.pop %v1484
      %v1498 = vrcp.pop %v1487
      %v1499 = vrcp.pop %v1490
      %v1500 = vrcp.pop %v1493
      %v1501 = vrcp.pop %v1496
      %v1502 = vmul.f32 %v1473, %v1497
      %v1503 = vmul.f32 %v1475, %v1498
      %v1504 = vmul.f32 %v1477, %v1499
      %v1505 = vmul.f32 %v1479, %v1500
      %v1506 = vmul.f32 %v1481, %v1501
      %v1507 = vpack.c.bf16 %v1503, %v1502
      %v1508 = vpack.c.bf16 %v1505, %v1504
      %v1509 = vpack.c.bf16 %v1506, %v1506
      %1510 = vrot.lane.b32.xlu0 %v686, 40
      %v1511 = vpop.permute.xlu0 %1510
      %1512 = vrot.lane.b32.xlu0 %v687, 40
      %v1513 = vpop.permute.xlu0 %1512
      %1514 = vrot.lane.b32.xlu0 %v688, 40
      %v1515 = vpop.permute.xlu0 %1514
      %v1519 = vsel %vm784, %v1507, 0
      %v1522 = vsel %vm784, %v1508, 0
      %v1525 = vsel %vm784, %v1509, 0
      %v1528 = vsel %vm863, %v1515, 0
      %1530 = vmatprep.subr.bf16.mxu0 0
      %1531 = vmatpush1.bf16.msra.mxu0 0
      %1532 = vmatprep.subr.bf16.mxu0 0
      %1533 = vmatpush1.bf16.msra.mxu0 0
      %1534 = vmatprep.subr.bf16.mxu0 0
      %1535 = vmatpush1.bf16.msra.mxu0 0
      %1536 = vmatprep.subr.bf16.mxu0 0
      %1537 = vmatpush1.bf16.msra.mxu0 0
      %1538 = vmatprep.subr.bf16.mxu0 0
      %1539 = vmatpush1.bf16.msra.mxu0 0
      %1540 = vmatprep.subr.bf16.mxu0 0
      %1541 = vmatpush1.bf16.msra.mxu0 %v1528
      %1542 = vmatprep.subr.bf16.mxu0 0
      %1543 = vmatpush1.bf16.msra.mxu0 %v1513
      %1544 = vmatprep.subr.bf16.mxu0 0
      %1545 = vmatpush1.bf16.msra.mxu0 %v1511
      %1546 = vmatprep.subr.bf16.mxu0 0
      %1547 = vmatpush2.bf16.msra.mxu0 0
      %1548 = vmatprep.subr.bf16.mxu0 0
      %1549 = vmatpush2.bf16.msra.mxu0 0
      %1550 = vmatprep.subr.bf16.mxu0 0
      %1551 = vmatpush2.bf16.msra.mxu0 0
      %1552 = vmatprep.subr.bf16.mxu0 0
      %1553 = vmatpush2.bf16.msra.mxu0 0
      %1554 = vmatprep.subr.bf16.mxu0 0
      %1555 = vmatpush2.bf16.msra.mxu0 0
      %1556 = vmatprep.subr.bf16.mxu0 0
      %1557 = vmatpush2.bf16.msra.mxu0 0
      %1558 = vmatprep.subr.bf16.mxu0 0
      %1559 = vmatpush2.bf16.msra.mxu0 0
      %1560 = vmatprep.subr.bf16.mxu0 0
      %1561 = vmatpush2.bf16.msra.mxu0 0
      %1562 = vmatprep.mubr.bf16.mxu0 0
      %1563 = vmatmul.mubr.bf16.gmra.mxu0 %v1519
      %v1564 = vpop.f32.mrf.mxu0
      %v1565 = vadd.f32 0.0, %v1564
      %v1566 = vpop.f32.mrf.mxu0
      %v1567 = vpop.f32.mrf.mxu0
      %v1568 = vadd.f32 0.0, %v1567
      %v1569 = vpop.f32.mrf.mxu0
      %1570 = vmatprep.mubr.bf16.mxu0 0
      %1571 = vmatmul.mubr.bf16.gmra.mxu0 %v1522
      %v1572 = vpop.f32.mrf.mxu0
      %v1573 = vadd.f32 0.0, %v1572
      %v1574 = vpop.f32.mrf.mxu0
      %v1575 = vpop.f32.mrf.mxu0
      %v1576 = vadd.f32 0.0, %v1575
      %v1577 = vpop.f32.mrf.mxu0
      %1578 = vmatprep.mubr.bf16.mxu0 0
      %1579 = vmatmul.mubr.bf16.gmra.mxu0 %v1525
      %v1580 = vpop.f32.mrf.mxu0
      %v1581 = vadd.f32 0.0, %v1580
      %v1582 = vpop.f32.mrf.mxu0
      %v1583 = vpop.f32.mrf.mxu0
      %v1584 = vpop.f32.mrf.mxu0
      %1585 = vdwg.mxu0
      %1591 = vrot.lane.b32.xlu0 %v1125, 8
      %v1592 = vpop.permute.xlu0 %1591
      %1593 = vrot.lane.b32.xlu0 %v1128, 8
      %v1594 = vpop.permute.xlu0 %1593
      %1595 = vrot.lane.b32.xlu0 %v1133, 8
      %v1596 = vpop.permute.xlu0 %1595
      %1597 = vrot.lane.b32.xlu0 %v1136, 8
      %v1598 = vpop.permute.xlu0 %1597
      %1599 = vrot.lane.b32.xlu0 %v1141, 8
      %v1600 = vpop.permute.xlu0 %1599
      %1611 = vrot.lane.b32.xlu0 %v1345, 16
      %v1612 = vpop.permute.xlu0 %1611
      %1613 = vrot.lane.b32.xlu0 %v1348, 16
      %v1614 = vpop.permute.xlu0 %1613
      %1615 = vrot.lane.b32.xlu0 %v1353, 16
      %v1616 = vpop.permute.xlu0 %1615
      %1617 = vrot.lane.b32.xlu0 %v1356, 16
      %v1618 = vpop.permute.xlu0 %1617
      %1619 = vrot.lane.b32.xlu0 %v1361, 16
      %v1620 = vpop.permute.xlu0 %1619
      %1631 = vrot.lane.b32.xlu0 %v1565, 24
      %v1632 = vpop.permute.xlu0 %1631
      %1633 = vrot.lane.b32.xlu0 %v1568, 24
      %v1634 = vpop.permute.xlu0 %1633
      %1635 = vrot.lane.b32.xlu0 %v1573, 24
      %v1636 = vpop.permute.xlu0 %1635
      %1637 = vrot.lane.b32.xlu0 %v1576, 24
      %v1638 = vpop.permute.xlu0 %1637
      %1639 = vrot.lane.b32.xlu0 %v1581, 24
      %v1640 = vpop.permute.xlu0 %1639
      %v1646 = vsel %vm709, %v902, %v1592
      %v1647 = vsel %vm709, %v905, %v1594
      %v1648 = vsel %vm709, %v910, %v1596
      %v1649 = vsel %vm709, %v913, %v1598
      %v1650 = vsel %vm709, %v918, %v1600
      %vm1651 = vcmask 130048
      %v1652 = vsel %vm1651, %v1646, %v1612
      %v1653 = vsel %vm1651, %v1647, %v1614
      %v1654 = vsel %vm1651, %v1648, %v1616
      %v1655 = vsel %vm1651, %v1649, %v1618
      %v1656 = vsel %vm1651, %v1650, %v1620
      %vm1657 = vcmask 195584
      %v1658 = vsel %vm1657, %v1652, %v1632
      %v1659 = vsel %vm1657, %v1653, %v1634
      %v1660 = vsel %vm1657, %v1654, %v1636
      %v1661 = vsel %vm1657, %v1655, %v1638
      %v1662 = vsel %vm1657, %v1656, %v1640
      %v1663 = vpack.c.bf16 %v1659, %v1658
      %v1664 = vpack.c.bf16 %v1661, %v1660
      %v1665 = vpack.c.bf16 %v1662, %v1662
      %v1666 = vld [vmem:[%s435] sm:$0xf]
      %v1667 = vld [vmem:[%s435 + $0x4] sm:$0xf]
      %v1668 = vld [vmem:[%s435 + $0x8] sm:$0xf]
      %v1669 = vld [vmem:[%s435 + $0xc] sm:$0xf]
      %v1674 = vunpack.c.l.b16 %v1666
      %v1675 = vunpack.c.l.b16 %v1667
      %v1676 = vunpack.c.l.b16 %v1668
      %v1677 = vunpack.c.l.b16 %v1669
      %v1678 = vpack.c.b16 %v1675, %v1674
      %v1679 = vpack.c.b16 %v1677, %v1676
      %v1683 = vsel %vm482, %v1663, 0
      %v1686 = vsel %vm482, %v1664, 0
      %v1689 = vsel %vm482, %v1665, 0
      %1691 = vmatprep.subr.bf16.mxu0 0
      %1692 = vmatpush1.bf16.msra.mxu0 0
      %1693 = vmatprep.subr.bf16.mxu0 0
      %1694 = vmatpush1.bf16.msra.mxu0 0
      %1695 = vmatprep.subr.bf16.mxu0 0
      %1696 = vmatpush1.bf16.msra.mxu0 0
      %1697 = vmatprep.subr.bf16.mxu0 0
      %1698 = vmatpush1.bf16.msra.mxu0 0
      %1699 = vmatprep.subr.bf16.mxu0 0
      %1700 = vmatpush1.bf16.msra.mxu0 0
      %1701 = vmatprep.subr.bf16.mxu0 0
      %1702 = vmatpush1.bf16.msra.mxu0 0
      %1703 = vmatprep.subr.bf16.mxu0 0
      %1704 = vmatpush1.bf16.msra.mxu0 %v1679
      %1705 = vmatprep.subr.bf16.mxu0 0
      %1706 = vmatpush1.bf16.msra.mxu0 %v1678
      %1707 = vmatprep.subr.bf16.mxu0 0
      %1708 = vmatpush2.bf16.msra.mxu0 0
      %1709 = vmatprep.subr.bf16.mxu0 0
      %1710 = vmatpush2.bf16.msra.mxu0 0
      %1711 = vmatprep.subr.bf16.mxu0 0
      %1712 = vmatpush2.bf16.msra.mxu0 0
      %1713 = vmatprep.subr.bf16.mxu0 0
      %1714 = vmatpush2.bf16.msra.mxu0 0
      %1715 = vmatprep.subr.bf16.mxu0 0
      %1716 = vmatpush2.bf16.msra.mxu0 0
      %1717 = vmatprep.subr.bf16.mxu0 0
      %1718 = vmatpush2.bf16.msra.mxu0 0
      %1719 = vmatprep.subr.bf16.mxu0 0
      %1720 = vmatpush2.bf16.msra.mxu0 0
      %1721 = vmatprep.subr.bf16.mxu0 0
      %1722 = vmatpush2.bf16.msra.mxu0 0
      %1723 = vmatprep.mubr.bf16.mxu0 0
      %1724 = vmatmul.mubr.bf16.gmra.mxu0 %v1683
      %v1725 = vpop.f32.mrf.mxu0
      %v1726 = vadd.f32 0.0, %v1725
      %v1727 = vpop.f32.mrf.mxu0
      %v1728 = vpop.f32.mrf.mxu0
      %v1729 = vadd.f32 0.0, %v1728
      %v1730 = vpop.f32.mrf.mxu0
      %1731 = vmatprep.mubr.bf16.mxu0 0
      %1732 = vmatmul.mubr.bf16.gmra.mxu0 %v1686
      %v1733 = vpop.f32.mrf.mxu0
      %v1734 = vadd.f32 0.0, %v1733
      %v1735 = vpop.f32.mrf.mxu0
      %v1736 = vpop.f32.mrf.mxu0
      %v1737 = vadd.f32 0.0, %v1736
      %v1738 = vpop.f32.mrf.mxu0
      %1739 = vmatprep.mubr.bf16.mxu0 0
      %1740 = vmatmul.mubr.bf16.gmra.mxu0 %v1689
      %v1741 = vpop.f32.mrf.mxu0
      %v1742 = vadd.f32 0.0, %v1741
      %v1743 = vpop.f32.mrf.mxu0
      %v1744 = vpop.f32.mrf.mxu0
      %v1745 = vpop.f32.mrf.mxu0
      %1746 = vdwg.mxu0
      %v1747 = vadd.f32 %v475, %v1726
      %v1748 = vadd.f32 %v476, %v1729
      %v1749 = vadd.f32 %v477, %v1734
      %v1750 = vadd.f32 %v478, %v1737
      %v1751 = vadd.f32 %v479, %v1742
      %v1752 = vlaneseq
      %v1753 = vshrl.u32 %v1752, 7
      %v1754 = vsub.s32 5, %v1753
      %v1755 = vrot.slane %v480, %v1754
      %v1756 = vadd.f32 %v1747, %v1755
      %v1757 = vadd.f32 %v1748, %v1755
      %v1758 = vadd.f32 %v1749, %v1755
      %v1759 = vadd.f32 %v1750, %v1755
      %v1760 = vadd.f32 %v1751, %v1755
      %v1761 = vsel %vm482, %v1756, 0.0
      %1762 = vadd.xlane.f32.xlu0 %v1761
      %v1763 = vpop.xlane.xlu0 %1762
      %v1764 = vsel %vm482, %v1757, 0.0
      %1765 = vadd.xlane.f32.xlu0 %v1764
      %v1766 = vpop.xlane.xlu0 %1765
      %v1767 = vsel %vm482, %v1758, 0.0
      %1768 = vadd.xlane.f32.xlu0 %v1767
      %v1769 = vpop.xlane.xlu0 %1768
      %v1770 = vsel %vm482, %v1759, 0.0
      %1771 = vadd.xlane.f32.xlu0 %v1770
      %v1772 = vpop.xlane.xlu0 %1771
      %v1773 = vsel %vm482, %v1760, 0.0
      %1774 = vadd.xlane.f32.xlu0 %v1773
      %v1775 = vpop.xlane.xlu0 %1774
      %v1776 = vmul.f32 %v1763, %v498
      %v1777 = vmul.f32 %v1766, %v498
      %v1778 = vmul.f32 %v1769, %v498
      %v1779 = vmul.f32 %v1772, %v498
      %v1780 = vmul.f32 %v1775, %v498
      %v1781 = vsub.f32 %v1756, %v1776
      %v1782 = vsub.f32 %v1757, %v1777
      %v1783 = vsub.f32 %v1758, %v1778
      %v1784 = vsub.f32 %v1759, %v1779
      %v1785 = vsub.f32 %v1760, %v1780
      %v1786 = vmul.f32 %v1781, %v1781
      %v1787 = vmul.f32 %v1782, %v1782
      %v1788 = vmul.f32 %v1783, %v1783
      %v1789 = vmul.f32 %v1784, %v1784
      %v1790 = vmul.f32 %v1785, %v1785
      %v1791 = vsel %vm482, %v1786, 0.0
      %1792 = vadd.xlane.f32.xlu0 %v1791
      %v1793 = vpop.xlane.xlu0 %1792
      %v1794 = vsel %vm482, %v1787, 0.0
      %1795 = vadd.xlane.f32.xlu0 %v1794
      %v1796 = vpop.xlane.xlu0 %1795
      %v1797 = vsel %vm482, %v1788, 0.0
      %1798 = vadd.xlane.f32.xlu0 %v1797
      %v1799 = vpop.xlane.xlu0 %1798
      %v1800 = vsel %vm482, %v1789, 0.0
      %1801 = vadd.xlane.f32.xlu0 %v1800
      %v1802 = vpop.xlane.xlu0 %1801
      %v1803 = vsel %vm482, %v1790, 0.0
      %1804 = vadd.xlane.f32.xlu0 %v1803
      %v1805 = vpop.xlane.xlu0 %1804
      %v1806 = vmul.f32 %v1793, %v498
      %v1807 = vmul.f32 %v1796, %v498
      %v1808 = vmul.f32 %v1799, %v498
      %v1809 = vmul.f32 %v1802, %v498
      %v1810 = vmul.f32 %v1805, %v498
      %v1811 = vadd.f32 %v1806, 1e-05
      %v1812 = vadd.f32 %v1807, 1e-05
      %v1813 = vadd.f32 %v1808, 1e-05
      %v1814 = vadd.f32 %v1809, 1e-05
      %v1815 = vadd.f32 %v1810, 1e-05
      %v1816 = vrsqrt.pop %v1811
      %v1817 = vrsqrt.pop %v1812
      %v1818 = vrsqrt.pop %v1813
      %v1819 = vrsqrt.pop %v1814
      %v1820 = vrsqrt.pop %v1815
      %v1821 = vmul.f32 %v1781, %v1816
      %v1822 = vmul.f32 %v1782, %v1817
      %v1823 = vmul.f32 %v1783, %v1818
      %v1824 = vmul.f32 %v1784, %v1819
      %v1825 = vmul.f32 %v1785, %v1820
      %v1826 = vlaneseq
      %v1827 = vshrl.u32 %v1826, 7
      %v1828 = vsub.s32 6, %v1827
      %v1829 = vrot.slane %v480, %v1828
      %v1830 = vmul.f32 %v1821, %v1829
      %v1831 = vmul.f32 %v1822, %v1829
      %v1832 = vmul.f32 %v1823, %v1829
      %v1833 = vmul.f32 %v1824, %v1829
      %v1834 = vmul.f32 %v1825, %v1829
      %v1835 = vlaneseq
      %v1836 = vshrl.u32 %v1835, 7
      %v1837 = vsub.s32 7, %v1836
      %v1838 = vrot.slane %v480, %v1837
      %v1839 = vadd.f32 %v1830, %v1838
      %v1840 = vadd.f32 %v1831, %v1838
      %v1841 = vadd.f32 %v1832, %v1838
      %v1842 = vadd.f32 %v1833, %v1838
      %v1843 = vadd.f32 %v1834, %v1838
      %v1844 = vpack.c.bf16 %v1840, %v1839
      %v1845 = vpack.c.bf16 %v1842, %v1841
      %v1846 = vpack.c.bf16 %v1843, %v1843
      %v1847 = vld [vmem:[%s440] sm:$0xf]
      %v1848 = vld [vmem:[%s440 + $0x4] sm:$0xf]
      %v1849 = vld [vmem:[%s440 + $0x8] sm:$0xf]
      %v1850 = vld [vmem:[%s440 + $0xc] sm:$0xf]
      %v1851 = vld [vmem:[%s453] sm:$0x1]
      %v1853 = vlaneseq
      %v1854 = vshrl.u32 %v1853, 7
      %v1855 = vsub.s32 0, %v1854
      %v1856 = vrot.slane %v1851, %v1855
      %v1862 = vunpack.c.l.b16 %v1847
      %v1863 = vunpack.c.l.b16 %v1848
      %v1864 = vunpack.c.l.b16 %v1849
      %v1865 = vunpack.c.l.b16 %v1850
      %v1866 = vpack.c.b16 %v1863, %v1862
      %v1867 = vpack.c.b16 %v1865, %v1864
      %v1871 = vsel %vm482, %v1844, 0
      %v1874 = vsel %vm482, %v1845, 0
      %v1877 = vsel %vm482, %v1846, 0
      %1879 = vmatprep.subr.bf16.mxu0 0
      %1880 = vmatpush1.bf16.msra.mxu0 0
      %1881 = vmatprep.subr.bf16.mxu0 0
      %1882 = vmatpush1.bf16.msra.mxu0 0
      %1883 = vmatprep.subr.bf16.mxu0 0
      %1884 = vmatpush1.bf16.msra.mxu0 0
      %1885 = vmatprep.subr.bf16.mxu0 0
      %1886 = vmatpush1.bf16.msra.mxu0 0
      %1887 = vmatprep.subr.bf16.mxu0 0
      %1888 = vmatpush1.bf16.msra.mxu0 0
      %1889 = vmatprep.subr.bf16.mxu0 0
      %1890 = vmatpush1.bf16.msra.mxu0 0
      %1891 = vmatprep.subr.bf16.mxu0 0
      %1892 = vmatpush1.bf16.msra.mxu0 %v1867
      %1893 = vmatprep.subr.bf16.mxu0 0
      %1894 = vmatpush1.bf16.msra.mxu0 %v1866
      %1895 = vmatprep.subr.bf16.mxu0 0
      %1896 = vmatpush2.bf16.msra.mxu0 0
      %1897 = vmatprep.subr.bf16.mxu0 0
      %1898 = vmatpush2.bf16.msra.mxu0 0
      %1899 = vmatprep.subr.bf16.mxu0 0
      %1900 = vmatpush2.bf16.msra.mxu0 0
      %1901 = vmatprep.subr.bf16.mxu0 0
      %1902 = vmatpush2.bf16.msra.mxu0 0
      %1903 = vmatprep.subr.bf16.mxu0 0
      %1904 = vmatpush2.bf16.msra.mxu0 0
      %1905 = vmatprep.subr.bf16.mxu0 0
      %1906 = vmatpush2.bf16.msra.mxu0 0
      %1907 = vmatprep.subr.bf16.mxu0 0
      %1908 = vmatpush2.bf16.msra.mxu0 0
      %1909 = vmatprep.subr.bf16.mxu0 0
      %1910 = vmatpush2.bf16.msra.mxu0 0
      %1911 = vmatprep.mubr.bf16.mxu0 0
      %1912 = vmatmul.mubr.bf16.gmra.mxu0 %v1871
      %v1913 = vpop.f32.mrf.mxu0
      %v1914 = vadd.f32 %v1856, %v1913
      %v1915 = vpop.f32.mrf.mxu0
      %v1916 = vpop.f32.mrf.mxu0
      %v1917 = vadd.f32 %v1856, %v1916
      %v1918 = vpop.f32.mrf.mxu0
      %1919 = vmatprep.mubr.bf16.mxu0 0
      %1920 = vmatmul.mubr.bf16.gmra.mxu0 %v1874
      %v1921 = vpop.f32.mrf.mxu0
      %v1922 = vadd.f32 %v1856, %v1921
      %v1923 = vpop.f32.mrf.mxu0
      %v1924 = vpop.f32.mrf.mxu0
      %v1925 = vadd.f32 %v1856, %v1924
      %v1926 = vpop.f32.mrf.mxu0
      %1927 = vmatprep.mubr.bf16.mxu0 0
      %1928 = vmatmul.mubr.bf16.gmra.mxu0 %v1877
      %v1929 = vpop.f32.mrf.mxu0
      %v1930 = vadd.f32 %v1856, %v1929
      %v1931 = vpop.f32.mrf.mxu0
      %v1932 = vpop.f32.mrf.mxu0
      %v1933 = vpop.f32.mrf.mxu0
      %1934 = vdwg.mxu0
      %v1935 = vmul.f32 %v1914, 0.5
      %v1936 = vmul.f32 %v1917, 0.5
      %v1937 = vmul.f32 %v1922, 0.5
      %v1938 = vmul.f32 %v1925, 0.5
      %v1939 = vmul.f32 %v1930, 0.5
      %v1940 = vmul.f32 %v1914, 0.044715
      %v1941 = vmul.f32 %v1917, 0.044715
      %v1942 = vmul.f32 %v1922, 0.044715
      %v1943 = vmul.f32 %v1925, 0.044715
      %v1944 = vmul.f32 %v1930, 0.044715
      %v1945 = vmul.f32 %v1940, %v1914
      %v1946 = vmul.f32 %v1941, %v1917
      %v1947 = vmul.f32 %v1942, %v1922
      %v1948 = vmul.f32 %v1943, %v1925
      %v1949 = vmul.f32 %v1944, %v1930
      %v1950 = vmul.f32 %v1945, %v1914
      %v1951 = vmul.f32 %v1946, %v1917
      %v1952 = vmul.f32 %v1947, %v1922
      %v1953 = vmul.f32 %v1948, %v1925
      %v1954 = vmul.f32 %v1949, %v1930
      %v1955 = vadd.f32 %v1914, %v1950
      %v1956 = vadd.f32 %v1917, %v1951
      %v1957 = vadd.f32 %v1922, %v1952
      %v1958 = vadd.f32 %v1925, %v1953
      %v1959 = vadd.f32 %v1930, %v1954
      %v1960 = vmul.f32 %v1955, 0.7978846
      %v1961 = vmul.f32 %v1956, 0.7978846
      %v1962 = vmul.f32 %v1957, 0.7978846
      %v1963 = vmul.f32 %v1958, 0.7978846
      %v1964 = vmul.f32 %v1959, 0.7978846
      %v1965 = vtanh.pop %v1960
      %v1966 = vtanh.pop %v1961
      %v1967 = vtanh.pop %v1962
      %v1968 = vtanh.pop %v1963
      %v1969 = vtanh.pop %v1964
      %v1970 = vadd.f32 %v1965, 1.0
      %v1971 = vadd.f32 %v1966, 1.0
      %v1972 = vadd.f32 %v1967, 1.0
      %v1973 = vadd.f32 %v1968, 1.0
      %v1974 = vadd.f32 %v1969, 1.0
      %v1975 = vmul.f32 %v1935, %v1970
      %v1976 = vmul.f32 %v1936, %v1971
      %v1977 = vmul.f32 %v1937, %v1972
      %v1978 = vmul.f32 %v1938, %v1973
      %v1979 = vmul.f32 %v1939, %v1974
      %v1980 = vpack.c.bf16 %v1976, %v1975
      %v1981 = vpack.c.bf16 %v1978, %v1977
      %v1982 = vpack.c.bf16 %v1979, %v1979
      %v1983 = vld [vmem:[%s445] sm:$0xf]
      %v1984 = vld [vmem:[%s445 + $0x4] sm:$0xf]
      %v1985 = vld [vmem:[%s445 + $0x8] sm:$0xf]
      %v1986 = vld [vmem:[%s445 + $0xc] sm:$0xf]
      %v1987 = vld [vmem:[%s445 + $0x10] sm:$0xf]
      %v1988 = vld [vmem:[%s445 + $0x14] sm:$0xf]
      %v1989 = vld [vmem:[%s445 + $0x18] sm:$0xf]
      %v1990 = vld [vmem:[%s445 + $0x1c] sm:$0xf]
      %v1991 = vld [vmem:[%s445 + $0x20] sm:$0xf]
      %v1992 = vld [vmem:[%s445 + $0x24] sm:$0xf]
      %v1993 = vld [vmem:[%s445 + $0x28] sm:$0xf]
      %v1994 = vld [vmem:[%s445 + $0x2c] sm:$0xf]
      %v1995 = vld [vmem:[%s445 + $0x30] sm:$0xf]
      %v1996 = vld [vmem:[%s445 + $0x34] sm:$0xf]
      %v1997 = vld [vmem:[%s445 + $0x38] sm:$0xf]
      %v1998 = vld [vmem:[%s445 + $0x3c] sm:$0xf]
      %v2015 = vunpack.c.l.b16 %v1983
      %v2016 = vunpack.c.l.b16 %v1984
      %v2017 = vunpack.c.l.b16 %v1985
      %v2018 = vunpack.c.l.b16 %v1986
      %v2019 = vunpack.c.l.b16 %v1987
      %v2020 = vunpack.c.l.b16 %v1988
      %v2021 = vunpack.c.l.b16 %v1989
      %v2022 = vunpack.c.l.b16 %v1990
      %v2023 = vunpack.c.l.b16 %v1991
      %v2024 = vunpack.c.l.b16 %v1992
      %v2025 = vunpack.c.l.b16 %v1993
      %v2026 = vunpack.c.l.b16 %v1994
      %v2027 = vunpack.c.l.b16 %v1995
      %v2028 = vunpack.c.l.b16 %v1996
      %v2029 = vunpack.c.l.b16 %v1997
      %v2030 = vunpack.c.l.b16 %v1998
      %v2031 = vpack.c.b16 %v2016, %v2015
      %v2032 = vpack.c.b16 %v2018, %v2017
      %v2033 = vpack.c.b16 %v2020, %v2019
      %v2034 = vpack.c.b16 %v2022, %v2021
      %v2035 = vpack.c.b16 %v2024, %v2023
      %v2036 = vpack.c.b16 %v2026, %v2025
      %v2037 = vpack.c.b16 %v2028, %v2027
      %v2038 = vpack.c.b16 %v2030, %v2029
      %2047 = vmatprep.subr.bf16.mxu0 0
      %2048 = vmatpush1.bf16.msra.mxu0 %v2038
      %2049 = vmatprep.subr.bf16.mxu0 0
      %2050 = vmatpush1.bf16.msra.mxu0 %v2037
      %2051 = vmatprep.subr.bf16.mxu0 0
      %2052 = vmatpush1.bf16.msra.mxu0 %v2036
      %2053 = vmatprep.subr.bf16.mxu0 0
      %2054 = vmatpush1.bf16.msra.mxu0 %v2035
      %2055 = vmatprep.subr.bf16.mxu0 0
      %2056 = vmatpush1.bf16.msra.mxu0 %v2034
      %2057 = vmatprep.subr.bf16.mxu0 0
      %2058 = vmatpush1.bf16.msra.mxu0 %v2033
      %2059 = vmatprep.subr.bf16.mxu0 0
      %2060 = vmatpush1.bf16.msra.mxu0 %v2032
      %2061 = vmatprep.subr.bf16.mxu0 0
      %2062 = vmatpush1.bf16.msra.mxu0 %v2031
      %2063 = vmatprep.subr.bf16.mxu0 0
      %2064 = vmatpush2.bf16.msra.mxu0 0
      %2065 = vmatprep.subr.bf16.mxu0 0
      %2066 = vmatpush2.bf16.msra.mxu0 0
      %2067 = vmatprep.subr.bf16.mxu0 0
      %2068 = vmatpush2.bf16.msra.mxu0 0
      %2069 = vmatprep.subr.bf16.mxu0 0
      %2070 = vmatpush2.bf16.msra.mxu0 0
      %2071 = vmatprep.subr.bf16.mxu0 0
      %2072 = vmatpush2.bf16.msra.mxu0 0
      %2073 = vmatprep.subr.bf16.mxu0 0
      %2074 = vmatpush2.bf16.msra.mxu0 0
      %2075 = vmatprep.subr.bf16.mxu0 0
      %2076 = vmatpush2.bf16.msra.mxu0 0
      %2077 = vmatprep.subr.bf16.mxu0 0
      %2078 = vmatpush2.bf16.msra.mxu0 0
      %2079 = vmatprep.mubr.bf16.mxu0 0
      %2080 = vmatmul.mubr.bf16.gmra.mxu0 %v1980
      %v2081 = vpop.f32.mrf.mxu0
      %v2082 = vadd.f32 0.0, %v2081
      %v2083 = vpop.f32.mrf.mxu0
      %v2084 = vpop.f32.mrf.mxu0
      %v2085 = vadd.f32 0.0, %v2084
      %v2086 = vpop.f32.mrf.mxu0
      %2087 = vmatprep.mubr.bf16.mxu0 0
      %2088 = vmatmul.mubr.bf16.gmra.mxu0 %v1981
      %v2089 = vpop.f32.mrf.mxu0
      %v2090 = vadd.f32 0.0, %v2089
      %v2091 = vpop.f32.mrf.mxu0
      %v2092 = vpop.f32.mrf.mxu0
      %v2093 = vadd.f32 0.0, %v2092
      %v2094 = vpop.f32.mrf.mxu0
      %2095 = vmatprep.mubr.bf16.mxu0 0
      %2096 = vmatmul.mubr.bf16.gmra.mxu0 %v1982
      %v2097 = vpop.f32.mrf.mxu0
      %v2098 = vadd.f32 0.0, %v2097
      %v2099 = vpop.f32.mrf.mxu0
      %v2100 = vpop.f32.mrf.mxu0
      %v2101 = vpop.f32.mrf.mxu0
      %2102 = vdwg.mxu0
      %v2103 = vadd.f32 %v1756, %v2082
      %v2104 = vadd.f32 %v1757, %v2085
      %v2105 = vadd.f32 %v1758, %v2090
      %v2106 = vadd.f32 %v1759, %v2093
      %v2107 = vadd.f32 %v1760, %v2098
      %v2108 = vlaneseq
      %v2109 = vshrl.u32 %v2108, 7
      %v2110 = vsub.s32 0, %v2109
      %v2111 = vrot.slane %v481, %v2110
      %v2112 = vadd.f32 %v2103, %v2111
      %v2113 = vadd.f32 %v2104, %v2111
      %v2114 = vadd.f32 %v2105, %v2111
      %v2115 = vadd.f32 %v2106, %v2111
      %v2116 = vadd.f32 %v2107, %v2111
      %2117 = vst.msk [vmem:[%s458] sm:$0xff] %vm482, %v2112
      %2118 = vst.msk [vmem:[%s458 + $0x8] sm:$0xff] %vm482, %v2113
      %2119 = vst.msk [vmem:[%s458 + $0x10] sm:$0xff] %vm482, %v2114
      %2120 = vst.msk [vmem:[%s458 + $0x18] sm:$0xff] %vm482, %v2115
      %2121 = vst.msk [vmem:[%s458 + $0x20] sm:$0xff] %vm482, %v2116
      %p2122 = scmp.eq.s32.totalorder %s25, 2
      // Predicated region
      $region61: #{emotion2vec_forward.9} parent=55 // pred_check
        %p2123 = pneg %p2122
      $region62: #{emotion2vec_forward.9} parent=55 // pred_check_branch
        %2125 = sbr.rel (%p2123) target = $region64
      $region63: #{emotion2vec_forward.9} parent=55 // pred_region
        %v2126 = vld [vmem:[%s7] sm:$0x1]
        %v2127 = vld [vmem:[%s8] sm:$0x1]
        %v2128 = vsel %vm482, %v2112, 0.0
        %2129 = vadd.xlane.f32.xlu0 %v2128
        %v2130 = vpop.xlane.xlu0 %2129
        %v2131 = vsel %vm482, %v2113, 0.0
        %2132 = vadd.xlane.f32.xlu0 %v2131
        %v2133 = vpop.xlane.xlu0 %2132
        %v2134 = vsel %vm482, %v2114, 0.0
        %2135 = vadd.xlane.f32.xlu0 %v2134
        %v2136 = vpop.xlane.xlu0 %2135
        %v2137 = vsel %vm482, %v2115, 0.0
        %2138 = vadd.xlane.f32.xlu0 %v2137
        %v2139 = vpop.xlane.xlu0 %2138
        %v2140 = vsel %vm482, %v2116, 0.0
        %2141 = vadd.xlane.f32.xlu0 %v2140
        %v2142 = vpop.xlane.xlu0 %2141
        %v2143 = vmul.f32 %v2130, %v498
        %v2144 = vmul.f32 %v2133, %v498
        %v2145 = vmul.f32 %v2136, %v498
        %v2146 = vmul.f32 %v2139, %v498
        %v2147 = vmul.f32 %v2142, %v498
        %v2148 = vsub.f32 %v2112, %v2143
        %v2149 = vsub.f32 %v2113, %v2144
        %v2150 = vsub.f32 %v2114, %v2145
        %v2151 = vsub.f32 %v2115, %v2146
        %v2152 = vsub.f32 %v2116, %v2147
        %v2153 = vmul.f32 %v2148, %v2148
        %v2154 = vmul.f32 %v2149, %v2149
        %v2155 = vmul.f32 %v2150, %v2150
        %v2156 = vmul.f32 %v2151, %v2151
        %v2157 = vmul.f32 %v2152, %v2152
        %v2158 = vsel %vm482, %v2153, 0.0
        %2159 = vadd.xlane.f32.xlu0 %v2158
        %v2160 = vpop.xlane.xlu0 %2159
        %v2161 = vsel %vm482, %v2154, 0.0
        %2162 = vadd.xlane.f32.xlu0 %v2161
        %v2163 = vpop.xlane.xlu0 %2162
        %v2164 = vsel %vm482, %v2155, 0.0
        %2165 = vadd.xlane.f32.xlu0 %v2164
        %v2166 = vpop.xlane.xlu0 %2165
        %v2167 = vsel %vm482, %v2156, 0.0
        %2168 = vadd.xlane.f32.xlu0 %v2167
        %v2169 = vpop.xlane.xlu0 %2168
        %v2170 = vsel %vm482, %v2157, 0.0
        %2171 = vadd.xlane.f32.xlu0 %v2170
        %v2172 = vpop.xlane.xlu0 %2171
        %v2173 = vmul.f32 %v2160, %v498
        %v2174 = vmul.f32 %v2163, %v498
        %v2175 = vmul.f32 %v2166, %v498
        %v2176 = vmul.f32 %v2169, %v498
        %v2177 = vmul.f32 %v2172, %v498
        %v2178 = vadd.f32 %v2173, 1e-05
        %v2179 = vadd.f32 %v2174, 1e-05
        %v2180 = vadd.f32 %v2175, 1e-05
        %v2181 = vadd.f32 %v2176, 1e-05
        %v2182 = vadd.f32 %v2177, 1e-05
        %v2183 = vrsqrt.pop %v2178
        %v2184 = vrsqrt.pop %v2179
        %v2185 = vrsqrt.pop %v2180
        %v2186 = vrsqrt.pop %v2181
        %v2187 = vrsqrt.pop %v2182
        %v2188 = vmul.f32 %v2148, %v2183
        %v2189 = vmul.f32 %v2149, %v2184
        %v2190 = vmul.f32 %v2150, %v2185
        %v2191 = vmul.f32 %v2151, %v2186
        %v2192 = vmul.f32 %v2152, %v2187
        %v2194 = vlaneseq
        %v2195 = vshrl.u32 %v2194, 7
        %v2196 = vsub.s32 0, %v2195
        %v2197 = vrot.slane %v2126, %v2196
        %v2199 = vmul.f32 %v2188, %v2197
        %v2200 = vmul.f32 %v2189, %v2197
        %v2201 = vmul.f32 %v2190, %v2197
        %v2202 = vmul.f32 %v2191, %v2197
        %v2203 = vmul.f32 %v2192, %v2197
        %v2205 = vlaneseq
        %v2206 = vshrl.u32 %v2205, 7
        %v2207 = vsub.s32 0, %v2206
        %v2208 = vrot.slane %v2127, %v2207
        %v2210 = vadd.f32 %v2199, %v2208
        %v2211 = vadd.f32 %v2200, %v2208
        %v2212 = vadd.f32 %v2201, %v2208
        %v2213 = vadd.f32 %v2202, %v2208
        %v2214 = vadd.f32 %v2203, %v2208
        %2215 = vst.msk [vmem:[%s458] sm:$0xff] %vm482, %v2210
        %2216 = vst.msk [vmem:[%s458 + $0x8] sm:$0xff] %vm482, %v2211
        %2217 = vst.msk [vmem:[%s458 + $0x10] sm:$0xff] %vm482, %v2212
        %2218 = vst.msk [vmem:[%s458 + $0x18] sm:$0xff] %vm482, %v2213
        %2219 = vst.msk [vmem:[%s458 + $0x20] sm:$0xff] %vm482, %v2214
      $region64: #{emotion2vec_forward.9} parent=55 // pred_fallthru
        _
      %p2220 = scmp.lt.s32.totalorder %s24, 1
      %s2221 = scalar_select %p2220, %s24, 1
      %s2222 = smul.addr %s2221, 5
      %s2223 = smul.addr %s2222, 8
      %s2224 = scalar_lea.vmem %s9, %s2223
      // Predicated region
      $region65: #{emotion2vec_forward.9} parent=55 // pred_check
        %p2225 = pneg %p274
      $region66: #{emotion2vec_forward.9} parent=55 // pred_check_branch
        %2227 = sbr.rel (%p2225) target = $region68
      $region67: #{emotion2vec_forward.9} parent=55 // pred_region
        _
      $region68: #{emotion2vec_forward.9} parent=55 // pred_fallthru
        _
    $region56: #{emotion2vec_forward.9} parent=5 // pred_fallthru
      _
    %p2228 = scmp.le.s32.totalorder 2, %s15
    // Predicated region
    $region69: #{emotion2vec_forward.9} parent=5 // pred_check
      %p2229 = pneg %p2228
    $region70: #{emotion2vec_forward.9} parent=5 // pred_check_branch
      %2231 = sbr.rel (%p2229) target = $region72
    $region71: #{emotion2vec_forward.9} parent=5 // pred_region
      %s2232 = ssub.s32 %s15, 2
      // Predicated region
      $region73: #{emotion2vec_forward.9} parent=71 // pred_check
        %p2233 = pneg %p280
      $region74: #{emotion2vec_forward.9} parent=71 // pred_check_branch
        %2235 = sbr.rel (%p2233) target = $region76
      $region75: #{emotion2vec_forward.9} parent=71 // pred_region
        %p2236 = scmp.lt.s32.totalorder %s26, 1
        %s2237 = scalar_select %p2236, %s26, 1
        %s2238 = smul.addr %s2237, 5
        %s2239 = smul.addr %s2238, 8
        %s2240 = scalar_lea.vmem %s9, %s2239
      $region76: #{emotion2vec_forward.9} parent=71 // pred_fallthru
        _
    $region72: #{emotion2vec_forward.9} parent=5 // pred_fallthru
      _
  $region6: #{emotion2vec_forward.9} parent=0 // loop_footer
    %s19 = sadd.s32 1, %s15
  $region7: #{emotion2vec_forward.9} parent=0 // loop_footer_branch
    %14 = sbr.rel target = $region3
  $region8: #{emotion2vec_forward.9} parent=0 // loop_exit
    _

</llo_original>
